<compile_context>
chip_gen: v6e
topology: v6e:2x2x1
jax: 0.10.0
libtpu: 0.0.40
codegen_flags: <defaults>
</compile_context>

<pallas_src>
import numpy as np

import jax
import jax.numpy as jnp
from jax.experimental import pallas as pl
from jax.experimental.pallas import tpu as pltpu

RRELU_SLOPE = (1.0 / 8.0 + 1.0 / 3.0) / 2.0   # 11/48
BN_EPS = 1e-5
ROWS = 32     # per-image sublane tile (max spatial H = 28)
LANES = 128   # lane tile (max packed width W*C = 128)


# ----------------------------------------------------------------------------
# Plan builder: packs every kernel operand into three stacked arrays
#   L    : (nL, 32, 32)   row operators  (shift / pool-rows / select), bf16
#   R    : (nR, 128, 128) lane operators (conv taps * BN scale, pool-cols, W),
#                         bf16
#   BIAS : (nB, 1, 128)   packed per-channel shifts / biases, f32
# and records the integer indices each layer uses (static Python ints).
# ----------------------------------------------------------------------------
class _Plan:
    def __init__(self):
        self.L = []
        self.R = []
        self.BIAS = []
        self._cache = {}

    def add_l(self, mat):
        r, c = mat.shape
        assert r <= ROWS and c <= ROWS, (r, c)
        m = np.zeros((ROWS, ROWS), np.float32)
        m[:r, :c] = mat
        self.L.append(m)
        return len(self.L) - 1

    def add_r(self, mat):
        k, n = mat.shape
        assert k <= LANES and n <= LANES, (k, n)
        self.R.append(jnp.pad(jnp.asarray(mat, jnp.float32),
                              ((0, LANES - k), (0, LANES - n))))
        return len(self.R) - 1

    def add_bias(self, vec):
        n = vec.shape[0]
        assert n <= LANES, n
        self.BIAS.append(jnp.pad(jnp.asarray(vec, jnp.float32),
                                 (0, LANES - n)).reshape(1, LANES))
        return len(self.BIAS) - 1

    # ---- cached structural operators (exact in bf16: values 0 / 1 / 0.5) ----
    def shift(self, h, dy):
        key = ("shift", h, dy)
        if key not in self._cache:
            m = np.zeros((h, h), np.float32)
            for y in range(h):
                if 0 <= y + dy < h:
                    m[y, y + dy] = 1.0
            self._cache[key] = self.add_l(m)
        return self._cache[key]

    def pool_rows(self, h):
        key = ("prow", h)
        if key not in self._cache:
            m = np.zeros((h // 2, h), np.float32)
            for i in range(h // 2):
                m[i, 2 * i] = 0.5
                m[i, 2 * i + 1] = 0.5
            self._cache[key] = self.add_l(m)
        return self._cache[key]

    def pool_cols(self, s, c):
        key = ("pcol", s, c)
        if key not in self._cache:
            m = np.zeros((s * c, (s // 2) * c), np.float32)
            for j in range(s // 2):
                for ch in range(c):
                    m[(2 * j) * c + ch, j * c + ch] = 0.5
                    m[(2 * j + 1) * c + ch, j * c + ch] = 0.5
            self._cache[key] = self.add_r(m)
        return self._cache[key]


def _conv_entries(plan, s, w, scale, shift):
    """3x3 / stride 1 / pad 1 conv on an (s, s, cin) image as 5 matmuls.

    out = sum_dy  (S_dy @ x) @ M_dy   with M_dy holding the 3 horizontal taps
    of kernel row (dy+1) and the BN scale folded into its columns.
    """
    cout, cin = w.shape[0], w.shape[1]
    # P[kx, x_in, x_out] = 1 iff x_in == x_out + kx - 1 (out-of-range taps are
    # simply absent -> zero padding).
    p = np.zeros((3, s, s), np.float32)
    for kx in range(3):
        for xo in range(s):
            xi = xo + kx - 1
            if 0 <= xi < s:
                p[kx, xi, xo] = 1.0
    m_idx = []
    for dy in (-1, 0, 1):
        wsl = w[:, :, dy + 1, :]                          # (cout, cin, kx)
        m4 = jnp.einsum("kio,zck->icoz", p, wsl)          # (s, cin, s, cout)
        m = (m4 * scale).reshape(s * cin, s * cout)       # fold BN scale
        m_idx.append(plan.add_r(m))
    return dict(sm=plan.shift(s, -1), sp=plan.shift(s, 1), m=m_idx,
                b=plan.add_bias(jnp.tile(shift, s)))


def _pool_entries(plan, s, c):
    return dict(r=plan.pool_rows(s), c=plan.pool_cols(s, c))


def _adaptive_entries(plan, s_in, s_out, c):
    """nn.AdaptiveAvgPool2d((s_out, s_out)) as separable row/col operators.

    For 7->8 the window weights are 1.0 or 0.5 (exact in bf16).
    """
    rows = np.zeros((s_out, s_in), np.float32)
    cols = np.zeros((s_in * c, s_out * c), np.float32)
    for i in range(s_out):
        lo = (i * s_in) // s_out
        hi = -((-(i + 1) * s_in) // s_out)
        wgt = 1.0 / (hi - lo)
        rows[i, lo:hi] = wgt
        for x in range(lo, hi):
            for ch in range(c):
                cols[x * c + ch, i * c + ch] = wgt
    return dict(r=plan.add_l(rows), c=plan.add_r(cols))


def _fold_bn(bias, bn):
    gamma, beta, mean, var = bn
    scale = gamma / jnp.sqrt(var + BN_EPS)
    shift = (bias - mean) * scale + beta
    return scale, shift


def _build_plan(params, channels, spatial):
    plan = _Plan()
    res_downs = []
    h, cin = spatial, channels
    for name in ("rd1", "rd2", "rd3", "rd4"):
        p = params[name]
        chalf = p["conv1_w"].shape[0]
        cout = p["conv2_w"].shape[0]
        s1, t1 = _fold_bn(p["conv1_b"], p["bn1"])
        s2, t2 = _fold_bn(p["conv2_b"], p["bn2"])
        rd = dict(
            pool_x=_pool_entries(plan, h, cin),        # AvgPool of the input
            conv3=_conv_entries(plan, h // 2, p["conv3_w"],
                                jnp.ones((cout,), jnp.float32), p["conv3_b"]),
            conv1=_conv_entries(plan, h, p["conv1_w"], s1, t1),
            pool_h=_pool_entries(plan, h, chalf),      # AvgPool of conv1 out
            conv2=_conv_entries(plan, h // 2, p["conv2_w"], s2, t2),
            post=None,
        )
        h, cin = h // 2, cout
        if name == "rd2":
            # wide=28 branch: AdaptiveAvgPool2d((8, 8)) on the 7x7 map.
            rd["post"] = _adaptive_entries(plan, h, 8, cin)
            h = 8
        res_downs.append(rd)

    # conv_mu: Conv2d(4ch, z, 2, 2) on the final 2x2 map -> 1x1xz.
    z, cin_mu = params["mu_w"].shape[0], params["mu_w"].shape[1]
    cmu = dict(m=[], sel=[], b=plan.add_bias(params["mu_b"]))
    for ky in range(2):
        wsl = params["mu_w"][:, :, ky, :]                 # (z, cin, kx)
        cmu["m"].append(plan.add_r(
            jnp.transpose(wsl, (2, 1, 0)).reshape(2 * cin_mu, z)))
        sel = np.zeros((1, 2), np.float32)
        sel[0, ky] = 1.0
        cmu["sel"].append(plan.add_l(sel))

    lin = dict(w=plan.add_r(params["lin_w"].T),
               b=plan.add_bias(params["lin_b"]))
    return plan, dict(res_downs=res_downs, conv_mu=cmu, linear=lin)


# ----------------------------------------------------------------------------
# The single fused kernel: one grid step per image.
# ----------------------------------------------------------------------------
def _make_kernel(recs):
    def mm(a, b):
        # bf16 MXU operands, f32 accumulation.
        return jnp.dot(a.astype(jnp.bfloat16), b.astype(jnp.bfloat16),
                       preferred_element_type=jnp.float32)

    def kernel(x_ref, l_ref, r_ref, b_ref, o_ref):
        def conv(x, c, res=None, act=True):
            y = mm(mm(l_ref[c["sm"]], x), r_ref[c["m"][0]])
            y = y + mm(x, r_ref[c["m"][1]])
            y = y + mm(mm(l_ref[c["sp"]], x), r_ref[c["m"][2]])
            y = y + b_ref[c["b"]]                 # f32 epilogue (BN shift/bias)
            if res is not None:
                y = y + res
            if act:
                y = jnp.where(y >= 0.0, y, RRELU_SLOPE * y)
            return y

        def pool(x, pr):
            return mm(mm(l_ref[pr["r"]], x), r_ref[pr["c"]])

        x = x_ref[...]
        for rd in recs["res_downs"]:
            skip = conv(pool(x, rd["pool_x"]), rd["conv3"], act=False)
            h = conv(x, rd["conv1"])
            x = conv(pool(h, rd["pool_h"]), rd["conv2"], res=skip)
            if rd["post"] is not None:
                x = pool(x, rd["post"])           # adaptive 7x7 -> 8x8

        cm = recs["conv_mu"]
        y = mm(l_ref[cm["sel"][0]], mm(x, r_ref[cm["m"][0]]))
        y = y + mm(l_ref[cm["sel"][1]], mm(x, r_ref[cm["m"][1]]))
        y = y + b_ref[cm["b"]]

        lin = recs["linear"]
        o_ref[...] = mm(y, r_ref[lin["w"]]) + b_ref[lin["b"]]

    return kernel


def encoder_forward(x_nchw, params):
    """x_nchw: (B, channels, 28, 28) float32 -> (B, hidden_dim) float32."""
    b, cin, hh, ww = x_nchw.shape
    assert hh == 28 and ww == 28, "wide=28 branch expects 28x28 inputs"
    assert hh <= ROWS and ww * cin <= LANES

    plan, recs = _build_plan(params, cin, hh)

    # Pack the NCHW input into per-image (ROWS, LANES) bf16 tiles:
    #   tile[y, x*C + c] = x[b, c, y, x]
    x_t = jnp.transpose(x_nchw, (0, 2, 3, 1)).reshape(b, hh, ww * cin)
    x_t = jnp.pad(x_t, ((0, 0), (0, ROWS - hh), (0, LANES - ww * cin)))
    x_t = x_t.astype(jnp.bfloat16)

    l_pack = jnp.asarray(np.stack(plan.L)).astype(jnp.bfloat16)
    r_pack = jnp.stack(plan.R).astype(jnp.bfloat16)
    bias_pack = jnp.stack(plan.BIAS)              # f32

    hidden = params["lin_b"].shape[0]
    out = pl.pallas_call(
        _make_kernel(recs),
        out_shape=jax.ShapeDtypeStruct((b, ROWS, LANES), jnp.float32),
        grid=(b,),
        in_specs=[
            pl.BlockSpec((None, ROWS, LANES), lambda i: (i, 0, 0)),
            pl.BlockSpec(l_pack.shape, lambda i: (0, 0, 0)),
            pl.BlockSpec(r_pack.shape, lambda i: (0, 0, 0)),
            pl.BlockSpec(bias_pack.shape, lambda i: (0, 0, 0)),
        ],
        out_specs=pl.BlockSpec((None, ROWS, LANES), lambda i: (i, 0, 0)),
        compiler_params=pltpu.CompilerParams(
            dimension_semantics=("parallel",)),
    )(x_t, l_pack, r_pack, bias_pack)

    # Row 0 of each image's tile holds the Linear output in lanes [0, hidden).
    return out[:, 0, :hidden]


# ----------------------------------------------------------------------------
# Deterministic parameter init (shapes mirror the PyTorch module)
# ----------------------------------------------------------------------------
def _init_conv(key, cout, cin, k):
    kw, kb = jax.random.split(key)
    fan = cin * k * k
    w = jax.random.normal(kw, (cout, cin, k, k), jnp.float32) / jnp.sqrt(fan)
    b = 0.05 * jax.random.normal(kb, (cout,), jnp.float32)
    return w, b


def _init_bn(key, c):
    k1, k2, k3, k4 = jax.random.split(key, 4)
    gamma = 1.0 + 0.1 * jax.random.normal(k1, (c,), jnp.float32)
    beta = 0.1 * jax.random.normal(k2, (c,), jnp.float32)
    mean = 0.1 * jax.random.normal(k3, (c,), jnp.float32)
    var = 0.5 + jnp.abs(jax.random.normal(k4, (c,), jnp.float32))
    return (gamma, beta, mean, var)


def _init_res_down(key, cin, cout):
    k1, k2, k3, k4, k5 = jax.random.split(key, 5)
    half = cout // 2
    w1, b1 = _init_conv(k1, half, cin, 3)
    w2, b2 = _init_conv(k2, cout, half, 3)
    w3, b3 = _init_conv(k3, cout, cin, 3)
    return dict(conv1_w=w1, conv1_b=b1, bn1=_init_bn(k4, half),
                conv2_w=w2, conv2_b=b2, bn2=_init_bn(k5, cout),
                conv3_w=w3, conv3_b=b3)


def init_encoder_params(key, channels, ch, z, hidden_dim):
    ks = jax.random.split(key, 6)
    params = dict(
        rd1=_init_res_down(ks[0], channels, ch),
        rd2=_init_res_down(ks[1], ch, 2 * ch),
        rd3=_init_res_down(ks[2], 2 * ch, 4 * ch),
        rd4=_init_res_down(ks[3], 4 * ch, 4 * ch),
    )
    params["mu_w"], params["mu_b"] = _init_conv(ks[4], z, 4 * ch, 2)
    kw, kb = jax.random.split(ks[5])
    params["lin_w"] = (jax.random.normal(kw, (hidden_dim, z), jnp.float32)
                       / jnp.sqrt(z))
    params["lin_b"] = 0.05 * jax.random.normal(kb, (hidden_dim,), jnp.float32)
    return params


if __name__ == "__main__":
    # Small shapes consistent with the wide=28 branch of the module.
    B, CHANNELS, CH, Z, HIDDEN = 2, 3, 8, 32, 10
    key = jax.random.PRNGKey(0)
    k_x, k_p = jax.random.split(key)
    x = jax.random.normal(k_x, (B, CHANNELS, 28, 28), jnp.float32)
    params = init_encoder_params(k_p, CHANNELS, CH, Z, HIDDEN)

    fwd = jax.jit(encoder_forward)
    out = jax.block_until_ready(fwd(x, params))
    assert out.shape == (B, HIDDEN), out.shape
    assert bool(jnp.all(jnp.isfinite(out)))
    print("KERNEL_OK")
</pallas_src>

<mosaic_0001>
module attributes {stable_mosaic.version = 11 : i64} {
  func.func @kernel(%arg0: i32, %arg1: memref<1x32x128xbf16, #tpu.memory_space<vmem>>, %arg2: memref<19x32x32xbf16, #tpu.memory_space<vmem>>, %arg3: memref<46x128x128xbf16, #tpu.memory_space<vmem>>, %arg4: memref<14x1x128xf32, #tpu.memory_space<vmem>>, %arg5: memref<1x32x128xf32, #tpu.memory_space<vmem>>) attributes {dimension_semantics = [#tpu.dimension_semantics<parallel>], iteration_bounds = array<i64: 2>, scalar_prefetch = 0 : i64, scratch_operands = 0 : i64, tpu.core_type = #tpu.core_type<tc>, window_params = [{transform_indices = @transform_0, window_bounds = array<i64: 1, 32, 128>}, {pipeline_mode = #tpu.pipeline_mode<synchronous>, transform_indices = @transform_1, window_bounds = array<i64: 19, 32, 32>}, {pipeline_mode = #tpu.pipeline_mode<synchronous>, transform_indices = @transform_2, window_bounds = array<i64: 46, 128, 128>}, {pipeline_mode = #tpu.pipeline_mode<synchronous>, transform_indices = @transform_3, window_bounds = array<i64: 14, 1, 128>}, {transform_indices = @transform_4, window_bounds = array<i64: 1, 32, 128>}]} {
    %c0 = arith.constant 0 : index
    %c0_0 = arith.constant 0 : index
    %c0_1 = arith.constant 0 : index
    %0 = vector.load %arg1[%c0, %c0_0, %c0_1] : memref<1x32x128xbf16, #tpu.memory_space<vmem>>, vector<1x32x128xbf16>
    %1 = vector.shape_cast %0 : vector<1x32x128xbf16> to vector<32x128xbf16>
    %c0_2 = arith.constant 0 : index
    %c0_3 = arith.constant 0 : index
    %c0_4 = arith.constant 0 : index
    %2 = vector.load %arg2[%c0_2, %c0_3, %c0_4] : memref<19x32x32xbf16, #tpu.memory_space<vmem>>, vector<1x32x32xbf16>
    %3 = vector.shape_cast %2 : vector<1x32x32xbf16> to vector<32x32xbf16>
    %cst = arith.constant dense<0.000000e+00> : vector<32x128xf32>
    %4 = tpu.matmul %3, %1, %cst {dimension_numbers = #tpu.dot_dimension_numbers<[1], [0], [0], [1], [0, 0, 1, 1], [], []>} : vector<32x32xbf16>, vector<32x128xbf16>, vector<32x128xf32> -> vector<32x128xf32>
    %c0_5 = arith.constant 0 : index
    %c0_6 = arith.constant 0 : index
    %c0_7 = arith.constant 0 : index
    %5 = vector.load %arg3[%c0_5, %c0_6, %c0_7] : memref<46x128x128xbf16, #tpu.memory_space<vmem>>, vector<1x128x128xbf16>
    %6 = vector.shape_cast %5 : vector<1x128x128xbf16> to vector<128x128xbf16>
    %7 = arith.truncf %4 : vector<32x128xf32> to vector<32x128xbf16>
    %cst_8 = arith.constant dense<0.000000e+00> : vector<32x128xf32>
    %8 = tpu.matmul %7, %6, %cst_8 {dimension_numbers = #tpu.dot_dimension_numbers<[1], [0], [0], [1], [0, 0, 1, 1], [], []>} : vector<32x128xbf16>, vector<128x128xbf16>, vector<32x128xf32> -> vector<32x128xf32>
    %c1 = arith.constant 1 : index
    %c0_9 = arith.constant 0 : index
    %c0_10 = arith.constant 0 : index
    %9 = vector.load %arg2[%c1, %c0_9, %c0_10] : memref<19x32x32xbf16, #tpu.memory_space<vmem>>, vector<1x32x32xbf16>
    %10 = vector.shape_cast %9 : vector<1x32x32xbf16> to vector<32x32xbf16>
    %11 = arith.truncf %8 : vector<32x128xf32> to vector<32x128xbf16>
    %cst_11 = arith.constant dense<0.000000e+00> : vector<32x128xf32>
    %12 = tpu.matmul %10, %11, %cst_11 {dimension_numbers = #tpu.dot_dimension_numbers<[1], [0], [0], [1], [0, 0, 1, 1], [], []>} : vector<32x32xbf16>, vector<32x128xbf16>, vector<32x128xf32> -> vector<32x128xf32>
    %c1_12 = arith.constant 1 : index
    %c0_13 = arith.constant 0 : index
    %c0_14 = arith.constant 0 : index
    %13 = vector.load %arg3[%c1_12, %c0_13, %c0_14] : memref<46x128x128xbf16, #tpu.memory_space<vmem>>, vector<1x128x128xbf16>
    %14 = vector.shape_cast %13 : vector<1x128x128xbf16> to vector<128x128xbf16>
    %15 = arith.truncf %12 : vector<32x128xf32> to vector<32x128xbf16>
    %cst_15 = arith.constant dense<0.000000e+00> : vector<32x128xf32>
    %16 = tpu.matmul %15, %14, %cst_15 {dimension_numbers = #tpu.dot_dimension_numbers<[1], [0], [0], [1], [0, 0, 1, 1], [], []>} : vector<32x128xbf16>, vector<128x128xbf16>, vector<32x128xf32> -> vector<32x128xf32>
    %c2 = arith.constant 2 : index
    %c0_16 = arith.constant 0 : index
    %c0_17 = arith.constant 0 : index
    %17 = vector.load %arg3[%c2, %c0_16, %c0_17] : memref<46x128x128xbf16, #tpu.memory_space<vmem>>, vector<1x128x128xbf16>
    %18 = vector.shape_cast %17 : vector<1x128x128xbf16> to vector<128x128xbf16>
    %19 = arith.truncf %8 : vector<32x128xf32> to vector<32x128xbf16>
    %cst_18 = arith.constant dense<0.000000e+00> : vector<32x128xf32>
    %20 = tpu.matmul %19, %18, %cst_18 {dimension_numbers = #tpu.dot_dimension_numbers<[1], [0], [0], [1], [0, 0, 1, 1], [], []>} : vector<32x128xbf16>, vector<128x128xbf16>, vector<32x128xf32> -> vector<32x128xf32>
    %21 = arith.addf %16, %20 : vector<32x128xf32>
    %c2_19 = arith.constant 2 : index
    %c0_20 = arith.constant 0 : index
    %c0_21 = arith.constant 0 : index
    %22 = vector.load %arg2[%c2_19, %c0_20, %c0_21] : memref<19x32x32xbf16, #tpu.memory_space<vmem>>, vector<1x32x32xbf16>
    %23 = vector.shape_cast %22 : vector<1x32x32xbf16> to vector<32x32xbf16>
    %24 = arith.truncf %8 : vector<32x128xf32> to vector<32x128xbf16>
    %cst_22 = arith.constant dense<0.000000e+00> : vector<32x128xf32>
    %25 = tpu.matmul %23, %24, %cst_22 {dimension_numbers = #tpu.dot_dimension_numbers<[1], [0], [0], [1], [0, 0, 1, 1], [], []>} : vector<32x32xbf16>, vector<32x128xbf16>, vector<32x128xf32> -> vector<32x128xf32>
    %c3 = arith.constant 3 : index
    %c0_23 = arith.constant 0 : index
    %c0_24 = arith.constant 0 : index
    %26 = vector.load %arg3[%c3, %c0_23, %c0_24] : memref<46x128x128xbf16, #tpu.memory_space<vmem>>, vector<1x128x128xbf16>
    %27 = vector.shape_cast %26 : vector<1x128x128xbf16> to vector<128x128xbf16>
    %28 = arith.truncf %25 : vector<32x128xf32> to vector<32x128xbf16>
    %cst_25 = arith.constant dense<0.000000e+00> : vector<32x128xf32>
    %29 = tpu.matmul %28, %27, %cst_25 {dimension_numbers = #tpu.dot_dimension_numbers<[1], [0], [0], [1], [0, 0, 1, 1], [], []>} : vector<32x128xbf16>, vector<128x128xbf16>, vector<32x128xf32> -> vector<32x128xf32>
    %30 = arith.addf %21, %29 : vector<32x128xf32>
    %c0_26 = arith.constant 0 : index
    %c0_27 = arith.constant 0 : index
    %c0_28 = arith.constant 0 : index
    %31 = vector.load %arg4[%c0_26, %c0_27, %c0_28] : memref<14x1x128xf32, #tpu.memory_space<vmem>>, vector<1x1x128xf32>
    %32 = vector.shape_cast %31 : vector<1x1x128xf32> to vector<1x128xf32>
    %33 = vector.broadcast %32 : vector<1x128xf32> to vector<32x128xf32>
    %34 = arith.addf %30, %33 : vector<32x128xf32>
    %c3_29 = arith.constant 3 : index
    %c0_30 = arith.constant 0 : index
    %c0_31 = arith.constant 0 : index
    %35 = vector.load %arg2[%c3_29, %c0_30, %c0_31] : memref<19x32x32xbf16, #tpu.memory_space<vmem>>, vector<1x32x32xbf16>
    %36 = vector.shape_cast %35 : vector<1x32x32xbf16> to vector<32x32xbf16>
    %cst_32 = arith.constant dense<0.000000e+00> : vector<32x128xf32>
    %37 = tpu.matmul %36, %1, %cst_32 {dimension_numbers = #tpu.dot_dimension_numbers<[1], [0], [0], [1], [0, 0, 1, 1], [], []>} : vector<32x32xbf16>, vector<32x128xbf16>, vector<32x128xf32> -> vector<32x128xf32>
    %c4 = arith.constant 4 : index
    %c0_33 = arith.constant 0 : index
    %c0_34 = arith.constant 0 : index
    %38 = vector.load %arg3[%c4, %c0_33, %c0_34] : memref<46x128x128xbf16, #tpu.memory_space<vmem>>, vector<1x128x128xbf16>
    %39 = vector.shape_cast %38 : vector<1x128x128xbf16> to vector<128x128xbf16>
    %40 = arith.truncf %37 : vector<32x128xf32> to vector<32x128xbf16>
    %cst_35 = arith.constant dense<0.000000e+00> : vector<32x128xf32>
    %41 = tpu.matmul %40, %39, %cst_35 {dimension_numbers = #tpu.dot_dimension_numbers<[1], [0], [0], [1], [0, 0, 1, 1], [], []>} : vector<32x128xbf16>, vector<128x128xbf16>, vector<32x128xf32> -> vector<32x128xf32>
    %c5 = arith.constant 5 : index
    %c0_36 = arith.constant 0 : index
    %c0_37 = arith.constant 0 : index
    %42 = vector.load %arg3[%c5, %c0_36, %c0_37] : memref<46x128x128xbf16, #tpu.memory_space<vmem>>, vector<1x128x128xbf16>
    %43 = vector.shape_cast %42 : vector<1x128x128xbf16> to vector<128x128xbf16>
    %cst_38 = arith.constant dense<0.000000e+00> : vector<32x128xf32>
    %44 = tpu.matmul %1, %43, %cst_38 {dimension_numbers = #tpu.dot_dimension_numbers<[1], [0], [0], [1], [0, 0, 1, 1], [], []>} : vector<32x128xbf16>, vector<128x128xbf16>, vector<32x128xf32> -> vector<32x128xf32>
    %45 = arith.addf %41, %44 : vector<32x128xf32>
    %c4_39 = arith.constant 4 : index
    %c0_40 = arith.constant 0 : index
    %c0_41 = arith.constant 0 : index
    %46 = vector.load %arg2[%c4_39, %c0_40, %c0_41] : memref<19x32x32xbf16, #tpu.memory_space<vmem>>, vector<1x32x32xbf16>
    %47 = vector.shape_cast %46 : vector<1x32x32xbf16> to vector<32x32xbf16>
    %cst_42 = arith.constant dense<0.000000e+00> : vector<32x128xf32>
    %48 = tpu.matmul %47, %1, %cst_42 {dimension_numbers = #tpu.dot_dimension_numbers<[1], [0], [0], [1], [0, 0, 1, 1], [], []>} : vector<32x32xbf16>, vector<32x128xbf16>, vector<32x128xf32> -> vector<32x128xf32>
    %c6 = arith.constant 6 : index
    %c0_43 = arith.constant 0 : index
    %c0_44 = arith.constant 0 : index
    %49 = vector.load %arg3[%c6, %c0_43, %c0_44] : memref<46x128x128xbf16, #tpu.memory_space<vmem>>, vector<1x128x128xbf16>
    %50 = vector.shape_cast %49 : vector<1x128x128xbf16> to vector<128x128xbf16>
    %51 = arith.truncf %48 : vector<32x128xf32> to vector<32x128xbf16>
    %cst_45 = arith.constant dense<0.000000e+00> : vector<32x128xf32>
    %52 = tpu.matmul %51, %50, %cst_45 {dimension_numbers = #tpu.dot_dimension_numbers<[1], [0], [0], [1], [0, 0, 1, 1], [], []>} : vector<32x128xbf16>, vector<128x128xbf16>, vector<32x128xf32> -> vector<32x128xf32>
    %53 = arith.addf %45, %52 : vector<32x128xf32>
    %c1_46 = arith.constant 1 : index
    %c0_47 = arith.constant 0 : index
    %c0_48 = arith.constant 0 : index
    %54 = vector.load %arg4[%c1_46, %c0_47, %c0_48] : memref<14x1x128xf32, #tpu.memory_space<vmem>>, vector<1x1x128xf32>
    %55 = vector.shape_cast %54 : vector<1x1x128xf32> to vector<1x128xf32>
    %56 = vector.broadcast %55 : vector<1x128xf32> to vector<32x128xf32>
    %57 = arith.addf %53, %56 : vector<32x128xf32>
    %cst_49 = arith.constant 0.000000e+00 : f32
    %58 = vector.broadcast %cst_49 : f32 to vector<32x128xf32>
    %59 = arith.cmpf oge, %57, %58 : vector<32x128xf32>
    %cst_50 = arith.constant 0.229166672 : f32
    %60 = vector.broadcast %cst_50 : f32 to vector<32x128xf32>
    %61 = arith.mulf %60, %57 : vector<32x128xf32>
    %62 = arith.select %59, %57, %61 : vector<32x128xi1>, vector<32x128xf32>
    %c0_51 = arith.constant 0 : index
    %c0_52 = arith.constant 0 : index
    %c0_53 = arith.constant 0 : index
    %63 = vector.load %arg2[%c0_51, %c0_52, %c0_53] : memref<19x32x32xbf16, #tpu.memory_space<vmem>>, vector<1x32x32xbf16>
    %64 = vector.shape_cast %63 : vector<1x32x32xbf16> to vector<32x32xbf16>
    %65 = arith.truncf %62 : vector<32x128xf32> to vector<32x128xbf16>
    %cst_54 = arith.constant dense<0.000000e+00> : vector<32x128xf32>
    %66 = tpu.matmul %64, %65, %cst_54 {dimension_numbers = #tpu.dot_dimension_numbers<[1], [0], [0], [1], [0, 0, 1, 1], [], []>} : vector<32x32xbf16>, vector<32x128xbf16>, vector<32x128xf32> -> vector<32x128xf32>
    %c7 = arith.constant 7 : index
    %c0_55 = arith.constant 0 : index
    %c0_56 = arith.constant 0 : index
    %67 = vector.load %arg3[%c7, %c0_55, %c0_56] : memref<46x128x128xbf16, #tpu.memory_space<vmem>>, vector<1x128x128xbf16>
    %68 = vector.shape_cast %67 : vector<1x128x128xbf16> to vector<128x128xbf16>
    %69 = arith.truncf %66 : vector<32x128xf32> to vector<32x128xbf16>
    %cst_57 = arith.constant dense<0.000000e+00> : vector<32x128xf32>
    %70 = tpu.matmul %69, %68, %cst_57 {dimension_numbers = #tpu.dot_dimension_numbers<[1], [0], [0], [1], [0, 0, 1, 1], [], []>} : vector<32x128xbf16>, vector<128x128xbf16>, vector<32x128xf32> -> vector<32x128xf32>
    %c1_58 = arith.constant 1 : index
    %c0_59 = arith.constant 0 : index
    %c0_60 = arith.constant 0 : index
    %71 = vector.load %arg2[%c1_58, %c0_59, %c0_60] : memref<19x32x32xbf16, #tpu.memory_space<vmem>>, vector<1x32x32xbf16>
    %72 = vector.shape_cast %71 : vector<1x32x32xbf16> to vector<32x32xbf16>
    %73 = arith.truncf %70 : vector<32x128xf32> to vector<32x128xbf16>
    %cst_61 = arith.constant dense<0.000000e+00> : vector<32x128xf32>
    %74 = tpu.matmul %72, %73, %cst_61 {dimension_numbers = #tpu.dot_dimension_numbers<[1], [0], [0], [1], [0, 0, 1, 1], [], []>} : vector<32x32xbf16>, vector<32x128xbf16>, vector<32x128xf32> -> vector<32x128xf32>
    %c8 = arith.constant 8 : index
    %c0_62 = arith.constant 0 : index
    %c0_63 = arith.constant 0 : index
    %75 = vector.load %arg3[%c8, %c0_62, %c0_63] : memref<46x128x128xbf16, #tpu.memory_space<vmem>>, vector<1x128x128xbf16>
    %76 = vector.shape_cast %75 : vector<1x128x128xbf16> to vector<128x128xbf16>
    %77 = arith.truncf %74 : vector<32x128xf32> to vector<32x128xbf16>
    %cst_64 = arith.constant dense<0.000000e+00> : vector<32x128xf32>
    %78 = tpu.matmul %77, %76, %cst_64 {dimension_numbers = #tpu.dot_dimension_numbers<[1], [0], [0], [1], [0, 0, 1, 1], [], []>} : vector<32x128xbf16>, vector<128x128xbf16>, vector<32x128xf32> -> vector<32x128xf32>
    %c9 = arith.constant 9 : index
    %c0_65 = arith.constant 0 : index
    %c0_66 = arith.constant 0 : index
    %79 = vector.load %arg3[%c9, %c0_65, %c0_66] : memref<46x128x128xbf16, #tpu.memory_space<vmem>>, vector<1x128x128xbf16>
    %80 = vector.shape_cast %79 : vector<1x128x128xbf16> to vector<128x128xbf16>
    %81 = arith.truncf %70 : vector<32x128xf32> to vector<32x128xbf16>
    %cst_67 = arith.constant dense<0.000000e+00> : vector<32x128xf32>
    %82 = tpu.matmul %81, %80, %cst_67 {dimension_numbers = #tpu.dot_dimension_numbers<[1], [0], [0], [1], [0, 0, 1, 1], [], []>} : vector<32x128xbf16>, vector<128x128xbf16>, vector<32x128xf32> -> vector<32x128xf32>
    %83 = arith.addf %78, %82 : vector<32x128xf32>
    %c2_68 = arith.constant 2 : index
    %c0_69 = arith.constant 0 : index
    %c0_70 = arith.constant 0 : index
    %84 = vector.load %arg2[%c2_68, %c0_69, %c0_70] : memref<19x32x32xbf16, #tpu.memory_space<vmem>>, vector<1x32x32xbf16>
    %85 = vector.shape_cast %84 : vector<1x32x32xbf16> to vector<32x32xbf16>
    %86 = arith.truncf %70 : vector<32x128xf32> to vector<32x128xbf16>
    %cst_71 = arith.constant dense<0.000000e+00> : vector<32x128xf32>
    %87 = tpu.matmul %85, %86, %cst_71 {dimension_numbers = #tpu.dot_dimension_numbers<[1], [0], [0], [1], [0, 0, 1, 1], [], []>} : vector<32x32xbf16>, vector<32x128xbf16>, vector<32x128xf32> -> vector<32x128xf32>
    %c10 = arith.constant 10 : index
    %c0_72 = arith.constant 0 : index
    %c0_73 = arith.constant 0 : index
    %88 = vector.load %arg3[%c10, %c0_72, %c0_73] : memref<46x128x128xbf16, #tpu.memory_space<vmem>>, vector<1x128x128xbf16>
    %89 = vector.shape_cast %88 : vector<1x128x128xbf16> to vector<128x128xbf16>
    %90 = arith.truncf %87 : vector<32x128xf32> to vector<32x128xbf16>
    %cst_74 = arith.constant dense<0.000000e+00> : vector<32x128xf32>
    %91 = tpu.matmul %90, %89, %cst_74 {dimension_numbers = #tpu.dot_dimension_numbers<[1], [0], [0], [1], [0, 0, 1, 1], [], []>} : vector<32x128xbf16>, vector<128x128xbf16>, vector<32x128xf32> -> vector<32x128xf32>
    %92 = arith.addf %83, %91 : vector<32x128xf32>
    %c2_75 = arith.constant 2 : index
    %c0_76 = arith.constant 0 : index
    %c0_77 = arith.constant 0 : index
    %93 = vector.load %arg4[%c2_75, %c0_76, %c0_77] : memref<14x1x128xf32, #tpu.memory_space<vmem>>, vector<1x1x128xf32>
    %94 = vector.shape_cast %93 : vector<1x1x128xf32> to vector<1x128xf32>
    %95 = vector.broadcast %94 : vector<1x128xf32> to vector<32x128xf32>
    %96 = arith.addf %92, %95 : vector<32x128xf32>
    %97 = arith.addf %96, %34 : vector<32x128xf32>
    %cst_78 = arith.constant 0.000000e+00 : f32
    %98 = vector.broadcast %cst_78 : f32 to vector<32x128xf32>
    %99 = arith.cmpf oge, %97, %98 : vector<32x128xf32>
    %cst_79 = arith.constant 0.229166672 : f32
    %100 = vector.broadcast %cst_79 : f32 to vector<32x128xf32>
    %101 = arith.mulf %100, %97 : vector<32x128xf32>
    %102 = arith.select %99, %97, %101 : vector<32x128xi1>, vector<32x128xf32>
    %c5_80 = arith.constant 5 : index
    %c0_81 = arith.constant 0 : index
    %c0_82 = arith.constant 0 : index
    %103 = vector.load %arg2[%c5_80, %c0_81, %c0_82] : memref<19x32x32xbf16, #tpu.memory_space<vmem>>, vector<1x32x32xbf16>
    %104 = vector.shape_cast %103 : vector<1x32x32xbf16> to vector<32x32xbf16>
    %105 = arith.truncf %102 : vector<32x128xf32> to vector<32x128xbf16>
    %cst_83 = arith.constant dense<0.000000e+00> : vector<32x128xf32>
    %106 = tpu.matmul %104, %105, %cst_83 {dimension_numbers = #tpu.dot_dimension_numbers<[1], [0], [0], [1], [0, 0, 1, 1], [], []>} : vector<32x32xbf16>, vector<32x128xbf16>, vector<32x128xf32> -> vector<32x128xf32>
    %c11 = arith.constant 11 : index
    %c0_84 = arith.constant 0 : index
    %c0_85 = arith.constant 0 : index
    %107 = vector.load %arg3[%c11, %c0_84, %c0_85] : memref<46x128x128xbf16, #tpu.memory_space<vmem>>, vector<1x128x128xbf16>
    %108 = vector.shape_cast %107 : vector<1x128x128xbf16> to vector<128x128xbf16>
    %109 = arith.truncf %106 : vector<32x128xf32> to vector<32x128xbf16>
    %cst_86 = arith.constant dense<0.000000e+00> : vector<32x128xf32>
    %110 = tpu.matmul %109, %108, %cst_86 {dimension_numbers = #tpu.dot_dimension_numbers<[1], [0], [0], [1], [0, 0, 1, 1], [], []>} : vector<32x128xbf16>, vector<128x128xbf16>, vector<32x128xf32> -> vector<32x128xf32>
    %c6_87 = arith.constant 6 : index
    %c0_88 = arith.constant 0 : index
    %c0_89 = arith.constant 0 : index
    %111 = vector.load %arg2[%c6_87, %c0_88, %c0_89] : memref<19x32x32xbf16, #tpu.memory_space<vmem>>, vector<1x32x32xbf16>
    %112 = vector.shape_cast %111 : vector<1x32x32xbf16> to vector<32x32xbf16>
    %113 = arith.truncf %110 : vector<32x128xf32> to vector<32x128xbf16>
    %cst_90 = arith.constant dense<0.000000e+00> : vector<32x128xf32>
    %114 = tpu.matmul %112, %113, %cst_90 {dimension_numbers = #tpu.dot_dimension_numbers<[1], [0], [0], [1], [0, 0, 1, 1], [], []>} : vector<32x32xbf16>, vector<32x128xbf16>, vector<32x128xf32> -> vector<32x128xf32>
    %c12 = arith.constant 12 : index
    %c0_91 = arith.constant 0 : index
    %c0_92 = arith.constant 0 : index
    %115 = vector.load %arg3[%c12, %c0_91, %c0_92] : memref<46x128x128xbf16, #tpu.memory_space<vmem>>, vector<1x128x128xbf16>
    %116 = vector.shape_cast %115 : vector<1x128x128xbf16> to vector<128x128xbf16>
    %117 = arith.truncf %114 : vector<32x128xf32> to vector<32x128xbf16>
    %cst_93 = arith.constant dense<0.000000e+00> : vector<32x128xf32>
    %118 = tpu.matmul %117, %116, %cst_93 {dimension_numbers = #tpu.dot_dimension_numbers<[1], [0], [0], [1], [0, 0, 1, 1], [], []>} : vector<32x128xbf16>, vector<128x128xbf16>, vector<32x128xf32> -> vector<32x128xf32>
    %c13 = arith.constant 13 : index
    %c0_94 = arith.constant 0 : index
    %c0_95 = arith.constant 0 : index
    %119 = vector.load %arg3[%c13, %c0_94, %c0_95] : memref<46x128x128xbf16, #tpu.memory_space<vmem>>, vector<1x128x128xbf16>
    %120 = vector.shape_cast %119 : vector<1x128x128xbf16> to vector<128x128xbf16>
    %121 = arith.truncf %110 : vector<32x128xf32> to vector<32x128xbf16>
    %cst_96 = arith.constant dense<0.000000e+00> : vector<32x128xf32>
    %122 = tpu.matmul %121, %120, %cst_96 {dimension_numbers = #tpu.dot_dimension_numbers<[1], [0], [0], [1], [0, 0, 1, 1], [], []>} : vector<32x128xbf16>, vector<128x128xbf16>, vector<32x128xf32> -> vector<32x128xf32>
    %123 = arith.addf %118, %122 : vector<32x128xf32>
    %c7_97 = arith.constant 7 : index
    %c0_98 = arith.constant 0 : index
    %c0_99 = arith.constant 0 : index
    %124 = vector.load %arg2[%c7_97, %c0_98, %c0_99] : memref<19x32x32xbf16, #tpu.memory_space<vmem>>, vector<1x32x32xbf16>
    %125 = vector.shape_cast %124 : vector<1x32x32xbf16> to vector<32x32xbf16>
    %126 = arith.truncf %110 : vector<32x128xf32> to vector<32x128xbf16>
    %cst_100 = arith.constant dense<0.000000e+00> : vector<32x128xf32>
    %127 = tpu.matmul %125, %126, %cst_100 {dimension_numbers = #tpu.dot_dimension_numbers<[1], [0], [0], [1], [0, 0, 1, 1], [], []>} : vector<32x32xbf16>, vector<32x128xbf16>, vector<32x128xf32> -> vector<32x128xf32>
    %c14 = arith.constant 14 : index
    %c0_101 = arith.constant 0 : index
    %c0_102 = arith.constant 0 : index
    %128 = vector.load %arg3[%c14, %c0_101, %c0_102] : memref<46x128x128xbf16, #tpu.memory_space<vmem>>, vector<1x128x128xbf16>
    %129 = vector.shape_cast %128 : vector<1x128x128xbf16> to vector<128x128xbf16>
    %130 = arith.truncf %127 : vector<32x128xf32> to vector<32x128xbf16>
    %cst_103 = arith.constant dense<0.000000e+00> : vector<32x128xf32>
    %131 = tpu.matmul %130, %129, %cst_103 {dimension_numbers = #tpu.dot_dimension_numbers<[1], [0], [0], [1], [0, 0, 1, 1], [], []>} : vector<32x128xbf16>, vector<128x128xbf16>, vector<32x128xf32> -> vector<32x128xf32>
    %132 = arith.addf %123, %131 : vector<32x128xf32>
    %c3_104 = arith.constant 3 : index
    %c0_105 = arith.constant 0 : index
    %c0_106 = arith.constant 0 : index
    %133 = vector.load %arg4[%c3_104, %c0_105, %c0_106] : memref<14x1x128xf32, #tpu.memory_space<vmem>>, vector<1x1x128xf32>
    %134 = vector.shape_cast %133 : vector<1x1x128xf32> to vector<1x128xf32>
    %135 = vector.broadcast %134 : vector<1x128xf32> to vector<32x128xf32>
    %136 = arith.addf %132, %135 : vector<32x128xf32>
    %c1_107 = arith.constant 1 : index
    %c0_108 = arith.constant 0 : index
    %c0_109 = arith.constant 0 : index
    %137 = vector.load %arg2[%c1_107, %c0_108, %c0_109] : memref<19x32x32xbf16, #tpu.memory_space<vmem>>, vector<1x32x32xbf16>
    %138 = vector.shape_cast %137 : vector<1x32x32xbf16> to vector<32x32xbf16>
    %139 = arith.truncf %102 : vector<32x128xf32> to vector<32x128xbf16>
    %cst_110 = arith.constant dense<0.000000e+00> : vector<32x128xf32>
    %140 = tpu.matmul %138, %139, %cst_110 {dimension_numbers = #tpu.dot_dimension_numbers<[1], [0], [0], [1], [0, 0, 1, 1], [], []>} : vector<32x32xbf16>, vector<32x128xbf16>, vector<32x128xf32> -> vector<32x128xf32>
    %c15 = arith.constant 15 : index
    %c0_111 = arith.constant 0 : index
    %c0_112 = arith.constant 0 : index
    %141 = vector.load %arg3[%c15, %c0_111, %c0_112] : memref<46x128x128xbf16, #tpu.memory_space<vmem>>, vector<1x128x128xbf16>
    %142 = vector.shape_cast %141 : vector<1x128x128xbf16> to vector<128x128xbf16>
    %143 = arith.truncf %140 : vector<32x128xf32> to vector<32x128xbf16>
    %cst_113 = arith.constant dense<0.000000e+00> : vector<32x128xf32>
    %144 = tpu.matmul %143, %142, %cst_113 {dimension_numbers = #tpu.dot_dimension_numbers<[1], [0], [0], [1], [0, 0, 1, 1], [], []>} : vector<32x128xbf16>, vector<128x128xbf16>, vector<32x128xf32> -> vector<32x128xf32>
    %c16 = arith.constant 16 : index
    %c0_114 = arith.constant 0 : index
    %c0_115 = arith.constant 0 : index
    %145 = vector.load %arg3[%c16, %c0_114, %c0_115] : memref<46x128x128xbf16, #tpu.memory_space<vmem>>, vector<1x128x128xbf16>
    %146 = vector.shape_cast %145 : vector<1x128x128xbf16> to vector<128x128xbf16>
    %147 = arith.truncf %102 : vector<32x128xf32> to vector<32x128xbf16>
    %cst_116 = arith.constant dense<0.000000e+00> : vector<32x128xf32>
    %148 = tpu.matmul %147, %146, %cst_116 {dimension_numbers = #tpu.dot_dimension_numbers<[1], [0], [0], [1], [0, 0, 1, 1], [], []>} : vector<32x128xbf16>, vector<128x128xbf16>, vector<32x128xf32> -> vector<32x128xf32>
    %149 = arith.addf %144, %148 : vector<32x128xf32>
    %c2_117 = arith.constant 2 : index
    %c0_118 = arith.constant 0 : index
    %c0_119 = arith.constant 0 : index
    %150 = vector.load %arg2[%c2_117, %c0_118, %c0_119] : memref<19x32x32xbf16, #tpu.memory_space<vmem>>, vector<1x32x32xbf16>
    %151 = vector.shape_cast %150 : vector<1x32x32xbf16> to vector<32x32xbf16>
    %152 = arith.truncf %102 : vector<32x128xf32> to vector<32x128xbf16>
    %cst_120 = arith.constant dense<0.000000e+00> : vector<32x128xf32>
    %153 = tpu.matmul %151, %152, %cst_120 {dimension_numbers = #tpu.dot_dimension_numbers<[1], [0], [0], [1], [0, 0, 1, 1], [], []>} : vector<32x32xbf16>, vector<32x128xbf16>, vector<32x128xf32> -> vector<32x128xf32>
    %c17 = arith.constant 17 : index
    %c0_121 = arith.constant 0 : index
    %c0_122 = arith.constant 0 : index
    %154 = vector.load %arg3[%c17, %c0_121, %c0_122] : memref<46x128x128xbf16, #tpu.memory_space<vmem>>, vector<1x128x128xbf16>
    %155 = vector.shape_cast %154 : vector<1x128x128xbf16> to vector<128x128xbf16>
    %156 = arith.truncf %153 : vector<32x128xf32> to vector<32x128xbf16>
    %cst_123 = arith.constant dense<0.000000e+00> : vector<32x128xf32>
    %157 = tpu.matmul %156, %155, %cst_123 {dimension_numbers = #tpu.dot_dimension_numbers<[1], [0], [0], [1], [0, 0, 1, 1], [], []>} : vector<32x128xbf16>, vector<128x128xbf16>, vector<32x128xf32> -> vector<32x128xf32>
    %158 = arith.addf %149, %157 : vector<32x128xf32>
    %c4_124 = arith.constant 4 : index
    %c0_125 = arith.constant 0 : index
    %c0_126 = arith.constant 0 : index
    %159 = vector.load %arg4[%c4_124, %c0_125, %c0_126] : memref<14x1x128xf32, #tpu.memory_space<vmem>>, vector<1x1x128xf32>
    %160 = vector.shape_cast %159 : vector<1x1x128xf32> to vector<1x128xf32>
    %161 = vector.broadcast %160 : vector<1x128xf32> to vector<32x128xf32>
    %162 = arith.addf %158, %161 : vector<32x128xf32>
    %cst_127 = arith.constant 0.000000e+00 : f32
    %163 = vector.broadcast %cst_127 : f32 to vector<32x128xf32>
    %164 = arith.cmpf oge, %162, %163 : vector<32x128xf32>
    %cst_128 = arith.constant 0.229166672 : f32
    %165 = vector.broadcast %cst_128 : f32 to vector<32x128xf32>
    %166 = arith.mulf %165, %162 : vector<32x128xf32>
    %167 = arith.select %164, %162, %166 : vector<32x128xi1>, vector<32x128xf32>
    %c5_129 = arith.constant 5 : index
    %c0_130 = arith.constant 0 : index
    %c0_131 = arith.constant 0 : index
    %168 = vector.load %arg2[%c5_129, %c0_130, %c0_131] : memref<19x32x32xbf16, #tpu.memory_space<vmem>>, vector<1x32x32xbf16>
    %169 = vector.shape_cast %168 : vector<1x32x32xbf16> to vector<32x32xbf16>
    %170 = arith.truncf %167 : vector<32x128xf32> to vector<32x128xbf16>
    %cst_132 = arith.constant dense<0.000000e+00> : vector<32x128xf32>
    %171 = tpu.matmul %169, %170, %cst_132 {dimension_numbers = #tpu.dot_dimension_numbers<[1], [0], [0], [1], [0, 0, 1, 1], [], []>} : vector<32x32xbf16>, vector<32x128xbf16>, vector<32x128xf32> -> vector<32x128xf32>
    %c11_133 = arith.constant 11 : index
    %c0_134 = arith.constant 0 : index
    %c0_135 = arith.constant 0 : index
    %172 = vector.load %arg3[%c11_133, %c0_134, %c0_135] : memref<46x128x128xbf16, #tpu.memory_space<vmem>>, vector<1x128x128xbf16>
    %173 = vector.shape_cast %172 : vector<1x128x128xbf16> to vector<128x128xbf16>
    %174 = arith.truncf %171 : vector<32x128xf32> to vector<32x128xbf16>
    %cst_136 = arith.constant dense<0.000000e+00> : vector<32x128xf32>
    %175 = tpu.matmul %174, %173, %cst_136 {dimension_numbers = #tpu.dot_dimension_numbers<[1], [0], [0], [1], [0, 0, 1, 1], [], []>} : vector<32x128xbf16>, vector<128x128xbf16>, vector<32x128xf32> -> vector<32x128xf32>
    %c6_137 = arith.constant 6 : index
    %c0_138 = arith.constant 0 : index
    %c0_139 = arith.constant 0 : index
    %176 = vector.load %arg2[%c6_137, %c0_138, %c0_139] : memref<19x32x32xbf16, #tpu.memory_space<vmem>>, vector<1x32x32xbf16>
    %177 = vector.shape_cast %176 : vector<1x32x32xbf16> to vector<32x32xbf16>
    %178 = arith.truncf %175 : vector<32x128xf32> to vector<32x128xbf16>
    %cst_140 = arith.constant dense<0.000000e+00> : vector<32x128xf32>
    %179 = tpu.matmul %177, %178, %cst_140 {dimension_numbers = #tpu.dot_dimension_numbers<[1], [0], [0], [1], [0, 0, 1, 1], [], []>} : vector<32x32xbf16>, vector<32x128xbf16>, vector<32x128xf32> -> vector<32x128xf32>
    %c18 = arith.constant 18 : index
    %c0_141 = arith.constant 0 : index
    %c0_142 = arith.constant 0 : index
    %180 = vector.load %arg3[%c18, %c0_141, %c0_142] : memref<46x128x128xbf16, #tpu.memory_space<vmem>>, vector<1x128x128xbf16>
    %181 = vector.shape_cast %180 : vector<1x128x128xbf16> to vector<128x128xbf16>
    %182 = arith.truncf %179 : vector<32x128xf32> to vector<32x128xbf16>
    %cst_143 = arith.constant dense<0.000000e+00> : vector<32x128xf32>
    %183 = tpu.matmul %182, %181, %cst_143 {dimension_numbers = #tpu.dot_dimension_numbers<[1], [0], [0], [1], [0, 0, 1, 1], [], []>} : vector<32x128xbf16>, vector<128x128xbf16>, vector<32x128xf32> -> vector<32x128xf32>
    %c19 = arith.constant 19 : index
    %c0_144 = arith.constant 0 : index
    %c0_145 = arith.constant 0 : index
    %184 = vector.load %arg3[%c19, %c0_144, %c0_145] : memref<46x128x128xbf16, #tpu.memory_space<vmem>>, vector<1x128x128xbf16>
    %185 = vector.shape_cast %184 : vector<1x128x128xbf16> to vector<128x128xbf16>
    %186 = arith.truncf %175 : vector<32x128xf32> to vector<32x128xbf16>
    %cst_146 = arith.constant dense<0.000000e+00> : vector<32x128xf32>
    %187 = tpu.matmul %186, %185, %cst_146 {dimension_numbers = #tpu.dot_dimension_numbers<[1], [0], [0], [1], [0, 0, 1, 1], [], []>} : vector<32x128xbf16>, vector<128x128xbf16>, vector<32x128xf32> -> vector<32x128xf32>
    %188 = arith.addf %183, %187 : vector<32x128xf32>
    %c7_147 = arith.constant 7 : index
    %c0_148 = arith.constant 0 : index
    %c0_149 = arith.constant 0 : index
    %189 = vector.load %arg2[%c7_147, %c0_148, %c0_149] : memref<19x32x32xbf16, #tpu.memory_space<vmem>>, vector<1x32x32xbf16>
    %190 = vector.shape_cast %189 : vector<1x32x32xbf16> to vector<32x32xbf16>
    %191 = arith.truncf %175 : vector<32x128xf32> to vector<32x128xbf16>
    %cst_150 = arith.constant dense<0.000000e+00> : vector<32x128xf32>
    %192 = tpu.matmul %190, %191, %cst_150 {dimension_numbers = #tpu.dot_dimension_numbers<[1], [0], [0], [1], [0, 0, 1, 1], [], []>} : vector<32x32xbf16>, vector<32x128xbf16>, vector<32x128xf32> -> vector<32x128xf32>
    %c20 = arith.constant 20 : index
    %c0_151 = arith.constant 0 : index
    %c0_152 = arith.constant 0 : index
    %193 = vector.load %arg3[%c20, %c0_151, %c0_152] : memref<46x128x128xbf16, #tpu.memory_space<vmem>>, vector<1x128x128xbf16>
    %194 = vector.shape_cast %193 : vector<1x128x128xbf16> to vector<128x128xbf16>
    %195 = arith.truncf %192 : vector<32x128xf32> to vector<32x128xbf16>
    %cst_153 = arith.constant dense<0.000000e+00> : vector<32x128xf32>
    %196 = tpu.matmul %195, %194, %cst_153 {dimension_numbers = #tpu.dot_dimension_numbers<[1], [0], [0], [1], [0, 0, 1, 1], [], []>} : vector<32x128xbf16>, vector<128x128xbf16>, vector<32x128xf32> -> vector<32x128xf32>
    %197 = arith.addf %188, %196 : vector<32x128xf32>
    %c5_154 = arith.constant 5 : index
    %c0_155 = arith.constant 0 : index
    %c0_156 = arith.constant 0 : index
    %198 = vector.load %arg4[%c5_154, %c0_155, %c0_156] : memref<14x1x128xf32, #tpu.memory_space<vmem>>, vector<1x1x128xf32>
    %199 = vector.shape_cast %198 : vector<1x1x128xf32> to vector<1x128xf32>
    %200 = vector.broadcast %199 : vector<1x128xf32> to vector<32x128xf32>
    %201 = arith.addf %197, %200 : vector<32x128xf32>
    %202 = arith.addf %201, %136 : vector<32x128xf32>
    %cst_157 = arith.constant 0.000000e+00 : f32
    %203 = vector.broadcast %cst_157 : f32 to vector<32x128xf32>
    %204 = arith.cmpf oge, %202, %203 : vector<32x128xf32>
    %cst_158 = arith.constant 0.229166672 : f32
    %205 = vector.broadcast %cst_158 : f32 to vector<32x128xf32>
    %206 = arith.mulf %205, %202 : vector<32x128xf32>
    %207 = arith.select %204, %202, %206 : vector<32x128xi1>, vector<32x128xf32>
    %c8_159 = arith.constant 8 : index
    %c0_160 = arith.constant 0 : index
    %c0_161 = arith.constant 0 : index
    %208 = vector.load %arg2[%c8_159, %c0_160, %c0_161] : memref<19x32x32xbf16, #tpu.memory_space<vmem>>, vector<1x32x32xbf16>
    %209 = vector.shape_cast %208 : vector<1x32x32xbf16> to vector<32x32xbf16>
    %210 = arith.truncf %207 : vector<32x128xf32> to vector<32x128xbf16>
    %cst_162 = arith.constant dense<0.000000e+00> : vector<32x128xf32>
    %211 = tpu.matmul %209, %210, %cst_162 {dimension_numbers = #tpu.dot_dimension_numbers<[1], [0], [0], [1], [0, 0, 1, 1], [], []>} : vector<32x32xbf16>, vector<32x128xbf16>, vector<32x128xf32> -> vector<32x128xf32>
    %c21 = arith.constant 21 : index
    %c0_163 = arith.constant 0 : index
    %c0_164 = arith.constant 0 : index
    %212 = vector.load %arg3[%c21, %c0_163, %c0_164] : memref<46x128x128xbf16, #tpu.memory_space<vmem>>, vector<1x128x128xbf16>
    %213 = vector.shape_cast %212 : vector<1x128x128xbf16> to vector<128x128xbf16>
    %214 = arith.truncf %211 : vector<32x128xf32> to vector<32x128xbf16>
    %cst_165 = arith.constant dense<0.000000e+00> : vector<32x128xf32>
    %215 = tpu.matmul %214, %213, %cst_165 {dimension_numbers = #tpu.dot_dimension_numbers<[1], [0], [0], [1], [0, 0, 1, 1], [], []>} : vector<32x128xbf16>, vector<128x128xbf16>, vector<32x128xf32> -> vector<32x128xf32>
    %c9_166 = arith.constant 9 : index
    %c0_167 = arith.constant 0 : index
    %c0_168 = arith.constant 0 : index
    %216 = vector.load %arg2[%c9_166, %c0_167, %c0_168] : memref<19x32x32xbf16, #tpu.memory_space<vmem>>, vector<1x32x32xbf16>
    %217 = vector.shape_cast %216 : vector<1x32x32xbf16> to vector<32x32xbf16>
    %218 = arith.truncf %215 : vector<32x128xf32> to vector<32x128xbf16>
    %cst_169 = arith.constant dense<0.000000e+00> : vector<32x128xf32>
    %219 = tpu.matmul %217, %218, %cst_169 {dimension_numbers = #tpu.dot_dimension_numbers<[1], [0], [0], [1], [0, 0, 1, 1], [], []>} : vector<32x32xbf16>, vector<32x128xbf16>, vector<32x128xf32> -> vector<32x128xf32>
    %c22 = arith.constant 22 : index
    %c0_170 = arith.constant 0 : index
    %c0_171 = arith.constant 0 : index
    %220 = vector.load %arg3[%c22, %c0_170, %c0_171] : memref<46x128x128xbf16, #tpu.memory_space<vmem>>, vector<1x128x128xbf16>
    %221 = vector.shape_cast %220 : vector<1x128x128xbf16> to vector<128x128xbf16>
    %222 = arith.truncf %219 : vector<32x128xf32> to vector<32x128xbf16>
    %cst_172 = arith.constant dense<0.000000e+00> : vector<32x128xf32>
    %223 = tpu.matmul %222, %221, %cst_172 {dimension_numbers = #tpu.dot_dimension_numbers<[1], [0], [0], [1], [0, 0, 1, 1], [], []>} : vector<32x128xbf16>, vector<128x128xbf16>, vector<32x128xf32> -> vector<32x128xf32>
    %c10_173 = arith.constant 10 : index
    %c0_174 = arith.constant 0 : index
    %c0_175 = arith.constant 0 : index
    %224 = vector.load %arg2[%c10_173, %c0_174, %c0_175] : memref<19x32x32xbf16, #tpu.memory_space<vmem>>, vector<1x32x32xbf16>
    %225 = vector.shape_cast %224 : vector<1x32x32xbf16> to vector<32x32xbf16>
    %226 = arith.truncf %223 : vector<32x128xf32> to vector<32x128xbf16>
    %cst_176 = arith.constant dense<0.000000e+00> : vector<32x128xf32>
    %227 = tpu.matmul %225, %226, %cst_176 {dimension_numbers = #tpu.dot_dimension_numbers<[1], [0], [0], [1], [0, 0, 1, 1], [], []>} : vector<32x32xbf16>, vector<32x128xbf16>, vector<32x128xf32> -> vector<32x128xf32>
    %c23 = arith.constant 23 : index
    %c0_177 = arith.constant 0 : index
    %c0_178 = arith.constant 0 : index
    %228 = vector.load %arg3[%c23, %c0_177, %c0_178] : memref<46x128x128xbf16, #tpu.memory_space<vmem>>, vector<1x128x128xbf16>
    %229 = vector.shape_cast %228 : vector<1x128x128xbf16> to vector<128x128xbf16>
    %230 = arith.truncf %227 : vector<32x128xf32> to vector<32x128xbf16>
    %cst_179 = arith.constant dense<0.000000e+00> : vector<32x128xf32>
    %231 = tpu.matmul %230, %229, %cst_179 {dimension_numbers = #tpu.dot_dimension_numbers<[1], [0], [0], [1], [0, 0, 1, 1], [], []>} : vector<32x128xbf16>, vector<128x128xbf16>, vector<32x128xf32> -> vector<32x128xf32>
    %c24 = arith.constant 24 : index
    %c0_180 = arith.constant 0 : index
    %c0_181 = arith.constant 0 : index
    %232 = vector.load %arg3[%c24, %c0_180, %c0_181] : memref<46x128x128xbf16, #tpu.memory_space<vmem>>, vector<1x128x128xbf16>
    %233 = vector.shape_cast %232 : vector<1x128x128xbf16> to vector<128x128xbf16>
    %234 = arith.truncf %223 : vector<32x128xf32> to vector<32x128xbf16>
    %cst_182 = arith.constant dense<0.000000e+00> : vector<32x128xf32>
    %235 = tpu.matmul %234, %233, %cst_182 {dimension_numbers = #tpu.dot_dimension_numbers<[1], [0], [0], [1], [0, 0, 1, 1], [], []>} : vector<32x128xbf16>, vector<128x128xbf16>, vector<32x128xf32> -> vector<32x128xf32>
    %236 = arith.addf %231, %235 : vector<32x128xf32>
    %c11_183 = arith.constant 11 : index
    %c0_184 = arith.constant 0 : index
    %c0_185 = arith.constant 0 : index
    %237 = vector.load %arg2[%c11_183, %c0_184, %c0_185] : memref<19x32x32xbf16, #tpu.memory_space<vmem>>, vector<1x32x32xbf16>
    %238 = vector.shape_cast %237 : vector<1x32x32xbf16> to vector<32x32xbf16>
    %239 = arith.truncf %223 : vector<32x128xf32> to vector<32x128xbf16>
    %cst_186 = arith.constant dense<0.000000e+00> : vector<32x128xf32>
    %240 = tpu.matmul %238, %239, %cst_186 {dimension_numbers = #tpu.dot_dimension_numbers<[1], [0], [0], [1], [0, 0, 1, 1], [], []>} : vector<32x32xbf16>, vector<32x128xbf16>, vector<32x128xf32> -> vector<32x128xf32>
    %c25 = arith.constant 25 : index
    %c0_187 = arith.constant 0 : index
    %c0_188 = arith.constant 0 : index
    %241 = vector.load %arg3[%c25, %c0_187, %c0_188] : memref<46x128x128xbf16, #tpu.memory_space<vmem>>, vector<1x128x128xbf16>
    %242 = vector.shape_cast %241 : vector<1x128x128xbf16> to vector<128x128xbf16>
    %243 = arith.truncf %240 : vector<32x128xf32> to vector<32x128xbf16>
    %cst_189 = arith.constant dense<0.000000e+00> : vector<32x128xf32>
    %244 = tpu.matmul %243, %242, %cst_189 {dimension_numbers = #tpu.dot_dimension_numbers<[1], [0], [0], [1], [0, 0, 1, 1], [], []>} : vector<32x128xbf16>, vector<128x128xbf16>, vector<32x128xf32> -> vector<32x128xf32>
    %245 = arith.addf %236, %244 : vector<32x128xf32>
    %c6_190 = arith.constant 6 : index
    %c0_191 = arith.constant 0 : index
    %c0_192 = arith.constant 0 : index
    %246 = vector.load %arg4[%c6_190, %c0_191, %c0_192] : memref<14x1x128xf32, #tpu.memory_space<vmem>>, vector<1x1x128xf32>
    %247 = vector.shape_cast %246 : vector<1x1x128xf32> to vector<1x128xf32>
    %248 = vector.broadcast %247 : vector<1x128xf32> to vector<32x128xf32>
    %249 = arith.addf %245, %248 : vector<32x128xf32>
    %c12_193 = arith.constant 12 : index
    %c0_194 = arith.constant 0 : index
    %c0_195 = arith.constant 0 : index
    %250 = vector.load %arg2[%c12_193, %c0_194, %c0_195] : memref<19x32x32xbf16, #tpu.memory_space<vmem>>, vector<1x32x32xbf16>
    %251 = vector.shape_cast %250 : vector<1x32x32xbf16> to vector<32x32xbf16>
    %252 = arith.truncf %215 : vector<32x128xf32> to vector<32x128xbf16>
    %cst_196 = arith.constant dense<0.000000e+00> : vector<32x128xf32>
    %253 = tpu.matmul %251, %252, %cst_196 {dimension_numbers = #tpu.dot_dimension_numbers<[1], [0], [0], [1], [0, 0, 1, 1], [], []>} : vector<32x32xbf16>, vector<32x128xbf16>, vector<32x128xf32> -> vector<32x128xf32>
    %c26 = arith.constant 26 : index
    %c0_197 = arith.constant 0 : index
    %c0_198 = arith.constant 0 : index
    %254 = vector.load %arg3[%c26, %c0_197, %c0_198] : memref<46x128x128xbf16, #tpu.memory_space<vmem>>, vector<1x128x128xbf16>
    %255 = vector.shape_cast %254 : vector<1x128x128xbf16> to vector<128x128xbf16>
    %256 = arith.truncf %253 : vector<32x128xf32> to vector<32x128xbf16>
    %cst_199 = arith.constant dense<0.000000e+00> : vector<32x128xf32>
    %257 = tpu.matmul %256, %255, %cst_199 {dimension_numbers = #tpu.dot_dimension_numbers<[1], [0], [0], [1], [0, 0, 1, 1], [], []>} : vector<32x128xbf16>, vector<128x128xbf16>, vector<32x128xf32> -> vector<32x128xf32>
    %c27 = arith.constant 27 : index
    %c0_200 = arith.constant 0 : index
    %c0_201 = arith.constant 0 : index
    %258 = vector.load %arg3[%c27, %c0_200, %c0_201] : memref<46x128x128xbf16, #tpu.memory_space<vmem>>, vector<1x128x128xbf16>
    %259 = vector.shape_cast %258 : vector<1x128x128xbf16> to vector<128x128xbf16>
    %260 = arith.truncf %215 : vector<32x128xf32> to vector<32x128xbf16>
    %cst_202 = arith.constant dense<0.000000e+00> : vector<32x128xf32>
    %261 = tpu.matmul %260, %259, %cst_202 {dimension_numbers = #tpu.dot_dimension_numbers<[1], [0], [0], [1], [0, 0, 1, 1], [], []>} : vector<32x128xbf16>, vector<128x128xbf16>, vector<32x128xf32> -> vector<32x128xf32>
    %262 = arith.addf %257, %261 : vector<32x128xf32>
    %c13_203 = arith.constant 13 : index
    %c0_204 = arith.constant 0 : index
    %c0_205 = arith.constant 0 : index
    %263 = vector.load %arg2[%c13_203, %c0_204, %c0_205] : memref<19x32x32xbf16, #tpu.memory_space<vmem>>, vector<1x32x32xbf16>
    %264 = vector.shape_cast %263 : vector<1x32x32xbf16> to vector<32x32xbf16>
    %265 = arith.truncf %215 : vector<32x128xf32> to vector<32x128xbf16>
    %cst_206 = arith.constant dense<0.000000e+00> : vector<32x128xf32>
    %266 = tpu.matmul %264, %265, %cst_206 {dimension_numbers = #tpu.dot_dimension_numbers<[1], [0], [0], [1], [0, 0, 1, 1], [], []>} : vector<32x32xbf16>, vector<32x128xbf16>, vector<32x128xf32> -> vector<32x128xf32>
    %c28 = arith.constant 28 : index
    %c0_207 = arith.constant 0 : index
    %c0_208 = arith.constant 0 : index
    %267 = vector.load %arg3[%c28, %c0_207, %c0_208] : memref<46x128x128xbf16, #tpu.memory_space<vmem>>, vector<1x128x128xbf16>
    %268 = vector.shape_cast %267 : vector<1x128x128xbf16> to vector<128x128xbf16>
    %269 = arith.truncf %266 : vector<32x128xf32> to vector<32x128xbf16>
    %cst_209 = arith.constant dense<0.000000e+00> : vector<32x128xf32>
    %270 = tpu.matmul %269, %268, %cst_209 {dimension_numbers = #tpu.dot_dimension_numbers<[1], [0], [0], [1], [0, 0, 1, 1], [], []>} : vector<32x128xbf16>, vector<128x128xbf16>, vector<32x128xf32> -> vector<32x128xf32>
    %271 = arith.addf %262, %270 : vector<32x128xf32>
    %c7_210 = arith.constant 7 : index
    %c0_211 = arith.constant 0 : index
    %c0_212 = arith.constant 0 : index
    %272 = vector.load %arg4[%c7_210, %c0_211, %c0_212] : memref<14x1x128xf32, #tpu.memory_space<vmem>>, vector<1x1x128xf32>
    %273 = vector.shape_cast %272 : vector<1x1x128xf32> to vector<1x128xf32>
    %274 = vector.broadcast %273 : vector<1x128xf32> to vector<32x128xf32>
    %275 = arith.addf %271, %274 : vector<32x128xf32>
    %cst_213 = arith.constant 0.000000e+00 : f32
    %276 = vector.broadcast %cst_213 : f32 to vector<32x128xf32>
    %277 = arith.cmpf oge, %275, %276 : vector<32x128xf32>
    %cst_214 = arith.constant 0.229166672 : f32
    %278 = vector.broadcast %cst_214 : f32 to vector<32x128xf32>
    %279 = arith.mulf %278, %275 : vector<32x128xf32>
    %280 = arith.select %277, %275, %279 : vector<32x128xi1>, vector<32x128xf32>
    %c9_215 = arith.constant 9 : index
    %c0_216 = arith.constant 0 : index
    %c0_217 = arith.constant 0 : index
    %281 = vector.load %arg2[%c9_215, %c0_216, %c0_217] : memref<19x32x32xbf16, #tpu.memory_space<vmem>>, vector<1x32x32xbf16>
    %282 = vector.shape_cast %281 : vector<1x32x32xbf16> to vector<32x32xbf16>
    %283 = arith.truncf %280 : vector<32x128xf32> to vector<32x128xbf16>
    %cst_218 = arith.constant dense<0.000000e+00> : vector<32x128xf32>
    %284 = tpu.matmul %282, %283, %cst_218 {dimension_numbers = #tpu.dot_dimension_numbers<[1], [0], [0], [1], [0, 0, 1, 1], [], []>} : vector<32x32xbf16>, vector<32x128xbf16>, vector<32x128xf32> -> vector<32x128xf32>
    %c22_219 = arith.constant 22 : index
    %c0_220 = arith.constant 0 : index
    %c0_221 = arith.constant 0 : index
    %285 = vector.load %arg3[%c22_219, %c0_220, %c0_221] : memref<46x128x128xbf16, #tpu.memory_space<vmem>>, vector<1x128x128xbf16>
    %286 = vector.shape_cast %285 : vector<1x128x128xbf16> to vector<128x128xbf16>
    %287 = arith.truncf %284 : vector<32x128xf32> to vector<32x128xbf16>
    %cst_222 = arith.constant dense<0.000000e+00> : vector<32x128xf32>
    %288 = tpu.matmul %287, %286, %cst_222 {dimension_numbers = #tpu.dot_dimension_numbers<[1], [0], [0], [1], [0, 0, 1, 1], [], []>} : vector<32x128xbf16>, vector<128x128xbf16>, vector<32x128xf32> -> vector<32x128xf32>
    %c10_223 = arith.constant 10 : index
    %c0_224 = arith.constant 0 : index
    %c0_225 = arith.constant 0 : index
    %289 = vector.load %arg2[%c10_223, %c0_224, %c0_225] : memref<19x32x32xbf16, #tpu.memory_space<vmem>>, vector<1x32x32xbf16>
    %290 = vector.shape_cast %289 : vector<1x32x32xbf16> to vector<32x32xbf16>
    %291 = arith.truncf %288 : vector<32x128xf32> to vector<32x128xbf16>
    %cst_226 = arith.constant dense<0.000000e+00> : vector<32x128xf32>
    %292 = tpu.matmul %290, %291, %cst_226 {dimension_numbers = #tpu.dot_dimension_numbers<[1], [0], [0], [1], [0, 0, 1, 1], [], []>} : vector<32x32xbf16>, vector<32x128xbf16>, vector<32x128xf32> -> vector<32x128xf32>
    %c29 = arith.constant 29 : index
    %c0_227 = arith.constant 0 : index
    %c0_228 = arith.constant 0 : index
    %293 = vector.load %arg3[%c29, %c0_227, %c0_228] : memref<46x128x128xbf16, #tpu.memory_space<vmem>>, vector<1x128x128xbf16>
    %294 = vector.shape_cast %293 : vector<1x128x128xbf16> to vector<128x128xbf16>
    %295 = arith.truncf %292 : vector<32x128xf32> to vector<32x128xbf16>
    %cst_229 = arith.constant dense<0.000000e+00> : vector<32x128xf32>
    %296 = tpu.matmul %295, %294, %cst_229 {dimension_numbers = #tpu.dot_dimension_numbers<[1], [0], [0], [1], [0, 0, 1, 1], [], []>} : vector<32x128xbf16>, vector<128x128xbf16>, vector<32x128xf32> -> vector<32x128xf32>
    %c30 = arith.constant 30 : index
    %c0_230 = arith.constant 0 : index
    %c0_231 = arith.constant 0 : index
    %297 = vector.load %arg3[%c30, %c0_230, %c0_231] : memref<46x128x128xbf16, #tpu.memory_space<vmem>>, vector<1x128x128xbf16>
    %298 = vector.shape_cast %297 : vector<1x128x128xbf16> to vector<128x128xbf16>
    %299 = arith.truncf %288 : vector<32x128xf32> to vector<32x128xbf16>
    %cst_232 = arith.constant dense<0.000000e+00> : vector<32x128xf32>
    %300 = tpu.matmul %299, %298, %cst_232 {dimension_numbers = #tpu.dot_dimension_numbers<[1], [0], [0], [1], [0, 0, 1, 1], [], []>} : vector<32x128xbf16>, vector<128x128xbf16>, vector<32x128xf32> -> vector<32x128xf32>
    %301 = arith.addf %296, %300 : vector<32x128xf32>
    %c11_233 = arith.constant 11 : index
    %c0_234 = arith.constant 0 : index
    %c0_235 = arith.constant 0 : index
    %302 = vector.load %arg2[%c11_233, %c0_234, %c0_235] : memref<19x32x32xbf16, #tpu.memory_space<vmem>>, vector<1x32x32xbf16>
    %303 = vector.shape_cast %302 : vector<1x32x32xbf16> to vector<32x32xbf16>
    %304 = arith.truncf %288 : vector<32x128xf32> to vector<32x128xbf16>
    %cst_236 = arith.constant dense<0.000000e+00> : vector<32x128xf32>
    %305 = tpu.matmul %303, %304, %cst_236 {dimension_numbers = #tpu.dot_dimension_numbers<[1], [0], [0], [1], [0, 0, 1, 1], [], []>} : vector<32x32xbf16>, vector<32x128xbf16>, vector<32x128xf32> -> vector<32x128xf32>
    %c31 = arith.constant 31 : index
    %c0_237 = arith.constant 0 : index
    %c0_238 = arith.constant 0 : index
    %306 = vector.load %arg3[%c31, %c0_237, %c0_238] : memref<46x128x128xbf16, #tpu.memory_space<vmem>>, vector<1x128x128xbf16>
    %307 = vector.shape_cast %306 : vector<1x128x128xbf16> to vector<128x128xbf16>
    %308 = arith.truncf %305 : vector<32x128xf32> to vector<32x128xbf16>
    %cst_239 = arith.constant dense<0.000000e+00> : vector<32x128xf32>
    %309 = tpu.matmul %308, %307, %cst_239 {dimension_numbers = #tpu.dot_dimension_numbers<[1], [0], [0], [1], [0, 0, 1, 1], [], []>} : vector<32x128xbf16>, vector<128x128xbf16>, vector<32x128xf32> -> vector<32x128xf32>
    %310 = arith.addf %301, %309 : vector<32x128xf32>
    %c8_240 = arith.constant 8 : index
    %c0_241 = arith.constant 0 : index
    %c0_242 = arith.constant 0 : index
    %311 = vector.load %arg4[%c8_240, %c0_241, %c0_242] : memref<14x1x128xf32, #tpu.memory_space<vmem>>, vector<1x1x128xf32>
    %312 = vector.shape_cast %311 : vector<1x1x128xf32> to vector<1x128xf32>
    %313 = vector.broadcast %312 : vector<1x128xf32> to vector<32x128xf32>
    %314 = arith.addf %310, %313 : vector<32x128xf32>
    %315 = arith.addf %314, %249 : vector<32x128xf32>
    %cst_243 = arith.constant 0.000000e+00 : f32
    %316 = vector.broadcast %cst_243 : f32 to vector<32x128xf32>
    %317 = arith.cmpf oge, %315, %316 : vector<32x128xf32>
    %cst_244 = arith.constant 0.229166672 : f32
    %318 = vector.broadcast %cst_244 : f32 to vector<32x128xf32>
    %319 = arith.mulf %318, %315 : vector<32x128xf32>
    %320 = arith.select %317, %315, %319 : vector<32x128xi1>, vector<32x128xf32>
    %c14_245 = arith.constant 14 : index
    %c0_246 = arith.constant 0 : index
    %c0_247 = arith.constant 0 : index
    %321 = vector.load %arg2[%c14_245, %c0_246, %c0_247] : memref<19x32x32xbf16, #tpu.memory_space<vmem>>, vector<1x32x32xbf16>
    %322 = vector.shape_cast %321 : vector<1x32x32xbf16> to vector<32x32xbf16>
    %323 = arith.truncf %320 : vector<32x128xf32> to vector<32x128xbf16>
    %cst_248 = arith.constant dense<0.000000e+00> : vector<32x128xf32>
    %324 = tpu.matmul %322, %323, %cst_248 {dimension_numbers = #tpu.dot_dimension_numbers<[1], [0], [0], [1], [0, 0, 1, 1], [], []>} : vector<32x32xbf16>, vector<32x128xbf16>, vector<32x128xf32> -> vector<32x128xf32>
    %c32 = arith.constant 32 : index
    %c0_249 = arith.constant 0 : index
    %c0_250 = arith.constant 0 : index
    %325 = vector.load %arg3[%c32, %c0_249, %c0_250] : memref<46x128x128xbf16, #tpu.memory_space<vmem>>, vector<1x128x128xbf16>
    %326 = vector.shape_cast %325 : vector<1x128x128xbf16> to vector<128x128xbf16>
    %327 = arith.truncf %324 : vector<32x128xf32> to vector<32x128xbf16>
    %cst_251 = arith.constant dense<0.000000e+00> : vector<32x128xf32>
    %328 = tpu.matmul %327, %326, %cst_251 {dimension_numbers = #tpu.dot_dimension_numbers<[1], [0], [0], [1], [0, 0, 1, 1], [], []>} : vector<32x128xbf16>, vector<128x128xbf16>, vector<32x128xf32> -> vector<32x128xf32>
    %c15_252 = arith.constant 15 : index
    %c0_253 = arith.constant 0 : index
    %c0_254 = arith.constant 0 : index
    %329 = vector.load %arg2[%c15_252, %c0_253, %c0_254] : memref<19x32x32xbf16, #tpu.memory_space<vmem>>, vector<1x32x32xbf16>
    %330 = vector.shape_cast %329 : vector<1x32x32xbf16> to vector<32x32xbf16>
    %331 = arith.truncf %328 : vector<32x128xf32> to vector<32x128xbf16>
    %cst_255 = arith.constant dense<0.000000e+00> : vector<32x128xf32>
    %332 = tpu.matmul %330, %331, %cst_255 {dimension_numbers = #tpu.dot_dimension_numbers<[1], [0], [0], [1], [0, 0, 1, 1], [], []>} : vector<32x32xbf16>, vector<32x128xbf16>, vector<32x128xf32> -> vector<32x128xf32>
    %c33 = arith.constant 33 : index
    %c0_256 = arith.constant 0 : index
    %c0_257 = arith.constant 0 : index
    %333 = vector.load %arg3[%c33, %c0_256, %c0_257] : memref<46x128x128xbf16, #tpu.memory_space<vmem>>, vector<1x128x128xbf16>
    %334 = vector.shape_cast %333 : vector<1x128x128xbf16> to vector<128x128xbf16>
    %335 = arith.truncf %332 : vector<32x128xf32> to vector<32x128xbf16>
    %cst_258 = arith.constant dense<0.000000e+00> : vector<32x128xf32>
    %336 = tpu.matmul %335, %334, %cst_258 {dimension_numbers = #tpu.dot_dimension_numbers<[1], [0], [0], [1], [0, 0, 1, 1], [], []>} : vector<32x128xbf16>, vector<128x128xbf16>, vector<32x128xf32> -> vector<32x128xf32>
    %c34 = arith.constant 34 : index
    %c0_259 = arith.constant 0 : index
    %c0_260 = arith.constant 0 : index
    %337 = vector.load %arg3[%c34, %c0_259, %c0_260] : memref<46x128x128xbf16, #tpu.memory_space<vmem>>, vector<1x128x128xbf16>
    %338 = vector.shape_cast %337 : vector<1x128x128xbf16> to vector<128x128xbf16>
    %339 = arith.truncf %328 : vector<32x128xf32> to vector<32x128xbf16>
    %cst_261 = arith.constant dense<0.000000e+00> : vector<32x128xf32>
    %340 = tpu.matmul %339, %338, %cst_261 {dimension_numbers = #tpu.dot_dimension_numbers<[1], [0], [0], [1], [0, 0, 1, 1], [], []>} : vector<32x128xbf16>, vector<128x128xbf16>, vector<32x128xf32> -> vector<32x128xf32>
    %341 = arith.addf %336, %340 : vector<32x128xf32>
    %c16_262 = arith.constant 16 : index
    %c0_263 = arith.constant 0 : index
    %c0_264 = arith.constant 0 : index
    %342 = vector.load %arg2[%c16_262, %c0_263, %c0_264] : memref<19x32x32xbf16, #tpu.memory_space<vmem>>, vector<1x32x32xbf16>
    %343 = vector.shape_cast %342 : vector<1x32x32xbf16> to vector<32x32xbf16>
    %344 = arith.truncf %328 : vector<32x128xf32> to vector<32x128xbf16>
    %cst_265 = arith.constant dense<0.000000e+00> : vector<32x128xf32>
    %345 = tpu.matmul %343, %344, %cst_265 {dimension_numbers = #tpu.dot_dimension_numbers<[1], [0], [0], [1], [0, 0, 1, 1], [], []>} : vector<32x32xbf16>, vector<32x128xbf16>, vector<32x128xf32> -> vector<32x128xf32>
    %c35 = arith.constant 35 : index
    %c0_266 = arith.constant 0 : index
    %c0_267 = arith.constant 0 : index
    %346 = vector.load %arg3[%c35, %c0_266, %c0_267] : memref<46x128x128xbf16, #tpu.memory_space<vmem>>, vector<1x128x128xbf16>
    %347 = vector.shape_cast %346 : vector<1x128x128xbf16> to vector<128x128xbf16>
    %348 = arith.truncf %345 : vector<32x128xf32> to vector<32x128xbf16>
    %cst_268 = arith.constant dense<0.000000e+00> : vector<32x128xf32>
    %349 = tpu.matmul %348, %347, %cst_268 {dimension_numbers = #tpu.dot_dimension_numbers<[1], [0], [0], [1], [0, 0, 1, 1], [], []>} : vector<32x128xbf16>, vector<128x128xbf16>, vector<32x128xf32> -> vector<32x128xf32>
    %350 = arith.addf %341, %349 : vector<32x128xf32>
    %c9_269 = arith.constant 9 : index
    %c0_270 = arith.constant 0 : index
    %c0_271 = arith.constant 0 : index
    %351 = vector.load %arg4[%c9_269, %c0_270, %c0_271] : memref<14x1x128xf32, #tpu.memory_space<vmem>>, vector<1x1x128xf32>
    %352 = vector.shape_cast %351 : vector<1x1x128xf32> to vector<1x128xf32>
    %353 = vector.broadcast %352 : vector<1x128xf32> to vector<32x128xf32>
    %354 = arith.addf %350, %353 : vector<32x128xf32>
    %c10_272 = arith.constant 10 : index
    %c0_273 = arith.constant 0 : index
    %c0_274 = arith.constant 0 : index
    %355 = vector.load %arg2[%c10_272, %c0_273, %c0_274] : memref<19x32x32xbf16, #tpu.memory_space<vmem>>, vector<1x32x32xbf16>
    %356 = vector.shape_cast %355 : vector<1x32x32xbf16> to vector<32x32xbf16>
    %357 = arith.truncf %320 : vector<32x128xf32> to vector<32x128xbf16>
    %cst_275 = arith.constant dense<0.000000e+00> : vector<32x128xf32>
    %358 = tpu.matmul %356, %357, %cst_275 {dimension_numbers = #tpu.dot_dimension_numbers<[1], [0], [0], [1], [0, 0, 1, 1], [], []>} : vector<32x32xbf16>, vector<32x128xbf16>, vector<32x128xf32> -> vector<32x128xf32>
    %c36 = arith.constant 36 : index
    %c0_276 = arith.constant 0 : index
    %c0_277 = arith.constant 0 : index
    %359 = vector.load %arg3[%c36, %c0_276, %c0_277] : memref<46x128x128xbf16, #tpu.memory_space<vmem>>, vector<1x128x128xbf16>
    %360 = vector.shape_cast %359 : vector<1x128x128xbf16> to vector<128x128xbf16>
    %361 = arith.truncf %358 : vector<32x128xf32> to vector<32x128xbf16>
    %cst_278 = arith.constant dense<0.000000e+00> : vector<32x128xf32>
    %362 = tpu.matmul %361, %360, %cst_278 {dimension_numbers = #tpu.dot_dimension_numbers<[1], [0], [0], [1], [0, 0, 1, 1], [], []>} : vector<32x128xbf16>, vector<128x128xbf16>, vector<32x128xf32> -> vector<32x128xf32>
    %c37 = arith.constant 37 : index
    %c0_279 = arith.constant 0 : index
    %c0_280 = arith.constant 0 : index
    %363 = vector.load %arg3[%c37, %c0_279, %c0_280] : memref<46x128x128xbf16, #tpu.memory_space<vmem>>, vector<1x128x128xbf16>
    %364 = vector.shape_cast %363 : vector<1x128x128xbf16> to vector<128x128xbf16>
    %365 = arith.truncf %320 : vector<32x128xf32> to vector<32x128xbf16>
    %cst_281 = arith.constant dense<0.000000e+00> : vector<32x128xf32>
    %366 = tpu.matmul %365, %364, %cst_281 {dimension_numbers = #tpu.dot_dimension_numbers<[1], [0], [0], [1], [0, 0, 1, 1], [], []>} : vector<32x128xbf16>, vector<128x128xbf16>, vector<32x128xf32> -> vector<32x128xf32>
    %367 = arith.addf %362, %366 : vector<32x128xf32>
    %c11_282 = arith.constant 11 : index
    %c0_283 = arith.constant 0 : index
    %c0_284 = arith.constant 0 : index
    %368 = vector.load %arg2[%c11_282, %c0_283, %c0_284] : memref<19x32x32xbf16, #tpu.memory_space<vmem>>, vector<1x32x32xbf16>
    %369 = vector.shape_cast %368 : vector<1x32x32xbf16> to vector<32x32xbf16>
    %370 = arith.truncf %320 : vector<32x128xf32> to vector<32x128xbf16>
    %cst_285 = arith.constant dense<0.000000e+00> : vector<32x128xf32>
    %371 = tpu.matmul %369, %370, %cst_285 {dimension_numbers = #tpu.dot_dimension_numbers<[1], [0], [0], [1], [0, 0, 1, 1], [], []>} : vector<32x32xbf16>, vector<32x128xbf16>, vector<32x128xf32> -> vector<32x128xf32>
    %c38 = arith.constant 38 : index
    %c0_286 = arith.constant 0 : index
    %c0_287 = arith.constant 0 : index
    %372 = vector.load %arg3[%c38, %c0_286, %c0_287] : memref<46x128x128xbf16, #tpu.memory_space<vmem>>, vector<1x128x128xbf16>
    %373 = vector.shape_cast %372 : vector<1x128x128xbf16> to vector<128x128xbf16>
    %374 = arith.truncf %371 : vector<32x128xf32> to vector<32x128xbf16>
    %cst_288 = arith.constant dense<0.000000e+00> : vector<32x128xf32>
    %375 = tpu.matmul %374, %373, %cst_288 {dimension_numbers = #tpu.dot_dimension_numbers<[1], [0], [0], [1], [0, 0, 1, 1], [], []>} : vector<32x128xbf16>, vector<128x128xbf16>, vector<32x128xf32> -> vector<32x128xf32>
    %376 = arith.addf %367, %375 : vector<32x128xf32>
    %c10_289 = arith.constant 10 : index
    %c0_290 = arith.constant 0 : index
    %c0_291 = arith.constant 0 : index
    %377 = vector.load %arg4[%c10_289, %c0_290, %c0_291] : memref<14x1x128xf32, #tpu.memory_space<vmem>>, vector<1x1x128xf32>
    %378 = vector.shape_cast %377 : vector<1x1x128xf32> to vector<1x128xf32>
    %379 = vector.broadcast %378 : vector<1x128xf32> to vector<32x128xf32>
    %380 = arith.addf %376, %379 : vector<32x128xf32>
    %cst_292 = arith.constant 0.000000e+00 : f32
    %381 = vector.broadcast %cst_292 : f32 to vector<32x128xf32>
    %382 = arith.cmpf oge, %380, %381 : vector<32x128xf32>
    %cst_293 = arith.constant 0.229166672 : f32
    %383 = vector.broadcast %cst_293 : f32 to vector<32x128xf32>
    %384 = arith.mulf %383, %380 : vector<32x128xf32>
    %385 = arith.select %382, %380, %384 : vector<32x128xi1>, vector<32x128xf32>
    %c14_294 = arith.constant 14 : index
    %c0_295 = arith.constant 0 : index
    %c0_296 = arith.constant 0 : index
    %386 = vector.load %arg2[%c14_294, %c0_295, %c0_296] : memref<19x32x32xbf16, #tpu.memory_space<vmem>>, vector<1x32x32xbf16>
    %387 = vector.shape_cast %386 : vector<1x32x32xbf16> to vector<32x32xbf16>
    %388 = arith.truncf %385 : vector<32x128xf32> to vector<32x128xbf16>
    %cst_297 = arith.constant dense<0.000000e+00> : vector<32x128xf32>
    %389 = tpu.matmul %387, %388, %cst_297 {dimension_numbers = #tpu.dot_dimension_numbers<[1], [0], [0], [1], [0, 0, 1, 1], [], []>} : vector<32x32xbf16>, vector<32x128xbf16>, vector<32x128xf32> -> vector<32x128xf32>
    %c39 = arith.constant 39 : index
    %c0_298 = arith.constant 0 : index
    %c0_299 = arith.constant 0 : index
    %390 = vector.load %arg3[%c39, %c0_298, %c0_299] : memref<46x128x128xbf16, #tpu.memory_space<vmem>>, vector<1x128x128xbf16>
    %391 = vector.shape_cast %390 : vector<1x128x128xbf16> to vector<128x128xbf16>
    %392 = arith.truncf %389 : vector<32x128xf32> to vector<32x128xbf16>
    %cst_300 = arith.constant dense<0.000000e+00> : vector<32x128xf32>
    %393 = tpu.matmul %392, %391, %cst_300 {dimension_numbers = #tpu.dot_dimension_numbers<[1], [0], [0], [1], [0, 0, 1, 1], [], []>} : vector<32x128xbf16>, vector<128x128xbf16>, vector<32x128xf32> -> vector<32x128xf32>
    %c15_301 = arith.constant 15 : index
    %c0_302 = arith.constant 0 : index
    %c0_303 = arith.constant 0 : index
    %394 = vector.load %arg2[%c15_301, %c0_302, %c0_303] : memref<19x32x32xbf16, #tpu.memory_space<vmem>>, vector<1x32x32xbf16>
    %395 = vector.shape_cast %394 : vector<1x32x32xbf16> to vector<32x32xbf16>
    %396 = arith.truncf %393 : vector<32x128xf32> to vector<32x128xbf16>
    %cst_304 = arith.constant dense<0.000000e+00> : vector<32x128xf32>
    %397 = tpu.matmul %395, %396, %cst_304 {dimension_numbers = #tpu.dot_dimension_numbers<[1], [0], [0], [1], [0, 0, 1, 1], [], []>} : vector<32x32xbf16>, vector<32x128xbf16>, vector<32x128xf32> -> vector<32x128xf32>
    %c40 = arith.constant 40 : index
    %c0_305 = arith.constant 0 : index
    %c0_306 = arith.constant 0 : index
    %398 = vector.load %arg3[%c40, %c0_305, %c0_306] : memref<46x128x128xbf16, #tpu.memory_space<vmem>>, vector<1x128x128xbf16>
    %399 = vector.shape_cast %398 : vector<1x128x128xbf16> to vector<128x128xbf16>
    %400 = arith.truncf %397 : vector<32x128xf32> to vector<32x128xbf16>
    %cst_307 = arith.constant dense<0.000000e+00> : vector<32x128xf32>
    %401 = tpu.matmul %400, %399, %cst_307 {dimension_numbers = #tpu.dot_dimension_numbers<[1], [0], [0], [1], [0, 0, 1, 1], [], []>} : vector<32x128xbf16>, vector<128x128xbf16>, vector<32x128xf32> -> vector<32x128xf32>
    %c41 = arith.constant 41 : index
    %c0_308 = arith.constant 0 : index
    %c0_309 = arith.constant 0 : index
    %402 = vector.load %arg3[%c41, %c0_308, %c0_309] : memref<46x128x128xbf16, #tpu.memory_space<vmem>>, vector<1x128x128xbf16>
    %403 = vector.shape_cast %402 : vector<1x128x128xbf16> to vector<128x128xbf16>
    %404 = arith.truncf %393 : vector<32x128xf32> to vector<32x128xbf16>
    %cst_310 = arith.constant dense<0.000000e+00> : vector<32x128xf32>
    %405 = tpu.matmul %404, %403, %cst_310 {dimension_numbers = #tpu.dot_dimension_numbers<[1], [0], [0], [1], [0, 0, 1, 1], [], []>} : vector<32x128xbf16>, vector<128x128xbf16>, vector<32x128xf32> -> vector<32x128xf32>
    %406 = arith.addf %401, %405 : vector<32x128xf32>
    %c16_311 = arith.constant 16 : index
    %c0_312 = arith.constant 0 : index
    %c0_313 = arith.constant 0 : index
    %407 = vector.load %arg2[%c16_311, %c0_312, %c0_313] : memref<19x32x32xbf16, #tpu.memory_space<vmem>>, vector<1x32x32xbf16>
    %408 = vector.shape_cast %407 : vector<1x32x32xbf16> to vector<32x32xbf16>
    %409 = arith.truncf %393 : vector<32x128xf32> to vector<32x128xbf16>
    %cst_314 = arith.constant dense<0.000000e+00> : vector<32x128xf32>
    %410 = tpu.matmul %408, %409, %cst_314 {dimension_numbers = #tpu.dot_dimension_numbers<[1], [0], [0], [1], [0, 0, 1, 1], [], []>} : vector<32x32xbf16>, vector<32x128xbf16>, vector<32x128xf32> -> vector<32x128xf32>
    %c42 = arith.constant 42 : index
    %c0_315 = arith.constant 0 : index
    %c0_316 = arith.constant 0 : index
    %411 = vector.load %arg3[%c42, %c0_315, %c0_316] : memref<46x128x128xbf16, #tpu.memory_space<vmem>>, vector<1x128x128xbf16>
    %412 = vector.shape_cast %411 : vector<1x128x128xbf16> to vector<128x128xbf16>
    %413 = arith.truncf %410 : vector<32x128xf32> to vector<32x128xbf16>
    %cst_317 = arith.constant dense<0.000000e+00> : vector<32x128xf32>
    %414 = tpu.matmul %413, %412, %cst_317 {dimension_numbers = #tpu.dot_dimension_numbers<[1], [0], [0], [1], [0, 0, 1, 1], [], []>} : vector<32x128xbf16>, vector<128x128xbf16>, vector<32x128xf32> -> vector<32x128xf32>
    %415 = arith.addf %406, %414 : vector<32x128xf32>
    %c11_318 = arith.constant 11 : index
    %c0_319 = arith.constant 0 : index
    %c0_320 = arith.constant 0 : index
    %416 = vector.load %arg4[%c11_318, %c0_319, %c0_320] : memref<14x1x128xf32, #tpu.memory_space<vmem>>, vector<1x1x128xf32>
    %417 = vector.shape_cast %416 : vector<1x1x128xf32> to vector<1x128xf32>
    %418 = vector.broadcast %417 : vector<1x128xf32> to vector<32x128xf32>
    %419 = arith.addf %415, %418 : vector<32x128xf32>
    %420 = arith.addf %419, %354 : vector<32x128xf32>
    %cst_321 = arith.constant 0.000000e+00 : f32
    %421 = vector.broadcast %cst_321 : f32 to vector<32x128xf32>
    %422 = arith.cmpf oge, %420, %421 : vector<32x128xf32>
    %cst_322 = arith.constant 0.229166672 : f32
    %423 = vector.broadcast %cst_322 : f32 to vector<32x128xf32>
    %424 = arith.mulf %423, %420 : vector<32x128xf32>
    %425 = arith.select %422, %420, %424 : vector<32x128xi1>, vector<32x128xf32>
    %c17_323 = arith.constant 17 : index
    %c0_324 = arith.constant 0 : index
    %c0_325 = arith.constant 0 : index
    %426 = vector.load %arg2[%c17_323, %c0_324, %c0_325] : memref<19x32x32xbf16, #tpu.memory_space<vmem>>, vector<1x32x32xbf16>
    %427 = vector.shape_cast %426 : vector<1x32x32xbf16> to vector<32x32xbf16>
    %c43 = arith.constant 43 : index
    %c0_326 = arith.constant 0 : index
    %c0_327 = arith.constant 0 : index
    %428 = vector.load %arg3[%c43, %c0_326, %c0_327] : memref<46x128x128xbf16, #tpu.memory_space<vmem>>, vector<1x128x128xbf16>
    %429 = vector.shape_cast %428 : vector<1x128x128xbf16> to vector<128x128xbf16>
    %430 = arith.truncf %425 : vector<32x128xf32> to vector<32x128xbf16>
    %cst_328 = arith.constant dense<0.000000e+00> : vector<32x128xf32>
    %431 = tpu.matmul %430, %429, %cst_328 {dimension_numbers = #tpu.dot_dimension_numbers<[1], [0], [0], [1], [0, 0, 1, 1], [], []>} : vector<32x128xbf16>, vector<128x128xbf16>, vector<32x128xf32> -> vector<32x128xf32>
    %432 = arith.truncf %431 : vector<32x128xf32> to vector<32x128xbf16>
    %cst_329 = arith.constant dense<0.000000e+00> : vector<32x128xf32>
    %433 = tpu.matmul %427, %432, %cst_329 {dimension_numbers = #tpu.dot_dimension_numbers<[1], [0], [0], [1], [0, 0, 1, 1], [], []>} : vector<32x32xbf16>, vector<32x128xbf16>, vector<32x128xf32> -> vector<32x128xf32>
    %c18_330 = arith.constant 18 : index
    %c0_331 = arith.constant 0 : index
    %c0_332 = arith.constant 0 : index
    %434 = vector.load %arg2[%c18_330, %c0_331, %c0_332] : memref<19x32x32xbf16, #tpu.memory_space<vmem>>, vector<1x32x32xbf16>
    %435 = vector.shape_cast %434 : vector<1x32x32xbf16> to vector<32x32xbf16>
    %c44 = arith.constant 44 : index
    %c0_333 = arith.constant 0 : index
    %c0_334 = arith.constant 0 : index
    %436 = vector.load %arg3[%c44, %c0_333, %c0_334] : memref<46x128x128xbf16, #tpu.memory_space<vmem>>, vector<1x128x128xbf16>
    %437 = vector.shape_cast %436 : vector<1x128x128xbf16> to vector<128x128xbf16>
    %438 = arith.truncf %425 : vector<32x128xf32> to vector<32x128xbf16>
    %cst_335 = arith.constant dense<0.000000e+00> : vector<32x128xf32>
    %439 = tpu.matmul %438, %437, %cst_335 {dimension_numbers = #tpu.dot_dimension_numbers<[1], [0], [0], [1], [0, 0, 1, 1], [], []>} : vector<32x128xbf16>, vector<128x128xbf16>, vector<32x128xf32> -> vector<32x128xf32>
    %440 = arith.truncf %439 : vector<32x128xf32> to vector<32x128xbf16>
    %cst_336 = arith.constant dense<0.000000e+00> : vector<32x128xf32>
    %441 = tpu.matmul %435, %440, %cst_336 {dimension_numbers = #tpu.dot_dimension_numbers<[1], [0], [0], [1], [0, 0, 1, 1], [], []>} : vector<32x32xbf16>, vector<32x128xbf16>, vector<32x128xf32> -> vector<32x128xf32>
    %442 = arith.addf %433, %441 : vector<32x128xf32>
    %c12_337 = arith.constant 12 : index
    %c0_338 = arith.constant 0 : index
    %c0_339 = arith.constant 0 : index
    %443 = vector.load %arg4[%c12_337, %c0_338, %c0_339] : memref<14x1x128xf32, #tpu.memory_space<vmem>>, vector<1x1x128xf32>
    %444 = vector.shape_cast %443 : vector<1x1x128xf32> to vector<1x128xf32>
    %445 = vector.broadcast %444 : vector<1x128xf32> to vector<32x128xf32>
    %446 = arith.addf %442, %445 : vector<32x128xf32>
    %c45 = arith.constant 45 : index
    %c0_340 = arith.constant 0 : index
    %c0_341 = arith.constant 0 : index
    %447 = vector.load %arg3[%c45, %c0_340, %c0_341] : memref<46x128x128xbf16, #tpu.memory_space<vmem>>, vector<1x128x128xbf16>
    %448 = vector.shape_cast %447 : vector<1x128x128xbf16> to vector<128x128xbf16>
    %449 = arith.truncf %446 : vector<32x128xf32> to vector<32x128xbf16>
    %cst_342 = arith.constant dense<0.000000e+00> : vector<32x128xf32>
    %450 = tpu.matmul %449, %448, %cst_342 {dimension_numbers = #tpu.dot_dimension_numbers<[1], [0], [0], [1], [0, 0, 1, 1], [], []>} : vector<32x128xbf16>, vector<128x128xbf16>, vector<32x128xf32> -> vector<32x128xf32>
    %c13_343 = arith.constant 13 : index
    %c0_344 = arith.constant 0 : index
    %c0_345 = arith.constant 0 : index
    %451 = vector.load %arg4[%c13_343, %c0_344, %c0_345] : memref<14x1x128xf32, #tpu.memory_space<vmem>>, vector<1x1x128xf32>
    %452 = vector.shape_cast %451 : vector<1x1x128xf32> to vector<1x128xf32>
    %453 = vector.broadcast %452 : vector<1x128xf32> to vector<32x128xf32>
    %454 = arith.addf %450, %453 : vector<32x128xf32>
    %c0_346 = arith.constant 0 : index
    %c0_347 = arith.constant 0 : index
    %c0_348 = arith.constant 0 : index
    %455 = vector.load %arg5[%c0_346, %c0_347, %c0_348] : memref<1x32x128xf32, #tpu.memory_space<vmem>>, vector<1x32x128xf32>
    %456 = vector.shape_cast %455 : vector<1x32x128xf32> to vector<32x128xf32>
    %457 = vector.shape_cast %454 : vector<32x128xf32> to vector<1x32x128xf32>
    tpu.vector_store %arg5[%c0_346, %c0_347, %c0_348], %457 {strides = array<i32>} : memref<1x32x128xf32, #tpu.memory_space<vmem>>, vector<1x32x128xf32>,
    return
  }
  func.func @transform_0(%arg0: i32) -> (i32, i32, i32) {
    %c0_i32 = arith.constant 0 : i32
    %c0_i32_0 = arith.constant 0 : i32
    %c0_i32_1 = arith.constant 0 : i32
    return %arg0, %c0_i32, %c0_i32_0 : i32, i32, i32
  }
  func.func @transform_1(%arg0: i32) -> (i32, i32, i32) {
    %c0_i32 = arith.constant 0 : i32
    %c0_i32_0 = arith.constant 0 : i32
    %c0_i32_1 = arith.constant 0 : i32
    %c0_i32_2 = arith.constant 0 : i32
    return %c0_i32, %c0_i32_0, %c0_i32_1 : i32, i32, i32
  }
  func.func @transform_2(%arg0: i32) -> (i32, i32, i32) {
    %c0_i32 = arith.constant 0 : i32
    %c0_i32_0 = arith.constant 0 : i32
    %c0_i32_1 = arith.constant 0 : i32
    %c0_i32_2 = arith.constant 0 : i32
    return %c0_i32, %c0_i32_0, %c0_i32_1 : i32, i32, i32
  }
  func.func @transform_3(%arg0: i32) -> (i32, i32, i32) {
    %c0_i32 = arith.constant 0 : i32
    %c0_i32_0 = arith.constant 0 : i32
    %c0_i32_1 = arith.constant 0 : i32
    %c0_i32_2 = arith.constant 0 : i32
    return %c0_i32, %c0_i32_0, %c0_i32_1 : i32, i32, i32
  }
  func.func @transform_4(%arg0: i32) -> (i32, i32, i32) {
    %c0_i32 = arith.constant 0 : i32
    %c0_i32_0 = arith.constant 0 : i32
    %c0_i32_1 = arith.constant 0 : i32
    return %arg0, %c0_i32, %c0_i32_0 : i32, i32, i32
  }
}

</mosaic_0001>

<llo_original>
// kernel: tile.68
$region0: #{tile.68}
  #allocation0 [shape = 's32[1]{0}', space=sflag, size = 0x4, scoped, tag = 'scoped memory for tile.68']
  %s0 = inlined_call_operand.vmem [shape: f32[4], index: 0, kind: input, shape index: {}]
  %s1 = inlined_call_operand.vmem [shape: f32[28,4], index: 1, kind: output, shape index: {}]
  // Predicated region
  $region2: #{tile.68} parent=0 // pred_check
    _
  $region3: #{tile.68} parent=0 // pred_check_branch
    %3 = sbr.rel (0) target = $region5
  $region4: #{tile.68} parent=0 // pred_region
    _
  $region5: #{tile.68} parent=0 // pred_fallthru
    _
  %v4 = vld [vmem:[%s0] ss:$0 sm:$0xff]
  %5 = vst [vmem:[%s1] sm:$0xff] %v4
  %s6 = scalar_lea.vmem %s1, 8
  %7 = vst [vmem:[%s6] sm:$0xff] %v4
  %s8 = scalar_lea.vmem %s1, 16
  %9 = vst [vmem:[%s8] sm:$0xff] %v4
  %s10 = scalar_lea.vmem %s1, 24
  %11 = vst [vmem:[%s10] sm:$0xff] %v4

// kernel: tile.69
$region0: #{tile.69}
  %s0 = inlined_call_operand.vmem [shape: f32[28,4], index: 0, kind: input, shape index: {}]
  %s1 = inlined_call_operand.vmem [shape: f32[112], index: 1, kind: output, shape index: {}]
  $region1: #{tile.69} parent=0
    #allocation0 [shape = 'u8[4096]{0}', space=vmem, size = 0x1000, scoped, tag = 'scoped mem for output reshape']
    %v2 = vld [vmem:[%s0] sm:$0x1]
    %vm3 = vcmask 31744
    %4 = vst.msk [vmem:[#allocation0] sm:$0x1] %vm3, %v2
    %s5 = scalar_lea.vmem %s0, 27
    %v6 = vld [vmem:[%s5] sm:$0x1]
    %7 = vrot.lane.b32.xlu0 %v6, 108
    %v8 = vpop.permute.xlu0 %7
    %vm9 = vcmask 917344
    %10 = vst.msk [vmem:[#allocation0] sm:$0x1] %vm9, %v8
    %s11 = scalar_lea.vmem %s0, 26
    %v12 = vld [vmem:[%s11] sm:$0x1]
    %13 = vrot.lane.b32.xlu0 %v12, 104
    %v14 = vpop.permute.xlu0 %13
    %vm15 = vcmask 884544
    %16 = vst.msk [vmem:[#allocation0] sm:$0x1] %vm15, %v14
    %s17 = scalar_lea.vmem %s0, 25
    %v18 = vld [vmem:[%s17] sm:$0x1]
    %19 = vrot.lane.b32.xlu0 %v18, 100
    %v20 = vpop.permute.xlu0 %19
    %vm21 = vcmask 851744
    %22 = vst.msk [vmem:[#allocation0] sm:$0x1] %vm21, %v20
    %s23 = scalar_lea.vmem %s0, 24
    %v24 = vld [vmem:[%s23] sm:$0x1]
    %25 = vrot.lane.b32.xlu0 %v24, 96
    %v26 = vpop.permute.xlu0 %25
    %vm27 = vcmask 818944
    %28 = vst.msk [vmem:[#allocation0] sm:$0x1] %vm27, %v26
    %s29 = scalar_lea.vmem %s0, 23
    %v30 = vld [vmem:[%s29] sm:$0x1]
    %31 = vrot.lane.b32.xlu0 %v30, 92
    %v32 = vpop.permute.xlu0 %31
    %vm33 = vcmask 786144
    %34 = vst.msk [vmem:[#allocation0] sm:$0x1] %vm33, %v32
    %s35 = scalar_lea.vmem %s0, 22
    %v36 = vld [vmem:[%s35] sm:$0x1]
    %37 = vrot.lane.b32.xlu0 %v36, 88
    %v38 = vpop.permute.xlu0 %37
    %vm39 = vcmask 753344
    %40 = vst.msk [vmem:[#allocation0] sm:$0x1] %vm39, %v38
    %s41 = scalar_lea.vmem %s0, 21
    %v42 = vld [vmem:[%s41] sm:$0x1]
    %43 = vrot.lane.b32.xlu0 %v42, 84
    %v44 = vpop.permute.xlu0 %43
    %vm45 = vcmask 720544
    %46 = vst.msk [vmem:[#allocation0] sm:$0x1] %vm45, %v44
    %s47 = scalar_lea.vmem %s0, 20
    %v48 = vld [vmem:[%s47] sm:$0x1]
    %49 = vrot.lane.b32.xlu0 %v48, 80
    %v50 = vpop.permute.xlu0 %49
    %vm51 = vcmask 687744
    %52 = vst.msk [vmem:[#allocation0] sm:$0x1] %vm51, %v50
    %s53 = scalar_lea.vmem %s0, 19
    %v54 = vld [vmem:[%s53] sm:$0x1]
    %55 = vrot.lane.b32.xlu0 %v54, 76
    %v56 = vpop.permute.xlu0 %55
    %vm57 = vcmask 654944
    %58 = vst.msk [vmem:[#allocation0] sm:$0x1] %vm57, %v56
    %s59 = scalar_lea.vmem %s0, 18
    %v60 = vld [vmem:[%s59] sm:$0x1]
    %61 = vrot.lane.b32.xlu0 %v60, 72
    %v62 = vpop.permute.xlu0 %61
    %vm63 = vcmask 622144
    %64 = vst.msk [vmem:[#allocation0] sm:$0x1] %vm63, %v62
    %s65 = scalar_lea.vmem %s0, 17
    %v66 = vld [vmem:[%s65] sm:$0x1]
    %67 = vrot.lane.b32.xlu0 %v66, 68
    %v68 = vpop.permute.xlu0 %67
    %vm69 = vcmask 589344
    %70 = vst.msk [vmem:[#allocation0] sm:$0x1] %vm69, %v68
    %s71 = scalar_lea.vmem %s0, 16
    %v72 = vld [vmem:[%s71] sm:$0x1]
    %73 = vrot.lane.b32.xlu0 %v72, 64
    %v74 = vpop.permute.xlu0 %73
    %vm75 = vcmask 556544
    %76 = vst.msk [vmem:[#allocation0] sm:$0x1] %vm75, %v74
    %s77 = scalar_lea.vmem %s0, 15
    %v78 = vld [vmem:[%s77] sm:$0x1]
    %79 = vrot.lane.b32.xlu0 %v78, 60
    %v80 = vpop.permute.xlu0 %79
    %vm81 = vcmask 523744
    %82 = vst.msk [vmem:[#allocation0] sm:$0x1] %vm81, %v80
    %s83 = scalar_lea.vmem %s0, 14
    %v84 = vld [vmem:[%s83] sm:$0x1]
    %85 = vrot.lane.b32.xlu0 %v84, 56
    %v86 = vpop.permute.xlu0 %85
    %vm87 = vcmask 490944
    %88 = vst.msk [vmem:[#allocation0] sm:$0x1] %vm87, %v86
    %s89 = scalar_lea.vmem %s0, 13
    %v90 = vld [vmem:[%s89] sm:$0x1]
    %91 = vrot.lane.b32.xlu0 %v90, 52
    %v92 = vpop.permute.xlu0 %91
    %vm93 = vcmask 458144
    %94 = vst.msk [vmem:[#allocation0] sm:$0x1] %vm93, %v92
    %s95 = scalar_lea.vmem %s0, 12
    %v96 = vld [vmem:[%s95] sm:$0x1]
    %97 = vrot.lane.b32.xlu0 %v96, 48
    %v98 = vpop.permute.xlu0 %97
    %vm99 = vcmask 425344
    %100 = vst.msk [vmem:[#allocation0] sm:$0x1] %vm99, %v98
    %s101 = scalar_lea.vmem %s0, 11
    %v102 = vld [vmem:[%s101] sm:$0x1]
    %103 = vrot.lane.b32.xlu0 %v102, 44
    %v104 = vpop.permute.xlu0 %103
    %vm105 = vcmask 392544
    %106 = vst.msk [vmem:[#allocation0] sm:$0x1] %vm105, %v104
    %s107 = scalar_lea.vmem %s0, 10
    %v108 = vld [vmem:[%s107] sm:$0x1]
    %109 = vrot.lane.b32.xlu0 %v108, 40
    %v110 = vpop.permute.xlu0 %109
    %vm111 = vcmask 359744
    %112 = vst.msk [vmem:[#allocation0] sm:$0x1] %vm111, %v110
    %s113 = scalar_lea.vmem %s0, 9
    %v114 = vld [vmem:[%s113] sm:$0x1]
    %115 = vrot.lane.b32.xlu0 %v114, 36
    %v116 = vpop.permute.xlu0 %115
    %vm117 = vcmask 326944
    %118 = vst.msk [vmem:[#allocation0] sm:$0x1] %vm117, %v116
    %s119 = scalar_lea.vmem %s0, 8
    %v120 = vld [vmem:[%s119] sm:$0x1]
    %121 = vrot.lane.b32.xlu0 %v120, 32
    %v122 = vpop.permute.xlu0 %121
    %vm123 = vcmask 294144
    %124 = vst.msk [vmem:[#allocation0] sm:$0x1] %vm123, %v122
    %s125 = scalar_lea.vmem %s0, 7
    %v126 = vld [vmem:[%s125] sm:$0x1]
    %127 = vrot.lane.b32.xlu0 %v126, 28
    %v128 = vpop.permute.xlu0 %127
    %vm129 = vcmask 261344
    %130 = vst.msk [vmem:[#allocation0] sm:$0x1] %vm129, %v128
    %s131 = scalar_lea.vmem %s0, 6
    %v132 = vld [vmem:[%s131] sm:$0x1]
    %133 = vrot.lane.b32.xlu0 %v132, 24
    %v134 = vpop.permute.xlu0 %133
    %vm135 = vcmask 228544
    %136 = vst.msk [vmem:[#allocation0] sm:$0x1] %vm135, %v134
    %s137 = scalar_lea.vmem %s0, 5
    %v138 = vld [vmem:[%s137] sm:$0x1]
    %139 = vrot.lane.b32.xlu0 %v138, 20
    %v140 = vpop.permute.xlu0 %139
    %vm141 = vcmask 195744
    %142 = vst.msk [vmem:[#allocation0] sm:$0x1] %vm141, %v140
    %s143 = scalar_lea.vmem %s0, 4
    %v144 = vld [vmem:[%s143] sm:$0x1]
    %145 = vrot.lane.b32.xlu0 %v144, 16
    %v146 = vpop.permute.xlu0 %145
    %vm147 = vcmask 162944
    %148 = vst.msk [vmem:[#allocation0] sm:$0x1] %vm147, %v146
    %s149 = scalar_lea.vmem %s0, 3
    %v150 = vld [vmem:[%s149] sm:$0x1]
    %151 = vrot.lane.b32.xlu0 %v150, 12
    %v152 = vpop.permute.xlu0 %151
    %vm153 = vcmask 130144
    %154 = vst.msk [vmem:[#allocation0] sm:$0x1] %vm153, %v152
    %s155 = scalar_lea.vmem %s0, 2
    %v156 = vld [vmem:[%s155] sm:$0x1]
    %157 = vrot.lane.b32.xlu0 %v156, 8
    %v158 = vpop.permute.xlu0 %157
    %vm159 = vcmask 97344
    %160 = vst.msk [vmem:[#allocation0] sm:$0x1] %vm159, %v158
    %s161 = scalar_lea.vmem %s0, 1
    %v162 = vld [vmem:[%s161] sm:$0x1]
    %163 = vrot.lane.b32.xlu0 %v162, 4
    %v164 = vpop.permute.xlu0 %163
    %vm165 = vcmask 64544
    %166 = vst.msk [vmem:[#allocation0] sm:$0x1] %vm165, %v164
    %s168 = sshll.u32 1, 1
    %s169 = ssub.s32 %s168, 1
    %v171 = vld [vmem:[#allocation0] sm:%s169]
    %s172 = sshll.u32 1, 1
    %s173 = ssub.s32 %s172, 1
    %174 = vst [vmem:[%s1] sm:%s173] %v171

// kernel: tile.63
$region0: #{tile.63}
  #allocation0 [shape = 's32[1]{0}', space=sflag, size = 0x4, scoped, tag = 'scoped memory for tile.63']
  %s0 = inlined_call_operand.vmem [shape: f32[8], index: 0, kind: input, shape index: {}]
  %s1 = inlined_call_operand.vmem [shape: f32[14,8], index: 1, kind: output, shape index: {}]
  // Predicated region
  $region2: #{tile.63} parent=0 // pred_check
    _
  $region3: #{tile.63} parent=0 // pred_check_branch
    %3 = sbr.rel (0) target = $region5
  $region4: #{tile.63} parent=0 // pred_region
    _
  $region5: #{tile.63} parent=0 // pred_fallthru
    _
  %v4 = vld [vmem:[%s0] ss:$0 sm:$0xff]
  %5 = vst [vmem:[%s1] sm:$0xff] %v4
  %s6 = scalar_lea.vmem %s1, 8
  %7 = vst [vmem:[%s6] sm:$0xff] %v4

// kernel: tile.64
$region0: #{tile.64}
  %s0 = inlined_call_operand.vmem [shape: f32[14,8], index: 0, kind: input, shape index: {}]
  %s1 = inlined_call_operand.vmem [shape: f32[112], index: 1, kind: output, shape index: {}]
  $region1: #{tile.64} parent=0
    #allocation0 [shape = 'u8[4096]{0}', space=vmem, size = 0x1000, scoped, tag = 'scoped mem for output reshape']
    %v2 = vld [vmem:[%s0] sm:$0x1]
    %vm3 = vcmask 64512
    %4 = vst.msk [vmem:[#allocation0] sm:$0x1] %vm3, %v2
    %s5 = scalar_lea.vmem %s0, 13
    %v6 = vld [vmem:[%s5] sm:$0x1]
    %7 = vrot.lane.b32.xlu0 %v6, 104
    %v8 = vpop.permute.xlu0 %7
    %vm9 = vcmask 917312
    %10 = vst.msk [vmem:[#allocation0] sm:$0x1] %vm9, %v8
    %s11 = scalar_lea.vmem %s0, 12
    %v12 = vld [vmem:[%s11] sm:$0x1]
    %13 = vrot.lane.b32.xlu0 %v12, 96
    %v14 = vpop.permute.xlu0 %13
    %vm15 = vcmask 851712
    %16 = vst.msk [vmem:[#allocation0] sm:$0x1] %vm15, %v14
    %s17 = scalar_lea.vmem %s0, 11
    %v18 = vld [vmem:[%s17] sm:$0x1]
    %19 = vrot.lane.b32.xlu0 %v18, 88
    %v20 = vpop.permute.xlu0 %19
    %vm21 = vcmask 786112
    %22 = vst.msk [vmem:[#allocation0] sm:$0x1] %vm21, %v20
    %s23 = scalar_lea.vmem %s0, 10
    %v24 = vld [vmem:[%s23] sm:$0x1]
    %25 = vrot.lane.b32.xlu0 %v24, 80
    %v26 = vpop.permute.xlu0 %25
    %vm27 = vcmask 720512
    %28 = vst.msk [vmem:[#allocation0] sm:$0x1] %vm27, %v26
    %s29 = scalar_lea.vmem %s0, 9
    %v30 = vld [vmem:[%s29] sm:$0x1]
    %31 = vrot.lane.b32.xlu0 %v30, 72
    %v32 = vpop.permute.xlu0 %31
    %vm33 = vcmask 654912
    %34 = vst.msk [vmem:[#allocation0] sm:$0x1] %vm33, %v32
    %s35 = scalar_lea.vmem %s0, 8
    %v36 = vld [vmem:[%s35] sm:$0x1]
    %37 = vrot.lane.b32.xlu0 %v36, 64
    %v38 = vpop.permute.xlu0 %37
    %vm39 = vcmask 589312
    %40 = vst.msk [vmem:[#allocation0] sm:$0x1] %vm39, %v38
    %s41 = scalar_lea.vmem %s0, 7
    %v42 = vld [vmem:[%s41] sm:$0x1]
    %43 = vrot.lane.b32.xlu0 %v42, 56
    %v44 = vpop.permute.xlu0 %43
    %vm45 = vcmask 523712
    %46 = vst.msk [vmem:[#allocation0] sm:$0x1] %vm45, %v44
    %s47 = scalar_lea.vmem %s0, 6
    %v48 = vld [vmem:[%s47] sm:$0x1]
    %49 = vrot.lane.b32.xlu0 %v48, 48
    %v50 = vpop.permute.xlu0 %49
    %vm51 = vcmask 458112
    %52 = vst.msk [vmem:[#allocation0] sm:$0x1] %vm51, %v50
    %s53 = scalar_lea.vmem %s0, 5
    %v54 = vld [vmem:[%s53] sm:$0x1]
    %55 = vrot.lane.b32.xlu0 %v54, 40
    %v56 = vpop.permute.xlu0 %55
    %vm57 = vcmask 392512
    %58 = vst.msk [vmem:[#allocation0] sm:$0x1] %vm57, %v56
    %s59 = scalar_lea.vmem %s0, 4
    %v60 = vld [vmem:[%s59] sm:$0x1]
    %61 = vrot.lane.b32.xlu0 %v60, 32
    %v62 = vpop.permute.xlu0 %61
    %vm63 = vcmask 326912
    %64 = vst.msk [vmem:[#allocation0] sm:$0x1] %vm63, %v62
    %s65 = scalar_lea.vmem %s0, 3
    %v66 = vld [vmem:[%s65] sm:$0x1]
    %67 = vrot.lane.b32.xlu0 %v66, 24
    %v68 = vpop.permute.xlu0 %67
    %vm69 = vcmask 261312
    %70 = vst.msk [vmem:[#allocation0] sm:$0x1] %vm69, %v68
    %s71 = scalar_lea.vmem %s0, 2
    %v72 = vld [vmem:[%s71] sm:$0x1]
    %73 = vrot.lane.b32.xlu0 %v72, 16
    %v74 = vpop.permute.xlu0 %73
    %vm75 = vcmask 195712
    %76 = vst.msk [vmem:[#allocation0] sm:$0x1] %vm75, %v74
    %s77 = scalar_lea.vmem %s0, 1
    %v78 = vld [vmem:[%s77] sm:$0x1]
    %79 = vrot.lane.b32.xlu0 %v78, 8
    %v80 = vpop.permute.xlu0 %79
    %vm81 = vcmask 130112
    %82 = vst.msk [vmem:[#allocation0] sm:$0x1] %vm81, %v80
    %s84 = sshll.u32 1, 1
    %s85 = ssub.s32 %s84, 1
    %v87 = vld [vmem:[#allocation0] sm:%s85]
    %s88 = sshll.u32 1, 1
    %s89 = ssub.s32 %s88, 1
    %90 = vst [vmem:[%s1] sm:%s89] %v87

// kernel: tile.78
$region0: #{tile.78}
  #allocation0 [shape = 's32[1]{0}', space=sflag, size = 0x4, scoped, tag = 'scoped memory for tile.78']
  %s0 = inlined_call_operand.vmem [shape: f32[16], index: 0, kind: input, shape index: {}]
  %s1 = inlined_call_operand.vmem [shape: f32[7,16], index: 1, kind: output, shape index: {}]
  // Predicated region
  $region2: #{tile.78} parent=0 // pred_check
    _
  $region3: #{tile.78} parent=0 // pred_check_branch
    %3 = sbr.rel (0) target = $region5
  $region4: #{tile.78} parent=0 // pred_region
    _
  $region5: #{tile.78} parent=0 // pred_fallthru
    _
  %v4 = vld [vmem:[%s0] ss:$0 sm:$0xff]
  %5 = vst [vmem:[%s1] sm:$0xff] %v4

// kernel: tile.79
$region0: #{tile.79}
  %s0 = inlined_call_operand.vmem [shape: f32[7,16], index: 0, kind: input, shape index: {}]
  %s1 = inlined_call_operand.vmem [shape: f32[112], index: 1, kind: output, shape index: {}]
  $region1: #{tile.79} parent=0
    #allocation0 [shape = 'u8[4096]{0}', space=vmem, size = 0x1000, scoped, tag = 'scoped mem for output reshape']
    %v2 = vld [vmem:[%s0] sm:$0x1]
    %vm3 = vcmask 130048
    %4 = vst.msk [vmem:[#allocation0] sm:$0x1] %vm3, %v2
    %s5 = scalar_lea.vmem %s0, 6
    %v6 = vld [vmem:[%s5] sm:$0x1]
    %7 = vrot.lane.b32.xlu0 %v6, 96
    %v8 = vpop.permute.xlu0 %7
    %vm9 = vcmask 917248
    %10 = vst.msk [vmem:[#allocation0] sm:$0x1] %vm9, %v8
    %s11 = scalar_lea.vmem %s0, 5
    %v12 = vld [vmem:[%s11] sm:$0x1]
    %13 = vrot.lane.b32.xlu0 %v12, 80
    %v14 = vpop.permute.xlu0 %13
    %vm15 = vcmask 786048
    %16 = vst.msk [vmem:[#allocation0] sm:$0x1] %vm15, %v14
    %s17 = scalar_lea.vmem %s0, 4
    %v18 = vld [vmem:[%s17] sm:$0x1]
    %19 = vrot.lane.b32.xlu0 %v18, 64
    %v20 = vpop.permute.xlu0 %19
    %vm21 = vcmask 654848
    %22 = vst.msk [vmem:[#allocation0] sm:$0x1] %vm21, %v20
    %s23 = scalar_lea.vmem %s0, 3
    %v24 = vld [vmem:[%s23] sm:$0x1]
    %25 = vrot.lane.b32.xlu0 %v24, 48
    %v26 = vpop.permute.xlu0 %25
    %vm27 = vcmask 523648
    %28 = vst.msk [vmem:[#allocation0] sm:$0x1] %vm27, %v26
    %s29 = scalar_lea.vmem %s0, 2
    %v30 = vld [vmem:[%s29] sm:$0x1]
    %31 = vrot.lane.b32.xlu0 %v30, 32
    %v32 = vpop.permute.xlu0 %31
    %vm33 = vcmask 392448
    %34 = vst.msk [vmem:[#allocation0] sm:$0x1] %vm33, %v32
    %s35 = scalar_lea.vmem %s0, 1
    %v36 = vld [vmem:[%s35] sm:$0x1]
    %37 = vrot.lane.b32.xlu0 %v36, 16
    %v38 = vpop.permute.xlu0 %37
    %vm39 = vcmask 261248
    %40 = vst.msk [vmem:[#allocation0] sm:$0x1] %vm39, %v38
    %s42 = sshll.u32 1, 1
    %s43 = ssub.s32 %s42, 1
    %v45 = vld [vmem:[#allocation0] sm:%s43]
    %s46 = sshll.u32 1, 1
    %s47 = ssub.s32 %s46, 1
    %48 = vst [vmem:[%s1] sm:%s47] %v45

// kernel: tile.93
$region0: #{tile.93}
  #allocation0 [shape = 's32[1]{0}', space=sflag, size = 0x4, scoped, tag = 'scoped memory for tile.93']
  %s0 = inlined_call_operand.vmem [shape: f32[32], index: 0, kind: input, shape index: {}]
  %s1 = inlined_call_operand.vmem [shape: f32[4,32], index: 1, kind: output, shape index: {}]
  // Predicated region
  $region2: #{tile.93} parent=0 // pred_check
    _
  $region3: #{tile.93} parent=0 // pred_check_branch
    %3 = sbr.rel (0) target = $region5
  $region4: #{tile.93} parent=0 // pred_region
    _
  $region5: #{tile.93} parent=0 // pred_fallthru
    _
  %v4 = vld [vmem:[%s0] ss:$0 sm:$0xff]
  %5 = vst [vmem:[%s1] sm:$0xf] %v4

// kernel: tile.98
$region0: #{tile.98}
  #allocation0 [shape = 's32[1]{0}', space=sflag, size = 0x4, scoped, tag = 'scoped memory for tile.98']
  %s0 = inlined_call_operand.vmem [shape: f32[16], index: 0, kind: input, shape index: {}]
  %s1 = inlined_call_operand.vmem [shape: f32[8,16], index: 1, kind: output, shape index: {}]
  // Predicated region
  $region2: #{tile.98} parent=0 // pred_check
    _
  $region3: #{tile.98} parent=0 // pred_check_branch
    %3 = sbr.rel (0) target = $region5
  $region4: #{tile.98} parent=0 // pred_region
    _
  $region5: #{tile.98} parent=0 // pred_fallthru
    _
  %v4 = vld [vmem:[%s0] ss:$0 sm:$0xff]
  %5 = vst [vmem:[%s1] sm:$0xff] %v4

// kernel: tile.109
$region0: #{tile.109}
  %s0 = inlined_call_operand.vmem [shape: f32[2,32], index: 0, kind: input, shape index: {}]
  %s1 = inlined_call_operand.vmem [shape: f32[64], index: 1, kind: output, shape index: {}]
  $region1: #{tile.109} parent=0
    #allocation0 [shape = 'u8[4096]{0}', space=vmem, size = 0x1000, scoped, tag = 'scoped mem for output reshape']
    #allocation1 [shape = 'u8[4096]{0}', space=vmem, size = 0x1000, scoped, tag = 'scoped mem for input reshape']
    %s3 = sshll.u32 1, 2
    %s4 = ssub.s32 %s3, 1
    %v5 = vld [vmem:[%s0] sm:%s4]
    %6 = vst [vmem:[#allocation1] sm:%s4] %v5
    %v7 = vld [vmem:[#allocation1] sm:$0x1]
    %vm8 = vcmask 261120
    %9 = vst.msk [vmem:[#allocation0] sm:$0x1] %vm8, %v7
    %s10 = scalar_lea.vmem [#allocation1], 1
    %v11 = vld [vmem:[%s10] sm:$0x1]
    %12 = vrot.lane.b32.xlu0 %v11, 32
    %v13 = vpop.permute.xlu0 %12
    %vm14 = vcmask 523520
    %15 = vst.msk [vmem:[#allocation0] sm:$0x1] %vm14, %v13
    %s17 = sshll.u32 1, 1
    %s18 = ssub.s32 %s17, 1
    %v20 = vld [vmem:[#allocation0] sm:%s18]
    %s21 = sshll.u32 1, 1
    %s22 = ssub.s32 %s21, 1
    %23 = vst [vmem:[%s1] sm:%s22] %v20

// kernel: tile.108
$region0: #{tile.108}
  #allocation0 [shape = 's32[1]{0}', space=sflag, size = 0x4, scoped, tag = 'scoped memory for tile.108']
  %s0 = inlined_call_operand.vmem [shape: f32[32], index: 0, kind: input, shape index: {}]
  %s1 = inlined_call_operand.vmem [shape: f32[2,32], index: 1, kind: output, shape index: {}]
  // Predicated region
  $region2: #{tile.108} parent=0 // pred_check
    _
  $region3: #{tile.108} parent=0 // pred_check_branch
    %3 = sbr.rel (0) target = $region5
  $region4: #{tile.108} parent=0 // pred_region
    _
  $region5: #{tile.108} parent=0 // pred_fallthru
    _
  %v4 = vld [vmem:[%s0] ss:$0 sm:$0xff]
  %5 = vst [vmem:[%s1] sm:$0x3] %v4

// kernel: tile.113
$region0: #{tile.113}
  #allocation0 [shape = 's32[1]{0}', space=sflag, size = 0x4, scoped, tag = 'scoped memory for tile.113']
  %s0 = inlined_call_operand.vmem [shape: f32[16], index: 0, kind: input, shape index: {}]
  %s1 = inlined_call_operand.vmem [shape: f32[4,16], index: 1, kind: output, shape index: {}]
  // Predicated region
  $region2: #{tile.113} parent=0 // pred_check
    _
  $region3: #{tile.113} parent=0 // pred_check_branch
    %3 = sbr.rel (0) target = $region5
  $region4: #{tile.113} parent=0 // pred_region
    _
  $region5: #{tile.113} parent=0 // pred_fallthru
    _
  %v4 = vld [vmem:[%s0] ss:$0 sm:$0xff]
  %5 = vst [vmem:[%s1] sm:$0xf] %v4

// kernel: tile.114
$region0: #{tile.114}
  %s0 = inlined_call_operand.vmem [shape: f32[4,16], index: 0, kind: input, shape index: {}]
  %s1 = inlined_call_operand.vmem [shape: f32[64], index: 1, kind: output, shape index: {}]
  $region1: #{tile.114} parent=0
    #allocation0 [shape = 'u8[4096]{0}', space=vmem, size = 0x1000, scoped, tag = 'scoped mem for output reshape']
    #allocation1 [shape = 'u8[4096]{0}', space=vmem, size = 0x1000, scoped, tag = 'scoped mem for input reshape']
    %s3 = sshll.u32 1, 4
    %s4 = ssub.s32 %s3, 1
    %v5 = vld [vmem:[%s0] sm:%s4]
    %6 = vst [vmem:[#allocation1] sm:%s4] %v5
    %v7 = vld [vmem:[#allocation1] sm:$0x1]
    %vm8 = vcmask 130048
    %9 = vst.msk [vmem:[#allocation0] sm:$0x1] %vm8, %v7
    %s10 = scalar_lea.vmem [#allocation1], 3
    %v11 = vld [vmem:[%s10] sm:$0x1]
    %12 = vrot.lane.b32.xlu0 %v11, 48
    %v13 = vpop.permute.xlu0 %12
    %vm14 = vcmask 523648
    %15 = vst.msk [vmem:[#allocation0] sm:$0x1] %vm14, %v13
    %s16 = scalar_lea.vmem [#allocation1], 2
    %v17 = vld [vmem:[%s16] sm:$0x1]
    %18 = vrot.lane.b32.xlu0 %v17, 32
    %v19 = vpop.permute.xlu0 %18
    %vm20 = vcmask 392448
    %21 = vst.msk [vmem:[#allocation0] sm:$0x1] %vm20, %v19
    %s22 = scalar_lea.vmem [#allocation1], 1
    %v23 = vld [vmem:[%s22] sm:$0x1]
    %24 = vrot.lane.b32.xlu0 %v23, 16
    %v25 = vpop.permute.xlu0 %24
    %vm26 = vcmask 261248
    %27 = vst.msk [vmem:[#allocation0] sm:$0x1] %vm26, %v25
    %s29 = sshll.u32 1, 1
    %s30 = ssub.s32 %s29, 1
    %v32 = vld [vmem:[#allocation0] sm:%s30]
    %s33 = sshll.u32 1, 1
    %s34 = ssub.s32 %s33, 1
    %35 = vst [vmem:[%s1] sm:%s34] %v32

// kernel: encoder_forward.1
$region0: #{encoder_forward.1}
  #allocation0 [shape = 'u32[]', space=smem, size = 0x4, offset = 0x4, fixed_abs, tag = 'smem constant byte address 0x4 - core index']
  #allocation1 [shape = 'u32[144,128]{1,0:T(1,128)}', space=vmem, size = 0x12000, scoped, tag = 'internal scratch']
  %s0 = inlined_call_operand.vmem [shape: bf16[2,32,128], index: 0, kind: input, shape index: {}]
  %s1 = inlined_call_operand.vmem [shape: bf16[19,32,32], index: 1, kind: input, shape index: {}]
  %s2 = inlined_call_operand.vmem [shape: bf16[46,128,128], index: 2, kind: input, shape index: {}]
  %s3 = inlined_call_operand.vmem [shape: f32[14,1,128], index: 3, kind: input, shape index: {}]
  %s4 = inlined_call_operand.vmem [shape: f32[2,32,128], index: 4, kind: output, shape index: {}]
  %s5 = sld [smem:[#allocation0]]
  $region49: #{encoder_forward.1} parent=0
    _
  %s7 = ssub.s32 1, %s5
  %s8 = scalar_select 0, %s7, %s5
  loop: start=0, step=1, limit=4
  $region2: #{encoder_forward.1} parent=0 // loop_pre_header
    _
  $region3: #{encoder_forward.1} parent=0 // loop_header
    %s10 = sphi 0, %s14
    %p11 = scmp.ge.s32.totalorder %s10, 4
    %s20 = sphi 0, %s22
    %s23 = sphi 0, %s20
    %s24 = sphi 0, %s23
    %s40 = sphi 0, %s24
    %s44 = sphi 0, %s44
    %s46 = sphi 0, %s44
    %s47 = sphi 0, %s46
    %s61 = sphi 0, %s47
    %s65 = sphi 0, %s65
    %s67 = sphi 0, %s65
    %s68 = sphi 0, %s67
    %s82 = sphi 0, %s68
    %s86 = sphi 0, %s86
    %s88 = sphi 0, %s86
    %s89 = sphi 0, %s88
    %s103 = sphi 0, %s89
    %s109 = sphi 0, %s111
    %s112 = sphi 0, %s109
    %s113 = sphi 0, %s112
    %s129 = sphi 0, %s113
  $region4: #{encoder_forward.1} parent=0 // loop_header_branch
    %13 = sbr.rel (%p11) target = $region8
  $region5: #{encoder_forward.1} parent=0 // loop_body
    %s15 = ssub.s32 %s10, 1
    %s16 = ssub.s32 %s10, 2
    %s17 = sadd.s32 %s10, 1
    %s18 = ssub.s32 %s10, %s17
    %p19 = scmp.eq.s32.totalorder %s18, 0
    %s21 = sadd.s32 %s20, 1
    %s22 = scalar_select %p19, %s20, %s21
    %p25 = pneg %p19
    %p26 = scmp.eq.s32.totalorder %s10, 1
    %p27 = por %p25, %p26
    %p28 = scmp.ne.s32.totalorder %s20, %s23
    %p29 = scmp.eq.s32.totalorder %s10, 0
    %p30 = por %p28, %p29
    %p31 = scmp.ne.s32.totalorder %s20, %s23
    %p32 = scmp.eq.s32.totalorder %s15, 1
    %p33 = por %p31, %p32
    %p34 = scmp.ne.s32.totalorder %s23, %s24
    %p35 = scmp.eq.s32.totalorder %s15, 0
    %p36 = por %p34, %p35
    %p37 = scmp.ne.s32.totalorder %s23, %s24
    %p38 = scmp.eq.s32.totalorder %s16, 1
    %p39 = por %p37, %p38
    %p41 = scmp.ne.s32.totalorder %s24, %s40
    %p42 = scmp.eq.s32.totalorder %s16, 0
    %p43 = por %p41, %p42
    %s45 = sadd.s32 %s44, 1
    %p48 = scmp.eq.s32.totalorder %s10, 1
    %p49 = scmp.ne.s32.totalorder %s44, %s46
    %p50 = scmp.eq.s32.totalorder %s10, 0
    %p51 = por %p49, %p50
    %p52 = scmp.ne.s32.totalorder %s44, %s46
    %p53 = scmp.eq.s32.totalorder %s15, 1
    %p54 = por %p52, %p53
    %p55 = scmp.ne.s32.totalorder %s46, %s47
    %p56 = scmp.eq.s32.totalorder %s15, 0
    %p57 = por %p55, %p56
    %p58 = scmp.ne.s32.totalorder %s46, %s47
    %p59 = scmp.eq.s32.totalorder %s16, 1
    %p60 = por %p58, %p59
    %p62 = scmp.ne.s32.totalorder %s47, %s61
    %p63 = scmp.eq.s32.totalorder %s16, 0
    %p64 = por %p62, %p63
    %s66 = sadd.s32 %s65, 1
    %p69 = scmp.eq.s32.totalorder %s10, 1
    %p70 = scmp.ne.s32.totalorder %s65, %s67
    %p71 = scmp.eq.s32.totalorder %s10, 0
    %p72 = por %p70, %p71
    %p73 = scmp.ne.s32.totalorder %s65, %s67
    %p74 = scmp.eq.s32.totalorder %s15, 1
    %p75 = por %p73, %p74
    %p76 = scmp.ne.s32.totalorder %s67, %s68
    %p77 = scmp.eq.s32.totalorder %s15, 0
    %p78 = por %p76, %p77
    %p79 = scmp.ne.s32.totalorder %s67, %s68
    %p80 = scmp.eq.s32.totalorder %s16, 1
    %p81 = por %p79, %p80
    %p83 = scmp.ne.s32.totalorder %s68, %s82
    %p84 = scmp.eq.s32.totalorder %s16, 0
    %p85 = por %p83, %p84
    %s87 = sadd.s32 %s86, 1
    %p90 = scmp.eq.s32.totalorder %s10, 1
    %p91 = scmp.ne.s32.totalorder %s86, %s88
    %p92 = scmp.eq.s32.totalorder %s10, 0
    %p93 = por %p91, %p92
    %p94 = scmp.ne.s32.totalorder %s86, %s88
    %p95 = scmp.eq.s32.totalorder %s15, 1
    %p96 = por %p94, %p95
    %p97 = scmp.ne.s32.totalorder %s88, %s89
    %p98 = scmp.eq.s32.totalorder %s15, 0
    %p99 = por %p97, %p98
    %p100 = scmp.ne.s32.totalorder %s88, %s89
    %p101 = scmp.eq.s32.totalorder %s16, 1
    %p102 = por %p100, %p101
    %p104 = scmp.ne.s32.totalorder %s89, %s103
    %p105 = scmp.eq.s32.totalorder %s16, 0
    %p106 = por %p104, %p105
    %s107 = ssub.s32 %s10, %s17
    %p108 = scmp.eq.s32.totalorder %s107, 0
    %s110 = sadd.s32 %s109, 1
    %s111 = scalar_select %p108, %s109, %s110
    %p114 = pneg %p108
    %p115 = scmp.eq.s32.totalorder %s10, 1
    %p116 = por %p114, %p115
    %p117 = scmp.ne.s32.totalorder %s109, %s112
    %p118 = scmp.eq.s32.totalorder %s10, 0
    %p119 = por %p117, %p118
    %p120 = scmp.ne.s32.totalorder %s109, %s112
    %p121 = scmp.eq.s32.totalorder %s15, 1
    %p122 = por %p120, %p121
    %p123 = scmp.ne.s32.totalorder %s112, %s113
    %p124 = scmp.eq.s32.totalorder %s15, 0
    %p125 = por %p123, %p124
    %p126 = scmp.ne.s32.totalorder %s112, %s113
    %p127 = scmp.eq.s32.totalorder %s16, 1
    %p128 = por %p126, %p127
    %p130 = scmp.ne.s32.totalorder %s113, %s129
    %p131 = scmp.eq.s32.totalorder %s16, 0
    %p132 = por %p130, %p131
    %p133 = scmp.le.s32.totalorder 1, %s10
    %p134 = scmp.lt.s32.totalorder %s10, 3
    %p135 = pnand %p133, %p134
    %p136 = pneg %p135
    // Predicated region
    $region9: #{encoder_forward.1} parent=5 // pred_check
      _
    $region10: #{encoder_forward.1} parent=5 // pred_check_branch
      %138 = sbr.rel (%p135) target = $region12
    $region11: #{encoder_forward.1} parent=5 // pred_region
      %s139 = ssub.s32 %s10, 1
      // Predicated region
      $region13: #{encoder_forward.1} parent=11 // pred_check
        %p140 = pneg %p57
      $region14: #{encoder_forward.1} parent=11 // pred_check_branch
        %142 = sbr.rel (%p140) target = $region16
      $region15: #{encoder_forward.1} parent=11 // pred_region
        _
      $region16: #{encoder_forward.1} parent=11 // pred_fallthru
        _
      // Predicated region
      $region17: #{encoder_forward.1} parent=11 // pred_check
        %p143 = pneg %p78
      $region18: #{encoder_forward.1} parent=11 // pred_check_branch
        %145 = sbr.rel (%p143) target = $region20
      $region19: #{encoder_forward.1} parent=11 // pred_region
        _
      $region20: #{encoder_forward.1} parent=11 // pred_fallthru
        _
      // Predicated region
      $region21: #{encoder_forward.1} parent=11 // pred_check
        %p146 = pneg %p99
      $region22: #{encoder_forward.1} parent=11 // pred_check_branch
        %148 = sbr.rel (%p146) target = $region24
      $region23: #{encoder_forward.1} parent=11 // pred_region
        _
      $region24: #{encoder_forward.1} parent=11 // pred_fallthru
        _
    $region12: #{encoder_forward.1} parent=5 // pred_fallthru
      _
    %p149 = scmp.lt.s32.totalorder %s10, 2
    // Predicated region
    $region25: #{encoder_forward.1} parent=5 // pred_check
      %p150 = pneg %p149
    $region26: #{encoder_forward.1} parent=5 // pred_check_branch
      %152 = sbr.rel (%p150) target = $region28
    $region27: #{encoder_forward.1} parent=5 // pred_region
      // Predicated region
      $region29: #{encoder_forward.1} parent=27 // pred_check
        %p153 = pneg %p30
      $region30: #{encoder_forward.1} parent=27 // pred_check_branch
        %155 = sbr.rel (%p153) target = $region32
      $region31: #{encoder_forward.1} parent=27 // pred_region
        %p156 = scmp.lt.s32.totalorder %s10, 1
        %s157 = scalar_select %p156, %s10, 1
        %s158 = smul.addr %s157, 4
        %s159 = smul.addr %s158, 4
        %s160 = scalar_lea.vmem %s0, %s159
      $region32: #{encoder_forward.1} parent=27 // pred_fallthru
        _
    $region28: #{encoder_forward.1} parent=5 // pred_fallthru
      _
    %p161 = scmp.le.s32.totalorder 1, %s10
    %p162 = scmp.lt.s32.totalorder %s10, 3
    %p163 = pnand %p161, %p162
    %p164 = pneg %p163
    // Predicated region
    $region33: #{encoder_forward.1} parent=5 // pred_check
      _
    $region34: #{encoder_forward.1} parent=5 // pred_check_branch
      %166 = sbr.rel (%p163) target = $region36
    $region35: #{encoder_forward.1} parent=5 // pred_region
      %s167 = ssub.s32 %s10, 1
      %p168 = scmp.lt.s32.totalorder %s15, 1
      %s169 = scalar_select %p168, %s15, 1
      %s170 = smul.addr %s169, 4
      %s171 = smul.addr %s170, 4
      %s172 = scalar_lea.vmem %s0, %s171
      %p173 = pneg %p36
      %p174 = pneg %p33
      %p175 = pneg %p57
      %p176 = pneg %p54
      %p177 = pneg %p78
      %p178 = pneg %p75
      %p179 = pneg %p99
      %p180 = pneg %p96
      %p181 = pneg %p125
      %p182 = pneg %p122
      %p183 = scmp.lt.s32.totalorder %s15, 1
      %s184 = scalar_select %p183, %s15, 1
      %s185 = smul.addr %s184, 4
      %s186 = smul.addr %s185, 8
      %s187 = scalar_lea.vmem %s4, %s186
      %p188 = scmp.lt.s32.totalorder %s15, 1
      %s189 = scalar_select %p188, %s15, 1
      %s190 = smul.addr %s189, 4
      %s191 = smul.addr %s190, 4
      %s192 = scalar_lea.vmem %s0, %s191
      %p193 = scmp.lt.s32.totalorder %s15, 1
      %s194 = scalar_select %p193, %s15, 1
      %s195 = smul.addr %s194, 4
      %s196 = smul.addr %s195, 8
      %s197 = scalar_lea.vmem %s4, %s196
      %v199 = vld [vmem:[%s192] sm:$0xf]
      %v200 = vld [vmem:[%s192 + $0x4] sm:$0xf]
      %v201 = vld [vmem:[%s192 + $0x8] sm:$0xf]
      %v202 = vld [vmem:[%s192 + $0xc] sm:$0xf]
      %v203 = vld [vmem:[%s1] sm:$0xf]
      %v204 = vld [vmem:[%s1 + $0x4] sm:$0xf]
      %v205 = vld [vmem:[%s1 + $0x8] sm:$0xf]
      %v206 = vld [vmem:[%s1 + $0xc] sm:$0xf]
      %v211 = vunpack.c.l.b16 %v203
      %v212 = vunpack.c.l.b16 %v204
      %v213 = vunpack.c.l.b16 %v205
      %v214 = vunpack.c.l.b16 %v206
      %v215 = vpack.c.b16 %v212, %v211
      %v216 = vpack.c.b16 %v214, %v213
      %v221 = vunpack.c.l.b16 %v199
      %v222 = vunpack.c.l.b16 %v200
      %v223 = vunpack.c.l.b16 %v201
      %v224 = vunpack.c.l.b16 %v202
      %v225 = vpack.c.b16 %v222, %v221
      %v226 = vpack.c.b16 %v224, %v223
      %vm229 = vcmask 261120
      %v231 = vsel %vm229, %v215, 0
      %v234 = vsel %vm229, %v216, 0
      %236 = vmatprep.subr.bf16.mxu0 0
      %237 = vmatpush1.bf16.msra.mxu0 0
      %238 = vmatprep.subr.bf16.mxu0 0
      %239 = vmatpush1.bf16.msra.mxu0 0
      %240 = vmatprep.subr.bf16.mxu0 0
      %241 = vmatpush1.bf16.msra.mxu0 0
      %242 = vmatprep.subr.bf16.mxu0 0
      %243 = vmatpush1.bf16.msra.mxu0 0
      %244 = vmatprep.subr.bf16.mxu0 0
      %245 = vmatpush1.bf16.msra.mxu0 0
      %246 = vmatprep.subr.bf16.mxu0 0
      %247 = vmatpush1.bf16.msra.mxu0 0
      %248 = vmatprep.subr.bf16.mxu0 0
      %249 = vmatpush1.bf16.msra.mxu0 %v226
      %250 = vmatprep.subr.bf16.mxu0 0
      %251 = vmatpush1.bf16.msra.mxu0 %v225
      %252 = vmatprep.subr.bf16.mxu0 0
      %253 = vmatpush2.bf16.msra.mxu0 0
      %254 = vmatprep.subr.bf16.mxu0 0
      %255 = vmatpush2.bf16.msra.mxu0 0
      %256 = vmatprep.subr.bf16.mxu0 0
      %257 = vmatpush2.bf16.msra.mxu0 0
      %258 = vmatprep.subr.bf16.mxu0 0
      %259 = vmatpush2.bf16.msra.mxu0 0
      %260 = vmatprep.subr.bf16.mxu0 0
      %261 = vmatpush2.bf16.msra.mxu0 0
      %262 = vmatprep.subr.bf16.mxu0 0
      %263 = vmatpush2.bf16.msra.mxu0 0
      %264 = vmatprep.subr.bf16.mxu0 0
      %265 = vmatpush2.bf16.msra.mxu0 0
      %266 = vmatprep.subr.bf16.mxu0 0
      %267 = vmatpush2.bf16.msra.mxu0 0
      %268 = vmatprep.mubr.bf16.mxu0 0
      %269 = vmatmul.mubr.bf16.gmra.mxu0 %v231
      %v270 = vpop.f32.mrf.mxu0
      %v271 = vadd.f32 0.0, %v270
      %v272 = vpop.f32.mrf.mxu0
      %v273 = vpop.f32.mrf.mxu0
      %v274 = vadd.f32 0.0, %v273
      %v275 = vpop.f32.mrf.mxu0
      %276 = vmatprep.mubr.bf16.mxu0 0
      %277 = vmatmul.mubr.bf16.gmra.mxu0 %v234
      %v278 = vpop.f32.mrf.mxu0
      %v279 = vadd.f32 0.0, %v278
      %v280 = vpop.f32.mrf.mxu0
      %v281 = vpop.f32.mrf.mxu0
      %v282 = vadd.f32 0.0, %v281
      %v283 = vpop.f32.mrf.mxu0
      %284 = vdwg.mxu0
      %v285 = vld [vmem:[%s2] sm:$0xf]
      %v286 = vld [vmem:[%s2 + $0x4] sm:$0xf]
      %v287 = vld [vmem:[%s2 + $0x8] sm:$0xf]
      %v288 = vld [vmem:[%s2 + $0xc] sm:$0xf]
      %v289 = vld [vmem:[%s2 + $0x10] sm:$0xf]
      %v290 = vld [vmem:[%s2 + $0x14] sm:$0xf]
      %v291 = vld [vmem:[%s2 + $0x18] sm:$0xf]
      %v292 = vld [vmem:[%s2 + $0x1c] sm:$0xf]
      %v293 = vld [vmem:[%s2 + $0x20] sm:$0xf]
      %v294 = vld [vmem:[%s2 + $0x24] sm:$0xf]
      %v295 = vld [vmem:[%s2 + $0x28] sm:$0xf]
      %v296 = vld [vmem:[%s2 + $0x2c] sm:$0xf]
      %v297 = vld [vmem:[%s2 + $0x30] sm:$0xf]
      %v298 = vld [vmem:[%s2 + $0x34] sm:$0xf]
      %v299 = vld [vmem:[%s2 + $0x38] sm:$0xf]
      %v300 = vld [vmem:[%s2 + $0x3c] sm:$0xf]
      %v301 = vpack.c.bf16 %v274, %v271
      %v302 = vpack.c.bf16 %v282, %v279
      %v319 = vunpack.c.l.b16 %v285
      %v320 = vunpack.c.l.b16 %v286
      %v321 = vunpack.c.l.b16 %v287
      %v322 = vunpack.c.l.b16 %v288
      %v323 = vunpack.c.l.b16 %v289
      %v324 = vunpack.c.l.b16 %v290
      %v325 = vunpack.c.l.b16 %v291
      %v326 = vunpack.c.l.b16 %v292
      %v327 = vunpack.c.l.b16 %v293
      %v328 = vunpack.c.l.b16 %v294
      %v329 = vunpack.c.l.b16 %v295
      %v330 = vunpack.c.l.b16 %v296
      %v331 = vunpack.c.l.b16 %v297
      %v332 = vunpack.c.l.b16 %v298
      %v333 = vunpack.c.l.b16 %v299
      %v334 = vunpack.c.l.b16 %v300
      %v335 = vpack.c.b16 %v320, %v319
      %v336 = vpack.c.b16 %v322, %v321
      %v337 = vpack.c.b16 %v324, %v323
      %v338 = vpack.c.b16 %v326, %v325
      %v339 = vpack.c.b16 %v328, %v327
      %v340 = vpack.c.b16 %v330, %v329
      %v341 = vpack.c.b16 %v332, %v331
      %v342 = vpack.c.b16 %v334, %v333
      %351 = vmatprep.subr.bf16.mxu0 0
      %352 = vmatpush1.bf16.msra.mxu0 %v342
      %353 = vmatprep.subr.bf16.mxu0 0
      %354 = vmatpush1.bf16.msra.mxu0 %v341
      %355 = vmatprep.subr.bf16.mxu0 0
      %356 = vmatpush1.bf16.msra.mxu0 %v340
      %357 = vmatprep.subr.bf16.mxu0 0
      %358 = vmatpush1.bf16.msra.mxu0 %v339
      %359 = vmatprep.subr.bf16.mxu0 0
      %360 = vmatpush1.bf16.msra.mxu0 %v338
      %361 = vmatprep.subr.bf16.mxu0 0
      %362 = vmatpush1.bf16.msra.mxu0 %v337
      %363 = vmatprep.subr.bf16.mxu0 0
      %364 = vmatpush1.bf16.msra.mxu0 %v336
      %365 = vmatprep.subr.bf16.mxu0 0
      %366 = vmatpush1.bf16.msra.mxu0 %v335
      %367 = vmatprep.subr.bf16.mxu0 0
      %368 = vmatpush2.bf16.msra.mxu0 0
      %369 = vmatprep.subr.bf16.mxu0 0
      %370 = vmatpush2.bf16.msra.mxu0 0
      %371 = vmatprep.subr.bf16.mxu0 0
      %372 = vmatpush2.bf16.msra.mxu0 0
      %373 = vmatprep.subr.bf16.mxu0 0
      %374 = vmatpush2.bf16.msra.mxu0 0
      %375 = vmatprep.subr.bf16.mxu0 0
      %376 = vmatpush2.bf16.msra.mxu0 0
      %377 = vmatprep.subr.bf16.mxu0 0
      %378 = vmatpush2.bf16.msra.mxu0 0
      %379 = vmatprep.subr.bf16.mxu0 0
      %380 = vmatpush2.bf16.msra.mxu0 0
      %381 = vmatprep.subr.bf16.mxu0 0
      %382 = vmatpush2.bf16.msra.mxu0 0
      %383 = vmatprep.mubr.bf16.mxu0 0
      %384 = vmatmul.mubr.bf16.gmra.mxu0 %v301
      %v385 = vpop.f32.mrf.mxu0
      %v386 = vadd.f32 0.0, %v385
      %v387 = vpop.f32.mrf.mxu0
      %v388 = vpop.f32.mrf.mxu0
      %v389 = vadd.f32 0.0, %v388
      %v390 = vpop.f32.mrf.mxu0
      %391 = vmatprep.mubr.bf16.mxu0 0
      %392 = vmatmul.mubr.bf16.gmra.mxu0 %v302
      %v393 = vpop.f32.mrf.mxu0
      %v394 = vadd.f32 0.0, %v393
      %v395 = vpop.f32.mrf.mxu0
      %v396 = vpop.f32.mrf.mxu0
      %v397 = vadd.f32 0.0, %v396
      %v398 = vpop.f32.mrf.mxu0
      %399 = vdwg.mxu0
      %s400 = scalar_lea.vmem %s1, 16
      %v401 = vld [vmem:[%s400] sm:$0xf]
      %v402 = vld [vmem:[%s400 + $0x4] sm:$0xf]
      %v403 = vld [vmem:[%s400 + $0x8] sm:$0xf]
      %v404 = vld [vmem:[%s400 + $0xc] sm:$0xf]
      %v405 = vpack.c.bf16 %v389, %v386
      %v406 = vpack.c.bf16 %v397, %v394
      %v411 = vunpack.c.l.b16 %v401
      %v412 = vunpack.c.l.b16 %v402
      %v413 = vunpack.c.l.b16 %v403
      %v414 = vunpack.c.l.b16 %v404
      %v415 = vpack.c.b16 %v412, %v411
      %v416 = vpack.c.b16 %v414, %v413
      %v418 = vsel %vm229, %v415, 0
      %v421 = vsel %vm229, %v416, 0
      %423 = vmatprep.subr.bf16.mxu0 0
      %424 = vmatpush1.bf16.msra.mxu0 0
      %425 = vmatprep.subr.bf16.mxu0 0
      %426 = vmatpush1.bf16.msra.mxu0 0
      %427 = vmatprep.subr.bf16.mxu0 0
      %428 = vmatpush1.bf16.msra.mxu0 0
      %429 = vmatprep.subr.bf16.mxu0 0
      %430 = vmatpush1.bf16.msra.mxu0 0
      %431 = vmatprep.subr.bf16.mxu0 0
      %432 = vmatpush1.bf16.msra.mxu0 0
      %433 = vmatprep.subr.bf16.mxu0 0
      %434 = vmatpush1.bf16.msra.mxu0 0
      %435 = vmatprep.subr.bf16.mxu0 0
      %436 = vmatpush1.bf16.msra.mxu0 %v406
      %437 = vmatprep.subr.bf16.mxu0 0
      %438 = vmatpush1.bf16.msra.mxu0 %v405
      %439 = vmatprep.subr.bf16.mxu0 0
      %440 = vmatpush2.bf16.msra.mxu0 0
      %441 = vmatprep.subr.bf16.mxu0 0
      %442 = vmatpush2.bf16.msra.mxu0 0
      %443 = vmatprep.subr.bf16.mxu0 0
      %444 = vmatpush2.bf16.msra.mxu0 0
      %445 = vmatprep.subr.bf16.mxu0 0
      %446 = vmatpush2.bf16.msra.mxu0 0
      %447 = vmatprep.subr.bf16.mxu0 0
      %448 = vmatpush2.bf16.msra.mxu0 0
      %449 = vmatprep.subr.bf16.mxu0 0
      %450 = vmatpush2.bf16.msra.mxu0 0
      %451 = vmatprep.subr.bf16.mxu0 0
      %452 = vmatpush2.bf16.msra.mxu0 0
      %453 = vmatprep.subr.bf16.mxu0 0
      %454 = vmatpush2.bf16.msra.mxu0 0
      %455 = vmatprep.mubr.bf16.mxu0 0
      %456 = vmatmul.mubr.bf16.gmra.mxu0 %v418
      %v457 = vpop.f32.mrf.mxu0
      %v458 = vadd.f32 0.0, %v457
      %v459 = vpop.f32.mrf.mxu0
      %v460 = vpop.f32.mrf.mxu0
      %v461 = vadd.f32 0.0, %v460
      %v462 = vpop.f32.mrf.mxu0
      %463 = vmatprep.mubr.bf16.mxu0 0
      %464 = vmatmul.mubr.bf16.gmra.mxu0 %v421
      %v465 = vpop.f32.mrf.mxu0
      %v466 = vadd.f32 0.0, %v465
      %v467 = vpop.f32.mrf.mxu0
      %v468 = vpop.f32.mrf.mxu0
      %v469 = vadd.f32 0.0, %v468
      %v470 = vpop.f32.mrf.mxu0
      %471 = vdwg.mxu0
      %s472 = scalar_lea.vmem %s2, 64
      %v473 = vld [vmem:[%s472] sm:$0xf]
      %v474 = vld [vmem:[%s472 + $0x4] sm:$0xf]
      %v475 = vld [vmem:[%s472 + $0x8] sm:$0xf]
      %v476 = vld [vmem:[%s472 + $0xc] sm:$0xf]
      %v477 = vld [vmem:[%s472 + $0x10] sm:$0xf]
      %v478 = vld [vmem:[%s472 + $0x14] sm:$0xf]
      %v479 = vld [vmem:[%s472 + $0x18] sm:$0xf]
      %v480 = vld [vmem:[%s472 + $0x1c] sm:$0xf]
      %v481 = vld [vmem:[%s472 + $0x20] sm:$0xf]
      %v482 = vld [vmem:[%s472 + $0x24] sm:$0xf]
      %v483 = vld [vmem:[%s472 + $0x28] sm:$0xf]
      %v484 = vld [vmem:[%s472 + $0x2c] sm:$0xf]
      %v485 = vld [vmem:[%s472 + $0x30] sm:$0xf]
      %v486 = vld [vmem:[%s472 + $0x34] sm:$0xf]
      %v487 = vld [vmem:[%s472 + $0x38] sm:$0xf]
      %v488 = vld [vmem:[%s472 + $0x3c] sm:$0xf]
      %v489 = vpack.c.bf16 %v461, %v458
      %v490 = vpack.c.bf16 %v469, %v466
      %s491 = scalar_lea.vmem %s2, 128
      %v492 = vld [vmem:[%s491] sm:$0xf]
      %v493 = vld [vmem:[%s491 + $0x4] sm:$0xf]
      %v494 = vld [vmem:[%s491 + $0x8] sm:$0xf]
      %v495 = vld [vmem:[%s491 + $0xc] sm:$0xf]
      %v496 = vld [vmem:[%s491 + $0x10] sm:$0xf]
      %v497 = vld [vmem:[%s491 + $0x14] sm:$0xf]
      %v498 = vld [vmem:[%s491 + $0x18] sm:$0xf]
      %v499 = vld [vmem:[%s491 + $0x1c] sm:$0xf]
      %v500 = vld [vmem:[%s491 + $0x20] sm:$0xf]
      %v501 = vld [vmem:[%s491 + $0x24] sm:$0xf]
      %v502 = vld [vmem:[%s491 + $0x28] sm:$0xf]
      %v503 = vld [vmem:[%s491 + $0x2c] sm:$0xf]
      %v504 = vld [vmem:[%s491 + $0x30] sm:$0xf]
      %v505 = vld [vmem:[%s491 + $0x34] sm:$0xf]
      %v506 = vld [vmem:[%s491 + $0x38] sm:$0xf]
      %v507 = vld [vmem:[%s491 + $0x3c] sm:$0xf]
      %v524 = vunpack.c.l.b16 %v492
      %v525 = vunpack.c.l.b16 %v493
      %v526 = vunpack.c.l.b16 %v494
      %v527 = vunpack.c.l.b16 %v495
      %v528 = vunpack.c.l.b16 %v496
      %v529 = vunpack.c.l.b16 %v497
      %v530 = vunpack.c.l.b16 %v498
      %v531 = vunpack.c.l.b16 %v499
      %v532 = vunpack.c.l.b16 %v500
      %v533 = vunpack.c.l.b16 %v501
      %v534 = vunpack.c.l.b16 %v502
      %v535 = vunpack.c.l.b16 %v503
      %v536 = vunpack.c.l.b16 %v504
      %v537 = vunpack.c.l.b16 %v505
      %v538 = vunpack.c.l.b16 %v506
      %v539 = vunpack.c.l.b16 %v507
      %v540 = vpack.c.b16 %v525, %v524
      %v541 = vpack.c.b16 %v527, %v526
      %v542 = vpack.c.b16 %v529, %v528
      %v543 = vpack.c.b16 %v531, %v530
      %v544 = vpack.c.b16 %v533, %v532
      %v545 = vpack.c.b16 %v535, %v534
      %v546 = vpack.c.b16 %v537, %v536
      %v547 = vpack.c.b16 %v539, %v538
      %556 = vmatprep.subr.bf16.mxu0 0
      %557 = vmatpush1.bf16.msra.mxu0 %v547
      %558 = vmatprep.subr.bf16.mxu0 0
      %559 = vmatpush1.bf16.msra.mxu0 %v546
      %560 = vmatprep.subr.bf16.mxu0 0
      %561 = vmatpush1.bf16.msra.mxu0 %v545
      %562 = vmatprep.subr.bf16.mxu0 0
      %563 = vmatpush1.bf16.msra.mxu0 %v544
      %564 = vmatprep.subr.bf16.mxu0 0
      %565 = vmatpush1.bf16.msra.mxu0 %v543
      %566 = vmatprep.subr.bf16.mxu0 0
      %567 = vmatpush1.bf16.msra.mxu0 %v542
      %568 = vmatprep.subr.bf16.mxu0 0
      %569 = vmatpush1.bf16.msra.mxu0 %v541
      %570 = vmatprep.subr.bf16.mxu0 0
      %571 = vmatpush1.bf16.msra.mxu0 %v540
      %572 = vmatprep.subr.bf16.mxu0 0
      %573 = vmatpush2.bf16.msra.mxu0 0
      %574 = vmatprep.subr.bf16.mxu0 0
      %575 = vmatpush2.bf16.msra.mxu0 0
      %576 = vmatprep.subr.bf16.mxu0 0
      %577 = vmatpush2.bf16.msra.mxu0 0
      %578 = vmatprep.subr.bf16.mxu0 0
      %579 = vmatpush2.bf16.msra.mxu0 0
      %580 = vmatprep.subr.bf16.mxu0 0
      %581 = vmatpush2.bf16.msra.mxu0 0
      %582 = vmatprep.subr.bf16.mxu0 0
      %583 = vmatpush2.bf16.msra.mxu0 0
      %584 = vmatprep.subr.bf16.mxu0 0
      %585 = vmatpush2.bf16.msra.mxu0 0
      %586 = vmatprep.subr.bf16.mxu0 0
      %587 = vmatpush2.bf16.msra.mxu0 0
      %588 = vmatprep.mubr.bf16.mxu0 0
      %589 = vmatmul.mubr.bf16.gmra.mxu0 %v405
      %v590 = vpop.f32.mrf.mxu0
      %v591 = vadd.f32 0.0, %v590
      %v592 = vpop.f32.mrf.mxu0
      %v593 = vpop.f32.mrf.mxu0
      %v594 = vadd.f32 0.0, %v593
      %v595 = vpop.f32.mrf.mxu0
      %596 = vmatprep.mubr.bf16.mxu0 0
      %597 = vmatmul.mubr.bf16.gmra.mxu0 %v406
      %v598 = vpop.f32.mrf.mxu0
      %v599 = vadd.f32 0.0, %v598
      %v600 = vpop.f32.mrf.mxu0
      %v601 = vpop.f32.mrf.mxu0
      %v602 = vadd.f32 0.0, %v601
      %v603 = vpop.f32.mrf.mxu0
      %604 = vdwg.mxu0
      %v621 = vunpack.c.l.b16 %v473
      %v622 = vunpack.c.l.b16 %v474
      %v623 = vunpack.c.l.b16 %v475
      %v624 = vunpack.c.l.b16 %v476
      %v625 = vunpack.c.l.b16 %v477
      %v626 = vunpack.c.l.b16 %v478
      %v627 = vunpack.c.l.b16 %v479
      %v628 = vunpack.c.l.b16 %v480
      %v629 = vunpack.c.l.b16 %v481
      %v630 = vunpack.c.l.b16 %v482
      %v631 = vunpack.c.l.b16 %v483
      %v632 = vunpack.c.l.b16 %v484
      %v633 = vunpack.c.l.b16 %v485
      %v634 = vunpack.c.l.b16 %v486
      %v635 = vunpack.c.l.b16 %v487
      %v636 = vunpack.c.l.b16 %v488
      %v637 = vpack.c.b16 %v622, %v621
      %v638 = vpack.c.b16 %v624, %v623
      %v639 = vpack.c.b16 %v626, %v625
      %v640 = vpack.c.b16 %v628, %v627
      %v641 = vpack.c.b16 %v630, %v629
      %v642 = vpack.c.b16 %v632, %v631
      %v643 = vpack.c.b16 %v634, %v633
      %v644 = vpack.c.b16 %v636, %v635
      %653 = vmatprep.subr.bf16.mxu0 0
      %654 = vmatpush1.bf16.msra.mxu0 %v644
      %655 = vmatprep.subr.bf16.mxu0 0
      %656 = vmatpush1.bf16.msra.mxu0 %v643
      %657 = vmatprep.subr.bf16.mxu0 0
      %658 = vmatpush1.bf16.msra.mxu0 %v642
      %659 = vmatprep.subr.bf16.mxu0 0
      %660 = vmatpush1.bf16.msra.mxu0 %v641
      %661 = vmatprep.subr.bf16.mxu0 0
      %662 = vmatpush1.bf16.msra.mxu0 %v640
      %663 = vmatprep.subr.bf16.mxu0 0
      %664 = vmatpush1.bf16.msra.mxu0 %v639
      %665 = vmatprep.subr.bf16.mxu0 0
      %666 = vmatpush1.bf16.msra.mxu0 %v638
      %667 = vmatprep.subr.bf16.mxu0 0
      %668 = vmatpush1.bf16.msra.mxu0 %v637
      %669 = vmatprep.subr.bf16.mxu0 0
      %670 = vmatpush2.bf16.msra.mxu0 0
      %671 = vmatprep.subr.bf16.mxu0 0
      %672 = vmatpush2.bf16.msra.mxu0 0
      %673 = vmatprep.subr.bf16.mxu0 0
      %674 = vmatpush2.bf16.msra.mxu0 0
      %675 = vmatprep.subr.bf16.mxu0 0
      %676 = vmatpush2.bf16.msra.mxu0 0
      %677 = vmatprep.subr.bf16.mxu0 0
      %678 = vmatpush2.bf16.msra.mxu0 0
      %679 = vmatprep.subr.bf16.mxu0 0
      %680 = vmatpush2.bf16.msra.mxu0 0
      %681 = vmatprep.subr.bf16.mxu0 0
      %682 = vmatpush2.bf16.msra.mxu0 0
      %683 = vmatprep.subr.bf16.mxu0 0
      %684 = vmatpush2.bf16.msra.mxu0 0
      %685 = vmatprep.mubr.bf16.mxu0 0
      %686 = vmatmul.mubr.bf16.gmra.mxu0 %v489
      %v687 = vpop.f32.mrf.mxu0
      %v688 = vadd.f32 %v591, %v687
      %v689 = vpop.f32.mrf.mxu0
      %v690 = vpop.f32.mrf.mxu0
      %v691 = vadd.f32 %v594, %v690
      %v692 = vpop.f32.mrf.mxu0
      %693 = vmatprep.mubr.bf16.mxu0 0
      %694 = vmatmul.mubr.bf16.gmra.mxu0 %v490
      %v695 = vpop.f32.mrf.mxu0
      %v696 = vadd.f32 %v599, %v695
      %v697 = vpop.f32.mrf.mxu0
      %v698 = vpop.f32.mrf.mxu0
      %v699 = vadd.f32 %v602, %v698
      %v700 = vpop.f32.mrf.mxu0
      %701 = vdwg.mxu0
      %s702 = scalar_lea.vmem %s1, 32
      %v703 = vld [vmem:[%s702] sm:$0xf]
      %v704 = vld [vmem:[%s702 + $0x4] sm:$0xf]
      %v705 = vld [vmem:[%s702 + $0x8] sm:$0xf]
      %v706 = vld [vmem:[%s702 + $0xc] sm:$0xf]
      %v711 = vunpack.c.l.b16 %v703
      %v712 = vunpack.c.l.b16 %v704
      %v713 = vunpack.c.l.b16 %v705
      %v714 = vunpack.c.l.b16 %v706
      %v715 = vpack.c.b16 %v712, %v711
      %v716 = vpack.c.b16 %v714, %v713
      %v718 = vsel %vm229, %v715, 0
      %v721 = vsel %vm229, %v716, 0
      %723 = vmatprep.subr.bf16.mxu0 0
      %724 = vmatpush1.bf16.msra.mxu0 0
      %725 = vmatprep.subr.bf16.mxu0 0
      %726 = vmatpush1.bf16.msra.mxu0 0
      %727 = vmatprep.subr.bf16.mxu0 0
      %728 = vmatpush1.bf16.msra.mxu0 0
      %729 = vmatprep.subr.bf16.mxu0 0
      %730 = vmatpush1.bf16.msra.mxu0 0
      %731 = vmatprep.subr.bf16.mxu0 0
      %732 = vmatpush1.bf16.msra.mxu0 0
      %733 = vmatprep.subr.bf16.mxu0 0
      %734 = vmatpush1.bf16.msra.mxu0 0
      %735 = vmatprep.subr.bf16.mxu0 0
      %736 = vmatpush1.bf16.msra.mxu0 %v406
      %737 = vmatprep.subr.bf16.mxu0 0
      %738 = vmatpush1.bf16.msra.mxu0 %v405
      %739 = vmatprep.subr.bf16.mxu0 0
      %740 = vmatpush2.bf16.msra.mxu0 0
      %741 = vmatprep.subr.bf16.mxu0 0
      %742 = vmatpush2.bf16.msra.mxu0 0
      %743 = vmatprep.subr.bf16.mxu0 0
      %744 = vmatpush2.bf16.msra.mxu0 0
      %745 = vmatprep.subr.bf16.mxu0 0
      %746 = vmatpush2.bf16.msra.mxu0 0
      %747 = vmatprep.subr.bf16.mxu0 0
      %748 = vmatpush2.bf16.msra.mxu0 0
      %749 = vmatprep.subr.bf16.mxu0 0
      %750 = vmatpush2.bf16.msra.mxu0 0
      %751 = vmatprep.subr.bf16.mxu0 0
      %752 = vmatpush2.bf16.msra.mxu0 0
      %753 = vmatprep.subr.bf16.mxu0 0
      %754 = vmatpush2.bf16.msra.mxu0 0
      %755 = vmatprep.mubr.bf16.mxu0 0
      %756 = vmatmul.mubr.bf16.gmra.mxu0 %v718
      %v757 = vpop.f32.mrf.mxu0
      %v758 = vadd.f32 0.0, %v757
      %v759 = vpop.f32.mrf.mxu0
      %v760 = vpop.f32.mrf.mxu0
      %v761 = vadd.f32 0.0, %v760
      %v762 = vpop.f32.mrf.mxu0
      %763 = vmatprep.mubr.bf16.mxu0 0
      %764 = vmatmul.mubr.bf16.gmra.mxu0 %v721
      %v765 = vpop.f32.mrf.mxu0
      %v766 = vadd.f32 0.0, %v765
      %v767 = vpop.f32.mrf.mxu0
      %v768 = vpop.f32.mrf.mxu0
      %v769 = vadd.f32 0.0, %v768
      %v770 = vpop.f32.mrf.mxu0
      %771 = vdwg.mxu0
      %s772 = scalar_lea.vmem %s2, 192
      %v773 = vld [vmem:[%s772] sm:$0xf]
      %v774 = vld [vmem:[%s772 + $0x4] sm:$0xf]
      %v775 = vld [vmem:[%s772 + $0x8] sm:$0xf]
      %v776 = vld [vmem:[%s772 + $0xc] sm:$0xf]
      %v777 = vld [vmem:[%s772 + $0x10] sm:$0xf]
      %v778 = vld [vmem:[%s772 + $0x14] sm:$0xf]
      %v779 = vld [vmem:[%s772 + $0x18] sm:$0xf]
      %v780 = vld [vmem:[%s772 + $0x1c] sm:$0xf]
      %v781 = vld [vmem:[%s772 + $0x20] sm:$0xf]
      %v782 = vld [vmem:[%s772 + $0x24] sm:$0xf]
      %v783 = vld [vmem:[%s772 + $0x28] sm:$0xf]
      %v784 = vld [vmem:[%s772 + $0x2c] sm:$0xf]
      %v785 = vld [vmem:[%s772 + $0x30] sm:$0xf]
      %v786 = vld [vmem:[%s772 + $0x34] sm:$0xf]
      %v787 = vld [vmem:[%s772 + $0x38] sm:$0xf]
      %v788 = vld [vmem:[%s772 + $0x3c] sm:$0xf]
      %v789 = vpack.c.bf16 %v761, %v758
      %v790 = vpack.c.bf16 %v769, %v766
      %v807 = vunpack.c.l.b16 %v773
      %v808 = vunpack.c.l.b16 %v774
      %v809 = vunpack.c.l.b16 %v775
      %v810 = vunpack.c.l.b16 %v776
      %v811 = vunpack.c.l.b16 %v777
      %v812 = vunpack.c.l.b16 %v778
      %v813 = vunpack.c.l.b16 %v779
      %v814 = vunpack.c.l.b16 %v780
      %v815 = vunpack.c.l.b16 %v781
      %v816 = vunpack.c.l.b16 %v782
      %v817 = vunpack.c.l.b16 %v783
      %v818 = vunpack.c.l.b16 %v784
      %v819 = vunpack.c.l.b16 %v785
      %v820 = vunpack.c.l.b16 %v786
      %v821 = vunpack.c.l.b16 %v787
      %v822 = vunpack.c.l.b16 %v788
      %v823 = vpack.c.b16 %v808, %v807
      %v824 = vpack.c.b16 %v810, %v809
      %v825 = vpack.c.b16 %v812, %v811
      %v826 = vpack.c.b16 %v814, %v813
      %v827 = vpack.c.b16 %v816, %v815
      %v828 = vpack.c.b16 %v818, %v817
      %v829 = vpack.c.b16 %v820, %v819
      %v830 = vpack.c.b16 %v822, %v821
      %839 = vmatprep.subr.bf16.mxu0 0
      %840 = vmatpush1.bf16.msra.mxu0 %v830
      %841 = vmatprep.subr.bf16.mxu0 0
      %842 = vmatpush1.bf16.msra.mxu0 %v829
      %843 = vmatprep.subr.bf16.mxu0 0
      %844 = vmatpush1.bf16.msra.mxu0 %v828
      %845 = vmatprep.subr.bf16.mxu0 0
      %846 = vmatpush1.bf16.msra.mxu0 %v827
      %847 = vmatprep.subr.bf16.mxu0 0
      %848 = vmatpush1.bf16.msra.mxu0 %v826
      %849 = vmatprep.subr.bf16.mxu0 0
      %850 = vmatpush1.bf16.msra.mxu0 %v825
      %851 = vmatprep.subr.bf16.mxu0 0
      %852 = vmatpush1.bf16.msra.mxu0 %v824
      %853 = vmatprep.subr.bf16.mxu0 0
      %854 = vmatpush1.bf16.msra.mxu0 %v823
      %855 = vmatprep.subr.bf16.mxu0 0
      %856 = vmatpush2.bf16.msra.mxu0 0
      %857 = vmatprep.subr.bf16.mxu0 0
      %858 = vmatpush2.bf16.msra.mxu0 0
      %859 = vmatprep.subr.bf16.mxu0 0
      %860 = vmatpush2.bf16.msra.mxu0 0
      %861 = vmatprep.subr.bf16.mxu0 0
      %862 = vmatpush2.bf16.msra.mxu0 0
      %863 = vmatprep.subr.bf16.mxu0 0
      %864 = vmatpush2.bf16.msra.mxu0 0
      %865 = vmatprep.subr.bf16.mxu0 0
      %866 = vmatpush2.bf16.msra.mxu0 0
      %867 = vmatprep.subr.bf16.mxu0 0
      %868 = vmatpush2.bf16.msra.mxu0 0
      %869 = vmatprep.subr.bf16.mxu0 0
      %870 = vmatpush2.bf16.msra.mxu0 0
      %871 = vmatprep.mubr.bf16.mxu0 0
      %872 = vmatmul.mubr.bf16.gmra.mxu0 %v789
      %v873 = vpop.f32.mrf.mxu0
      %v874 = vadd.f32 0.0, %v873
      %v875 = vpop.f32.mrf.mxu0
      %v876 = vpop.f32.mrf.mxu0
      %v877 = vadd.f32 0.0, %v876
      %v878 = vpop.f32.mrf.mxu0
      %879 = vmatprep.mubr.bf16.mxu0 0
      %880 = vmatmul.mubr.bf16.gmra.mxu0 %v790
      %v881 = vpop.f32.mrf.mxu0
      %v882 = vadd.f32 0.0, %v881
      %v883 = vpop.f32.mrf.mxu0
      %v884 = vpop.f32.mrf.mxu0
      %v885 = vadd.f32 0.0, %v884
      %v886 = vpop.f32.mrf.mxu0
      %887 = vdwg.mxu0
      %v888 = vadd.f32 %v688, %v874
      %v889 = vadd.f32 %v691, %v877
      %v890 = vadd.f32 %v696, %v882
      %v891 = vadd.f32 %v699, %v885
      %v892 = vld [vmem:[%s3] sm:$0x1]
      %v894 = vlaneseq
      %v895 = vshrl.u32 %v894, 7
      %v896 = vsub.s32 0, %v895
      %v897 = vrot.slane %v892, %v896
      %v899 = vadd.f32 %v888, %v897
      %v900 = vadd.f32 %v889, %v897
      %v901 = vadd.f32 %v890, %v897
      %v902 = vadd.f32 %v891, %v897
      %s903 = scalar_lea.vmem %s1, 48
      %v904 = vld [vmem:[%s903] sm:$0xf]
      %v905 = vld [vmem:[%s903 + $0x4] sm:$0xf]
      %v906 = vld [vmem:[%s903 + $0x8] sm:$0xf]
      %v907 = vld [vmem:[%s903 + $0xc] sm:$0xf]
      %v912 = vunpack.c.l.b16 %v904
      %v913 = vunpack.c.l.b16 %v905
      %v914 = vunpack.c.l.b16 %v906
      %v915 = vunpack.c.l.b16 %v907
      %v916 = vpack.c.b16 %v913, %v912
      %v917 = vpack.c.b16 %v915, %v914
      %v919 = vsel %vm229, %v916, 0
      %v922 = vsel %vm229, %v917, 0
      %924 = vmatprep.subr.bf16.mxu0 0
      %925 = vmatpush1.bf16.msra.mxu0 0
      %926 = vmatprep.subr.bf16.mxu0 0
      %927 = vmatpush1.bf16.msra.mxu0 0
      %928 = vmatprep.subr.bf16.mxu0 0
      %929 = vmatpush1.bf16.msra.mxu0 0
      %930 = vmatprep.subr.bf16.mxu0 0
      %931 = vmatpush1.bf16.msra.mxu0 0
      %932 = vmatprep.subr.bf16.mxu0 0
      %933 = vmatpush1.bf16.msra.mxu0 0
      %934 = vmatprep.subr.bf16.mxu0 0
      %935 = vmatpush1.bf16.msra.mxu0 0
      %936 = vmatprep.subr.bf16.mxu0 0
      %937 = vmatpush1.bf16.msra.mxu0 %v226
      %938 = vmatprep.subr.bf16.mxu0 0
      %939 = vmatpush1.bf16.msra.mxu0 %v225
      %940 = vmatprep.subr.bf16.mxu0 0
      %941 = vmatpush2.bf16.msra.mxu0 0
      %942 = vmatprep.subr.bf16.mxu0 0
      %943 = vmatpush2.bf16.msra.mxu0 0
      %944 = vmatprep.subr.bf16.mxu0 0
      %945 = vmatpush2.bf16.msra.mxu0 0
      %946 = vmatprep.subr.bf16.mxu0 0
      %947 = vmatpush2.bf16.msra.mxu0 0
      %948 = vmatprep.subr.bf16.mxu0 0
      %949 = vmatpush2.bf16.msra.mxu0 0
      %950 = vmatprep.subr.bf16.mxu0 0
      %951 = vmatpush2.bf16.msra.mxu0 0
      %952 = vmatprep.subr.bf16.mxu0 0
      %953 = vmatpush2.bf16.msra.mxu0 0
      %954 = vmatprep.subr.bf16.mxu0 0
      %955 = vmatpush2.bf16.msra.mxu0 0
      %956 = vmatprep.mubr.bf16.mxu0 0
      %957 = vmatmul.mubr.bf16.gmra.mxu0 %v919
      %v958 = vpop.f32.mrf.mxu0
      %v959 = vadd.f32 0.0, %v958
      %v960 = vpop.f32.mrf.mxu0
      %v961 = vpop.f32.mrf.mxu0
      %v962 = vadd.f32 0.0, %v961
      %v963 = vpop.f32.mrf.mxu0
      %964 = vmatprep.mubr.bf16.mxu0 0
      %965 = vmatmul.mubr.bf16.gmra.mxu0 %v922
      %v966 = vpop.f32.mrf.mxu0
      %v967 = vadd.f32 0.0, %v966
      %v968 = vpop.f32.mrf.mxu0
      %v969 = vpop.f32.mrf.mxu0
      %v970 = vadd.f32 0.0, %v969
      %v971 = vpop.f32.mrf.mxu0
      %972 = vdwg.mxu0
      %s973 = scalar_lea.vmem %s2, 256
      %v974 = vld [vmem:[%s973] sm:$0xf]
      %v975 = vld [vmem:[%s973 + $0x4] sm:$0xf]
      %v976 = vld [vmem:[%s973 + $0x8] sm:$0xf]
      %v977 = vld [vmem:[%s973 + $0xc] sm:$0xf]
      %v978 = vld [vmem:[%s973 + $0x10] sm:$0xf]
      %v979 = vld [vmem:[%s973 + $0x14] sm:$0xf]
      %v980 = vld [vmem:[%s973 + $0x18] sm:$0xf]
      %v981 = vld [vmem:[%s973 + $0x1c] sm:$0xf]
      %v982 = vld [vmem:[%s973 + $0x20] sm:$0xf]
      %v983 = vld [vmem:[%s973 + $0x24] sm:$0xf]
      %v984 = vld [vmem:[%s973 + $0x28] sm:$0xf]
      %v985 = vld [vmem:[%s973 + $0x2c] sm:$0xf]
      %v986 = vld [vmem:[%s973 + $0x30] sm:$0xf]
      %v987 = vld [vmem:[%s973 + $0x34] sm:$0xf]
      %v988 = vld [vmem:[%s973 + $0x38] sm:$0xf]
      %v989 = vld [vmem:[%s973 + $0x3c] sm:$0xf]
      %v990 = vpack.c.bf16 %v962, %v959
      %v991 = vpack.c.bf16 %v970, %v967
      %s992 = scalar_lea.vmem %s2, 320
      %v993 = vld [vmem:[%s992] sm:$0xf]
      %v994 = vld [vmem:[%s992 + $0x4] sm:$0xf]
      %v995 = vld [vmem:[%s992 + $0x8] sm:$0xf]
      %v996 = vld [vmem:[%s992 + $0xc] sm:$0xf]
      %v997 = vld [vmem:[%s992 + $0x10] sm:$0xf]
      %v998 = vld [vmem:[%s992 + $0x14] sm:$0xf]
      %v999 = vld [vmem:[%s992 + $0x18] sm:$0xf]
      %v1000 = vld [vmem:[%s992 + $0x1c] sm:$0xf]
      %v1001 = vld [vmem:[%s992 + $0x20] sm:$0xf]
      %v1002 = vld [vmem:[%s992 + $0x24] sm:$0xf]
      %v1003 = vld [vmem:[%s992 + $0x28] sm:$0xf]
      %v1004 = vld [vmem:[%s992 + $0x2c] sm:$0xf]
      %v1005 = vld [vmem:[%s992 + $0x30] sm:$0xf]
      %v1006 = vld [vmem:[%s992 + $0x34] sm:$0xf]
      %v1007 = vld [vmem:[%s992 + $0x38] sm:$0xf]
      %v1008 = vld [vmem:[%s992 + $0x3c] sm:$0xf]
      %v1025 = vunpack.c.l.b16 %v993
      %v1026 = vunpack.c.l.b16 %v994
      %v1027 = vunpack.c.l.b16 %v995
      %v1028 = vunpack.c.l.b16 %v996
      %v1029 = vunpack.c.l.b16 %v997
      %v1030 = vunpack.c.l.b16 %v998
      %v1031 = vunpack.c.l.b16 %v999
      %v1032 = vunpack.c.l.b16 %v1000
      %v1033 = vunpack.c.l.b16 %v1001
      %v1034 = vunpack.c.l.b16 %v1002
      %v1035 = vunpack.c.l.b16 %v1003
      %v1036 = vunpack.c.l.b16 %v1004
      %v1037 = vunpack.c.l.b16 %v1005
      %v1038 = vunpack.c.l.b16 %v1006
      %v1039 = vunpack.c.l.b16 %v1007
      %v1040 = vunpack.c.l.b16 %v1008
      %v1041 = vpack.c.b16 %v1026, %v1025
      %v1042 = vpack.c.b16 %v1028, %v1027
      %v1043 = vpack.c.b16 %v1030, %v1029
      %v1044 = vpack.c.b16 %v1032, %v1031
      %v1045 = vpack.c.b16 %v1034, %v1033
      %v1046 = vpack.c.b16 %v1036, %v1035
      %v1047 = vpack.c.b16 %v1038, %v1037
      %v1048 = vpack.c.b16 %v1040, %v1039
      %1057 = vmatprep.subr.bf16.mxu0 0
      %1058 = vmatpush1.bf16.msra.mxu0 %v1048
      %1059 = vmatprep.subr.bf16.mxu0 0
      %1060 = vmatpush1.bf16.msra.mxu0 %v1047
      %1061 = vmatprep.subr.bf16.mxu0 0
      %1062 = vmatpush1.bf16.msra.mxu0 %v1046
      %1063 = vmatprep.subr.bf16.mxu0 0
      %1064 = vmatpush1.bf16.msra.mxu0 %v1045
      %1065 = vmatprep.subr.bf16.mxu0 0
      %1066 = vmatpush1.bf16.msra.mxu0 %v1044
      %1067 = vmatprep.subr.bf16.mxu0 0
      %1068 = vmatpush1.bf16.msra.mxu0 %v1043
      %1069 = vmatprep.subr.bf16.mxu0 0
      %1070 = vmatpush1.bf16.msra.mxu0 %v1042
      %1071 = vmatprep.subr.bf16.mxu0 0
      %1072 = vmatpush1.bf16.msra.mxu0 %v1041
      %1073 = vmatprep.subr.bf16.mxu0 0
      %1074 = vmatpush2.bf16.msra.mxu0 0
      %1075 = vmatprep.subr.bf16.mxu0 0
      %1076 = vmatpush2.bf16.msra.mxu0 0
      %1077 = vmatprep.subr.bf16.mxu0 0
      %1078 = vmatpush2.bf16.msra.mxu0 0
      %1079 = vmatprep.subr.bf16.mxu0 0
      %1080 = vmatpush2.bf16.msra.mxu0 0
      %1081 = vmatprep.subr.bf16.mxu0 0
      %1082 = vmatpush2.bf16.msra.mxu0 0
      %1083 = vmatprep.subr.bf16.mxu0 0
      %1084 = vmatpush2.bf16.msra.mxu0 0
      %1085 = vmatprep.subr.bf16.mxu0 0
      %1086 = vmatpush2.bf16.msra.mxu0 0
      %1087 = vmatprep.subr.bf16.mxu0 0
      %1088 = vmatpush2.bf16.msra.mxu0 0
      %1089 = vmatprep.mubr.bf16.mxu0 0
      %1090 = vmatmul.mubr.bf16.gmra.mxu0 %v225
      %v1091 = vpop.f32.mrf.mxu0
      %v1092 = vadd.f32 0.0, %v1091
      %v1093 = vpop.f32.mrf.mxu0
      %v1094 = vpop.f32.mrf.mxu0
      %v1095 = vadd.f32 0.0, %v1094
      %v1096 = vpop.f32.mrf.mxu0
      %1097 = vmatprep.mubr.bf16.mxu0 0
      %1098 = vmatmul.mubr.bf16.gmra.mxu0 %v226
      %v1099 = vpop.f32.mrf.mxu0
      %v1100 = vadd.f32 0.0, %v1099
      %v1101 = vpop.f32.mrf.mxu0
      %v1102 = vpop.f32.mrf.mxu0
      %v1103 = vadd.f32 0.0, %v1102
      %v1104 = vpop.f32.mrf.mxu0
      %1105 = vdwg.mxu0
      %v1122 = vunpack.c.l.b16 %v974
      %v1123 = vunpack.c.l.b16 %v975
      %v1124 = vunpack.c.l.b16 %v976
      %v1125 = vunpack.c.l.b16 %v977
      %v1126 = vunpack.c.l.b16 %v978
      %v1127 = vunpack.c.l.b16 %v979
      %v1128 = vunpack.c.l.b16 %v980
      %v1129 = vunpack.c.l.b16 %v981
      %v1130 = vunpack.c.l.b16 %v982
      %v1131 = vunpack.c.l.b16 %v983
      %v1132 = vunpack.c.l.b16 %v984
      %v1133 = vunpack.c.l.b16 %v985
      %v1134 = vunpack.c.l.b16 %v986
      %v1135 = vunpack.c.l.b16 %v987
      %v1136 = vunpack.c.l.b16 %v988
      %v1137 = vunpack.c.l.b16 %v989
      %v1138 = vpack.c.b16 %v1123, %v1122
      %v1139 = vpack.c.b16 %v1125, %v1124
      %v1140 = vpack.c.b16 %v1127, %v1126
      %v1141 = vpack.c.b16 %v1129, %v1128
      %v1142 = vpack.c.b16 %v1131, %v1130
      %v1143 = vpack.c.b16 %v1133, %v1132
      %v1144 = vpack.c.b16 %v1135, %v1134
      %v1145 = vpack.c.b16 %v1137, %v1136
      %1154 = vmatprep.subr.bf16.mxu0 0
      %1155 = vmatpush1.bf16.msra.mxu0 %v1145
      %1156 = vmatprep.subr.bf16.mxu0 0
      %1157 = vmatpush1.bf16.msra.mxu0 %v1144
      %1158 = vmatprep.subr.bf16.mxu0 0
      %1159 = vmatpush1.bf16.msra.mxu0 %v1143
      %1160 = vmatprep.subr.bf16.mxu0 0
      %1161 = vmatpush1.bf16.msra.mxu0 %v1142
      %1162 = vmatprep.subr.bf16.mxu0 0
      %1163 = vmatpush1.bf16.msra.mxu0 %v1141
      %1164 = vmatprep.subr.bf16.mxu0 0
      %1165 = vmatpush1.bf16.msra.mxu0 %v1140
      %1166 = vmatprep.subr.bf16.mxu0 0
      %1167 = vmatpush1.bf16.msra.mxu0 %v1139
      %1168 = vmatprep.subr.bf16.mxu0 0
      %1169 = vmatpush1.bf16.msra.mxu0 %v1138
      %1170 = vmatprep.subr.bf16.mxu0 0
      %1171 = vmatpush2.bf16.msra.mxu0 0
      %1172 = vmatprep.subr.bf16.mxu0 0
      %1173 = vmatpush2.bf16.msra.mxu0 0
      %1174 = vmatprep.subr.bf16.mxu0 0
      %1175 = vmatpush2.bf16.msra.mxu0 0
      %1176 = vmatprep.subr.bf16.mxu0 0
      %1177 = vmatpush2.bf16.msra.mxu0 0
      %1178 = vmatprep.subr.bf16.mxu0 0
      %1179 = vmatpush2.bf16.msra.mxu0 0
      %1180 = vmatprep.subr.bf16.mxu0 0
      %1181 = vmatpush2.bf16.msra.mxu0 0
      %1182 = vmatprep.subr.bf16.mxu0 0
      %1183 = vmatpush2.bf16.msra.mxu0 0
      %1184 = vmatprep.subr.bf16.mxu0 0
      %1185 = vmatpush2.bf16.msra.mxu0 0
      %1186 = vmatprep.mubr.bf16.mxu0 0
      %1187 = vmatmul.mubr.bf16.gmra.mxu0 %v990
      %v1188 = vpop.f32.mrf.mxu0
      %v1189 = vadd.f32 %v1092, %v1188
      %v1190 = vpop.f32.mrf.mxu0
      %v1191 = vpop.f32.mrf.mxu0
      %v1192 = vadd.f32 %v1095, %v1191
      %v1193 = vpop.f32.mrf.mxu0
      %1194 = vmatprep.mubr.bf16.mxu0 0
      %1195 = vmatmul.mubr.bf16.gmra.mxu0 %v991
      %v1196 = vpop.f32.mrf.mxu0
      %v1197 = vadd.f32 %v1100, %v1196
      %v1198 = vpop.f32.mrf.mxu0
      %v1199 = vpop.f32.mrf.mxu0
      %v1200 = vadd.f32 %v1103, %v1199
      %v1201 = vpop.f32.mrf.mxu0
      %1202 = vdwg.mxu0
      %s1203 = scalar_lea.vmem %s1, 64
      %v1204 = vld [vmem:[%s1203] sm:$0xf]
      %v1205 = vld [vmem:[%s1203 + $0x4] sm:$0xf]
      %v1206 = vld [vmem:[%s1203 + $0x8] sm:$0xf]
      %v1207 = vld [vmem:[%s1203 + $0xc] sm:$0xf]
      %v1212 = vunpack.c.l.b16 %v1204
      %v1213 = vunpack.c.l.b16 %v1205
      %v1214 = vunpack.c.l.b16 %v1206
      %v1215 = vunpack.c.l.b16 %v1207
      %v1216 = vpack.c.b16 %v1213, %v1212
      %v1217 = vpack.c.b16 %v1215, %v1214
      %v1219 = vsel %vm229, %v1216, 0
      %v1222 = vsel %vm229, %v1217, 0
      %1224 = vmatprep.subr.bf16.mxu0 0
      %1225 = vmatpush1.bf16.msra.mxu0 0
      %1226 = vmatprep.subr.bf16.mxu0 0
      %1227 = vmatpush1.bf16.msra.mxu0 0
      %1228 = vmatprep.subr.bf16.mxu0 0
      %1229 = vmatpush1.bf16.msra.mxu0 0
      %1230 = vmatprep.subr.bf16.mxu0 0
      %1231 = vmatpush1.bf16.msra.mxu0 0
      %1232 = vmatprep.subr.bf16.mxu0 0
      %1233 = vmatpush1.bf16.msra.mxu0 0
      %1234 = vmatprep.subr.bf16.mxu0 0
      %1235 = vmatpush1.bf16.msra.mxu0 0
      %1236 = vmatprep.subr.bf16.mxu0 0
      %1237 = vmatpush1.bf16.msra.mxu0 %v226
      %1238 = vmatprep.subr.bf16.mxu0 0
      %1239 = vmatpush1.bf16.msra.mxu0 %v225
      %1240 = vmatprep.subr.bf16.mxu0 0
      %1241 = vmatpush2.bf16.msra.mxu0 0
      %1242 = vmatprep.subr.bf16.mxu0 0
      %1243 = vmatpush2.bf16.msra.mxu0 0
      %1244 = vmatprep.subr.bf16.mxu0 0
      %1245 = vmatpush2.bf16.msra.mxu0 0
      %1246 = vmatprep.subr.bf16.mxu0 0
      %1247 = vmatpush2.bf16.msra.mxu0 0
      %1248 = vmatprep.subr.bf16.mxu0 0
      %1249 = vmatpush2.bf16.msra.mxu0 0
      %1250 = vmatprep.subr.bf16.mxu0 0
      %1251 = vmatpush2.bf16.msra.mxu0 0
      %1252 = vmatprep.subr.bf16.mxu0 0
      %1253 = vmatpush2.bf16.msra.mxu0 0
      %1254 = vmatprep.subr.bf16.mxu0 0
      %1255 = vmatpush2.bf16.msra.mxu0 0
      %1256 = vmatprep.mubr.bf16.mxu0 0
      %1257 = vmatmul.mubr.bf16.gmra.mxu0 %v1219
      %v1258 = vpop.f32.mrf.mxu0
      %v1259 = vadd.f32 0.0, %v1258
      %v1260 = vpop.f32.mrf.mxu0
      %v1261 = vpop.f32.mrf.mxu0
      %v1262 = vadd.f32 0.0, %v1261
      %v1263 = vpop.f32.mrf.mxu0
      %1264 = vmatprep.mubr.bf16.mxu0 0
      %1265 = vmatmul.mubr.bf16.gmra.mxu0 %v1222
      %v1266 = vpop.f32.mrf.mxu0
      %v1267 = vadd.f32 0.0, %v1266
      %v1268 = vpop.f32.mrf.mxu0
      %v1269 = vpop.f32.mrf.mxu0
      %v1270 = vadd.f32 0.0, %v1269
      %v1271 = vpop.f32.mrf.mxu0
      %1272 = vdwg.mxu0
      %s1273 = scalar_lea.vmem %s2, 384
      %v1274 = vld [vmem:[%s1273] sm:$0xf]
      %v1275 = vld [vmem:[%s1273 + $0x4] sm:$0xf]
      %v1276 = vld [vmem:[%s1273 + $0x8] sm:$0xf]
      %v1277 = vld [vmem:[%s1273 + $0xc] sm:$0xf]
      %v1278 = vld [vmem:[%s1273 + $0x10] sm:$0xf]
      %v1279 = vld [vmem:[%s1273 + $0x14] sm:$0xf]
      %v1280 = vld [vmem:[%s1273 + $0x18] sm:$0xf]
      %v1281 = vld [vmem:[%s1273 + $0x1c] sm:$0xf]
      %v1282 = vld [vmem:[%s1273 + $0x20] sm:$0xf]
      %v1283 = vld [vmem:[%s1273 + $0x24] sm:$0xf]
      %v1284 = vld [vmem:[%s1273 + $0x28] sm:$0xf]
      %v1285 = vld [vmem:[%s1273 + $0x2c] sm:$0xf]
      %v1286 = vld [vmem:[%s1273 + $0x30] sm:$0xf]
      %v1287 = vld [vmem:[%s1273 + $0x34] sm:$0xf]
      %v1288 = vld [vmem:[%s1273 + $0x38] sm:$0xf]
      %v1289 = vld [vmem:[%s1273 + $0x3c] sm:$0xf]
      %v1290 = vpack.c.bf16 %v1262, %v1259
      %v1291 = vpack.c.bf16 %v1270, %v1267
      %v1308 = vunpack.c.l.b16 %v1274
      %v1309 = vunpack.c.l.b16 %v1275
      %v1310 = vunpack.c.l.b16 %v1276
      %v1311 = vunpack.c.l.b16 %v1277
      %v1312 = vunpack.c.l.b16 %v1278
      %v1313 = vunpack.c.l.b16 %v1279
      %v1314 = vunpack.c.l.b16 %v1280
      %v1315 = vunpack.c.l.b16 %v1281
      %v1316 = vunpack.c.l.b16 %v1282
      %v1317 = vunpack.c.l.b16 %v1283
      %v1318 = vunpack.c.l.b16 %v1284
      %v1319 = vunpack.c.l.b16 %v1285
      %v1320 = vunpack.c.l.b16 %v1286
      %v1321 = vunpack.c.l.b16 %v1287
      %v1322 = vunpack.c.l.b16 %v1288
      %v1323 = vunpack.c.l.b16 %v1289
      %v1324 = vpack.c.b16 %v1309, %v1308
      %v1325 = vpack.c.b16 %v1311, %v1310
      %v1326 = vpack.c.b16 %v1313, %v1312
      %v1327 = vpack.c.b16 %v1315, %v1314
      %v1328 = vpack.c.b16 %v1317, %v1316
      %v1329 = vpack.c.b16 %v1319, %v1318
      %v1330 = vpack.c.b16 %v1321, %v1320
      %v1331 = vpack.c.b16 %v1323, %v1322
      %1340 = vmatprep.subr.bf16.mxu0 0
      %1341 = vmatpush1.bf16.msra.mxu0 %v1331
      %1342 = vmatprep.subr.bf16.mxu0 0
      %1343 = vmatpush1.bf16.msra.mxu0 %v1330
      %1344 = vmatprep.subr.bf16.mxu0 0
      %1345 = vmatpush1.bf16.msra.mxu0 %v1329
      %1346 = vmatprep.subr.bf16.mxu0 0
      %1347 = vmatpush1.bf16.msra.mxu0 %v1328
      %1348 = vmatprep.subr.bf16.mxu0 0
      %1349 = vmatpush1.bf16.msra.mxu0 %v1327
      %1350 = vmatprep.subr.bf16.mxu0 0
      %1351 = vmatpush1.bf16.msra.mxu0 %v1326
      %1352 = vmatprep.subr.bf16.mxu0 0
      %1353 = vmatpush1.bf16.msra.mxu0 %v1325
      %1354 = vmatprep.subr.bf16.mxu0 0
      %1355 = vmatpush1.bf16.msra.mxu0 %v1324
      %1356 = vmatprep.subr.bf16.mxu0 0
      %1357 = vmatpush2.bf16.msra.mxu0 0
      %1358 = vmatprep.subr.bf16.mxu0 0
      %1359 = vmatpush2.bf16.msra.mxu0 0
      %1360 = vmatprep.subr.bf16.mxu0 0
      %1361 = vmatpush2.bf16.msra.mxu0 0
      %1362 = vmatprep.subr.bf16.mxu0 0
      %1363 = vmatpush2.bf16.msra.mxu0 0
      %1364 = vmatprep.subr.bf16.mxu0 0
      %1365 = vmatpush2.bf16.msra.mxu0 0
      %1366 = vmatprep.subr.bf16.mxu0 0
      %1367 = vmatpush2.bf16.msra.mxu0 0
      %1368 = vmatprep.subr.bf16.mxu0 0
      %1369 = vmatpush2.bf16.msra.mxu0 0
      %1370 = vmatprep.subr.bf16.mxu0 0
      %1371 = vmatpush2.bf16.msra.mxu0 0
      %1372 = vmatprep.mubr.bf16.mxu0 0
      %1373 = vmatmul.mubr.bf16.gmra.mxu0 %v1290
      %v1374 = vpop.f32.mrf.mxu0
      %v1375 = vadd.f32 0.0, %v1374
      %v1376 = vpop.f32.mrf.mxu0
      %v1377 = vpop.f32.mrf.mxu0
      %v1378 = vadd.f32 0.0, %v1377
      %v1379 = vpop.f32.mrf.mxu0
      %1380 = vmatprep.mubr.bf16.mxu0 0
      %1381 = vmatmul.mubr.bf16.gmra.mxu0 %v1291
      %v1382 = vpop.f32.mrf.mxu0
      %v1383 = vadd.f32 0.0, %v1382
      %v1384 = vpop.f32.mrf.mxu0
      %v1385 = vpop.f32.mrf.mxu0
      %v1386 = vadd.f32 0.0, %v1385
      %v1387 = vpop.f32.mrf.mxu0
      %1388 = vdwg.mxu0
      %v1389 = vadd.f32 %v1189, %v1375
      %v1390 = vadd.f32 %v1192, %v1378
      %v1391 = vadd.f32 %v1197, %v1383
      %v1392 = vadd.f32 %v1200, %v1386
      %s1393 = scalar_lea.vmem %s3, 1
      %v1394 = vld [vmem:[%s1393] sm:$0x1]
      %v1396 = vlaneseq
      %v1397 = vshrl.u32 %v1396, 7
      %v1398 = vsub.s32 0, %v1397
      %v1399 = vrot.slane %v1394, %v1398
      %v1401 = vadd.f32 %v1389, %v1399
      %v1402 = vadd.f32 %v1390, %v1399
      %v1403 = vadd.f32 %v1391, %v1399
      %v1404 = vadd.f32 %v1392, %v1399
      %vm1405 = vcmp.ge.f32.partialorder %v1401, 0.0
      %vm1406 = vcmp.ge.f32.partialorder %v1402, 0.0
      %vm1407 = vcmp.ge.f32.partialorder %v1403, 0.0
      %vm1408 = vcmp.ge.f32.partialorder %v1404, 0.0
      %v1409 = vmul.f32 %v1401, 0.22916667
      %v1410 = vmul.f32 %v1402, 0.22916667
      %v1411 = vmul.f32 %v1403, 0.22916667
      %v1412 = vmul.f32 %v1404, 0.22916667
      %v1413 = vsel %vm1405, %v1401, %v1409
      %v1414 = vsel %vm1406, %v1402, %v1410
      %v1415 = vsel %vm1407, %v1403, %v1411
      %v1416 = vsel %vm1408, %v1404, %v1412
      %v1417 = vpack.c.bf16 %v1414, %v1413
      %v1418 = vpack.c.bf16 %v1416, %v1415
      %1419 = vmatprep.subr.bf16.mxu0 0
      %1420 = vmatpush1.bf16.msra.mxu0 0
      %1421 = vmatprep.subr.bf16.mxu0 0
      %1422 = vmatpush1.bf16.msra.mxu0 0
      %1423 = vmatprep.subr.bf16.mxu0 0
      %1424 = vmatpush1.bf16.msra.mxu0 0
      %1425 = vmatprep.subr.bf16.mxu0 0
      %1426 = vmatpush1.bf16.msra.mxu0 0
      %1427 = vmatprep.subr.bf16.mxu0 0
      %1428 = vmatpush1.bf16.msra.mxu0 0
      %1429 = vmatprep.subr.bf16.mxu0 0
      %1430 = vmatpush1.bf16.msra.mxu0 0
      %1431 = vmatprep.subr.bf16.mxu0 0
      %1432 = vmatpush1.bf16.msra.mxu0 %v1418
      %1433 = vmatprep.subr.bf16.mxu0 0
      %1434 = vmatpush1.bf16.msra.mxu0 %v1417
      %1435 = vmatprep.subr.bf16.mxu0 0
      %1436 = vmatpush2.bf16.msra.mxu0 0
      %1437 = vmatprep.subr.bf16.mxu0 0
      %1438 = vmatpush2.bf16.msra.mxu0 0
      %1439 = vmatprep.subr.bf16.mxu0 0
      %1440 = vmatpush2.bf16.msra.mxu0 0
      %1441 = vmatprep.subr.bf16.mxu0 0
      %1442 = vmatpush2.bf16.msra.mxu0 0
      %1443 = vmatprep.subr.bf16.mxu0 0
      %1444 = vmatpush2.bf16.msra.mxu0 0
      %1445 = vmatprep.subr.bf16.mxu0 0
      %1446 = vmatpush2.bf16.msra.mxu0 0
      %1447 = vmatprep.subr.bf16.mxu0 0
      %1448 = vmatpush2.bf16.msra.mxu0 0
      %1449 = vmatprep.subr.bf16.mxu0 0
      %1450 = vmatpush2.bf16.msra.mxu0 0
      %1451 = vmatprep.mubr.bf16.mxu0 0
      %1452 = vmatmul.mubr.bf16.gmra.mxu0 %v231
      %v1453 = vpop.f32.mrf.mxu0
      %v1454 = vadd.f32 0.0, %v1453
      %v1455 = vpop.f32.mrf.mxu0
      %v1456 = vpop.f32.mrf.mxu0
      %v1457 = vadd.f32 0.0, %v1456
      %v1458 = vpop.f32.mrf.mxu0
      %1459 = vmatprep.mubr.bf16.mxu0 0
      %1460 = vmatmul.mubr.bf16.gmra.mxu0 %v234
      %v1461 = vpop.f32.mrf.mxu0
      %v1462 = vadd.f32 0.0, %v1461
      %v1463 = vpop.f32.mrf.mxu0
      %v1464 = vpop.f32.mrf.mxu0
      %v1465 = vadd.f32 0.0, %v1464
      %v1466 = vpop.f32.mrf.mxu0
      %1467 = vdwg.mxu0
      %s1468 = scalar_lea.vmem %s2, 448
      %v1469 = vld [vmem:[%s1468] sm:$0xf]
      %v1470 = vld [vmem:[%s1468 + $0x4] sm:$0xf]
      %v1471 = vld [vmem:[%s1468 + $0x8] sm:$0xf]
      %v1472 = vld [vmem:[%s1468 + $0xc] sm:$0xf]
      %v1473 = vld [vmem:[%s1468 + $0x10] sm:$0xf]
      %v1474 = vld [vmem:[%s1468 + $0x14] sm:$0xf]
      %v1475 = vld [vmem:[%s1468 + $0x18] sm:$0xf]
      %v1476 = vld [vmem:[%s1468 + $0x1c] sm:$0xf]
      %v1477 = vld [vmem:[%s1468 + $0x20] sm:$0xf]
      %v1478 = vld [vmem:[%s1468 + $0x24] sm:$0xf]
      %v1479 = vld [vmem:[%s1468 + $0x28] sm:$0xf]
      %v1480 = vld [vmem:[%s1468 + $0x2c] sm:$0xf]
      %v1481 = vld [vmem:[%s1468 + $0x30] sm:$0xf]
      %v1482 = vld [vmem:[%s1468 + $0x34] sm:$0xf]
      %v1483 = vld [vmem:[%s1468 + $0x38] sm:$0xf]
      %v1484 = vld [vmem:[%s1468 + $0x3c] sm:$0xf]
      %v1485 = vpack.c.bf16 %v1457, %v1454
      %v1486 = vpack.c.bf16 %v1465, %v1462
      %v1503 = vunpack.c.l.b16 %v1469
      %v1504 = vunpack.c.l.b16 %v1470
      %v1505 = vunpack.c.l.b16 %v1471
      %v1506 = vunpack.c.l.b16 %v1472
      %v1507 = vunpack.c.l.b16 %v1473
      %v1508 = vunpack.c.l.b16 %v1474
      %v1509 = vunpack.c.l.b16 %v1475
      %v1510 = vunpack.c.l.b16 %v1476
      %v1511 = vunpack.c.l.b16 %v1477
      %v1512 = vunpack.c.l.b16 %v1478
      %v1513 = vunpack.c.l.b16 %v1479
      %v1514 = vunpack.c.l.b16 %v1480
      %v1515 = vunpack.c.l.b16 %v1481
      %v1516 = vunpack.c.l.b16 %v1482
      %v1517 = vunpack.c.l.b16 %v1483
      %v1518 = vunpack.c.l.b16 %v1484
      %v1519 = vpack.c.b16 %v1504, %v1503
      %v1520 = vpack.c.b16 %v1506, %v1505
      %v1521 = vpack.c.b16 %v1508, %v1507
      %v1522 = vpack.c.b16 %v1510, %v1509
      %v1523 = vpack.c.b16 %v1512, %v1511
      %v1524 = vpack.c.b16 %v1514, %v1513
      %v1525 = vpack.c.b16 %v1516, %v1515
      %v1526 = vpack.c.b16 %v1518, %v1517
      %1535 = vmatprep.subr.bf16.mxu0 0
      %1536 = vmatpush1.bf16.msra.mxu0 %v1526
      %1537 = vmatprep.subr.bf16.mxu0 0
      %1538 = vmatpush1.bf16.msra.mxu0 %v1525
      %1539 = vmatprep.subr.bf16.mxu0 0
      %1540 = vmatpush1.bf16.msra.mxu0 %v1524
      %1541 = vmatprep.subr.bf16.mxu0 0
      %1542 = vmatpush1.bf16.msra.mxu0 %v1523
      %1543 = vmatprep.subr.bf16.mxu0 0
      %1544 = vmatpush1.bf16.msra.mxu0 %v1522
      %1545 = vmatprep.subr.bf16.mxu0 0
      %1546 = vmatpush1.bf16.msra.mxu0 %v1521
      %1547 = vmatprep.subr.bf16.mxu0 0
      %1548 = vmatpush1.bf16.msra.mxu0 %v1520
      %1549 = vmatprep.subr.bf16.mxu0 0
      %1550 = vmatpush1.bf16.msra.mxu0 %v1519
      %1551 = vmatprep.subr.bf16.mxu0 0
      %1552 = vmatpush2.bf16.msra.mxu0 0
      %1553 = vmatprep.subr.bf16.mxu0 0
      %1554 = vmatpush2.bf16.msra.mxu0 0
      %1555 = vmatprep.subr.bf16.mxu0 0
      %1556 = vmatpush2.bf16.msra.mxu0 0
      %1557 = vmatprep.subr.bf16.mxu0 0
      %1558 = vmatpush2.bf16.msra.mxu0 0
      %1559 = vmatprep.subr.bf16.mxu0 0
      %1560 = vmatpush2.bf16.msra.mxu0 0
      %1561 = vmatprep.subr.bf16.mxu0 0
      %1562 = vmatpush2.bf16.msra.mxu0 0
      %1563 = vmatprep.subr.bf16.mxu0 0
      %1564 = vmatpush2.bf16.msra.mxu0 0
      %1565 = vmatprep.subr.bf16.mxu0 0
      %1566 = vmatpush2.bf16.msra.mxu0 0
      %1567 = vmatprep.mubr.bf16.mxu0 0
      %1568 = vmatmul.mubr.bf16.gmra.mxu0 %v1485
      %v1569 = vpop.f32.mrf.mxu0
      %v1570 = vadd.f32 0.0, %v1569
      %v1571 = vpop.f32.mrf.mxu0
      %v1572 = vpop.f32.mrf.mxu0
      %v1573 = vadd.f32 0.0, %v1572
      %v1574 = vpop.f32.mrf.mxu0
      %1575 = vmatprep.mubr.bf16.mxu0 0
      %1576 = vmatmul.mubr.bf16.gmra.mxu0 %v1486
      %v1577 = vpop.f32.mrf.mxu0
      %v1578 = vadd.f32 0.0, %v1577
      %v1579 = vpop.f32.mrf.mxu0
      %v1580 = vpop.f32.mrf.mxu0
      %v1581 = vadd.f32 0.0, %v1580
      %v1582 = vpop.f32.mrf.mxu0
      %1583 = vdwg.mxu0
      %v1584 = vpack.c.bf16 %v1573, %v1570
      %v1585 = vpack.c.bf16 %v1581, %v1578
      %1586 = vmatprep.subr.bf16.mxu0 0
      %1587 = vmatpush1.bf16.msra.mxu0 0
      %1588 = vmatprep.subr.bf16.mxu0 0
      %1589 = vmatpush1.bf16.msra.mxu0 0
      %1590 = vmatprep.subr.bf16.mxu0 0
      %1591 = vmatpush1.bf16.msra.mxu0 0
      %1592 = vmatprep.subr.bf16.mxu0 0
      %1593 = vmatpush1.bf16.msra.mxu0 0
      %1594 = vmatprep.subr.bf16.mxu0 0
      %1595 = vmatpush1.bf16.msra.mxu0 0
      %1596 = vmatprep.subr.bf16.mxu0 0
      %1597 = vmatpush1.bf16.msra.mxu0 0
      %1598 = vmatprep.subr.bf16.mxu0 0
      %1599 = vmatpush1.bf16.msra.mxu0 %v1585
      %1600 = vmatprep.subr.bf16.mxu0 0
      %1601 = vmatpush1.bf16.msra.mxu0 %v1584
      %1602 = vmatprep.subr.bf16.mxu0 0
      %1603 = vmatpush2.bf16.msra.mxu0 0
      %1604 = vmatprep.subr.bf16.mxu0 0
      %1605 = vmatpush2.bf16.msra.mxu0 0
      %1606 = vmatprep.subr.bf16.mxu0 0
      %1607 = vmatpush2.bf16.msra.mxu0 0
      %1608 = vmatprep.subr.bf16.mxu0 0
      %1609 = vmatpush2.bf16.msra.mxu0 0
      %1610 = vmatprep.subr.bf16.mxu0 0
      %1611 = vmatpush2.bf16.msra.mxu0 0
      %1612 = vmatprep.subr.bf16.mxu0 0
      %1613 = vmatpush2.bf16.msra.mxu0 0
      %1614 = vmatprep.subr.bf16.mxu0 0
      %1615 = vmatpush2.bf16.msra.mxu0 0
      %1616 = vmatprep.subr.bf16.mxu0 0
      %1617 = vmatpush2.bf16.msra.mxu0 0
      %1618 = vmatprep.mubr.bf16.mxu0 0
      %1619 = vmatmul.mubr.bf16.gmra.mxu0 %v418
      %v1620 = vpop.f32.mrf.mxu0
      %v1621 = vadd.f32 0.0, %v1620
      %v1622 = vpop.f32.mrf.mxu0
      %v1623 = vpop.f32.mrf.mxu0
      %v1624 = vadd.f32 0.0, %v1623
      %v1625 = vpop.f32.mrf.mxu0
      %1626 = vmatprep.mubr.bf16.mxu0 0
      %1627 = vmatmul.mubr.bf16.gmra.mxu0 %v421
      %v1628 = vpop.f32.mrf.mxu0
      %v1629 = vadd.f32 0.0, %v1628
      %v1630 = vpop.f32.mrf.mxu0
      %v1631 = vpop.f32.mrf.mxu0
      %v1632 = vadd.f32 0.0, %v1631
      %v1633 = vpop.f32.mrf.mxu0
      %1634 = vdwg.mxu0
      %s1635 = scalar_lea.vmem %s2, 512
      %v1636 = vld [vmem:[%s1635] sm:$0xf]
      %v1637 = vld [vmem:[%s1635 + $0x4] sm:$0xf]
      %v1638 = vld [vmem:[%s1635 + $0x8] sm:$0xf]
      %v1639 = vld [vmem:[%s1635 + $0xc] sm:$0xf]
      %v1640 = vld [vmem:[%s1635 + $0x10] sm:$0xf]
      %v1641 = vld [vmem:[%s1635 + $0x14] sm:$0xf]
      %v1642 = vld [vmem:[%s1635 + $0x18] sm:$0xf]
      %v1643 = vld [vmem:[%s1635 + $0x1c] sm:$0xf]
      %v1644 = vld [vmem:[%s1635 + $0x20] sm:$0xf]
      %v1645 = vld [vmem:[%s1635 + $0x24] sm:$0xf]
      %v1646 = vld [vmem:[%s1635 + $0x28] sm:$0xf]
      %v1647 = vld [vmem:[%s1635 + $0x2c] sm:$0xf]
      %v1648 = vld [vmem:[%s1635 + $0x30] sm:$0xf]
      %v1649 = vld [vmem:[%s1635 + $0x34] sm:$0xf]
      %v1650 = vld [vmem:[%s1635 + $0x38] sm:$0xf]
      %v1651 = vld [vmem:[%s1635 + $0x3c] sm:$0xf]
      %v1652 = vpack.c.bf16 %v1624, %v1621
      %v1653 = vpack.c.bf16 %v1632, %v1629
      %s1654 = scalar_lea.vmem %s2, 576
      %v1655 = vld [vmem:[%s1654] sm:$0xf]
      %v1656 = vld [vmem:[%s1654 + $0x4] sm:$0xf]
      %v1657 = vld [vmem:[%s1654 + $0x8] sm:$0xf]
      %v1658 = vld [vmem:[%s1654 + $0xc] sm:$0xf]
      %v1659 = vld [vmem:[%s1654 + $0x10] sm:$0xf]
      %v1660 = vld [vmem:[%s1654 + $0x14] sm:$0xf]
      %v1661 = vld [vmem:[%s1654 + $0x18] sm:$0xf]
      %v1662 = vld [vmem:[%s1654 + $0x1c] sm:$0xf]
      %v1663 = vld [vmem:[%s1654 + $0x20] sm:$0xf]
      %v1664 = vld [vmem:[%s1654 + $0x24] sm:$0xf]
      %v1665 = vld [vmem:[%s1654 + $0x28] sm:$0xf]
      %v1666 = vld [vmem:[%s1654 + $0x2c] sm:$0xf]
      %v1667 = vld [vmem:[%s1654 + $0x30] sm:$0xf]
      %v1668 = vld [vmem:[%s1654 + $0x34] sm:$0xf]
      %v1669 = vld [vmem:[%s1654 + $0x38] sm:$0xf]
      %v1670 = vld [vmem:[%s1654 + $0x3c] sm:$0xf]
      %v1687 = vunpack.c.l.b16 %v1655
      %v1688 = vunpack.c.l.b16 %v1656
      %v1689 = vunpack.c.l.b16 %v1657
      %v1690 = vunpack.c.l.b16 %v1658
      %v1691 = vunpack.c.l.b16 %v1659
      %v1692 = vunpack.c.l.b16 %v1660
      %v1693 = vunpack.c.l.b16 %v1661
      %v1694 = vunpack.c.l.b16 %v1662
      %v1695 = vunpack.c.l.b16 %v1663
      %v1696 = vunpack.c.l.b16 %v1664
      %v1697 = vunpack.c.l.b16 %v1665
      %v1698 = vunpack.c.l.b16 %v1666
      %v1699 = vunpack.c.l.b16 %v1667
      %v1700 = vunpack.c.l.b16 %v1668
      %v1701 = vunpack.c.l.b16 %v1669
      %v1702 = vunpack.c.l.b16 %v1670
      %v1703 = vpack.c.b16 %v1688, %v1687
      %v1704 = vpack.c.b16 %v1690, %v1689
      %v1705 = vpack.c.b16 %v1692, %v1691
      %v1706 = vpack.c.b16 %v1694, %v1693
      %v1707 = vpack.c.b16 %v1696, %v1695
      %v1708 = vpack.c.b16 %v1698, %v1697
      %v1709 = vpack.c.b16 %v1700, %v1699
      %v1710 = vpack.c.b16 %v1702, %v1701
      %1719 = vmatprep.subr.bf16.mxu0 0
      %1720 = vmatpush1.bf16.msra.mxu0 %v1710
      %1721 = vmatprep.subr.bf16.mxu0 0
      %1722 = vmatpush1.bf16.msra.mxu0 %v1709
      %1723 = vmatprep.subr.bf16.mxu0 0
      %1724 = vmatpush1.bf16.msra.mxu0 %v1708
      %1725 = vmatprep.subr.bf16.mxu0 0
      %1726 = vmatpush1.bf16.msra.mxu0 %v1707
      %1727 = vmatprep.subr.bf16.mxu0 0
      %1728 = vmatpush1.bf16.msra.mxu0 %v1706
      %1729 = vmatprep.subr.bf16.mxu0 0
      %1730 = vmatpush1.bf16.msra.mxu0 %v1705
      %1731 = vmatprep.subr.bf16.mxu0 0
      %1732 = vmatpush1.bf16.msra.mxu0 %v1704
      %1733 = vmatprep.subr.bf16.mxu0 0
      %1734 = vmatpush1.bf16.msra.mxu0 %v1703
      %1735 = vmatprep.subr.bf16.mxu0 0
      %1736 = vmatpush2.bf16.msra.mxu0 0
      %1737 = vmatprep.subr.bf16.mxu0 0
      %1738 = vmatpush2.bf16.msra.mxu0 0
      %1739 = vmatprep.subr.bf16.mxu0 0
      %1740 = vmatpush2.bf16.msra.mxu0 0
      %1741 = vmatprep.subr.bf16.mxu0 0
      %1742 = vmatpush2.bf16.msra.mxu0 0
      %1743 = vmatprep.subr.bf16.mxu0 0
      %1744 = vmatpush2.bf16.msra.mxu0 0
      %1745 = vmatprep.subr.bf16.mxu0 0
      %1746 = vmatpush2.bf16.msra.mxu0 0
      %1747 = vmatprep.subr.bf16.mxu0 0
      %1748 = vmatpush2.bf16.msra.mxu0 0
      %1749 = vmatprep.subr.bf16.mxu0 0
      %1750 = vmatpush2.bf16.msra.mxu0 0
      %1751 = vmatprep.mubr.bf16.mxu0 0
      %1752 = vmatmul.mubr.bf16.gmra.mxu0 %v1584
      %v1753 = vpop.f32.mrf.mxu0
      %v1754 = vadd.f32 0.0, %v1753
      %v1755 = vpop.f32.mrf.mxu0
      %v1756 = vpop.f32.mrf.mxu0
      %v1757 = vadd.f32 0.0, %v1756
      %v1758 = vpop.f32.mrf.mxu0
      %1759 = vmatprep.mubr.bf16.mxu0 0
      %1760 = vmatmul.mubr.bf16.gmra.mxu0 %v1585
      %v1761 = vpop.f32.mrf.mxu0
      %v1762 = vadd.f32 0.0, %v1761
      %v1763 = vpop.f32.mrf.mxu0
      %v1764 = vpop.f32.mrf.mxu0
      %v1765 = vadd.f32 0.0, %v1764
      %v1766 = vpop.f32.mrf.mxu0
      %1767 = vdwg.mxu0
      %v1784 = vunpack.c.l.b16 %v1636
      %v1785 = vunpack.c.l.b16 %v1637
      %v1786 = vunpack.c.l.b16 %v1638
      %v1787 = vunpack.c.l.b16 %v1639
      %v1788 = vunpack.c.l.b16 %v1640
      %v1789 = vunpack.c.l.b16 %v1641
      %v1790 = vunpack.c.l.b16 %v1642
      %v1791 = vunpack.c.l.b16 %v1643
      %v1792 = vunpack.c.l.b16 %v1644
      %v1793 = vunpack.c.l.b16 %v1645
      %v1794 = vunpack.c.l.b16 %v1646
      %v1795 = vunpack.c.l.b16 %v1647
      %v1796 = vunpack.c.l.b16 %v1648
      %v1797 = vunpack.c.l.b16 %v1649
      %v1798 = vunpack.c.l.b16 %v1650
      %v1799 = vunpack.c.l.b16 %v1651
      %v1800 = vpack.c.b16 %v1785, %v1784
      %v1801 = vpack.c.b16 %v1787, %v1786
      %v1802 = vpack.c.b16 %v1789, %v1788
      %v1803 = vpack.c.b16 %v1791, %v1790
      %v1804 = vpack.c.b16 %v1793, %v1792
      %v1805 = vpack.c.b16 %v1795, %v1794
      %v1806 = vpack.c.b16 %v1797, %v1796
      %v1807 = vpack.c.b16 %v1799, %v1798
      %1816 = vmatprep.subr.bf16.mxu0 0
      %1817 = vmatpush1.bf16.msra.mxu0 %v1807
      %1818 = vmatprep.subr.bf16.mxu0 0
      %1819 = vmatpush1.bf16.msra.mxu0 %v1806
      %1820 = vmatprep.subr.bf16.mxu0 0
      %1821 = vmatpush1.bf16.msra.mxu0 %v1805
      %1822 = vmatprep.subr.bf16.mxu0 0
      %1823 = vmatpush1.bf16.msra.mxu0 %v1804
      %1824 = vmatprep.subr.bf16.mxu0 0
      %1825 = vmatpush1.bf16.msra.mxu0 %v1803
      %1826 = vmatprep.subr.bf16.mxu0 0
      %1827 = vmatpush1.bf16.msra.mxu0 %v1802
      %1828 = vmatprep.subr.bf16.mxu0 0
      %1829 = vmatpush1.bf16.msra.mxu0 %v1801
      %1830 = vmatprep.subr.bf16.mxu0 0
      %1831 = vmatpush1.bf16.msra.mxu0 %v1800
      %1832 = vmatprep.subr.bf16.mxu0 0
      %1833 = vmatpush2.bf16.msra.mxu0 0
      %1834 = vmatprep.subr.bf16.mxu0 0
      %1835 = vmatpush2.bf16.msra.mxu0 0
      %1836 = vmatprep.subr.bf16.mxu0 0
      %1837 = vmatpush2.bf16.msra.mxu0 0
      %1838 = vmatprep.subr.bf16.mxu0 0
      %1839 = vmatpush2.bf16.msra.mxu0 0
      %1840 = vmatprep.subr.bf16.mxu0 0
      %1841 = vmatpush2.bf16.msra.mxu0 0
      %1842 = vmatprep.subr.bf16.mxu0 0
      %1843 = vmatpush2.bf16.msra.mxu0 0
      %1844 = vmatprep.subr.bf16.mxu0 0
      %1845 = vmatpush2.bf16.msra.mxu0 0
      %1846 = vmatprep.subr.bf16.mxu0 0
      %1847 = vmatpush2.bf16.msra.mxu0 0
      %1848 = vmatprep.mubr.bf16.mxu0 0
      %1849 = vmatmul.mubr.bf16.gmra.mxu0 %v1652
      %v1850 = vpop.f32.mrf.mxu0
      %v1851 = vadd.f32 %v1754, %v1850
      %v1852 = vpop.f32.mrf.mxu0
      %v1853 = vpop.f32.mrf.mxu0
      %v1854 = vadd.f32 %v1757, %v1853
      %v1855 = vpop.f32.mrf.mxu0
      %1856 = vmatprep.mubr.bf16.mxu0 0
      %1857 = vmatmul.mubr.bf16.gmra.mxu0 %v1653
      %v1858 = vpop.f32.mrf.mxu0
      %v1859 = vadd.f32 %v1762, %v1858
      %v1860 = vpop.f32.mrf.mxu0
      %v1861 = vpop.f32.mrf.mxu0
      %v1862 = vadd.f32 %v1765, %v1861
      %v1863 = vpop.f32.mrf.mxu0
      %1864 = vdwg.mxu0
      %1865 = vmatprep.subr.bf16.mxu0 0
      %1866 = vmatpush1.bf16.msra.mxu0 0
      %1867 = vmatprep.subr.bf16.mxu0 0
      %1868 = vmatpush1.bf16.msra.mxu0 0
      %1869 = vmatprep.subr.bf16.mxu0 0
      %1870 = vmatpush1.bf16.msra.mxu0 0
      %1871 = vmatprep.subr.bf16.mxu0 0
      %1872 = vmatpush1.bf16.msra.mxu0 0
      %1873 = vmatprep.subr.bf16.mxu0 0
      %1874 = vmatpush1.bf16.msra.mxu0 0
      %1875 = vmatprep.subr.bf16.mxu0 0
      %1876 = vmatpush1.bf16.msra.mxu0 0
      %1877 = vmatprep.subr.bf16.mxu0 0
      %1878 = vmatpush1.bf16.msra.mxu0 %v1585
      %1879 = vmatprep.subr.bf16.mxu0 0
      %1880 = vmatpush1.bf16.msra.mxu0 %v1584
      %1881 = vmatprep.subr.bf16.mxu0 0
      %1882 = vmatpush2.bf16.msra.mxu0 0
      %1883 = vmatprep.subr.bf16.mxu0 0
      %1884 = vmatpush2.bf16.msra.mxu0 0
      %1885 = vmatprep.subr.bf16.mxu0 0
      %1886 = vmatpush2.bf16.msra.mxu0 0
      %1887 = vmatprep.subr.bf16.mxu0 0
      %1888 = vmatpush2.bf16.msra.mxu0 0
      %1889 = vmatprep.subr.bf16.mxu0 0
      %1890 = vmatpush2.bf16.msra.mxu0 0
      %1891 = vmatprep.subr.bf16.mxu0 0
      %1892 = vmatpush2.bf16.msra.mxu0 0
      %1893 = vmatprep.subr.bf16.mxu0 0
      %1894 = vmatpush2.bf16.msra.mxu0 0
      %1895 = vmatprep.subr.bf16.mxu0 0
      %1896 = vmatpush2.bf16.msra.mxu0 0
      %1897 = vmatprep.mubr.bf16.mxu0 0
      %1898 = vmatmul.mubr.bf16.gmra.mxu0 %v718
      %v1899 = vpop.f32.mrf.mxu0
      %v1900 = vadd.f32 0.0, %v1899
      %v1901 = vpop.f32.mrf.mxu0
      %v1902 = vpop.f32.mrf.mxu0
      %v1903 = vadd.f32 0.0, %v1902
      %v1904 = vpop.f32.mrf.mxu0
      %1905 = vmatprep.mubr.bf16.mxu0 0
      %1906 = vmatmul.mubr.bf16.gmra.mxu0 %v721
      %v1907 = vpop.f32.mrf.mxu0
      %v1908 = vadd.f32 0.0, %v1907
      %v1909 = vpop.f32.mrf.mxu0
      %v1910 = vpop.f32.mrf.mxu0
      %v1911 = vadd.f32 0.0, %v1910
      %v1912 = vpop.f32.mrf.mxu0
      %1913 = vdwg.mxu0
      %s1914 = scalar_lea.vmem %s2, 640
      %v1915 = vld [vmem:[%s1914] sm:$0xf]
      %v1916 = vld [vmem:[%s1914 + $0x4] sm:$0xf]
      %v1917 = vld [vmem:[%s1914 + $0x8] sm:$0xf]
      %v1918 = vld [vmem:[%s1914 + $0xc] sm:$0xf]
      %v1919 = vld [vmem:[%s1914 + $0x10] sm:$0xf]
      %v1920 = vld [vmem:[%s1914 + $0x14] sm:$0xf]
      %v1921 = vld [vmem:[%s1914 + $0x18] sm:$0xf]
      %v1922 = vld [vmem:[%s1914 + $0x1c] sm:$0xf]
      %v1923 = vld [vmem:[%s1914 + $0x20] sm:$0xf]
      %v1924 = vld [vmem:[%s1914 + $0x24] sm:$0xf]
      %v1925 = vld [vmem:[%s1914 + $0x28] sm:$0xf]
      %v1926 = vld [vmem:[%s1914 + $0x2c] sm:$0xf]
      %v1927 = vld [vmem:[%s1914 + $0x30] sm:$0xf]
      %v1928 = vld [vmem:[%s1914 + $0x34] sm:$0xf]
      %v1929 = vld [vmem:[%s1914 + $0x38] sm:$0xf]
      %v1930 = vld [vmem:[%s1914 + $0x3c] sm:$0xf]
      %v1931 = vpack.c.bf16 %v1903, %v1900
      %v1932 = vpack.c.bf16 %v1911, %v1908
      %v1949 = vunpack.c.l.b16 %v1915
      %v1950 = vunpack.c.l.b16 %v1916
      %v1951 = vunpack.c.l.b16 %v1917
      %v1952 = vunpack.c.l.b16 %v1918
      %v1953 = vunpack.c.l.b16 %v1919
      %v1954 = vunpack.c.l.b16 %v1920
      %v1955 = vunpack.c.l.b16 %v1921
      %v1956 = vunpack.c.l.b16 %v1922
      %v1957 = vunpack.c.l.b16 %v1923
      %v1958 = vunpack.c.l.b16 %v1924
      %v1959 = vunpack.c.l.b16 %v1925
      %v1960 = vunpack.c.l.b16 %v1926
      %v1961 = vunpack.c.l.b16 %v1927
      %v1962 = vunpack.c.l.b16 %v1928
      %v1963 = vunpack.c.l.b16 %v1929
      %v1964 = vunpack.c.l.b16 %v1930
      %v1965 = vpack.c.b16 %v1950, %v1949
      %v1966 = vpack.c.b16 %v1952, %v1951
      %v1967 = vpack.c.b16 %v1954, %v1953
      %v1968 = vpack.c.b16 %v1956, %v1955
      %v1969 = vpack.c.b16 %v1958, %v1957
      %v1970 = vpack.c.b16 %v1960, %v1959
      %v1971 = vpack.c.b16 %v1962, %v1961
      %v1972 = vpack.c.b16 %v1964, %v1963
      %1981 = vmatprep.subr.bf16.mxu0 0
      %1982 = vmatpush1.bf16.msra.mxu0 %v1972
      %1983 = vmatprep.subr.bf16.mxu0 0
      %1984 = vmatpush1.bf16.msra.mxu0 %v1971
      %1985 = vmatprep.subr.bf16.mxu0 0
      %1986 = vmatpush1.bf16.msra.mxu0 %v1970
      %1987 = vmatprep.subr.bf16.mxu0 0
      %1988 = vmatpush1.bf16.msra.mxu0 %v1969
      %1989 = vmatprep.subr.bf16.mxu0 0
      %1990 = vmatpush1.bf16.msra.mxu0 %v1968
      %1991 = vmatprep.subr.bf16.mxu0 0
      %1992 = vmatpush1.bf16.msra.mxu0 %v1967
      %1993 = vmatprep.subr.bf16.mxu0 0
      %1994 = vmatpush1.bf16.msra.mxu0 %v1966
      %1995 = vmatprep.subr.bf16.mxu0 0
      %1996 = vmatpush1.bf16.msra.mxu0 %v1965
      %1997 = vmatprep.subr.bf16.mxu0 0
      %1998 = vmatpush2.bf16.msra.mxu0 0
      %1999 = vmatprep.subr.bf16.mxu0 0
      %2000 = vmatpush2.bf16.msra.mxu0 0
      %2001 = vmatprep.subr.bf16.mxu0 0
      %2002 = vmatpush2.bf16.msra.mxu0 0
      %2003 = vmatprep.subr.bf16.mxu0 0
      %2004 = vmatpush2.bf16.msra.mxu0 0
      %2005 = vmatprep.subr.bf16.mxu0 0
      %2006 = vmatpush2.bf16.msra.mxu0 0
      %2007 = vmatprep.subr.bf16.mxu0 0
      %2008 = vmatpush2.bf16.msra.mxu0 0
      %2009 = vmatprep.subr.bf16.mxu0 0
      %2010 = vmatpush2.bf16.msra.mxu0 0
      %2011 = vmatprep.subr.bf16.mxu0 0
      %2012 = vmatpush2.bf16.msra.mxu0 0
      %2013 = vmatprep.mubr.bf16.mxu0 0
      %2014 = vmatmul.mubr.bf16.gmra.mxu0 %v1931
      %v2015 = vpop.f32.mrf.mxu0
      %v2016 = vadd.f32 0.0, %v2015
      %v2017 = vpop.f32.mrf.mxu0
      %v2018 = vpop.f32.mrf.mxu0
      %v2019 = vadd.f32 0.0, %v2018
      %v2020 = vpop.f32.mrf.mxu0
      %2021 = vmatprep.mubr.bf16.mxu0 0
      %2022 = vmatmul.mubr.bf16.gmra.mxu0 %v1932
      %v2023 = vpop.f32.mrf.mxu0
      %v2024 = vadd.f32 0.0, %v2023
      %v2025 = vpop.f32.mrf.mxu0
      %v2026 = vpop.f32.mrf.mxu0
      %v2027 = vadd.f32 0.0, %v2026
      %v2028 = vpop.f32.mrf.mxu0
      %2029 = vdwg.mxu0
      %v2030 = vadd.f32 %v1851, %v2016
      %v2031 = vadd.f32 %v1854, %v2019
      %v2032 = vadd.f32 %v1859, %v2024
      %v2033 = vadd.f32 %v1862, %v2027
      %s2034 = scalar_lea.vmem %s3, 2
      %v2035 = vld [vmem:[%s2034] sm:$0x1]
      %v2037 = vlaneseq
      %v2038 = vshrl.u32 %v2037, 7
      %v2039 = vsub.s32 0, %v2038
      %v2040 = vrot.slane %v2035, %v2039
      %v2042 = vadd.f32 %v2030, %v2040
      %v2043 = vadd.f32 %v2031, %v2040
      %v2044 = vadd.f32 %v2032, %v2040
      %v2045 = vadd.f32 %v2033, %v2040
      %v2046 = vadd.f32 %v2042, %v899
      %v2047 = vadd.f32 %v2043, %v900
      %v2048 = vadd.f32 %v2044, %v901
      %v2049 = vadd.f32 %v2045, %v902
      %vm2050 = vcmp.ge.f32.partialorder %v2046, 0.0
      %vm2051 = vcmp.ge.f32.partialorder %v2047, 0.0
      %vm2052 = vcmp.ge.f32.partialorder %v2048, 0.0
      %vm2053 = vcmp.ge.f32.partialorder %v2049, 0.0
      %v2054 = vmul.f32 %v2046, 0.22916667
      %v2055 = vmul.f32 %v2047, 0.22916667
      %v2056 = vmul.f32 %v2048, 0.22916667
      %v2057 = vmul.f32 %v2049, 0.22916667
      %v2058 = vsel %vm2050, %v2046, %v2054
      %v2059 = vsel %vm2051, %v2047, %v2055
      %v2060 = vsel %vm2052, %v2048, %v2056
      %v2061 = vsel %vm2053, %v2049, %v2057
      %s2062 = scalar_lea.vmem %s1, 80
      %v2063 = vld [vmem:[%s2062] sm:$0xf]
      %v2064 = vld [vmem:[%s2062 + $0x4] sm:$0xf]
      %v2065 = vld [vmem:[%s2062 + $0x8] sm:$0xf]
      %v2066 = vld [vmem:[%s2062 + $0xc] sm:$0xf]
      %v2067 = vpack.c.bf16 %v2059, %v2058
      %v2068 = vpack.c.bf16 %v2061, %v2060
      %v2073 = vunpack.c.l.b16 %v2063
      %v2074 = vunpack.c.l.b16 %v2064
      %v2075 = vunpack.c.l.b16 %v2065
      %v2076 = vunpack.c.l.b16 %v2066
      %v2077 = vpack.c.b16 %v2074, %v2073
      %v2078 = vpack.c.b16 %v2076, %v2075
      %v2080 = vsel %vm229, %v2077, 0
      %v2083 = vsel %vm229, %v2078, 0
      %2085 = vmatprep.subr.bf16.mxu0 0
      %2086 = vmatpush1.bf16.msra.mxu0 0
      %2087 = vmatprep.subr.bf16.mxu0 0
      %2088 = vmatpush1.bf16.msra.mxu0 0
      %2089 = vmatprep.subr.bf16.mxu0 0
      %2090 = vmatpush1.bf16.msra.mxu0 0
      %2091 = vmatprep.subr.bf16.mxu0 0
      %2092 = vmatpush1.bf16.msra.mxu0 0
      %2093 = vmatprep.subr.bf16.mxu0 0
      %2094 = vmatpush1.bf16.msra.mxu0 0
      %2095 = vmatprep.subr.bf16.mxu0 0
      %2096 = vmatpush1.bf16.msra.mxu0 0
      %2097 = vmatprep.subr.bf16.mxu0 0
      %2098 = vmatpush1.bf16.msra.mxu0 %v2068
      %2099 = vmatprep.subr.bf16.mxu0 0
      %2100 = vmatpush1.bf16.msra.mxu0 %v2067
      %2101 = vmatprep.subr.bf16.mxu0 0
      %2102 = vmatpush2.bf16.msra.mxu0 0
      %2103 = vmatprep.subr.bf16.mxu0 0
      %2104 = vmatpush2.bf16.msra.mxu0 0
      %2105 = vmatprep.subr.bf16.mxu0 0
      %2106 = vmatpush2.bf16.msra.mxu0 0
      %2107 = vmatprep.subr.bf16.mxu0 0
      %2108 = vmatpush2.bf16.msra.mxu0 0
      %2109 = vmatprep.subr.bf16.mxu0 0
      %2110 = vmatpush2.bf16.msra.mxu0 0
      %2111 = vmatprep.subr.bf16.mxu0 0
      %2112 = vmatpush2.bf16.msra.mxu0 0
      %2113 = vmatprep.subr.bf16.mxu0 0
      %2114 = vmatpush2.bf16.msra.mxu0 0
      %2115 = vmatprep.subr.bf16.mxu0 0
      %2116 = vmatpush2.bf16.msra.mxu0 0
      %2117 = vmatprep.mubr.bf16.mxu0 0
      %2118 = vmatmul.mubr.bf16.gmra.mxu0 %v2080
      %v2119 = vpop.f32.mrf.mxu0
      %v2120 = vadd.f32 0.0, %v2119
      %v2121 = vpop.f32.mrf.mxu0
      %v2122 = vpop.f32.mrf.mxu0
      %v2123 = vadd.f32 0.0, %v2122
      %v2124 = vpop.f32.mrf.mxu0
      %2125 = vmatprep.mubr.bf16.mxu0 0
      %2126 = vmatmul.mubr.bf16.gmra.mxu0 %v2083
      %v2127 = vpop.f32.mrf.mxu0
      %v2128 = vadd.f32 0.0, %v2127
      %v2129 = vpop.f32.mrf.mxu0
      %v2130 = vpop.f32.mrf.mxu0
      %v2131 = vadd.f32 0.0, %v2130
      %v2132 = vpop.f32.mrf.mxu0
      %2133 = vdwg.mxu0
      %s2134 = scalar_lea.vmem %s2, 704
      %v2135 = vld [vmem:[%s2134] sm:$0xf]
      %v2136 = vld [vmem:[%s2134 + $0x4] sm:$0xf]
      %v2137 = vld [vmem:[%s2134 + $0x8] sm:$0xf]
      %v2138 = vld [vmem:[%s2134 + $0xc] sm:$0xf]
      %v2139 = vld [vmem:[%s2134 + $0x10] sm:$0xf]
      %v2140 = vld [vmem:[%s2134 + $0x14] sm:$0xf]
      %v2141 = vld [vmem:[%s2134 + $0x18] sm:$0xf]
      %v2142 = vld [vmem:[%s2134 + $0x1c] sm:$0xf]
      %v2143 = vld [vmem:[%s2134 + $0x20] sm:$0xf]
      %v2144 = vld [vmem:[%s2134 + $0x24] sm:$0xf]
      %v2145 = vld [vmem:[%s2134 + $0x28] sm:$0xf]
      %v2146 = vld [vmem:[%s2134 + $0x2c] sm:$0xf]
      %v2147 = vld [vmem:[%s2134 + $0x30] sm:$0xf]
      %v2148 = vld [vmem:[%s2134 + $0x34] sm:$0xf]
      %v2149 = vld [vmem:[%s2134 + $0x38] sm:$0xf]
      %v2150 = vld [vmem:[%s2134 + $0x3c] sm:$0xf]
      %v2151 = vpack.c.bf16 %v2123, %v2120
      %v2152 = vpack.c.bf16 %v2131, %v2128
      %v2169 = vunpack.c.l.b16 %v2135
      %v2170 = vunpack.c.l.b16 %v2136
      %v2171 = vunpack.c.l.b16 %v2137
      %v2172 = vunpack.c.l.b16 %v2138
      %v2173 = vunpack.c.l.b16 %v2139
      %v2174 = vunpack.c.l.b16 %v2140
      %v2175 = vunpack.c.l.b16 %v2141
      %v2176 = vunpack.c.l.b16 %v2142
      %v2177 = vunpack.c.l.b16 %v2143
      %v2178 = vunpack.c.l.b16 %v2144
      %v2179 = vunpack.c.l.b16 %v2145
      %v2180 = vunpack.c.l.b16 %v2146
      %v2181 = vunpack.c.l.b16 %v2147
      %v2182 = vunpack.c.l.b16 %v2148
      %v2183 = vunpack.c.l.b16 %v2149
      %v2184 = vunpack.c.l.b16 %v2150
      %v2185 = vpack.c.b16 %v2170, %v2169
      %v2186 = vpack.c.b16 %v2172, %v2171
      %v2187 = vpack.c.b16 %v2174, %v2173
      %v2188 = vpack.c.b16 %v2176, %v2175
      %v2189 = vpack.c.b16 %v2178, %v2177
      %v2190 = vpack.c.b16 %v2180, %v2179
      %v2191 = vpack.c.b16 %v2182, %v2181
      %v2192 = vpack.c.b16 %v2184, %v2183
      %2201 = vmatprep.subr.bf16.mxu0 0
      %2202 = vmatpush1.bf16.msra.mxu0 %v2192
      %2203 = vmatprep.subr.bf16.mxu0 0
      %2204 = vmatpush1.bf16.msra.mxu0 %v2191
      %2205 = vmatprep.subr.bf16.mxu0 0
      %2206 = vmatpush1.bf16.msra.mxu0 %v2190
      %2207 = vmatprep.subr.bf16.mxu0 0
      %2208 = vmatpush1.bf16.msra.mxu0 %v2189
      %2209 = vmatprep.subr.bf16.mxu0 0
      %2210 = vmatpush1.bf16.msra.mxu0 %v2188
      %2211 = vmatprep.subr.bf16.mxu0 0
      %2212 = vmatpush1.bf16.msra.mxu0 %v2187
      %2213 = vmatprep.subr.bf16.mxu0 0
      %2214 = vmatpush1.bf16.msra.mxu0 %v2186
      %2215 = vmatprep.subr.bf16.mxu0 0
      %2216 = vmatpush1.bf16.msra.mxu0 %v2185
      %2217 = vmatprep.subr.bf16.mxu0 0
      %2218 = vmatpush2.bf16.msra.mxu0 0
      %2219 = vmatprep.subr.bf16.mxu0 0
      %2220 = vmatpush2.bf16.msra.mxu0 0
      %2221 = vmatprep.subr.bf16.mxu0 0
      %2222 = vmatpush2.bf16.msra.mxu0 0
      %2223 = vmatprep.subr.bf16.mxu0 0
      %2224 = vmatpush2.bf16.msra.mxu0 0
      %2225 = vmatprep.subr.bf16.mxu0 0
      %2226 = vmatpush2.bf16.msra.mxu0 0
      %2227 = vmatprep.subr.bf16.mxu0 0
      %2228 = vmatpush2.bf16.msra.mxu0 0
      %2229 = vmatprep.subr.bf16.mxu0 0
      %2230 = vmatpush2.bf16.msra.mxu0 0
      %2231 = vmatprep.subr.bf16.mxu0 0
      %2232 = vmatpush2.bf16.msra.mxu0 0
      %2233 = vmatprep.mubr.bf16.mxu0 0
      %2234 = vmatmul.mubr.bf16.gmra.mxu0 %v2151
      %v2235 = vpop.f32.mrf.mxu0
      %v2236 = vadd.f32 0.0, %v2235
      %v2237 = vpop.f32.mrf.mxu0
      %v2238 = vpop.f32.mrf.mxu0
      %v2239 = vadd.f32 0.0, %v2238
      %v2240 = vpop.f32.mrf.mxu0
      %2241 = vmatprep.mubr.bf16.mxu0 0
      %2242 = vmatmul.mubr.bf16.gmra.mxu0 %v2152
      %v2243 = vpop.f32.mrf.mxu0
      %v2244 = vadd.f32 0.0, %v2243
      %v2245 = vpop.f32.mrf.mxu0
      %v2246 = vpop.f32.mrf.mxu0
      %v2247 = vadd.f32 0.0, %v2246
      %v2248 = vpop.f32.mrf.mxu0
      %2249 = vdwg.mxu0
      %s2250 = scalar_lea.vmem %s1, 96
      %v2251 = vld [vmem:[%s2250] sm:$0xf]
      %v2252 = vld [vmem:[%s2250 + $0x4] sm:$0xf]
      %v2253 = vld [vmem:[%s2250 + $0x8] sm:$0xf]
      %v2254 = vld [vmem:[%s2250 + $0xc] sm:$0xf]
      %v2255 = vpack.c.bf16 %v2239, %v2236
      %v2256 = vpack.c.bf16 %v2247, %v2244
      %v2261 = vunpack.c.l.b16 %v2251
      %v2262 = vunpack.c.l.b16 %v2252
      %v2263 = vunpack.c.l.b16 %v2253
      %v2264 = vunpack.c.l.b16 %v2254
      %v2265 = vpack.c.b16 %v2262, %v2261
      %v2266 = vpack.c.b16 %v2264, %v2263
      %v2268 = vsel %vm229, %v2265, 0
      %v2271 = vsel %vm229, %v2266, 0
      %2273 = vmatprep.subr.bf16.mxu0 0
      %2274 = vmatpush1.bf16.msra.mxu0 0
      %2275 = vmatprep.subr.bf16.mxu0 0
      %2276 = vmatpush1.bf16.msra.mxu0 0
      %2277 = vmatprep.subr.bf16.mxu0 0
      %2278 = vmatpush1.bf16.msra.mxu0 0
      %2279 = vmatprep.subr.bf16.mxu0 0
      %2280 = vmatpush1.bf16.msra.mxu0 0
      %2281 = vmatprep.subr.bf16.mxu0 0
      %2282 = vmatpush1.bf16.msra.mxu0 0
      %2283 = vmatprep.subr.bf16.mxu0 0
      %2284 = vmatpush1.bf16.msra.mxu0 0
      %2285 = vmatprep.subr.bf16.mxu0 0
      %2286 = vmatpush1.bf16.msra.mxu0 %v2256
      %2287 = vmatprep.subr.bf16.mxu0 0
      %2288 = vmatpush1.bf16.msra.mxu0 %v2255
      %2289 = vmatprep.subr.bf16.mxu0 0
      %2290 = vmatpush2.bf16.msra.mxu0 0
      %2291 = vmatprep.subr.bf16.mxu0 0
      %2292 = vmatpush2.bf16.msra.mxu0 0
      %2293 = vmatprep.subr.bf16.mxu0 0
      %2294 = vmatpush2.bf16.msra.mxu0 0
      %2295 = vmatprep.subr.bf16.mxu0 0
      %2296 = vmatpush2.bf16.msra.mxu0 0
      %2297 = vmatprep.subr.bf16.mxu0 0
      %2298 = vmatpush2.bf16.msra.mxu0 0
      %2299 = vmatprep.subr.bf16.mxu0 0
      %2300 = vmatpush2.bf16.msra.mxu0 0
      %2301 = vmatprep.subr.bf16.mxu0 0
      %2302 = vmatpush2.bf16.msra.mxu0 0
      %2303 = vmatprep.subr.bf16.mxu0 0
      %2304 = vmatpush2.bf16.msra.mxu0 0
      %2305 = vmatprep.mubr.bf16.mxu0 0
      %2306 = vmatmul.mubr.bf16.gmra.mxu0 %v2268
      %v2307 = vpop.f32.mrf.mxu0
      %v2308 = vadd.f32 0.0, %v2307
      %v2309 = vpop.f32.mrf.mxu0
      %v2310 = vpop.f32.mrf.mxu0
      %v2311 = vadd.f32 0.0, %v2310
      %v2312 = vpop.f32.mrf.mxu0
      %2313 = vmatprep.mubr.bf16.mxu0 0
      %2314 = vmatmul.mubr.bf16.gmra.mxu0 %v2271
      %v2315 = vpop.f32.mrf.mxu0
      %v2316 = vadd.f32 0.0, %v2315
      %v2317 = vpop.f32.mrf.mxu0
      %v2318 = vpop.f32.mrf.mxu0
      %v2319 = vadd.f32 0.0, %v2318
      %v2320 = vpop.f32.mrf.mxu0
      %2321 = vdwg.mxu0
      %s2322 = scalar_lea.vmem %s2, 768
      %v2323 = vld [vmem:[%s2322] sm:$0xf]
      %v2324 = vld [vmem:[%s2322 + $0x4] sm:$0xf]
      %v2325 = vld [vmem:[%s2322 + $0x8] sm:$0xf]
      %v2326 = vld [vmem:[%s2322 + $0xc] sm:$0xf]
      %v2327 = vld [vmem:[%s2322 + $0x10] sm:$0xf]
      %v2328 = vld [vmem:[%s2322 + $0x14] sm:$0xf]
      %v2329 = vld [vmem:[%s2322 + $0x18] sm:$0xf]
      %v2330 = vld [vmem:[%s2322 + $0x1c] sm:$0xf]
      %v2331 = vld [vmem:[%s2322 + $0x20] sm:$0xf]
      %v2332 = vld [vmem:[%s2322 + $0x24] sm:$0xf]
      %v2333 = vld [vmem:[%s2322 + $0x28] sm:$0xf]
      %v2334 = vld [vmem:[%s2322 + $0x2c] sm:$0xf]
      %v2335 = vld [vmem:[%s2322 + $0x30] sm:$0xf]
      %v2336 = vld [vmem:[%s2322 + $0x34] sm:$0xf]
      %v2337 = vld [vmem:[%s2322 + $0x38] sm:$0xf]
      %v2338 = vld [vmem:[%s2322 + $0x3c] sm:$0xf]
      %v2339 = vpack.c.bf16 %v2311, %v2308
      %v2340 = vpack.c.bf16 %v2319, %v2316
      %s2341 = scalar_lea.vmem %s2, 832
      %v2342 = vld [vmem:[%s2341] sm:$0xf]
      %v2343 = vld [vmem:[%s2341 + $0x4] sm:$0xf]
      %v2344 = vld [vmem:[%s2341 + $0x8] sm:$0xf]
      %v2345 = vld [vmem:[%s2341 + $0xc] sm:$0xf]
      %v2346 = vld [vmem:[%s2341 + $0x10] sm:$0xf]
      %v2347 = vld [vmem:[%s2341 + $0x14] sm:$0xf]
      %v2348 = vld [vmem:[%s2341 + $0x18] sm:$0xf]
      %v2349 = vld [vmem:[%s2341 + $0x1c] sm:$0xf]
      %v2350 = vld [vmem:[%s2341 + $0x20] sm:$0xf]
      %v2351 = vld [vmem:[%s2341 + $0x24] sm:$0xf]
      %v2352 = vld [vmem:[%s2341 + $0x28] sm:$0xf]
      %v2353 = vld [vmem:[%s2341 + $0x2c] sm:$0xf]
      %v2354 = vld [vmem:[%s2341 + $0x30] sm:$0xf]
      %v2355 = vld [vmem:[%s2341 + $0x34] sm:$0xf]
      %v2356 = vld [vmem:[%s2341 + $0x38] sm:$0xf]
      %v2357 = vld [vmem:[%s2341 + $0x3c] sm:$0xf]
      %v2374 = vunpack.c.l.b16 %v2342
      %v2375 = vunpack.c.l.b16 %v2343
      %v2376 = vunpack.c.l.b16 %v2344
      %v2377 = vunpack.c.l.b16 %v2345
      %v2378 = vunpack.c.l.b16 %v2346
      %v2379 = vunpack.c.l.b16 %v2347
      %v2380 = vunpack.c.l.b16 %v2348
      %v2381 = vunpack.c.l.b16 %v2349
      %v2382 = vunpack.c.l.b16 %v2350
      %v2383 = vunpack.c.l.b16 %v2351
      %v2384 = vunpack.c.l.b16 %v2352
      %v2385 = vunpack.c.l.b16 %v2353
      %v2386 = vunpack.c.l.b16 %v2354
      %v2387 = vunpack.c.l.b16 %v2355
      %v2388 = vunpack.c.l.b16 %v2356
      %v2389 = vunpack.c.l.b16 %v2357
      %v2390 = vpack.c.b16 %v2375, %v2374
      %v2391 = vpack.c.b16 %v2377, %v2376
      %v2392 = vpack.c.b16 %v2379, %v2378
      %v2393 = vpack.c.b16 %v2381, %v2380
      %v2394 = vpack.c.b16 %v2383, %v2382
      %v2395 = vpack.c.b16 %v2385, %v2384
      %v2396 = vpack.c.b16 %v2387, %v2386
      %v2397 = vpack.c.b16 %v2389, %v2388
      %2406 = vmatprep.subr.bf16.mxu0 0
      %2407 = vmatpush1.bf16.msra.mxu0 %v2397
      %2408 = vmatprep.subr.bf16.mxu0 0
      %2409 = vmatpush1.bf16.msra.mxu0 %v2396
      %2410 = vmatprep.subr.bf16.mxu0 0
      %2411 = vmatpush1.bf16.msra.mxu0 %v2395
      %2412 = vmatprep.subr.bf16.mxu0 0
      %2413 = vmatpush1.bf16.msra.mxu0 %v2394
      %2414 = vmatprep.subr.bf16.mxu0 0
      %2415 = vmatpush1.bf16.msra.mxu0 %v2393
      %2416 = vmatprep.subr.bf16.mxu0 0
      %2417 = vmatpush1.bf16.msra.mxu0 %v2392
      %2418 = vmatprep.subr.bf16.mxu0 0
      %2419 = vmatpush1.bf16.msra.mxu0 %v2391
      %2420 = vmatprep.subr.bf16.mxu0 0
      %2421 = vmatpush1.bf16.msra.mxu0 %v2390
      %2422 = vmatprep.subr.bf16.mxu0 0
      %2423 = vmatpush2.bf16.msra.mxu0 0
      %2424 = vmatprep.subr.bf16.mxu0 0
      %2425 = vmatpush2.bf16.msra.mxu0 0
      %2426 = vmatprep.subr.bf16.mxu0 0
      %2427 = vmatpush2.bf16.msra.mxu0 0
      %2428 = vmatprep.subr.bf16.mxu0 0
      %2429 = vmatpush2.bf16.msra.mxu0 0
      %2430 = vmatprep.subr.bf16.mxu0 0
      %2431 = vmatpush2.bf16.msra.mxu0 0
      %2432 = vmatprep.subr.bf16.mxu0 0
      %2433 = vmatpush2.bf16.msra.mxu0 0
      %2434 = vmatprep.subr.bf16.mxu0 0
      %2435 = vmatpush2.bf16.msra.mxu0 0
      %2436 = vmatprep.subr.bf16.mxu0 0
      %2437 = vmatpush2.bf16.msra.mxu0 0
      %2438 = vmatprep.mubr.bf16.mxu0 0
      %2439 = vmatmul.mubr.bf16.gmra.mxu0 %v2255
      %v2440 = vpop.f32.mrf.mxu0
      %v2441 = vadd.f32 0.0, %v2440
      %v2442 = vpop.f32.mrf.mxu0
      %v2443 = vpop.f32.mrf.mxu0
      %v2444 = vadd.f32 0.0, %v2443
      %v2445 = vpop.f32.mrf.mxu0
      %2446 = vmatprep.mubr.bf16.mxu0 0
      %2447 = vmatmul.mubr.bf16.gmra.mxu0 %v2256
      %v2448 = vpop.f32.mrf.mxu0
      %v2449 = vadd.f32 0.0, %v2448
      %v2450 = vpop.f32.mrf.mxu0
      %v2451 = vpop.f32.mrf.mxu0
      %v2452 = vadd.f32 0.0, %v2451
      %v2453 = vpop.f32.mrf.mxu0
      %2454 = vdwg.mxu0
      %v2471 = vunpack.c.l.b16 %v2323
      %v2472 = vunpack.c.l.b16 %v2324
      %v2473 = vunpack.c.l.b16 %v2325
      %v2474 = vunpack.c.l.b16 %v2326
      %v2475 = vunpack.c.l.b16 %v2327
      %v2476 = vunpack.c.l.b16 %v2328
      %v2477 = vunpack.c.l.b16 %v2329
      %v2478 = vunpack.c.l.b16 %v2330
      %v2479 = vunpack.c.l.b16 %v2331
      %v2480 = vunpack.c.l.b16 %v2332
      %v2481 = vunpack.c.l.b16 %v2333
      %v2482 = vunpack.c.l.b16 %v2334
      %v2483 = vunpack.c.l.b16 %v2335
      %v2484 = vunpack.c.l.b16 %v2336
      %v2485 = vunpack.c.l.b16 %v2337
      %v2486 = vunpack.c.l.b16 %v2338
      %v2487 = vpack.c.b16 %v2472, %v2471
      %v2488 = vpack.c.b16 %v2474, %v2473
      %v2489 = vpack.c.b16 %v2476, %v2475
      %v2490 = vpack.c.b16 %v2478, %v2477
      %v2491 = vpack.c.b16 %v2480, %v2479
      %v2492 = vpack.c.b16 %v2482, %v2481
      %v2493 = vpack.c.b16 %v2484, %v2483
      %v2494 = vpack.c.b16 %v2486, %v2485
      %2503 = vmatprep.subr.bf16.mxu0 0
      %2504 = vmatpush1.bf16.msra.mxu0 %v2494
      %2505 = vmatprep.subr.bf16.mxu0 0
      %2506 = vmatpush1.bf16.msra.mxu0 %v2493
      %2507 = vmatprep.subr.bf16.mxu0 0
      %2508 = vmatpush1.bf16.msra.mxu0 %v2492
      %2509 = vmatprep.subr.bf16.mxu0 0
      %2510 = vmatpush1.bf16.msra.mxu0 %v2491
      %2511 = vmatprep.subr.bf16.mxu0 0
      %2512 = vmatpush1.bf16.msra.mxu0 %v2490
      %2513 = vmatprep.subr.bf16.mxu0 0
      %2514 = vmatpush1.bf16.msra.mxu0 %v2489
      %2515 = vmatprep.subr.bf16.mxu0 0
      %2516 = vmatpush1.bf16.msra.mxu0 %v2488
      %2517 = vmatprep.subr.bf16.mxu0 0
      %2518 = vmatpush1.bf16.msra.mxu0 %v2487
      %2519 = vmatprep.subr.bf16.mxu0 0
      %2520 = vmatpush2.bf16.msra.mxu0 0
      %2521 = vmatprep.subr.bf16.mxu0 0
      %2522 = vmatpush2.bf16.msra.mxu0 0
      %2523 = vmatprep.subr.bf16.mxu0 0
      %2524 = vmatpush2.bf16.msra.mxu0 0
      %2525 = vmatprep.subr.bf16.mxu0 0
      %2526 = vmatpush2.bf16.msra.mxu0 0
      %2527 = vmatprep.subr.bf16.mxu0 0
      %2528 = vmatpush2.bf16.msra.mxu0 0
      %2529 = vmatprep.subr.bf16.mxu0 0
      %2530 = vmatpush2.bf16.msra.mxu0 0
      %2531 = vmatprep.subr.bf16.mxu0 0
      %2532 = vmatpush2.bf16.msra.mxu0 0
      %2533 = vmatprep.subr.bf16.mxu0 0
      %2534 = vmatpush2.bf16.msra.mxu0 0
      %2535 = vmatprep.mubr.bf16.mxu0 0
      %2536 = vmatmul.mubr.bf16.gmra.mxu0 %v2339
      %v2537 = vpop.f32.mrf.mxu0
      %v2538 = vadd.f32 %v2441, %v2537
      %v2539 = vpop.f32.mrf.mxu0
      %v2540 = vpop.f32.mrf.mxu0
      %v2541 = vadd.f32 %v2444, %v2540
      %v2542 = vpop.f32.mrf.mxu0
      %2543 = vmatprep.mubr.bf16.mxu0 0
      %2544 = vmatmul.mubr.bf16.gmra.mxu0 %v2340
      %v2545 = vpop.f32.mrf.mxu0
      %v2546 = vadd.f32 %v2449, %v2545
      %v2547 = vpop.f32.mrf.mxu0
      %v2548 = vpop.f32.mrf.mxu0
      %v2549 = vadd.f32 %v2452, %v2548
      %v2550 = vpop.f32.mrf.mxu0
      %2551 = vdwg.mxu0
      %s2552 = scalar_lea.vmem %s1, 112
      %v2553 = vld [vmem:[%s2552] sm:$0xf]
      %v2554 = vld [vmem:[%s2552 + $0x4] sm:$0xf]
      %v2555 = vld [vmem:[%s2552 + $0x8] sm:$0xf]
      %v2556 = vld [vmem:[%s2552 + $0xc] sm:$0xf]
      %v2561 = vunpack.c.l.b16 %v2553
      %v2562 = vunpack.c.l.b16 %v2554
      %v2563 = vunpack.c.l.b16 %v2555
      %v2564 = vunpack.c.l.b16 %v2556
      %v2565 = vpack.c.b16 %v2562, %v2561
      %v2566 = vpack.c.b16 %v2564, %v2563
      %v2568 = vsel %vm229, %v2565, 0
      %v2571 = vsel %vm229, %v2566, 0
      %2573 = vmatprep.subr.bf16.mxu0 0
      %2574 = vmatpush1.bf16.msra.mxu0 0
      %2575 = vmatprep.subr.bf16.mxu0 0
      %2576 = vmatpush1.bf16.msra.mxu0 0
      %2577 = vmatprep.subr.bf16.mxu0 0
      %2578 = vmatpush1.bf16.msra.mxu0 0
      %2579 = vmatprep.subr.bf16.mxu0 0
      %2580 = vmatpush1.bf16.msra.mxu0 0
      %2581 = vmatprep.subr.bf16.mxu0 0
      %2582 = vmatpush1.bf16.msra.mxu0 0
      %2583 = vmatprep.subr.bf16.mxu0 0
      %2584 = vmatpush1.bf16.msra.mxu0 0
      %2585 = vmatprep.subr.bf16.mxu0 0
      %2586 = vmatpush1.bf16.msra.mxu0 %v2256
      %2587 = vmatprep.subr.bf16.mxu0 0
      %2588 = vmatpush1.bf16.msra.mxu0 %v2255
      %2589 = vmatprep.subr.bf16.mxu0 0
      %2590 = vmatpush2.bf16.msra.mxu0 0
      %2591 = vmatprep.subr.bf16.mxu0 0
      %2592 = vmatpush2.bf16.msra.mxu0 0
      %2593 = vmatprep.subr.bf16.mxu0 0
      %2594 = vmatpush2.bf16.msra.mxu0 0
      %2595 = vmatprep.subr.bf16.mxu0 0
      %2596 = vmatpush2.bf16.msra.mxu0 0
      %2597 = vmatprep.subr.bf16.mxu0 0
      %2598 = vmatpush2.bf16.msra.mxu0 0
      %2599 = vmatprep.subr.bf16.mxu0 0
      %2600 = vmatpush2.bf16.msra.mxu0 0
      %2601 = vmatprep.subr.bf16.mxu0 0
      %2602 = vmatpush2.bf16.msra.mxu0 0
      %2603 = vmatprep.subr.bf16.mxu0 0
      %2604 = vmatpush2.bf16.msra.mxu0 0
      %2605 = vmatprep.mubr.bf16.mxu0 0
      %2606 = vmatmul.mubr.bf16.gmra.mxu0 %v2568
      %v2607 = vpop.f32.mrf.mxu0
      %v2608 = vadd.f32 0.0, %v2607
      %v2609 = vpop.f32.mrf.mxu0
      %v2610 = vpop.f32.mrf.mxu0
      %v2611 = vadd.f32 0.0, %v2610
      %v2612 = vpop.f32.mrf.mxu0
      %2613 = vmatprep.mubr.bf16.mxu0 0
      %2614 = vmatmul.mubr.bf16.gmra.mxu0 %v2571
      %v2615 = vpop.f32.mrf.mxu0
      %v2616 = vadd.f32 0.0, %v2615
      %v2617 = vpop.f32.mrf.mxu0
      %v2618 = vpop.f32.mrf.mxu0
      %v2619 = vadd.f32 0.0, %v2618
      %v2620 = vpop.f32.mrf.mxu0
      %2621 = vdwg.mxu0
      %s2622 = scalar_lea.vmem %s2, 896
      %v2623 = vld [vmem:[%s2622] sm:$0xf]
      %v2624 = vld [vmem:[%s2622 + $0x4] sm:$0xf]
      %v2625 = vld [vmem:[%s2622 + $0x8] sm:$0xf]
      %v2626 = vld [vmem:[%s2622 + $0xc] sm:$0xf]
      %v2627 = vld [vmem:[%s2622 + $0x10] sm:$0xf]
      %v2628 = vld [vmem:[%s2622 + $0x14] sm:$0xf]
      %v2629 = vld [vmem:[%s2622 + $0x18] sm:$0xf]
      %v2630 = vld [vmem:[%s2622 + $0x1c] sm:$0xf]
      %v2631 = vld [vmem:[%s2622 + $0x20] sm:$0xf]
      %v2632 = vld [vmem:[%s2622 + $0x24] sm:$0xf]
      %v2633 = vld [vmem:[%s2622 + $0x28] sm:$0xf]
      %v2634 = vld [vmem:[%s2622 + $0x2c] sm:$0xf]
      %v2635 = vld [vmem:[%s2622 + $0x30] sm:$0xf]
      %v2636 = vld [vmem:[%s2622 + $0x34] sm:$0xf]
      %v2637 = vld [vmem:[%s2622 + $0x38] sm:$0xf]
      %v2638 = vld [vmem:[%s2622 + $0x3c] sm:$0xf]
      %v2639 = vpack.c.bf16 %v2611, %v2608
      %v2640 = vpack.c.bf16 %v2619, %v2616
      %v2657 = vunpack.c.l.b16 %v2623
      %v2658 = vunpack.c.l.b16 %v2624
      %v2659 = vunpack.c.l.b16 %v2625
      %v2660 = vunpack.c.l.b16 %v2626
      %v2661 = vunpack.c.l.b16 %v2627
      %v2662 = vunpack.c.l.b16 %v2628
      %v2663 = vunpack.c.l.b16 %v2629
      %v2664 = vunpack.c.l.b16 %v2630
      %v2665 = vunpack.c.l.b16 %v2631
      %v2666 = vunpack.c.l.b16 %v2632
      %v2667 = vunpack.c.l.b16 %v2633
      %v2668 = vunpack.c.l.b16 %v2634
      %v2669 = vunpack.c.l.b16 %v2635
      %v2670 = vunpack.c.l.b16 %v2636
      %v2671 = vunpack.c.l.b16 %v2637
      %v2672 = vunpack.c.l.b16 %v2638
      %v2673 = vpack.c.b16 %v2658, %v2657
      %v2674 = vpack.c.b16 %v2660, %v2659
      %v2675 = vpack.c.b16 %v2662, %v2661
      %v2676 = vpack.c.b16 %v2664, %v2663
      %v2677 = vpack.c.b16 %v2666, %v2665
      %v2678 = vpack.c.b16 %v2668, %v2667
      %v2679 = vpack.c.b16 %v2670, %v2669
      %v2680 = vpack.c.b16 %v2672, %v2671
      %2689 = vmatprep.subr.bf16.mxu0 0
      %2690 = vmatpush1.bf16.msra.mxu0 %v2680
      %2691 = vmatprep.subr.bf16.mxu0 0
      %2692 = vmatpush1.bf16.msra.mxu0 %v2679
      %2693 = vmatprep.subr.bf16.mxu0 0
      %2694 = vmatpush1.bf16.msra.mxu0 %v2678
      %2695 = vmatprep.subr.bf16.mxu0 0
      %2696 = vmatpush1.bf16.msra.mxu0 %v2677
      %2697 = vmatprep.subr.bf16.mxu0 0
      %2698 = vmatpush1.bf16.msra.mxu0 %v2676
      %2699 = vmatprep.subr.bf16.mxu0 0
      %2700 = vmatpush1.bf16.msra.mxu0 %v2675
      %2701 = vmatprep.subr.bf16.mxu0 0
      %2702 = vmatpush1.bf16.msra.mxu0 %v2674
      %2703 = vmatprep.subr.bf16.mxu0 0
      %2704 = vmatpush1.bf16.msra.mxu0 %v2673
      %2705 = vmatprep.subr.bf16.mxu0 0
      %2706 = vmatpush2.bf16.msra.mxu0 0
      %2707 = vmatprep.subr.bf16.mxu0 0
      %2708 = vmatpush2.bf16.msra.mxu0 0
      %2709 = vmatprep.subr.bf16.mxu0 0
      %2710 = vmatpush2.bf16.msra.mxu0 0
      %2711 = vmatprep.subr.bf16.mxu0 0
      %2712 = vmatpush2.bf16.msra.mxu0 0
      %2713 = vmatprep.subr.bf16.mxu0 0
      %2714 = vmatpush2.bf16.msra.mxu0 0
      %2715 = vmatprep.subr.bf16.mxu0 0
      %2716 = vmatpush2.bf16.msra.mxu0 0
      %2717 = vmatprep.subr.bf16.mxu0 0
      %2718 = vmatpush2.bf16.msra.mxu0 0
      %2719 = vmatprep.subr.bf16.mxu0 0
      %2720 = vmatpush2.bf16.msra.mxu0 0
      %2721 = vmatprep.mubr.bf16.mxu0 0
      %2722 = vmatmul.mubr.bf16.gmra.mxu0 %v2639
      %v2723 = vpop.f32.mrf.mxu0
      %v2724 = vadd.f32 0.0, %v2723
      %v2725 = vpop.f32.mrf.mxu0
      %v2726 = vpop.f32.mrf.mxu0
      %v2727 = vadd.f32 0.0, %v2726
      %v2728 = vpop.f32.mrf.mxu0
      %2729 = vmatprep.mubr.bf16.mxu0 0
      %2730 = vmatmul.mubr.bf16.gmra.mxu0 %v2640
      %v2731 = vpop.f32.mrf.mxu0
      %v2732 = vadd.f32 0.0, %v2731
      %v2733 = vpop.f32.mrf.mxu0
      %v2734 = vpop.f32.mrf.mxu0
      %v2735 = vadd.f32 0.0, %v2734
      %v2736 = vpop.f32.mrf.mxu0
      %2737 = vdwg.mxu0
      %v2738 = vadd.f32 %v2538, %v2724
      %v2739 = vadd.f32 %v2541, %v2727
      %v2740 = vadd.f32 %v2546, %v2732
      %v2741 = vadd.f32 %v2549, %v2735
      %s2742 = scalar_lea.vmem %s3, 3
      %v2743 = vld [vmem:[%s2742] sm:$0x1]
      %v2745 = vlaneseq
      %v2746 = vshrl.u32 %v2745, 7
      %v2747 = vsub.s32 0, %v2746
      %v2748 = vrot.slane %v2743, %v2747
      %v2750 = vadd.f32 %v2738, %v2748
      %v2751 = vadd.f32 %v2739, %v2748
      %v2752 = vadd.f32 %v2740, %v2748
      %v2753 = vadd.f32 %v2741, %v2748
      %2754 = vmatprep.subr.bf16.mxu0 0
      %2755 = vmatpush1.bf16.msra.mxu0 0
      %2756 = vmatprep.subr.bf16.mxu0 0
      %2757 = vmatpush1.bf16.msra.mxu0 0
      %2758 = vmatprep.subr.bf16.mxu0 0
      %2759 = vmatpush1.bf16.msra.mxu0 0
      %2760 = vmatprep.subr.bf16.mxu0 0
      %2761 = vmatpush1.bf16.msra.mxu0 0
      %2762 = vmatprep.subr.bf16.mxu0 0
      %2763 = vmatpush1.bf16.msra.mxu0 0
      %2764 = vmatprep.subr.bf16.mxu0 0
      %2765 = vmatpush1.bf16.msra.mxu0 0
      %2766 = vmatprep.subr.bf16.mxu0 0
      %2767 = vmatpush1.bf16.msra.mxu0 %v2068
      %2768 = vmatprep.subr.bf16.mxu0 0
      %2769 = vmatpush1.bf16.msra.mxu0 %v2067
      %2770 = vmatprep.subr.bf16.mxu0 0
      %2771 = vmatpush2.bf16.msra.mxu0 0
      %2772 = vmatprep.subr.bf16.mxu0 0
      %2773 = vmatpush2.bf16.msra.mxu0 0
      %2774 = vmatprep.subr.bf16.mxu0 0
      %2775 = vmatpush2.bf16.msra.mxu0 0
      %2776 = vmatprep.subr.bf16.mxu0 0
      %2777 = vmatpush2.bf16.msra.mxu0 0
      %2778 = vmatprep.subr.bf16.mxu0 0
      %2779 = vmatpush2.bf16.msra.mxu0 0
      %2780 = vmatprep.subr.bf16.mxu0 0
      %2781 = vmatpush2.bf16.msra.mxu0 0
      %2782 = vmatprep.subr.bf16.mxu0 0
      %2783 = vmatpush2.bf16.msra.mxu0 0
      %2784 = vmatprep.subr.bf16.mxu0 0
      %2785 = vmatpush2.bf16.msra.mxu0 0
      %2786 = vmatprep.mubr.bf16.mxu0 0
      %2787 = vmatmul.mubr.bf16.gmra.mxu0 %v418
      %v2788 = vpop.f32.mrf.mxu0
      %v2789 = vadd.f32 0.0, %v2788
      %v2790 = vpop.f32.mrf.mxu0
      %v2791 = vpop.f32.mrf.mxu0
      %v2792 = vadd.f32 0.0, %v2791
      %v2793 = vpop.f32.mrf.mxu0
      %2794 = vmatprep.mubr.bf16.mxu0 0
      %2795 = vmatmul.mubr.bf16.gmra.mxu0 %v421
      %v2796 = vpop.f32.mrf.mxu0
      %v2797 = vadd.f32 0.0, %v2796
      %v2798 = vpop.f32.mrf.mxu0
      %v2799 = vpop.f32.mrf.mxu0
      %v2800 = vadd.f32 0.0, %v2799
      %v2801 = vpop.f32.mrf.mxu0
      %2802 = vdwg.mxu0
      %s2803 = scalar_lea.vmem %s2, 960
      %v2804 = vld [vmem:[%s2803] sm:$0xf]
      %v2805 = vld [vmem:[%s2803 + $0x4] sm:$0xf]
      %v2806 = vld [vmem:[%s2803 + $0x8] sm:$0xf]
      %v2807 = vld [vmem:[%s2803 + $0xc] sm:$0xf]
      %v2808 = vld [vmem:[%s2803 + $0x10] sm:$0xf]
      %v2809 = vld [vmem:[%s2803 + $0x14] sm:$0xf]
      %v2810 = vld [vmem:[%s2803 + $0x18] sm:$0xf]
      %v2811 = vld [vmem:[%s2803 + $0x1c] sm:$0xf]
      %v2812 = vld [vmem:[%s2803 + $0x20] sm:$0xf]
      %v2813 = vld [vmem:[%s2803 + $0x24] sm:$0xf]
      %v2814 = vld [vmem:[%s2803 + $0x28] sm:$0xf]
      %v2815 = vld [vmem:[%s2803 + $0x2c] sm:$0xf]
      %v2816 = vld [vmem:[%s2803 + $0x30] sm:$0xf]
      %v2817 = vld [vmem:[%s2803 + $0x34] sm:$0xf]
      %v2818 = vld [vmem:[%s2803 + $0x38] sm:$0xf]
      %v2819 = vld [vmem:[%s2803 + $0x3c] sm:$0xf]
      %v2820 = vpack.c.bf16 %v2792, %v2789
      %v2821 = vpack.c.bf16 %v2800, %v2797
      %s2822 = scalar_lea.vmem %s2, 1024
      %v2823 = vld [vmem:[%s2822] sm:$0xf]
      %v2824 = vld [vmem:[%s2822 + $0x4] sm:$0xf]
      %v2825 = vld [vmem:[%s2822 + $0x8] sm:$0xf]
      %v2826 = vld [vmem:[%s2822 + $0xc] sm:$0xf]
      %v2827 = vld [vmem:[%s2822 + $0x10] sm:$0xf]
      %v2828 = vld [vmem:[%s2822 + $0x14] sm:$0xf]
      %v2829 = vld [vmem:[%s2822 + $0x18] sm:$0xf]
      %v2830 = vld [vmem:[%s2822 + $0x1c] sm:$0xf]
      %v2831 = vld [vmem:[%s2822 + $0x20] sm:$0xf]
      %v2832 = vld [vmem:[%s2822 + $0x24] sm:$0xf]
      %v2833 = vld [vmem:[%s2822 + $0x28] sm:$0xf]
      %v2834 = vld [vmem:[%s2822 + $0x2c] sm:$0xf]
      %v2835 = vld [vmem:[%s2822 + $0x30] sm:$0xf]
      %v2836 = vld [vmem:[%s2822 + $0x34] sm:$0xf]
      %v2837 = vld [vmem:[%s2822 + $0x38] sm:$0xf]
      %v2838 = vld [vmem:[%s2822 + $0x3c] sm:$0xf]
      %v2855 = vunpack.c.l.b16 %v2823
      %v2856 = vunpack.c.l.b16 %v2824
      %v2857 = vunpack.c.l.b16 %v2825
      %v2858 = vunpack.c.l.b16 %v2826
      %v2859 = vunpack.c.l.b16 %v2827
      %v2860 = vunpack.c.l.b16 %v2828
      %v2861 = vunpack.c.l.b16 %v2829
      %v2862 = vunpack.c.l.b16 %v2830
      %v2863 = vunpack.c.l.b16 %v2831
      %v2864 = vunpack.c.l.b16 %v2832
      %v2865 = vunpack.c.l.b16 %v2833
      %v2866 = vunpack.c.l.b16 %v2834
      %v2867 = vunpack.c.l.b16 %v2835
      %v2868 = vunpack.c.l.b16 %v2836
      %v2869 = vunpack.c.l.b16 %v2837
      %v2870 = vunpack.c.l.b16 %v2838
      %v2871 = vpack.c.b16 %v2856, %v2855
      %v2872 = vpack.c.b16 %v2858, %v2857
      %v2873 = vpack.c.b16 %v2860, %v2859
      %v2874 = vpack.c.b16 %v2862, %v2861
      %v2875 = vpack.c.b16 %v2864, %v2863
      %v2876 = vpack.c.b16 %v2866, %v2865
      %v2877 = vpack.c.b16 %v2868, %v2867
      %v2878 = vpack.c.b16 %v2870, %v2869
      %2887 = vmatprep.subr.bf16.mxu0 0
      %2888 = vmatpush1.bf16.msra.mxu0 %v2878
      %2889 = vmatprep.subr.bf16.mxu0 0
      %2890 = vmatpush1.bf16.msra.mxu0 %v2877
      %2891 = vmatprep.subr.bf16.mxu0 0
      %2892 = vmatpush1.bf16.msra.mxu0 %v2876
      %2893 = vmatprep.subr.bf16.mxu0 0
      %2894 = vmatpush1.bf16.msra.mxu0 %v2875
      %2895 = vmatprep.subr.bf16.mxu0 0
      %2896 = vmatpush1.bf16.msra.mxu0 %v2874
      %2897 = vmatprep.subr.bf16.mxu0 0
      %2898 = vmatpush1.bf16.msra.mxu0 %v2873
      %2899 = vmatprep.subr.bf16.mxu0 0
      %2900 = vmatpush1.bf16.msra.mxu0 %v2872
      %2901 = vmatprep.subr.bf16.mxu0 0
      %2902 = vmatpush1.bf16.msra.mxu0 %v2871
      %2903 = vmatprep.subr.bf16.mxu0 0
      %2904 = vmatpush2.bf16.msra.mxu0 0
      %2905 = vmatprep.subr.bf16.mxu0 0
      %2906 = vmatpush2.bf16.msra.mxu0 0
      %2907 = vmatprep.subr.bf16.mxu0 0
      %2908 = vmatpush2.bf16.msra.mxu0 0
      %2909 = vmatprep.subr.bf16.mxu0 0
      %2910 = vmatpush2.bf16.msra.mxu0 0
      %2911 = vmatprep.subr.bf16.mxu0 0
      %2912 = vmatpush2.bf16.msra.mxu0 0
      %2913 = vmatprep.subr.bf16.mxu0 0
      %2914 = vmatpush2.bf16.msra.mxu0 0
      %2915 = vmatprep.subr.bf16.mxu0 0
      %2916 = vmatpush2.bf16.msra.mxu0 0
      %2917 = vmatprep.subr.bf16.mxu0 0
      %2918 = vmatpush2.bf16.msra.mxu0 0
      %2919 = vmatprep.mubr.bf16.mxu0 0
      %2920 = vmatmul.mubr.bf16.gmra.mxu0 %v2067
      %v2921 = vpop.f32.mrf.mxu0
      %v2922 = vadd.f32 0.0, %v2921
      %v2923 = vpop.f32.mrf.mxu0
      %v2924 = vpop.f32.mrf.mxu0
      %v2925 = vadd.f32 0.0, %v2924
      %v2926 = vpop.f32.mrf.mxu0
      %2927 = vmatprep.mubr.bf16.mxu0 0
      %2928 = vmatmul.mubr.bf16.gmra.mxu0 %v2068
      %v2929 = vpop.f32.mrf.mxu0
      %v2930 = vadd.f32 0.0, %v2929
      %v2931 = vpop.f32.mrf.mxu0
      %v2932 = vpop.f32.mrf.mxu0
      %v2933 = vadd.f32 0.0, %v2932
      %v2934 = vpop.f32.mrf.mxu0
      %2935 = vdwg.mxu0
      %v2952 = vunpack.c.l.b16 %v2804
      %v2953 = vunpack.c.l.b16 %v2805
      %v2954 = vunpack.c.l.b16 %v2806
      %v2955 = vunpack.c.l.b16 %v2807
      %v2956 = vunpack.c.l.b16 %v2808
      %v2957 = vunpack.c.l.b16 %v2809
      %v2958 = vunpack.c.l.b16 %v2810
      %v2959 = vunpack.c.l.b16 %v2811
      %v2960 = vunpack.c.l.b16 %v2812
      %v2961 = vunpack.c.l.b16 %v2813
      %v2962 = vunpack.c.l.b16 %v2814
      %v2963 = vunpack.c.l.b16 %v2815
      %v2964 = vunpack.c.l.b16 %v2816
      %v2965 = vunpack.c.l.b16 %v2817
      %v2966 = vunpack.c.l.b16 %v2818
      %v2967 = vunpack.c.l.b16 %v2819
      %v2968 = vpack.c.b16 %v2953, %v2952
      %v2969 = vpack.c.b16 %v2955, %v2954
      %v2970 = vpack.c.b16 %v2957, %v2956
      %v2971 = vpack.c.b16 %v2959, %v2958
      %v2972 = vpack.c.b16 %v2961, %v2960
      %v2973 = vpack.c.b16 %v2963, %v2962
      %v2974 = vpack.c.b16 %v2965, %v2964
      %v2975 = vpack.c.b16 %v2967, %v2966
      %2984 = vmatprep.subr.bf16.mxu0 0
      %2985 = vmatpush1.bf16.msra.mxu0 %v2975
      %2986 = vmatprep.subr.bf16.mxu0 0
      %2987 = vmatpush1.bf16.msra.mxu0 %v2974
      %2988 = vmatprep.subr.bf16.mxu0 0
      %2989 = vmatpush1.bf16.msra.mxu0 %v2973
      %2990 = vmatprep.subr.bf16.mxu0 0
      %2991 = vmatpush1.bf16.msra.mxu0 %v2972
      %2992 = vmatprep.subr.bf16.mxu0 0
      %2993 = vmatpush1.bf16.msra.mxu0 %v2971
      %2994 = vmatprep.subr.bf16.mxu0 0
      %2995 = vmatpush1.bf16.msra.mxu0 %v2970
      %2996 = vmatprep.subr.bf16.mxu0 0
      %2997 = vmatpush1.bf16.msra.mxu0 %v2969
      %2998 = vmatprep.subr.bf16.mxu0 0
      %2999 = vmatpush1.bf16.msra.mxu0 %v2968
      %3000 = vmatprep.subr.bf16.mxu0 0
      %3001 = vmatpush2.bf16.msra.mxu0 0
      %3002 = vmatprep.subr.bf16.mxu0 0
      %3003 = vmatpush2.bf16.msra.mxu0 0
      %3004 = vmatprep.subr.bf16.mxu0 0
      %3005 = vmatpush2.bf16.msra.mxu0 0
      %3006 = vmatprep.subr.bf16.mxu0 0
      %3007 = vmatpush2.bf16.msra.mxu0 0
      %3008 = vmatprep.subr.bf16.mxu0 0
      %3009 = vmatpush2.bf16.msra.mxu0 0
      %3010 = vmatprep.subr.bf16.mxu0 0
      %3011 = vmatpush2.bf16.msra.mxu0 0
      %3012 = vmatprep.subr.bf16.mxu0 0
      %3013 = vmatpush2.bf16.msra.mxu0 0
      %3014 = vmatprep.subr.bf16.mxu0 0
      %3015 = vmatpush2.bf16.msra.mxu0 0
      %3016 = vmatprep.mubr.bf16.mxu0 0
      %3017 = vmatmul.mubr.bf16.gmra.mxu0 %v2820
      %v3018 = vpop.f32.mrf.mxu0
      %v3019 = vadd.f32 %v2922, %v3018
      %v3020 = vpop.f32.mrf.mxu0
      %v3021 = vpop.f32.mrf.mxu0
      %v3022 = vadd.f32 %v2925, %v3021
      %v3023 = vpop.f32.mrf.mxu0
      %3024 = vmatprep.mubr.bf16.mxu0 0
      %3025 = vmatmul.mubr.bf16.gmra.mxu0 %v2821
      %v3026 = vpop.f32.mrf.mxu0
      %v3027 = vadd.f32 %v2930, %v3026
      %v3028 = vpop.f32.mrf.mxu0
      %v3029 = vpop.f32.mrf.mxu0
      %v3030 = vadd.f32 %v2933, %v3029
      %v3031 = vpop.f32.mrf.mxu0
      %3032 = vdwg.mxu0
      %3033 = vmatprep.subr.bf16.mxu0 0
      %3034 = vmatpush1.bf16.msra.mxu0 0
      %3035 = vmatprep.subr.bf16.mxu0 0
      %3036 = vmatpush1.bf16.msra.mxu0 0
      %3037 = vmatprep.subr.bf16.mxu0 0
      %3038 = vmatpush1.bf16.msra.mxu0 0
      %3039 = vmatprep.subr.bf16.mxu0 0
      %3040 = vmatpush1.bf16.msra.mxu0 0
      %3041 = vmatprep.subr.bf16.mxu0 0
      %3042 = vmatpush1.bf16.msra.mxu0 0
      %3043 = vmatprep.subr.bf16.mxu0 0
      %3044 = vmatpush1.bf16.msra.mxu0 0
      %3045 = vmatprep.subr.bf16.mxu0 0
      %3046 = vmatpush1.bf16.msra.mxu0 %v2068
      %3047 = vmatprep.subr.bf16.mxu0 0
      %3048 = vmatpush1.bf16.msra.mxu0 %v2067
      %3049 = vmatprep.subr.bf16.mxu0 0
      %3050 = vmatpush2.bf16.msra.mxu0 0
      %3051 = vmatprep.subr.bf16.mxu0 0
      %3052 = vmatpush2.bf16.msra.mxu0 0
      %3053 = vmatprep.subr.bf16.mxu0 0
      %3054 = vmatpush2.bf16.msra.mxu0 0
      %3055 = vmatprep.subr.bf16.mxu0 0
      %3056 = vmatpush2.bf16.msra.mxu0 0
      %3057 = vmatprep.subr.bf16.mxu0 0
      %3058 = vmatpush2.bf16.msra.mxu0 0
      %3059 = vmatprep.subr.bf16.mxu0 0
      %3060 = vmatpush2.bf16.msra.mxu0 0
      %3061 = vmatprep.subr.bf16.mxu0 0
      %3062 = vmatpush2.bf16.msra.mxu0 0
      %3063 = vmatprep.subr.bf16.mxu0 0
      %3064 = vmatpush2.bf16.msra.mxu0 0
      %3065 = vmatprep.mubr.bf16.mxu0 0
      %3066 = vmatmul.mubr.bf16.gmra.mxu0 %v718
      %v3067 = vpop.f32.mrf.mxu0
      %v3068 = vadd.f32 0.0, %v3067
      %v3069 = vpop.f32.mrf.mxu0
      %v3070 = vpop.f32.mrf.mxu0
      %v3071 = vadd.f32 0.0, %v3070
      %v3072 = vpop.f32.mrf.mxu0
      %3073 = vmatprep.mubr.bf16.mxu0 0
      %3074 = vmatmul.mubr.bf16.gmra.mxu0 %v721
      %v3075 = vpop.f32.mrf.mxu0
      %v3076 = vadd.f32 0.0, %v3075
      %v3077 = vpop.f32.mrf.mxu0
      %v3078 = vpop.f32.mrf.mxu0
      %v3079 = vadd.f32 0.0, %v3078
      %v3080 = vpop.f32.mrf.mxu0
      %3081 = vdwg.mxu0
      %s3082 = scalar_lea.vmem %s2, 1088
      %v3083 = vld [vmem:[%s3082] sm:$0xf]
      %v3084 = vld [vmem:[%s3082 + $0x4] sm:$0xf]
      %v3085 = vld [vmem:[%s3082 + $0x8] sm:$0xf]
      %v3086 = vld [vmem:[%s3082 + $0xc] sm:$0xf]
      %v3087 = vld [vmem:[%s3082 + $0x10] sm:$0xf]
      %v3088 = vld [vmem:[%s3082 + $0x14] sm:$0xf]
      %v3089 = vld [vmem:[%s3082 + $0x18] sm:$0xf]
      %v3090 = vld [vmem:[%s3082 + $0x1c] sm:$0xf]
      %v3091 = vld [vmem:[%s3082 + $0x20] sm:$0xf]
      %v3092 = vld [vmem:[%s3082 + $0x24] sm:$0xf]
      %v3093 = vld [vmem:[%s3082 + $0x28] sm:$0xf]
      %v3094 = vld [vmem:[%s3082 + $0x2c] sm:$0xf]
      %v3095 = vld [vmem:[%s3082 + $0x30] sm:$0xf]
      %v3096 = vld [vmem:[%s3082 + $0x34] sm:$0xf]
      %v3097 = vld [vmem:[%s3082 + $0x38] sm:$0xf]
      %v3098 = vld [vmem:[%s3082 + $0x3c] sm:$0xf]
      %v3099 = vpack.c.bf16 %v3071, %v3068
      %v3100 = vpack.c.bf16 %v3079, %v3076
      %v3117 = vunpack.c.l.b16 %v3083
      %v3118 = vunpack.c.l.b16 %v3084
      %v3119 = vunpack.c.l.b16 %v3085
      %v3120 = vunpack.c.l.b16 %v3086
      %v3121 = vunpack.c.l.b16 %v3087
      %v3122 = vunpack.c.l.b16 %v3088
      %v3123 = vunpack.c.l.b16 %v3089
      %v3124 = vunpack.c.l.b16 %v3090
      %v3125 = vunpack.c.l.b16 %v3091
      %v3126 = vunpack.c.l.b16 %v3092
      %v3127 = vunpack.c.l.b16 %v3093
      %v3128 = vunpack.c.l.b16 %v3094
      %v3129 = vunpack.c.l.b16 %v3095
      %v3130 = vunpack.c.l.b16 %v3096
      %v3131 = vunpack.c.l.b16 %v3097
      %v3132 = vunpack.c.l.b16 %v3098
      %v3133 = vpack.c.b16 %v3118, %v3117
      %v3134 = vpack.c.b16 %v3120, %v3119
      %v3135 = vpack.c.b16 %v3122, %v3121
      %v3136 = vpack.c.b16 %v3124, %v3123
      %v3137 = vpack.c.b16 %v3126, %v3125
      %v3138 = vpack.c.b16 %v3128, %v3127
      %v3139 = vpack.c.b16 %v3130, %v3129
      %v3140 = vpack.c.b16 %v3132, %v3131
      %3149 = vmatprep.subr.bf16.mxu0 0
      %3150 = vmatpush1.bf16.msra.mxu0 %v3140
      %3151 = vmatprep.subr.bf16.mxu0 0
      %3152 = vmatpush1.bf16.msra.mxu0 %v3139
      %3153 = vmatprep.subr.bf16.mxu0 0
      %3154 = vmatpush1.bf16.msra.mxu0 %v3138
      %3155 = vmatprep.subr.bf16.mxu0 0
      %3156 = vmatpush1.bf16.msra.mxu0 %v3137
      %3157 = vmatprep.subr.bf16.mxu0 0
      %3158 = vmatpush1.bf16.msra.mxu0 %v3136
      %3159 = vmatprep.subr.bf16.mxu0 0
      %3160 = vmatpush1.bf16.msra.mxu0 %v3135
      %3161 = vmatprep.subr.bf16.mxu0 0
      %3162 = vmatpush1.bf16.msra.mxu0 %v3134
      %3163 = vmatprep.subr.bf16.mxu0 0
      %3164 = vmatpush1.bf16.msra.mxu0 %v3133
      %3165 = vmatprep.subr.bf16.mxu0 0
      %3166 = vmatpush2.bf16.msra.mxu0 0
      %3167 = vmatprep.subr.bf16.mxu0 0
      %3168 = vmatpush2.bf16.msra.mxu0 0
      %3169 = vmatprep.subr.bf16.mxu0 0
      %3170 = vmatpush2.bf16.msra.mxu0 0
      %3171 = vmatprep.subr.bf16.mxu0 0
      %3172 = vmatpush2.bf16.msra.mxu0 0
      %3173 = vmatprep.subr.bf16.mxu0 0
      %3174 = vmatpush2.bf16.msra.mxu0 0
      %3175 = vmatprep.subr.bf16.mxu0 0
      %3176 = vmatpush2.bf16.msra.mxu0 0
      %3177 = vmatprep.subr.bf16.mxu0 0
      %3178 = vmatpush2.bf16.msra.mxu0 0
      %3179 = vmatprep.subr.bf16.mxu0 0
      %3180 = vmatpush2.bf16.msra.mxu0 0
      %3181 = vmatprep.mubr.bf16.mxu0 0
      %3182 = vmatmul.mubr.bf16.gmra.mxu0 %v3099
      %v3183 = vpop.f32.mrf.mxu0
      %v3184 = vadd.f32 0.0, %v3183
      %v3185 = vpop.f32.mrf.mxu0
      %v3186 = vpop.f32.mrf.mxu0
      %v3187 = vadd.f32 0.0, %v3186
      %v3188 = vpop.f32.mrf.mxu0
      %3189 = vmatprep.mubr.bf16.mxu0 0
      %3190 = vmatmul.mubr.bf16.gmra.mxu0 %v3100
      %v3191 = vpop.f32.mrf.mxu0
      %v3192 = vadd.f32 0.0, %v3191
      %v3193 = vpop.f32.mrf.mxu0
      %v3194 = vpop.f32.mrf.mxu0
      %v3195 = vadd.f32 0.0, %v3194
      %v3196 = vpop.f32.mrf.mxu0
      %3197 = vdwg.mxu0
      %v3198 = vadd.f32 %v3019, %v3184
      %v3199 = vadd.f32 %v3022, %v3187
      %v3200 = vadd.f32 %v3027, %v3192
      %v3201 = vadd.f32 %v3030, %v3195
      %s3202 = scalar_lea.vmem %s3, 4
      %v3203 = vld [vmem:[%s3202] sm:$0x1]
      %v3205 = vlaneseq
      %v3206 = vshrl.u32 %v3205, 7
      %v3207 = vsub.s32 0, %v3206
      %v3208 = vrot.slane %v3203, %v3207
      %v3210 = vadd.f32 %v3198, %v3208
      %v3211 = vadd.f32 %v3199, %v3208
      %v3212 = vadd.f32 %v3200, %v3208
      %v3213 = vadd.f32 %v3201, %v3208
      %vm3214 = vcmp.ge.f32.partialorder %v3210, 0.0
      %vm3215 = vcmp.ge.f32.partialorder %v3211, 0.0
      %vm3216 = vcmp.ge.f32.partialorder %v3212, 0.0
      %vm3217 = vcmp.ge.f32.partialorder %v3213, 0.0
      %v3218 = vmul.f32 %v3210, 0.22916667
      %v3219 = vmul.f32 %v3211, 0.22916667
      %v3220 = vmul.f32 %v3212, 0.22916667
      %v3221 = vmul.f32 %v3213, 0.22916667
      %v3222 = vsel %vm3214, %v3210, %v3218
      %v3223 = vsel %vm3215, %v3211, %v3219
      %v3224 = vsel %vm3216, %v3212, %v3220
      %v3225 = vsel %vm3217, %v3213, %v3221
      %v3226 = vpack.c.bf16 %v3223, %v3222
      %v3227 = vpack.c.bf16 %v3225, %v3224
      %3228 = vmatprep.subr.bf16.mxu0 0
      %3229 = vmatpush1.bf16.msra.mxu0 0
      %3230 = vmatprep.subr.bf16.mxu0 0
      %3231 = vmatpush1.bf16.msra.mxu0 0
      %3232 = vmatprep.subr.bf16.mxu0 0
      %3233 = vmatpush1.bf16.msra.mxu0 0
      %3234 = vmatprep.subr.bf16.mxu0 0
      %3235 = vmatpush1.bf16.msra.mxu0 0
      %3236 = vmatprep.subr.bf16.mxu0 0
      %3237 = vmatpush1.bf16.msra.mxu0 0
      %3238 = vmatprep.subr.bf16.mxu0 0
      %3239 = vmatpush1.bf16.msra.mxu0 0
      %3240 = vmatprep.subr.bf16.mxu0 0
      %3241 = vmatpush1.bf16.msra.mxu0 %v3227
      %3242 = vmatprep.subr.bf16.mxu0 0
      %3243 = vmatpush1.bf16.msra.mxu0 %v3226
      %3244 = vmatprep.subr.bf16.mxu0 0
      %3245 = vmatpush2.bf16.msra.mxu0 0
      %3246 = vmatprep.subr.bf16.mxu0 0
      %3247 = vmatpush2.bf16.msra.mxu0 0
      %3248 = vmatprep.subr.bf16.mxu0 0
      %3249 = vmatpush2.bf16.msra.mxu0 0
      %3250 = vmatprep.subr.bf16.mxu0 0
      %3251 = vmatpush2.bf16.msra.mxu0 0
      %3252 = vmatprep.subr.bf16.mxu0 0
      %3253 = vmatpush2.bf16.msra.mxu0 0
      %3254 = vmatprep.subr.bf16.mxu0 0
      %3255 = vmatpush2.bf16.msra.mxu0 0
      %3256 = vmatprep.subr.bf16.mxu0 0
      %3257 = vmatpush2.bf16.msra.mxu0 0
      %3258 = vmatprep.subr.bf16.mxu0 0
      %3259 = vmatpush2.bf16.msra.mxu0 0
      %3260 = vmatprep.mubr.bf16.mxu0 0
      %3261 = vmatmul.mubr.bf16.gmra.mxu0 %v2080
      %v3262 = vpop.f32.mrf.mxu0
      %v3263 = vadd.f32 0.0, %v3262
      %v3264 = vpop.f32.mrf.mxu0
      %v3265 = vpop.f32.mrf.mxu0
      %v3266 = vadd.f32 0.0, %v3265
      %v3267 = vpop.f32.mrf.mxu0
      %3268 = vmatprep.mubr.bf16.mxu0 0
      %3269 = vmatmul.mubr.bf16.gmra.mxu0 %v2083
      %v3270 = vpop.f32.mrf.mxu0
      %v3271 = vadd.f32 0.0, %v3270
      %v3272 = vpop.f32.mrf.mxu0
      %v3273 = vpop.f32.mrf.mxu0
      %v3274 = vadd.f32 0.0, %v3273
      %v3275 = vpop.f32.mrf.mxu0
      %3276 = vdwg.mxu0
      %v3277 = vpack.c.bf16 %v3266, %v3263
      %v3278 = vpack.c.bf16 %v3274, %v3271
      %3279 = vmatprep.subr.bf16.mxu0 0
      %3280 = vmatpush1.bf16.msra.mxu0 %v2192
      %3281 = vmatprep.subr.bf16.mxu0 0
      %3282 = vmatpush1.bf16.msra.mxu0 %v2191
      %3283 = vmatprep.subr.bf16.mxu0 0
      %3284 = vmatpush1.bf16.msra.mxu0 %v2190
      %3285 = vmatprep.subr.bf16.mxu0 0
      %3286 = vmatpush1.bf16.msra.mxu0 %v2189
      %3287 = vmatprep.subr.bf16.mxu0 0
      %3288 = vmatpush1.bf16.msra.mxu0 %v2188
      %3289 = vmatprep.subr.bf16.mxu0 0
      %3290 = vmatpush1.bf16.msra.mxu0 %v2187
      %3291 = vmatprep.subr.bf16.mxu0 0
      %3292 = vmatpush1.bf16.msra.mxu0 %v2186
      %3293 = vmatprep.subr.bf16.mxu0 0
      %3294 = vmatpush1.bf16.msra.mxu0 %v2185
      %3295 = vmatprep.subr.bf16.mxu0 0
      %3296 = vmatpush2.bf16.msra.mxu0 0
      %3297 = vmatprep.subr.bf16.mxu0 0
      %3298 = vmatpush2.bf16.msra.mxu0 0
      %3299 = vmatprep.subr.bf16.mxu0 0
      %3300 = vmatpush2.bf16.msra.mxu0 0
      %3301 = vmatprep.subr.bf16.mxu0 0
      %3302 = vmatpush2.bf16.msra.mxu0 0
      %3303 = vmatprep.subr.bf16.mxu0 0
      %3304 = vmatpush2.bf16.msra.mxu0 0
      %3305 = vmatprep.subr.bf16.mxu0 0
      %3306 = vmatpush2.bf16.msra.mxu0 0
      %3307 = vmatprep.subr.bf16.mxu0 0
      %3308 = vmatpush2.bf16.msra.mxu0 0
      %3309 = vmatprep.subr.bf16.mxu0 0
      %3310 = vmatpush2.bf16.msra.mxu0 0
      %3311 = vmatprep.mubr.bf16.mxu0 0
      %3312 = vmatmul.mubr.bf16.gmra.mxu0 %v3277
      %v3313 = vpop.f32.mrf.mxu0
      %v3314 = vadd.f32 0.0, %v3313
      %v3315 = vpop.f32.mrf.mxu0
      %v3316 = vpop.f32.mrf.mxu0
      %v3317 = vadd.f32 0.0, %v3316
      %v3318 = vpop.f32.mrf.mxu0
      %3319 = vmatprep.mubr.bf16.mxu0 0
      %3320 = vmatmul.mubr.bf16.gmra.mxu0 %v3278
      %v3321 = vpop.f32.mrf.mxu0
      %v3322 = vadd.f32 0.0, %v3321
      %v3323 = vpop.f32.mrf.mxu0
      %v3324 = vpop.f32.mrf.mxu0
      %v3325 = vadd.f32 0.0, %v3324
      %v3326 = vpop.f32.mrf.mxu0
      %3327 = vdwg.mxu0
      %v3328 = vpack.c.bf16 %v3317, %v3314
      %v3329 = vpack.c.bf16 %v3325, %v3322
      %3330 = vmatprep.subr.bf16.mxu0 0
      %3331 = vmatpush1.bf16.msra.mxu0 0
      %3332 = vmatprep.subr.bf16.mxu0 0
      %3333 = vmatpush1.bf16.msra.mxu0 0
      %3334 = vmatprep.subr.bf16.mxu0 0
      %3335 = vmatpush1.bf16.msra.mxu0 0
      %3336 = vmatprep.subr.bf16.mxu0 0
      %3337 = vmatpush1.bf16.msra.mxu0 0
      %3338 = vmatprep.subr.bf16.mxu0 0
      %3339 = vmatpush1.bf16.msra.mxu0 0
      %3340 = vmatprep.subr.bf16.mxu0 0
      %3341 = vmatpush1.bf16.msra.mxu0 0
      %3342 = vmatprep.subr.bf16.mxu0 0
      %3343 = vmatpush1.bf16.msra.mxu0 %v3329
      %3344 = vmatprep.subr.bf16.mxu0 0
      %3345 = vmatpush1.bf16.msra.mxu0 %v3328
      %3346 = vmatprep.subr.bf16.mxu0 0
      %3347 = vmatpush2.bf16.msra.mxu0 0
      %3348 = vmatprep.subr.bf16.mxu0 0
      %3349 = vmatpush2.bf16.msra.mxu0 0
      %3350 = vmatprep.subr.bf16.mxu0 0
      %3351 = vmatpush2.bf16.msra.mxu0 0
      %3352 = vmatprep.subr.bf16.mxu0 0
      %3353 = vmatpush2.bf16.msra.mxu0 0
      %3354 = vmatprep.subr.bf16.mxu0 0
      %3355 = vmatpush2.bf16.msra.mxu0 0
      %3356 = vmatprep.subr.bf16.mxu0 0
      %3357 = vmatpush2.bf16.msra.mxu0 0
      %3358 = vmatprep.subr.bf16.mxu0 0
      %3359 = vmatpush2.bf16.msra.mxu0 0
      %3360 = vmatprep.subr.bf16.mxu0 0
      %3361 = vmatpush2.bf16.msra.mxu0 0
      %3362 = vmatprep.mubr.bf16.mxu0 0
      %3363 = vmatmul.mubr.bf16.gmra.mxu0 %v2268
      %v3364 = vpop.f32.mrf.mxu0
      %v3365 = vadd.f32 0.0, %v3364
      %v3366 = vpop.f32.mrf.mxu0
      %v3367 = vpop.f32.mrf.mxu0
      %v3368 = vadd.f32 0.0, %v3367
      %v3369 = vpop.f32.mrf.mxu0
      %3370 = vmatprep.mubr.bf16.mxu0 0
      %3371 = vmatmul.mubr.bf16.gmra.mxu0 %v2271
      %v3372 = vpop.f32.mrf.mxu0
      %v3373 = vadd.f32 0.0, %v3372
      %v3374 = vpop.f32.mrf.mxu0
      %v3375 = vpop.f32.mrf.mxu0
      %v3376 = vadd.f32 0.0, %v3375
      %v3377 = vpop.f32.mrf.mxu0
      %3378 = vdwg.mxu0
      %s3379 = scalar_lea.vmem %s2, 1152
      %v3380 = vld [vmem:[%s3379] sm:$0xf]
      %v3381 = vld [vmem:[%s3379 + $0x4] sm:$0xf]
      %v3382 = vld [vmem:[%s3379 + $0x8] sm:$0xf]
      %v3383 = vld [vmem:[%s3379 + $0xc] sm:$0xf]
      %v3384 = vld [vmem:[%s3379 + $0x10] sm:$0xf]
      %v3385 = vld [vmem:[%s3379 + $0x14] sm:$0xf]
      %v3386 = vld [vmem:[%s3379 + $0x18] sm:$0xf]
      %v3387 = vld [vmem:[%s3379 + $0x1c] sm:$0xf]
      %v3388 = vld [vmem:[%s3379 + $0x20] sm:$0xf]
      %v3389 = vld [vmem:[%s3379 + $0x24] sm:$0xf]
      %v3390 = vld [vmem:[%s3379 + $0x28] sm:$0xf]
      %v3391 = vld [vmem:[%s3379 + $0x2c] sm:$0xf]
      %v3392 = vld [vmem:[%s3379 + $0x30] sm:$0xf]
      %v3393 = vld [vmem:[%s3379 + $0x34] sm:$0xf]
      %v3394 = vld [vmem:[%s3379 + $0x38] sm:$0xf]
      %v3395 = vld [vmem:[%s3379 + $0x3c] sm:$0xf]
      %v3396 = vpack.c.bf16 %v3368, %v3365
      %v3397 = vpack.c.bf16 %v3376, %v3373
      %s3398 = scalar_lea.vmem %s2, 1216
      %v3399 = vld [vmem:[%s3398] sm:$0xf]
      %v3400 = vld [vmem:[%s3398 + $0x4] sm:$0xf]
      %v3401 = vld [vmem:[%s3398 + $0x8] sm:$0xf]
      %v3402 = vld [vmem:[%s3398 + $0xc] sm:$0xf]
      %v3403 = vld [vmem:[%s3398 + $0x10] sm:$0xf]
      %v3404 = vld [vmem:[%s3398 + $0x14] sm:$0xf]
      %v3405 = vld [vmem:[%s3398 + $0x18] sm:$0xf]
      %v3406 = vld [vmem:[%s3398 + $0x1c] sm:$0xf]
      %v3407 = vld [vmem:[%s3398 + $0x20] sm:$0xf]
      %v3408 = vld [vmem:[%s3398 + $0x24] sm:$0xf]
      %v3409 = vld [vmem:[%s3398 + $0x28] sm:$0xf]
      %v3410 = vld [vmem:[%s3398 + $0x2c] sm:$0xf]
      %v3411 = vld [vmem:[%s3398 + $0x30] sm:$0xf]
      %v3412 = vld [vmem:[%s3398 + $0x34] sm:$0xf]
      %v3413 = vld [vmem:[%s3398 + $0x38] sm:$0xf]
      %v3414 = vld [vmem:[%s3398 + $0x3c] sm:$0xf]
      %v3431 = vunpack.c.l.b16 %v3399
      %v3432 = vunpack.c.l.b16 %v3400
      %v3433 = vunpack.c.l.b16 %v3401
      %v3434 = vunpack.c.l.b16 %v3402
      %v3435 = vunpack.c.l.b16 %v3403
      %v3436 = vunpack.c.l.b16 %v3404
      %v3437 = vunpack.c.l.b16 %v3405
      %v3438 = vunpack.c.l.b16 %v3406
      %v3439 = vunpack.c.l.b16 %v3407
      %v3440 = vunpack.c.l.b16 %v3408
      %v3441 = vunpack.c.l.b16 %v3409
      %v3442 = vunpack.c.l.b16 %v3410
      %v3443 = vunpack.c.l.b16 %v3411
      %v3444 = vunpack.c.l.b16 %v3412
      %v3445 = vunpack.c.l.b16 %v3413
      %v3446 = vunpack.c.l.b16 %v3414
      %v3447 = vpack.c.b16 %v3432, %v3431
      %v3448 = vpack.c.b16 %v3434, %v3433
      %v3449 = vpack.c.b16 %v3436, %v3435
      %v3450 = vpack.c.b16 %v3438, %v3437
      %v3451 = vpack.c.b16 %v3440, %v3439
      %v3452 = vpack.c.b16 %v3442, %v3441
      %v3453 = vpack.c.b16 %v3444, %v3443
      %v3454 = vpack.c.b16 %v3446, %v3445
      %3463 = vmatprep.subr.bf16.mxu0 0
      %3464 = vmatpush1.bf16.msra.mxu0 %v3454
      %3465 = vmatprep.subr.bf16.mxu0 0
      %3466 = vmatpush1.bf16.msra.mxu0 %v3453
      %3467 = vmatprep.subr.bf16.mxu0 0
      %3468 = vmatpush1.bf16.msra.mxu0 %v3452
      %3469 = vmatprep.subr.bf16.mxu0 0
      %3470 = vmatpush1.bf16.msra.mxu0 %v3451
      %3471 = vmatprep.subr.bf16.mxu0 0
      %3472 = vmatpush1.bf16.msra.mxu0 %v3450
      %3473 = vmatprep.subr.bf16.mxu0 0
      %3474 = vmatpush1.bf16.msra.mxu0 %v3449
      %3475 = vmatprep.subr.bf16.mxu0 0
      %3476 = vmatpush1.bf16.msra.mxu0 %v3448
      %3477 = vmatprep.subr.bf16.mxu0 0
      %3478 = vmatpush1.bf16.msra.mxu0 %v3447
      %3479 = vmatprep.subr.bf16.mxu0 0
      %3480 = vmatpush2.bf16.msra.mxu0 0
      %3481 = vmatprep.subr.bf16.mxu0 0
      %3482 = vmatpush2.bf16.msra.mxu0 0
      %3483 = vmatprep.subr.bf16.mxu0 0
      %3484 = vmatpush2.bf16.msra.mxu0 0
      %3485 = vmatprep.subr.bf16.mxu0 0
      %3486 = vmatpush2.bf16.msra.mxu0 0
      %3487 = vmatprep.subr.bf16.mxu0 0
      %3488 = vmatpush2.bf16.msra.mxu0 0
      %3489 = vmatprep.subr.bf16.mxu0 0
      %3490 = vmatpush2.bf16.msra.mxu0 0
      %3491 = vmatprep.subr.bf16.mxu0 0
      %3492 = vmatpush2.bf16.msra.mxu0 0
      %3493 = vmatprep.subr.bf16.mxu0 0
      %3494 = vmatpush2.bf16.msra.mxu0 0
      %3495 = vmatprep.mubr.bf16.mxu0 0
      %3496 = vmatmul.mubr.bf16.gmra.mxu0 %v3328
      %v3497 = vpop.f32.mrf.mxu0
      %v3498 = vadd.f32 0.0, %v3497
      %v3499 = vpop.f32.mrf.mxu0
      %v3500 = vpop.f32.mrf.mxu0
      %v3501 = vadd.f32 0.0, %v3500
      %v3502 = vpop.f32.mrf.mxu0
      %3503 = vmatprep.mubr.bf16.mxu0 0
      %3504 = vmatmul.mubr.bf16.gmra.mxu0 %v3329
      %v3505 = vpop.f32.mrf.mxu0
      %v3506 = vadd.f32 0.0, %v3505
      %v3507 = vpop.f32.mrf.mxu0
      %v3508 = vpop.f32.mrf.mxu0
      %v3509 = vadd.f32 0.0, %v3508
      %v3510 = vpop.f32.mrf.mxu0
      %3511 = vdwg.mxu0
      %v3528 = vunpack.c.l.b16 %v3380
      %v3529 = vunpack.c.l.b16 %v3381
      %v3530 = vunpack.c.l.b16 %v3382
      %v3531 = vunpack.c.l.b16 %v3383
      %v3532 = vunpack.c.l.b16 %v3384
      %v3533 = vunpack.c.l.b16 %v3385
      %v3534 = vunpack.c.l.b16 %v3386
      %v3535 = vunpack.c.l.b16 %v3387
      %v3536 = vunpack.c.l.b16 %v3388
      %v3537 = vunpack.c.l.b16 %v3389
      %v3538 = vunpack.c.l.b16 %v3390
      %v3539 = vunpack.c.l.b16 %v3391
      %v3540 = vunpack.c.l.b16 %v3392
      %v3541 = vunpack.c.l.b16 %v3393
      %v3542 = vunpack.c.l.b16 %v3394
      %v3543 = vunpack.c.l.b16 %v3395
      %v3544 = vpack.c.b16 %v3529, %v3528
      %v3545 = vpack.c.b16 %v3531, %v3530
      %v3546 = vpack.c.b16 %v3533, %v3532
      %v3547 = vpack.c.b16 %v3535, %v3534
      %v3548 = vpack.c.b16 %v3537, %v3536
      %v3549 = vpack.c.b16 %v3539, %v3538
      %v3550 = vpack.c.b16 %v3541, %v3540
      %v3551 = vpack.c.b16 %v3543, %v3542
      %3560 = vmatprep.subr.bf16.mxu0 0
      %3561 = vmatpush1.bf16.msra.mxu0 %v3551
      %3562 = vmatprep.subr.bf16.mxu0 0
      %3563 = vmatpush1.bf16.msra.mxu0 %v3550
      %3564 = vmatprep.subr.bf16.mxu0 0
      %3565 = vmatpush1.bf16.msra.mxu0 %v3549
      %3566 = vmatprep.subr.bf16.mxu0 0
      %3567 = vmatpush1.bf16.msra.mxu0 %v3548
      %3568 = vmatprep.subr.bf16.mxu0 0
      %3569 = vmatpush1.bf16.msra.mxu0 %v3547
      %3570 = vmatprep.subr.bf16.mxu0 0
      %3571 = vmatpush1.bf16.msra.mxu0 %v3546
      %3572 = vmatprep.subr.bf16.mxu0 0
      %3573 = vmatpush1.bf16.msra.mxu0 %v3545
      %3574 = vmatprep.subr.bf16.mxu0 0
      %3575 = vmatpush1.bf16.msra.mxu0 %v3544
      %3576 = vmatprep.subr.bf16.mxu0 0
      %3577 = vmatpush2.bf16.msra.mxu0 0
      %3578 = vmatprep.subr.bf16.mxu0 0
      %3579 = vmatpush2.bf16.msra.mxu0 0
      %3580 = vmatprep.subr.bf16.mxu0 0
      %3581 = vmatpush2.bf16.msra.mxu0 0
      %3582 = vmatprep.subr.bf16.mxu0 0
      %3583 = vmatpush2.bf16.msra.mxu0 0
      %3584 = vmatprep.subr.bf16.mxu0 0
      %3585 = vmatpush2.bf16.msra.mxu0 0
      %3586 = vmatprep.subr.bf16.mxu0 0
      %3587 = vmatpush2.bf16.msra.mxu0 0
      %3588 = vmatprep.subr.bf16.mxu0 0
      %3589 = vmatpush2.bf16.msra.mxu0 0
      %3590 = vmatprep.subr.bf16.mxu0 0
      %3591 = vmatpush2.bf16.msra.mxu0 0
      %3592 = vmatprep.mubr.bf16.mxu0 0
      %3593 = vmatmul.mubr.bf16.gmra.mxu0 %v3396
      %v3594 = vpop.f32.mrf.mxu0
      %v3595 = vadd.f32 %v3498, %v3594
      %v3596 = vpop.f32.mrf.mxu0
      %v3597 = vpop.f32.mrf.mxu0
      %v3598 = vadd.f32 %v3501, %v3597
      %v3599 = vpop.f32.mrf.mxu0
      %3600 = vmatprep.mubr.bf16.mxu0 0
      %3601 = vmatmul.mubr.bf16.gmra.mxu0 %v3397
      %v3602 = vpop.f32.mrf.mxu0
      %v3603 = vadd.f32 %v3506, %v3602
      %v3604 = vpop.f32.mrf.mxu0
      %v3605 = vpop.f32.mrf.mxu0
      %v3606 = vadd.f32 %v3509, %v3605
      %v3607 = vpop.f32.mrf.mxu0
      %3608 = vdwg.mxu0
      %3609 = vmatprep.subr.bf16.mxu0 0
      %3610 = vmatpush1.bf16.msra.mxu0 0
      %3611 = vmatprep.subr.bf16.mxu0 0
      %3612 = vmatpush1.bf16.msra.mxu0 0
      %3613 = vmatprep.subr.bf16.mxu0 0
      %3614 = vmatpush1.bf16.msra.mxu0 0
      %3615 = vmatprep.subr.bf16.mxu0 0
      %3616 = vmatpush1.bf16.msra.mxu0 0
      %3617 = vmatprep.subr.bf16.mxu0 0
      %3618 = vmatpush1.bf16.msra.mxu0 0
      %3619 = vmatprep.subr.bf16.mxu0 0
      %3620 = vmatpush1.bf16.msra.mxu0 0
      %3621 = vmatprep.subr.bf16.mxu0 0
      %3622 = vmatpush1.bf16.msra.mxu0 %v3329
      %3623 = vmatprep.subr.bf16.mxu0 0
      %3624 = vmatpush1.bf16.msra.mxu0 %v3328
      %3625 = vmatprep.subr.bf16.mxu0 0
      %3626 = vmatpush2.bf16.msra.mxu0 0
      %3627 = vmatprep.subr.bf16.mxu0 0
      %3628 = vmatpush2.bf16.msra.mxu0 0
      %3629 = vmatprep.subr.bf16.mxu0 0
      %3630 = vmatpush2.bf16.msra.mxu0 0
      %3631 = vmatprep.subr.bf16.mxu0 0
      %3632 = vmatpush2.bf16.msra.mxu0 0
      %3633 = vmatprep.subr.bf16.mxu0 0
      %3634 = vmatpush2.bf16.msra.mxu0 0
      %3635 = vmatprep.subr.bf16.mxu0 0
      %3636 = vmatpush2.bf16.msra.mxu0 0
      %3637 = vmatprep.subr.bf16.mxu0 0
      %3638 = vmatpush2.bf16.msra.mxu0 0
      %3639 = vmatprep.subr.bf16.mxu0 0
      %3640 = vmatpush2.bf16.msra.mxu0 0
      %3641 = vmatprep.mubr.bf16.mxu0 0
      %3642 = vmatmul.mubr.bf16.gmra.mxu0 %v2568
      %v3643 = vpop.f32.mrf.mxu0
      %v3644 = vadd.f32 0.0, %v3643
      %v3645 = vpop.f32.mrf.mxu0
      %v3646 = vpop.f32.mrf.mxu0
      %v3647 = vadd.f32 0.0, %v3646
      %v3648 = vpop.f32.mrf.mxu0
      %3649 = vmatprep.mubr.bf16.mxu0 0
      %3650 = vmatmul.mubr.bf16.gmra.mxu0 %v2571
      %v3651 = vpop.f32.mrf.mxu0
      %v3652 = vadd.f32 0.0, %v3651
      %v3653 = vpop.f32.mrf.mxu0
      %v3654 = vpop.f32.mrf.mxu0
      %v3655 = vadd.f32 0.0, %v3654
      %v3656 = vpop.f32.mrf.mxu0
      %3657 = vdwg.mxu0
      %s3658 = scalar_lea.vmem %s2, 1280
      %v3659 = vld [vmem:[%s3658] sm:$0xf]
      %v3660 = vld [vmem:[%s3658 + $0x4] sm:$0xf]
      %v3661 = vld [vmem:[%s3658 + $0x8] sm:$0xf]
      %v3662 = vld [vmem:[%s3658 + $0xc] sm:$0xf]
      %v3663 = vld [vmem:[%s3658 + $0x10] sm:$0xf]
      %v3664 = vld [vmem:[%s3658 + $0x14] sm:$0xf]
      %v3665 = vld [vmem:[%s3658 + $0x18] sm:$0xf]
      %v3666 = vld [vmem:[%s3658 + $0x1c] sm:$0xf]
      %v3667 = vld [vmem:[%s3658 + $0x20] sm:$0xf]
      %v3668 = vld [vmem:[%s3658 + $0x24] sm:$0xf]
      %v3669 = vld [vmem:[%s3658 + $0x28] sm:$0xf]
      %v3670 = vld [vmem:[%s3658 + $0x2c] sm:$0xf]
      %v3671 = vld [vmem:[%s3658 + $0x30] sm:$0xf]
      %v3672 = vld [vmem:[%s3658 + $0x34] sm:$0xf]
      %v3673 = vld [vmem:[%s3658 + $0x38] sm:$0xf]
      %v3674 = vld [vmem:[%s3658 + $0x3c] sm:$0xf]
      %v3675 = vpack.c.bf16 %v3647, %v3644
      %v3676 = vpack.c.bf16 %v3655, %v3652
      %v3693 = vunpack.c.l.b16 %v3659
      %v3694 = vunpack.c.l.b16 %v3660
      %v3695 = vunpack.c.l.b16 %v3661
      %v3696 = vunpack.c.l.b16 %v3662
      %v3697 = vunpack.c.l.b16 %v3663
      %v3698 = vunpack.c.l.b16 %v3664
      %v3699 = vunpack.c.l.b16 %v3665
      %v3700 = vunpack.c.l.b16 %v3666
      %v3701 = vunpack.c.l.b16 %v3667
      %v3702 = vunpack.c.l.b16 %v3668
      %v3703 = vunpack.c.l.b16 %v3669
      %v3704 = vunpack.c.l.b16 %v3670
      %v3705 = vunpack.c.l.b16 %v3671
      %v3706 = vunpack.c.l.b16 %v3672
      %v3707 = vunpack.c.l.b16 %v3673
      %v3708 = vunpack.c.l.b16 %v3674
      %v3709 = vpack.c.b16 %v3694, %v3693
      %v3710 = vpack.c.b16 %v3696, %v3695
      %v3711 = vpack.c.b16 %v3698, %v3697
      %v3712 = vpack.c.b16 %v3700, %v3699
      %v3713 = vpack.c.b16 %v3702, %v3701
      %v3714 = vpack.c.b16 %v3704, %v3703
      %v3715 = vpack.c.b16 %v3706, %v3705
      %v3716 = vpack.c.b16 %v3708, %v3707
      %3725 = vmatprep.subr.bf16.mxu0 0
      %3726 = vmatpush1.bf16.msra.mxu0 %v3716
      %3727 = vmatprep.subr.bf16.mxu0 0
      %3728 = vmatpush1.bf16.msra.mxu0 %v3715
      %3729 = vmatprep.subr.bf16.mxu0 0
      %3730 = vmatpush1.bf16.msra.mxu0 %v3714
      %3731 = vmatprep.subr.bf16.mxu0 0
      %3732 = vmatpush1.bf16.msra.mxu0 %v3713
      %3733 = vmatprep.subr.bf16.mxu0 0
      %3734 = vmatpush1.bf16.msra.mxu0 %v3712
      %3735 = vmatprep.subr.bf16.mxu0 0
      %3736 = vmatpush1.bf16.msra.mxu0 %v3711
      %3737 = vmatprep.subr.bf16.mxu0 0
      %3738 = vmatpush1.bf16.msra.mxu0 %v3710
      %3739 = vmatprep.subr.bf16.mxu0 0
      %3740 = vmatpush1.bf16.msra.mxu0 %v3709
      %3741 = vmatprep.subr.bf16.mxu0 0
      %3742 = vmatpush2.bf16.msra.mxu0 0
      %3743 = vmatprep.subr.bf16.mxu0 0
      %3744 = vmatpush2.bf16.msra.mxu0 0
      %3745 = vmatprep.subr.bf16.mxu0 0
      %3746 = vmatpush2.bf16.msra.mxu0 0
      %3747 = vmatprep.subr.bf16.mxu0 0
      %3748 = vmatpush2.bf16.msra.mxu0 0
      %3749 = vmatprep.subr.bf16.mxu0 0
      %3750 = vmatpush2.bf16.msra.mxu0 0
      %3751 = vmatprep.subr.bf16.mxu0 0
      %3752 = vmatpush2.bf16.msra.mxu0 0
      %3753 = vmatprep.subr.bf16.mxu0 0
      %3754 = vmatpush2.bf16.msra.mxu0 0
      %3755 = vmatprep.subr.bf16.mxu0 0
      %3756 = vmatpush2.bf16.msra.mxu0 0
      %3757 = vmatprep.mubr.bf16.mxu0 0
      %3758 = vmatmul.mubr.bf16.gmra.mxu0 %v3675
      %v3759 = vpop.f32.mrf.mxu0
      %v3760 = vadd.f32 0.0, %v3759
      %v3761 = vpop.f32.mrf.mxu0
      %v3762 = vpop.f32.mrf.mxu0
      %v3763 = vadd.f32 0.0, %v3762
      %v3764 = vpop.f32.mrf.mxu0
      %3765 = vmatprep.mubr.bf16.mxu0 0
      %3766 = vmatmul.mubr.bf16.gmra.mxu0 %v3676
      %v3767 = vpop.f32.mrf.mxu0
      %v3768 = vadd.f32 0.0, %v3767
      %v3769 = vpop.f32.mrf.mxu0
      %v3770 = vpop.f32.mrf.mxu0
      %v3771 = vadd.f32 0.0, %v3770
      %v3772 = vpop.f32.mrf.mxu0
      %3773 = vdwg.mxu0
      %v3774 = vadd.f32 %v3595, %v3760
      %v3775 = vadd.f32 %v3598, %v3763
      %v3776 = vadd.f32 %v3603, %v3768
      %v3777 = vadd.f32 %v3606, %v3771
      %s3778 = scalar_lea.vmem %s3, 5
      %v3779 = vld [vmem:[%s3778] sm:$0x1]
      %v3781 = vlaneseq
      %v3782 = vshrl.u32 %v3781, 7
      %v3783 = vsub.s32 0, %v3782
      %v3784 = vrot.slane %v3779, %v3783
      %v3786 = vadd.f32 %v3774, %v3784
      %v3787 = vadd.f32 %v3775, %v3784
      %v3788 = vadd.f32 %v3776, %v3784
      %v3789 = vadd.f32 %v3777, %v3784
      %v3790 = vadd.f32 %v3786, %v2750
      %v3791 = vadd.f32 %v3787, %v2751
      %v3792 = vadd.f32 %v3788, %v2752
      %v3793 = vadd.f32 %v3789, %v2753
      %vm3794 = vcmp.ge.f32.partialorder %v3790, 0.0
      %vm3795 = vcmp.ge.f32.partialorder %v3791, 0.0
      %vm3796 = vcmp.ge.f32.partialorder %v3792, 0.0
      %vm3797 = vcmp.ge.f32.partialorder %v3793, 0.0
      %v3798 = vmul.f32 %v3790, 0.22916667
      %v3799 = vmul.f32 %v3791, 0.22916667
      %v3800 = vmul.f32 %v3792, 0.22916667
      %v3801 = vmul.f32 %v3793, 0.22916667
      %v3802 = vsel %vm3794, %v3790, %v3798
      %v3803 = vsel %vm3795, %v3791, %v3799
      %v3804 = vsel %vm3796, %v3792, %v3800
      %v3805 = vsel %vm3797, %v3793, %v3801
      %s3806 = scalar_lea.vmem %s1, 128
      %v3807 = vld [vmem:[%s3806] sm:$0xf]
      %v3808 = vld [vmem:[%s3806 + $0x4] sm:$0xf]
      %v3809 = vld [vmem:[%s3806 + $0x8] sm:$0xf]
      %v3810 = vld [vmem:[%s3806 + $0xc] sm:$0xf]
      %v3811 = vpack.c.bf16 %v3803, %v3802
      %v3812 = vpack.c.bf16 %v3805, %v3804
      %v3817 = vunpack.c.l.b16 %v3807
      %v3818 = vunpack.c.l.b16 %v3808
      %v3819 = vunpack.c.l.b16 %v3809
      %v3820 = vunpack.c.l.b16 %v3810
      %v3821 = vpack.c.b16 %v3818, %v3817
      %v3822 = vpack.c.b16 %v3820, %v3819
      %v3824 = vsel %vm229, %v3821, 0
      %v3827 = vsel %vm229, %v3822, 0
      %3829 = vmatprep.subr.bf16.mxu0 0
      %3830 = vmatpush1.bf16.msra.mxu0 0
      %3831 = vmatprep.subr.bf16.mxu0 0
      %3832 = vmatpush1.bf16.msra.mxu0 0
      %3833 = vmatprep.subr.bf16.mxu0 0
      %3834 = vmatpush1.bf16.msra.mxu0 0
      %3835 = vmatprep.subr.bf16.mxu0 0
      %3836 = vmatpush1.bf16.msra.mxu0 0
      %3837 = vmatprep.subr.bf16.mxu0 0
      %3838 = vmatpush1.bf16.msra.mxu0 0
      %3839 = vmatprep.subr.bf16.mxu0 0
      %3840 = vmatpush1.bf16.msra.mxu0 0
      %3841 = vmatprep.subr.bf16.mxu0 0
      %3842 = vmatpush1.bf16.msra.mxu0 %v3812
      %3843 = vmatprep.subr.bf16.mxu0 0
      %3844 = vmatpush1.bf16.msra.mxu0 %v3811
      %3845 = vmatprep.subr.bf16.mxu0 0
      %3846 = vmatpush2.bf16.msra.mxu0 0
      %3847 = vmatprep.subr.bf16.mxu0 0
      %3848 = vmatpush2.bf16.msra.mxu0 0
      %3849 = vmatprep.subr.bf16.mxu0 0
      %3850 = vmatpush2.bf16.msra.mxu0 0
      %3851 = vmatprep.subr.bf16.mxu0 0
      %3852 = vmatpush2.bf16.msra.mxu0 0
      %3853 = vmatprep.subr.bf16.mxu0 0
      %3854 = vmatpush2.bf16.msra.mxu0 0
      %3855 = vmatprep.subr.bf16.mxu0 0
      %3856 = vmatpush2.bf16.msra.mxu0 0
      %3857 = vmatprep.subr.bf16.mxu0 0
      %3858 = vmatpush2.bf16.msra.mxu0 0
      %3859 = vmatprep.subr.bf16.mxu0 0
      %3860 = vmatpush2.bf16.msra.mxu0 0
      %3861 = vmatprep.mubr.bf16.mxu0 0
      %3862 = vmatmul.mubr.bf16.gmra.mxu0 %v3824
      %v3863 = vpop.f32.mrf.mxu0
      %v3864 = vadd.f32 0.0, %v3863
      %v3865 = vpop.f32.mrf.mxu0
      %v3866 = vpop.f32.mrf.mxu0
      %v3867 = vadd.f32 0.0, %v3866
      %v3868 = vpop.f32.mrf.mxu0
      %3869 = vmatprep.mubr.bf16.mxu0 0
      %3870 = vmatmul.mubr.bf16.gmra.mxu0 %v3827
      %v3871 = vpop.f32.mrf.mxu0
      %v3872 = vadd.f32 0.0, %v3871
      %v3873 = vpop.f32.mrf.mxu0
      %v3874 = vpop.f32.mrf.mxu0
      %v3875 = vadd.f32 0.0, %v3874
      %v3876 = vpop.f32.mrf.mxu0
      %3877 = vdwg.mxu0
      %s3878 = scalar_lea.vmem %s2, 1344
      %v3879 = vld [vmem:[%s3878] sm:$0xf]
      %v3880 = vld [vmem:[%s3878 + $0x4] sm:$0xf]
      %v3881 = vld [vmem:[%s3878 + $0x8] sm:$0xf]
      %v3882 = vld [vmem:[%s3878 + $0xc] sm:$0xf]
      %v3883 = vld [vmem:[%s3878 + $0x10] sm:$0xf]
      %v3884 = vld [vmem:[%s3878 + $0x14] sm:$0xf]
      %v3885 = vld [vmem:[%s3878 + $0x18] sm:$0xf]
      %v3886 = vld [vmem:[%s3878 + $0x1c] sm:$0xf]
      %v3887 = vld [vmem:[%s3878 + $0x20] sm:$0xf]
      %v3888 = vld [vmem:[%s3878 + $0x24] sm:$0xf]
      %v3889 = vld [vmem:[%s3878 + $0x28] sm:$0xf]
      %v3890 = vld [vmem:[%s3878 + $0x2c] sm:$0xf]
      %v3891 = vld [vmem:[%s3878 + $0x30] sm:$0xf]
      %v3892 = vld [vmem:[%s3878 + $0x34] sm:$0xf]
      %v3893 = vld [vmem:[%s3878 + $0x38] sm:$0xf]
      %v3894 = vld [vmem:[%s3878 + $0x3c] sm:$0xf]
      %v3895 = vpack.c.bf16 %v3867, %v3864
      %v3896 = vpack.c.bf16 %v3875, %v3872
      %v3913 = vunpack.c.l.b16 %v3879
      %v3914 = vunpack.c.l.b16 %v3880
      %v3915 = vunpack.c.l.b16 %v3881
      %v3916 = vunpack.c.l.b16 %v3882
      %v3917 = vunpack.c.l.b16 %v3883
      %v3918 = vunpack.c.l.b16 %v3884
      %v3919 = vunpack.c.l.b16 %v3885
      %v3920 = vunpack.c.l.b16 %v3886
      %v3921 = vunpack.c.l.b16 %v3887
      %v3922 = vunpack.c.l.b16 %v3888
      %v3923 = vunpack.c.l.b16 %v3889
      %v3924 = vunpack.c.l.b16 %v3890
      %v3925 = vunpack.c.l.b16 %v3891
      %v3926 = vunpack.c.l.b16 %v3892
      %v3927 = vunpack.c.l.b16 %v3893
      %v3928 = vunpack.c.l.b16 %v3894
      %v3929 = vpack.c.b16 %v3914, %v3913
      %v3930 = vpack.c.b16 %v3916, %v3915
      %v3931 = vpack.c.b16 %v3918, %v3917
      %v3932 = vpack.c.b16 %v3920, %v3919
      %v3933 = vpack.c.b16 %v3922, %v3921
      %v3934 = vpack.c.b16 %v3924, %v3923
      %v3935 = vpack.c.b16 %v3926, %v3925
      %v3936 = vpack.c.b16 %v3928, %v3927
      %3945 = vmatprep.subr.bf16.mxu0 0
      %3946 = vmatpush1.bf16.msra.mxu0 %v3936
      %3947 = vmatprep.subr.bf16.mxu0 0
      %3948 = vmatpush1.bf16.msra.mxu0 %v3935
      %3949 = vmatprep.subr.bf16.mxu0 0
      %3950 = vmatpush1.bf16.msra.mxu0 %v3934
      %3951 = vmatprep.subr.bf16.mxu0 0
      %3952 = vmatpush1.bf16.msra.mxu0 %v3933
      %3953 = vmatprep.subr.bf16.mxu0 0
      %3954 = vmatpush1.bf16.msra.mxu0 %v3932
      %3955 = vmatprep.subr.bf16.mxu0 0
      %3956 = vmatpush1.bf16.msra.mxu0 %v3931
      %3957 = vmatprep.subr.bf16.mxu0 0
      %3958 = vmatpush1.bf16.msra.mxu0 %v3930
      %3959 = vmatprep.subr.bf16.mxu0 0
      %3960 = vmatpush1.bf16.msra.mxu0 %v3929
      %3961 = vmatprep.subr.bf16.mxu0 0
      %3962 = vmatpush2.bf16.msra.mxu0 0
      %3963 = vmatprep.subr.bf16.mxu0 0
      %3964 = vmatpush2.bf16.msra.mxu0 0
      %3965 = vmatprep.subr.bf16.mxu0 0
      %3966 = vmatpush2.bf16.msra.mxu0 0
      %3967 = vmatprep.subr.bf16.mxu0 0
      %3968 = vmatpush2.bf16.msra.mxu0 0
      %3969 = vmatprep.subr.bf16.mxu0 0
      %3970 = vmatpush2.bf16.msra.mxu0 0
      %3971 = vmatprep.subr.bf16.mxu0 0
      %3972 = vmatpush2.bf16.msra.mxu0 0
      %3973 = vmatprep.subr.bf16.mxu0 0
      %3974 = vmatpush2.bf16.msra.mxu0 0
      %3975 = vmatprep.subr.bf16.mxu0 0
      %3976 = vmatpush2.bf16.msra.mxu0 0
      %3977 = vmatprep.mubr.bf16.mxu0 0
      %3978 = vmatmul.mubr.bf16.gmra.mxu0 %v3895
      %v3979 = vpop.f32.mrf.mxu0
      %v3980 = vadd.f32 0.0, %v3979
      %v3981 = vpop.f32.mrf.mxu0
      %v3982 = vpop.f32.mrf.mxu0
      %v3983 = vadd.f32 0.0, %v3982
      %v3984 = vpop.f32.mrf.mxu0
      %3985 = vmatprep.mubr.bf16.mxu0 0
      %3986 = vmatmul.mubr.bf16.gmra.mxu0 %v3896
      %v3987 = vpop.f32.mrf.mxu0
      %v3988 = vadd.f32 0.0, %v3987
      %v3989 = vpop.f32.mrf.mxu0
      %v3990 = vpop.f32.mrf.mxu0
      %v3991 = vadd.f32 0.0, %v3990
      %v3992 = vpop.f32.mrf.mxu0
      %3993 = vdwg.mxu0
      %s3994 = scalar_lea.vmem %s1, 144
      %v3995 = vld [vmem:[%s3994] sm:$0xf]
      %v3996 = vld [vmem:[%s3994 + $0x4] sm:$0xf]
      %v3997 = vld [vmem:[%s3994 + $0x8] sm:$0xf]
      %v3998 = vld [vmem:[%s3994 + $0xc] sm:$0xf]
      %v3999 = vpack.c.bf16 %v3983, %v3980
      %v4000 = vpack.c.bf16 %v3991, %v3988
      %v4005 = vunpack.c.l.b16 %v3995
      %v4006 = vunpack.c.l.b16 %v3996
      %v4007 = vunpack.c.l.b16 %v3997
      %v4008 = vunpack.c.l.b16 %v3998
      %v4009 = vpack.c.b16 %v4006, %v4005
      %v4010 = vpack.c.b16 %v4008, %v4007
      %v4012 = vsel %vm229, %v4009, 0
      %v4015 = vsel %vm229, %v4010, 0
      %4017 = vmatprep.subr.bf16.mxu0 0
      %4018 = vmatpush1.bf16.msra.mxu0 0
      %4019 = vmatprep.subr.bf16.mxu0 0
      %4020 = vmatpush1.bf16.msra.mxu0 0
      %4021 = vmatprep.subr.bf16.mxu0 0
      %4022 = vmatpush1.bf16.msra.mxu0 0
      %4023 = vmatprep.subr.bf16.mxu0 0
      %4024 = vmatpush1.bf16.msra.mxu0 0
      %4025 = vmatprep.subr.bf16.mxu0 0
      %4026 = vmatpush1.bf16.msra.mxu0 0
      %4027 = vmatprep.subr.bf16.mxu0 0
      %4028 = vmatpush1.bf16.msra.mxu0 0
      %4029 = vmatprep.subr.bf16.mxu0 0
      %4030 = vmatpush1.bf16.msra.mxu0 %v4000
      %4031 = vmatprep.subr.bf16.mxu0 0
      %4032 = vmatpush1.bf16.msra.mxu0 %v3999
      %4033 = vmatprep.subr.bf16.mxu0 0
      %4034 = vmatpush2.bf16.msra.mxu0 0
      %4035 = vmatprep.subr.bf16.mxu0 0
      %4036 = vmatpush2.bf16.msra.mxu0 0
      %4037 = vmatprep.subr.bf16.mxu0 0
      %4038 = vmatpush2.bf16.msra.mxu0 0
      %4039 = vmatprep.subr.bf16.mxu0 0
      %4040 = vmatpush2.bf16.msra.mxu0 0
      %4041 = vmatprep.subr.bf16.mxu0 0
      %4042 = vmatpush2.bf16.msra.mxu0 0
      %4043 = vmatprep.subr.bf16.mxu0 0
      %4044 = vmatpush2.bf16.msra.mxu0 0
      %4045 = vmatprep.subr.bf16.mxu0 0
      %4046 = vmatpush2.bf16.msra.mxu0 0
      %4047 = vmatprep.subr.bf16.mxu0 0
      %4048 = vmatpush2.bf16.msra.mxu0 0
      %4049 = vmatprep.mubr.bf16.mxu0 0
      %4050 = vmatmul.mubr.bf16.gmra.mxu0 %v4012
      %v4051 = vpop.f32.mrf.mxu0
      %v4052 = vadd.f32 0.0, %v4051
      %v4053 = vpop.f32.mrf.mxu0
      %v4054 = vpop.f32.mrf.mxu0
      %v4055 = vadd.f32 0.0, %v4054
      %v4056 = vpop.f32.mrf.mxu0
      %4057 = vmatprep.mubr.bf16.mxu0 0
      %4058 = vmatmul.mubr.bf16.gmra.mxu0 %v4015
      %v4059 = vpop.f32.mrf.mxu0
      %v4060 = vadd.f32 0.0, %v4059
      %v4061 = vpop.f32.mrf.mxu0
      %v4062 = vpop.f32.mrf.mxu0
      %v4063 = vadd.f32 0.0, %v4062
      %v4064 = vpop.f32.mrf.mxu0
      %4065 = vdwg.mxu0
      %s4066 = scalar_lea.vmem %s2, 1408
      %v4067 = vld [vmem:[%s4066] sm:$0xf]
      %v4068 = vld [vmem:[%s4066 + $0x4] sm:$0xf]
      %v4069 = vld [vmem:[%s4066 + $0x8] sm:$0xf]
      %v4070 = vld [vmem:[%s4066 + $0xc] sm:$0xf]
      %v4071 = vld [vmem:[%s4066 + $0x10] sm:$0xf]
      %v4072 = vld [vmem:[%s4066 + $0x14] sm:$0xf]
      %v4073 = vld [vmem:[%s4066 + $0x18] sm:$0xf]
      %v4074 = vld [vmem:[%s4066 + $0x1c] sm:$0xf]
      %v4075 = vld [vmem:[%s4066 + $0x20] sm:$0xf]
      %v4076 = vld [vmem:[%s4066 + $0x24] sm:$0xf]
      %v4077 = vld [vmem:[%s4066 + $0x28] sm:$0xf]
      %v4078 = vld [vmem:[%s4066 + $0x2c] sm:$0xf]
      %v4079 = vld [vmem:[%s4066 + $0x30] sm:$0xf]
      %v4080 = vld [vmem:[%s4066 + $0x34] sm:$0xf]
      %v4081 = vld [vmem:[%s4066 + $0x38] sm:$0xf]
      %v4082 = vld [vmem:[%s4066 + $0x3c] sm:$0xf]
      %v4083 = vpack.c.bf16 %v4055, %v4052
      %v4084 = vpack.c.bf16 %v4063, %v4060
      %v4101 = vunpack.c.l.b16 %v4067
      %v4102 = vunpack.c.l.b16 %v4068
      %v4103 = vunpack.c.l.b16 %v4069
      %v4104 = vunpack.c.l.b16 %v4070
      %v4105 = vunpack.c.l.b16 %v4071
      %v4106 = vunpack.c.l.b16 %v4072
      %v4107 = vunpack.c.l.b16 %v4073
      %v4108 = vunpack.c.l.b16 %v4074
      %v4109 = vunpack.c.l.b16 %v4075
      %v4110 = vunpack.c.l.b16 %v4076
      %v4111 = vunpack.c.l.b16 %v4077
      %v4112 = vunpack.c.l.b16 %v4078
      %v4113 = vunpack.c.l.b16 %v4079
      %v4114 = vunpack.c.l.b16 %v4080
      %v4115 = vunpack.c.l.b16 %v4081
      %v4116 = vunpack.c.l.b16 %v4082
      %v4117 = vpack.c.b16 %v4102, %v4101
      %v4118 = vpack.c.b16 %v4104, %v4103
      %v4119 = vpack.c.b16 %v4106, %v4105
      %v4120 = vpack.c.b16 %v4108, %v4107
      %v4121 = vpack.c.b16 %v4110, %v4109
      %v4122 = vpack.c.b16 %v4112, %v4111
      %v4123 = vpack.c.b16 %v4114, %v4113
      %v4124 = vpack.c.b16 %v4116, %v4115
      %4133 = vmatprep.subr.bf16.mxu0 0
      %4134 = vmatpush1.bf16.msra.mxu0 %v4124
      %4135 = vmatprep.subr.bf16.mxu0 0
      %4136 = vmatpush1.bf16.msra.mxu0 %v4123
      %4137 = vmatprep.subr.bf16.mxu0 0
      %4138 = vmatpush1.bf16.msra.mxu0 %v4122
      %4139 = vmatprep.subr.bf16.mxu0 0
      %4140 = vmatpush1.bf16.msra.mxu0 %v4121
      %4141 = vmatprep.subr.bf16.mxu0 0
      %4142 = vmatpush1.bf16.msra.mxu0 %v4120
      %4143 = vmatprep.subr.bf16.mxu0 0
      %4144 = vmatpush1.bf16.msra.mxu0 %v4119
      %4145 = vmatprep.subr.bf16.mxu0 0
      %4146 = vmatpush1.bf16.msra.mxu0 %v4118
      %4147 = vmatprep.subr.bf16.mxu0 0
      %4148 = vmatpush1.bf16.msra.mxu0 %v4117
      %4149 = vmatprep.subr.bf16.mxu0 0
      %4150 = vmatpush2.bf16.msra.mxu0 0
      %4151 = vmatprep.subr.bf16.mxu0 0
      %4152 = vmatpush2.bf16.msra.mxu0 0
      %4153 = vmatprep.subr.bf16.mxu0 0
      %4154 = vmatpush2.bf16.msra.mxu0 0
      %4155 = vmatprep.subr.bf16.mxu0 0
      %4156 = vmatpush2.bf16.msra.mxu0 0
      %4157 = vmatprep.subr.bf16.mxu0 0
      %4158 = vmatpush2.bf16.msra.mxu0 0
      %4159 = vmatprep.subr.bf16.mxu0 0
      %4160 = vmatpush2.bf16.msra.mxu0 0
      %4161 = vmatprep.subr.bf16.mxu0 0
      %4162 = vmatpush2.bf16.msra.mxu0 0
      %4163 = vmatprep.subr.bf16.mxu0 0
      %4164 = vmatpush2.bf16.msra.mxu0 0
      %4165 = vmatprep.mubr.bf16.mxu0 0
      %4166 = vmatmul.mubr.bf16.gmra.mxu0 %v4083
      %v4167 = vpop.f32.mrf.mxu0
      %v4168 = vadd.f32 0.0, %v4167
      %v4169 = vpop.f32.mrf.mxu0
      %v4170 = vpop.f32.mrf.mxu0
      %v4171 = vadd.f32 0.0, %v4170
      %v4172 = vpop.f32.mrf.mxu0
      %4173 = vmatprep.mubr.bf16.mxu0 0
      %4174 = vmatmul.mubr.bf16.gmra.mxu0 %v4084
      %v4175 = vpop.f32.mrf.mxu0
      %v4176 = vadd.f32 0.0, %v4175
      %v4177 = vpop.f32.mrf.mxu0
      %v4178 = vpop.f32.mrf.mxu0
      %v4179 = vadd.f32 0.0, %v4178
      %v4180 = vpop.f32.mrf.mxu0
      %4181 = vdwg.mxu0
      %s4182 = scalar_lea.vmem %s1, 160
      %v4183 = vld [vmem:[%s4182] sm:$0xf]
      %v4184 = vld [vmem:[%s4182 + $0x4] sm:$0xf]
      %v4185 = vld [vmem:[%s4182 + $0x8] sm:$0xf]
      %v4186 = vld [vmem:[%s4182 + $0xc] sm:$0xf]
      %v4187 = vpack.c.bf16 %v4171, %v4168
      %v4188 = vpack.c.bf16 %v4179, %v4176
      %v4193 = vunpack.c.l.b16 %v4183
      %v4194 = vunpack.c.l.b16 %v4184
      %v4195 = vunpack.c.l.b16 %v4185
      %v4196 = vunpack.c.l.b16 %v4186
      %v4197 = vpack.c.b16 %v4194, %v4193
      %v4198 = vpack.c.b16 %v4196, %v4195
      %v4200 = vsel %vm229, %v4197, 0
      %v4203 = vsel %vm229, %v4198, 0
      %4205 = vmatprep.subr.bf16.mxu0 0
      %4206 = vmatpush1.bf16.msra.mxu0 0
      %4207 = vmatprep.subr.bf16.mxu0 0
      %4208 = vmatpush1.bf16.msra.mxu0 0
      %4209 = vmatprep.subr.bf16.mxu0 0
      %4210 = vmatpush1.bf16.msra.mxu0 0
      %4211 = vmatprep.subr.bf16.mxu0 0
      %4212 = vmatpush1.bf16.msra.mxu0 0
      %4213 = vmatprep.subr.bf16.mxu0 0
      %4214 = vmatpush1.bf16.msra.mxu0 0
      %4215 = vmatprep.subr.bf16.mxu0 0
      %4216 = vmatpush1.bf16.msra.mxu0 0
      %4217 = vmatprep.subr.bf16.mxu0 0
      %4218 = vmatpush1.bf16.msra.mxu0 %v4188
      %4219 = vmatprep.subr.bf16.mxu0 0
      %4220 = vmatpush1.bf16.msra.mxu0 %v4187
      %4221 = vmatprep.subr.bf16.mxu0 0
      %4222 = vmatpush2.bf16.msra.mxu0 0
      %4223 = vmatprep.subr.bf16.mxu0 0
      %4224 = vmatpush2.bf16.msra.mxu0 0
      %4225 = vmatprep.subr.bf16.mxu0 0
      %4226 = vmatpush2.bf16.msra.mxu0 0
      %4227 = vmatprep.subr.bf16.mxu0 0
      %4228 = vmatpush2.bf16.msra.mxu0 0
      %4229 = vmatprep.subr.bf16.mxu0 0
      %4230 = vmatpush2.bf16.msra.mxu0 0
      %4231 = vmatprep.subr.bf16.mxu0 0
      %4232 = vmatpush2.bf16.msra.mxu0 0
      %4233 = vmatprep.subr.bf16.mxu0 0
      %4234 = vmatpush2.bf16.msra.mxu0 0
      %4235 = vmatprep.subr.bf16.mxu0 0
      %4236 = vmatpush2.bf16.msra.mxu0 0
      %4237 = vmatprep.mubr.bf16.mxu0 0
      %4238 = vmatmul.mubr.bf16.gmra.mxu0 %v4200
      %v4239 = vpop.f32.mrf.mxu0
      %v4240 = vadd.f32 0.0, %v4239
      %v4241 = vpop.f32.mrf.mxu0
      %v4242 = vpop.f32.mrf.mxu0
      %v4243 = vadd.f32 0.0, %v4242
      %v4244 = vpop.f32.mrf.mxu0
      %4245 = vmatprep.mubr.bf16.mxu0 0
      %4246 = vmatmul.mubr.bf16.gmra.mxu0 %v4203
      %v4247 = vpop.f32.mrf.mxu0
      %v4248 = vadd.f32 0.0, %v4247
      %v4249 = vpop.f32.mrf.mxu0
      %v4250 = vpop.f32.mrf.mxu0
      %v4251 = vadd.f32 0.0, %v4250
      %v4252 = vpop.f32.mrf.mxu0
      %4253 = vdwg.mxu0
      %s4254 = scalar_lea.vmem %s2, 1472
      %v4255 = vld [vmem:[%s4254] sm:$0xf]
      %v4256 = vld [vmem:[%s4254 + $0x4] sm:$0xf]
      %v4257 = vld [vmem:[%s4254 + $0x8] sm:$0xf]
      %v4258 = vld [vmem:[%s4254 + $0xc] sm:$0xf]
      %v4259 = vld [vmem:[%s4254 + $0x10] sm:$0xf]
      %v4260 = vld [vmem:[%s4254 + $0x14] sm:$0xf]
      %v4261 = vld [vmem:[%s4254 + $0x18] sm:$0xf]
      %v4262 = vld [vmem:[%s4254 + $0x1c] sm:$0xf]
      %v4263 = vld [vmem:[%s4254 + $0x20] sm:$0xf]
      %v4264 = vld [vmem:[%s4254 + $0x24] sm:$0xf]
      %v4265 = vld [vmem:[%s4254 + $0x28] sm:$0xf]
      %v4266 = vld [vmem:[%s4254 + $0x2c] sm:$0xf]
      %v4267 = vld [vmem:[%s4254 + $0x30] sm:$0xf]
      %v4268 = vld [vmem:[%s4254 + $0x34] sm:$0xf]
      %v4269 = vld [vmem:[%s4254 + $0x38] sm:$0xf]
      %v4270 = vld [vmem:[%s4254 + $0x3c] sm:$0xf]
      %v4271 = vpack.c.bf16 %v4243, %v4240
      %v4272 = vpack.c.bf16 %v4251, %v4248
      %s4273 = scalar_lea.vmem %s2, 1536
      %v4274 = vld [vmem:[%s4273] sm:$0xf]
      %v4275 = vld [vmem:[%s4273 + $0x4] sm:$0xf]
      %v4276 = vld [vmem:[%s4273 + $0x8] sm:$0xf]
      %v4277 = vld [vmem:[%s4273 + $0xc] sm:$0xf]
      %v4278 = vld [vmem:[%s4273 + $0x10] sm:$0xf]
      %v4279 = vld [vmem:[%s4273 + $0x14] sm:$0xf]
      %v4280 = vld [vmem:[%s4273 + $0x18] sm:$0xf]
      %v4281 = vld [vmem:[%s4273 + $0x1c] sm:$0xf]
      %v4282 = vld [vmem:[%s4273 + $0x20] sm:$0xf]
      %v4283 = vld [vmem:[%s4273 + $0x24] sm:$0xf]
      %v4284 = vld [vmem:[%s4273 + $0x28] sm:$0xf]
      %v4285 = vld [vmem:[%s4273 + $0x2c] sm:$0xf]
      %v4286 = vld [vmem:[%s4273 + $0x30] sm:$0xf]
      %v4287 = vld [vmem:[%s4273 + $0x34] sm:$0xf]
      %v4288 = vld [vmem:[%s4273 + $0x38] sm:$0xf]
      %v4289 = vld [vmem:[%s4273 + $0x3c] sm:$0xf]
      %v4306 = vunpack.c.l.b16 %v4274
      %v4307 = vunpack.c.l.b16 %v4275
      %v4308 = vunpack.c.l.b16 %v4276
      %v4309 = vunpack.c.l.b16 %v4277
      %v4310 = vunpack.c.l.b16 %v4278
      %v4311 = vunpack.c.l.b16 %v4279
      %v4312 = vunpack.c.l.b16 %v4280
      %v4313 = vunpack.c.l.b16 %v4281
      %v4314 = vunpack.c.l.b16 %v4282
      %v4315 = vunpack.c.l.b16 %v4283
      %v4316 = vunpack.c.l.b16 %v4284
      %v4317 = vunpack.c.l.b16 %v4285
      %v4318 = vunpack.c.l.b16 %v4286
      %v4319 = vunpack.c.l.b16 %v4287
      %v4320 = vunpack.c.l.b16 %v4288
      %v4321 = vunpack.c.l.b16 %v4289
      %v4322 = vpack.c.b16 %v4307, %v4306
      %v4323 = vpack.c.b16 %v4309, %v4308
      %v4324 = vpack.c.b16 %v4311, %v4310
      %v4325 = vpack.c.b16 %v4313, %v4312
      %v4326 = vpack.c.b16 %v4315, %v4314
      %v4327 = vpack.c.b16 %v4317, %v4316
      %v4328 = vpack.c.b16 %v4319, %v4318
      %v4329 = vpack.c.b16 %v4321, %v4320
      %4338 = vmatprep.subr.bf16.mxu0 0
      %4339 = vmatpush1.bf16.msra.mxu0 %v4329
      %4340 = vmatprep.subr.bf16.mxu0 0
      %4341 = vmatpush1.bf16.msra.mxu0 %v4328
      %4342 = vmatprep.subr.bf16.mxu0 0
      %4343 = vmatpush1.bf16.msra.mxu0 %v4327
      %4344 = vmatprep.subr.bf16.mxu0 0
      %4345 = vmatpush1.bf16.msra.mxu0 %v4326
      %4346 = vmatprep.subr.bf16.mxu0 0
      %4347 = vmatpush1.bf16.msra.mxu0 %v4325
      %4348 = vmatprep.subr.bf16.mxu0 0
      %4349 = vmatpush1.bf16.msra.mxu0 %v4324
      %4350 = vmatprep.subr.bf16.mxu0 0
      %4351 = vmatpush1.bf16.msra.mxu0 %v4323
      %4352 = vmatprep.subr.bf16.mxu0 0
      %4353 = vmatpush1.bf16.msra.mxu0 %v4322
      %4354 = vmatprep.subr.bf16.mxu0 0
      %4355 = vmatpush2.bf16.msra.mxu0 0
      %4356 = vmatprep.subr.bf16.mxu0 0
      %4357 = vmatpush2.bf16.msra.mxu0 0
      %4358 = vmatprep.subr.bf16.mxu0 0
      %4359 = vmatpush2.bf16.msra.mxu0 0
      %4360 = vmatprep.subr.bf16.mxu0 0
      %4361 = vmatpush2.bf16.msra.mxu0 0
      %4362 = vmatprep.subr.bf16.mxu0 0
      %4363 = vmatpush2.bf16.msra.mxu0 0
      %4364 = vmatprep.subr.bf16.mxu0 0
      %4365 = vmatpush2.bf16.msra.mxu0 0
      %4366 = vmatprep.subr.bf16.mxu0 0
      %4367 = vmatpush2.bf16.msra.mxu0 0
      %4368 = vmatprep.subr.bf16.mxu0 0
      %4369 = vmatpush2.bf16.msra.mxu0 0
      %4370 = vmatprep.mubr.bf16.mxu0 0
      %4371 = vmatmul.mubr.bf16.gmra.mxu0 %v4187
      %v4372 = vpop.f32.mrf.mxu0
      %v4373 = vadd.f32 0.0, %v4372
      %v4374 = vpop.f32.mrf.mxu0
      %v4375 = vpop.f32.mrf.mxu0
      %v4376 = vadd.f32 0.0, %v4375
      %v4377 = vpop.f32.mrf.mxu0
      %4378 = vmatprep.mubr.bf16.mxu0 0
      %4379 = vmatmul.mubr.bf16.gmra.mxu0 %v4188
      %v4380 = vpop.f32.mrf.mxu0
      %v4381 = vadd.f32 0.0, %v4380
      %v4382 = vpop.f32.mrf.mxu0
      %v4383 = vpop.f32.mrf.mxu0
      %v4384 = vadd.f32 0.0, %v4383
      %v4385 = vpop.f32.mrf.mxu0
      %4386 = vdwg.mxu0
      %v4403 = vunpack.c.l.b16 %v4255
      %v4404 = vunpack.c.l.b16 %v4256
      %v4405 = vunpack.c.l.b16 %v4257
      %v4406 = vunpack.c.l.b16 %v4258
      %v4407 = vunpack.c.l.b16 %v4259
      %v4408 = vunpack.c.l.b16 %v4260
      %v4409 = vunpack.c.l.b16 %v4261
      %v4410 = vunpack.c.l.b16 %v4262
      %v4411 = vunpack.c.l.b16 %v4263
      %v4412 = vunpack.c.l.b16 %v4264
      %v4413 = vunpack.c.l.b16 %v4265
      %v4414 = vunpack.c.l.b16 %v4266
      %v4415 = vunpack.c.l.b16 %v4267
      %v4416 = vunpack.c.l.b16 %v4268
      %v4417 = vunpack.c.l.b16 %v4269
      %v4418 = vunpack.c.l.b16 %v4270
      %v4419 = vpack.c.b16 %v4404, %v4403
      %v4420 = vpack.c.b16 %v4406, %v4405
      %v4421 = vpack.c.b16 %v4408, %v4407
      %v4422 = vpack.c.b16 %v4410, %v4409
      %v4423 = vpack.c.b16 %v4412, %v4411
      %v4424 = vpack.c.b16 %v4414, %v4413
      %v4425 = vpack.c.b16 %v4416, %v4415
      %v4426 = vpack.c.b16 %v4418, %v4417
      %4435 = vmatprep.subr.bf16.mxu0 0
      %4436 = vmatpush1.bf16.msra.mxu0 %v4426
      %4437 = vmatprep.subr.bf16.mxu0 0
      %4438 = vmatpush1.bf16.msra.mxu0 %v4425
      %4439 = vmatprep.subr.bf16.mxu0 0
      %4440 = vmatpush1.bf16.msra.mxu0 %v4424
      %4441 = vmatprep.subr.bf16.mxu0 0
      %4442 = vmatpush1.bf16.msra.mxu0 %v4423
      %4443 = vmatprep.subr.bf16.mxu0 0
      %4444 = vmatpush1.bf16.msra.mxu0 %v4422
      %4445 = vmatprep.subr.bf16.mxu0 0
      %4446 = vmatpush1.bf16.msra.mxu0 %v4421
      %4447 = vmatprep.subr.bf16.mxu0 0
      %4448 = vmatpush1.bf16.msra.mxu0 %v4420
      %4449 = vmatprep.subr.bf16.mxu0 0
      %4450 = vmatpush1.bf16.msra.mxu0 %v4419
      %4451 = vmatprep.subr.bf16.mxu0 0
      %4452 = vmatpush2.bf16.msra.mxu0 0
      %4453 = vmatprep.subr.bf16.mxu0 0
      %4454 = vmatpush2.bf16.msra.mxu0 0
      %4455 = vmatprep.subr.bf16.mxu0 0
      %4456 = vmatpush2.bf16.msra.mxu0 0
      %4457 = vmatprep.subr.bf16.mxu0 0
      %4458 = vmatpush2.bf16.msra.mxu0 0
      %4459 = vmatprep.subr.bf16.mxu0 0
      %4460 = vmatpush2.bf16.msra.mxu0 0
      %4461 = vmatprep.subr.bf16.mxu0 0
      %4462 = vmatpush2.bf16.msra.mxu0 0
      %4463 = vmatprep.subr.bf16.mxu0 0
      %4464 = vmatpush2.bf16.msra.mxu0 0
      %4465 = vmatprep.subr.bf16.mxu0 0
      %4466 = vmatpush2.bf16.msra.mxu0 0
      %4467 = vmatprep.mubr.bf16.mxu0 0
      %4468 = vmatmul.mubr.bf16.gmra.mxu0 %v4271
      %v4469 = vpop.f32.mrf.mxu0
      %v4470 = vadd.f32 %v4373, %v4469
      %v4471 = vpop.f32.mrf.mxu0
      %v4472 = vpop.f32.mrf.mxu0
      %v4473 = vadd.f32 %v4376, %v4472
      %v4474 = vpop.f32.mrf.mxu0
      %4475 = vmatprep.mubr.bf16.mxu0 0
      %4476 = vmatmul.mubr.bf16.gmra.mxu0 %v4272
      %v4477 = vpop.f32.mrf.mxu0
      %v4478 = vadd.f32 %v4381, %v4477
      %v4479 = vpop.f32.mrf.mxu0
      %v4480 = vpop.f32.mrf.mxu0
      %v4481 = vadd.f32 %v4384, %v4480
      %v4482 = vpop.f32.mrf.mxu0
      %4483 = vdwg.mxu0
      %s4484 = scalar_lea.vmem %s1, 176
      %v4485 = vld [vmem:[%s4484] sm:$0xf]
      %v4486 = vld [vmem:[%s4484 + $0x4] sm:$0xf]
      %v4487 = vld [vmem:[%s4484 + $0x8] sm:$0xf]
      %v4488 = vld [vmem:[%s4484 + $0xc] sm:$0xf]
      %v4493 = vunpack.c.l.b16 %v4485
      %v4494 = vunpack.c.l.b16 %v4486
      %v4495 = vunpack.c.l.b16 %v4487
      %v4496 = vunpack.c.l.b16 %v4488
      %v4497 = vpack.c.b16 %v4494, %v4493
      %v4498 = vpack.c.b16 %v4496, %v4495
      %v4500 = vsel %vm229, %v4497, 0
      %v4503 = vsel %vm229, %v4498, 0
      %4505 = vmatprep.subr.bf16.mxu0 0
      %4506 = vmatpush1.bf16.msra.mxu0 0
      %4507 = vmatprep.subr.bf16.mxu0 0
      %4508 = vmatpush1.bf16.msra.mxu0 0
      %4509 = vmatprep.subr.bf16.mxu0 0
      %4510 = vmatpush1.bf16.msra.mxu0 0
      %4511 = vmatprep.subr.bf16.mxu0 0
      %4512 = vmatpush1.bf16.msra.mxu0 0
      %4513 = vmatprep.subr.bf16.mxu0 0
      %4514 = vmatpush1.bf16.msra.mxu0 0
      %4515 = vmatprep.subr.bf16.mxu0 0
      %4516 = vmatpush1.bf16.msra.mxu0 0
      %4517 = vmatprep.subr.bf16.mxu0 0
      %4518 = vmatpush1.bf16.msra.mxu0 %v4188
      %4519 = vmatprep.subr.bf16.mxu0 0
      %4520 = vmatpush1.bf16.msra.mxu0 %v4187
      %4521 = vmatprep.subr.bf16.mxu0 0
      %4522 = vmatpush2.bf16.msra.mxu0 0
      %4523 = vmatprep.subr.bf16.mxu0 0
      %4524 = vmatpush2.bf16.msra.mxu0 0
      %4525 = vmatprep.subr.bf16.mxu0 0
      %4526 = vmatpush2.bf16.msra.mxu0 0
      %4527 = vmatprep.subr.bf16.mxu0 0
      %4528 = vmatpush2.bf16.msra.mxu0 0
      %4529 = vmatprep.subr.bf16.mxu0 0
      %4530 = vmatpush2.bf16.msra.mxu0 0
      %4531 = vmatprep.subr.bf16.mxu0 0
      %4532 = vmatpush2.bf16.msra.mxu0 0
      %4533 = vmatprep.subr.bf16.mxu0 0
      %4534 = vmatpush2.bf16.msra.mxu0 0
      %4535 = vmatprep.subr.bf16.mxu0 0
      %4536 = vmatpush2.bf16.msra.mxu0 0
      %4537 = vmatprep.mubr.bf16.mxu0 0
      %4538 = vmatmul.mubr.bf16.gmra.mxu0 %v4500
      %v4539 = vpop.f32.mrf.mxu0
      %v4540 = vadd.f32 0.0, %v4539
      %v4541 = vpop.f32.mrf.mxu0
      %v4542 = vpop.f32.mrf.mxu0
      %v4543 = vadd.f32 0.0, %v4542
      %v4544 = vpop.f32.mrf.mxu0
      %4545 = vmatprep.mubr.bf16.mxu0 0
      %4546 = vmatmul.mubr.bf16.gmra.mxu0 %v4503
      %v4547 = vpop.f32.mrf.mxu0
      %v4548 = vadd.f32 0.0, %v4547
      %v4549 = vpop.f32.mrf.mxu0
      %v4550 = vpop.f32.mrf.mxu0
      %v4551 = vadd.f32 0.0, %v4550
      %v4552 = vpop.f32.mrf.mxu0
      %4553 = vdwg.mxu0
      %s4554 = scalar_lea.vmem %s2, 1600
      %v4555 = vld [vmem:[%s4554] sm:$0xf]
      %v4556 = vld [vmem:[%s4554 + $0x4] sm:$0xf]
      %v4557 = vld [vmem:[%s4554 + $0x8] sm:$0xf]
      %v4558 = vld [vmem:[%s4554 + $0xc] sm:$0xf]
      %v4559 = vld [vmem:[%s4554 + $0x10] sm:$0xf]
      %v4560 = vld [vmem:[%s4554 + $0x14] sm:$0xf]
      %v4561 = vld [vmem:[%s4554 + $0x18] sm:$0xf]
      %v4562 = vld [vmem:[%s4554 + $0x1c] sm:$0xf]
      %v4563 = vld [vmem:[%s4554 + $0x20] sm:$0xf]
      %v4564 = vld [vmem:[%s4554 + $0x24] sm:$0xf]
      %v4565 = vld [vmem:[%s4554 + $0x28] sm:$0xf]
      %v4566 = vld [vmem:[%s4554 + $0x2c] sm:$0xf]
      %v4567 = vld [vmem:[%s4554 + $0x30] sm:$0xf]
      %v4568 = vld [vmem:[%s4554 + $0x34] sm:$0xf]
      %v4569 = vld [vmem:[%s4554 + $0x38] sm:$0xf]
      %v4570 = vld [vmem:[%s4554 + $0x3c] sm:$0xf]
      %v4571 = vpack.c.bf16 %v4543, %v4540
      %v4572 = vpack.c.bf16 %v4551, %v4548
      %v4589 = vunpack.c.l.b16 %v4555
      %v4590 = vunpack.c.l.b16 %v4556
      %v4591 = vunpack.c.l.b16 %v4557
      %v4592 = vunpack.c.l.b16 %v4558
      %v4593 = vunpack.c.l.b16 %v4559
      %v4594 = vunpack.c.l.b16 %v4560
      %v4595 = vunpack.c.l.b16 %v4561
      %v4596 = vunpack.c.l.b16 %v4562
      %v4597 = vunpack.c.l.b16 %v4563
      %v4598 = vunpack.c.l.b16 %v4564
      %v4599 = vunpack.c.l.b16 %v4565
      %v4600 = vunpack.c.l.b16 %v4566
      %v4601 = vunpack.c.l.b16 %v4567
      %v4602 = vunpack.c.l.b16 %v4568
      %v4603 = vunpack.c.l.b16 %v4569
      %v4604 = vunpack.c.l.b16 %v4570
      %v4605 = vpack.c.b16 %v4590, %v4589
      %v4606 = vpack.c.b16 %v4592, %v4591
      %v4607 = vpack.c.b16 %v4594, %v4593
      %v4608 = vpack.c.b16 %v4596, %v4595
      %v4609 = vpack.c.b16 %v4598, %v4597
      %v4610 = vpack.c.b16 %v4600, %v4599
      %v4611 = vpack.c.b16 %v4602, %v4601
      %v4612 = vpack.c.b16 %v4604, %v4603
      %4621 = vmatprep.subr.bf16.mxu0 0
      %4622 = vmatpush1.bf16.msra.mxu0 %v4612
      %4623 = vmatprep.subr.bf16.mxu0 0
      %4624 = vmatpush1.bf16.msra.mxu0 %v4611
      %4625 = vmatprep.subr.bf16.mxu0 0
      %4626 = vmatpush1.bf16.msra.mxu0 %v4610
      %4627 = vmatprep.subr.bf16.mxu0 0
      %4628 = vmatpush1.bf16.msra.mxu0 %v4609
      %4629 = vmatprep.subr.bf16.mxu0 0
      %4630 = vmatpush1.bf16.msra.mxu0 %v4608
      %4631 = vmatprep.subr.bf16.mxu0 0
      %4632 = vmatpush1.bf16.msra.mxu0 %v4607
      %4633 = vmatprep.subr.bf16.mxu0 0
      %4634 = vmatpush1.bf16.msra.mxu0 %v4606
      %4635 = vmatprep.subr.bf16.mxu0 0
      %4636 = vmatpush1.bf16.msra.mxu0 %v4605
      %4637 = vmatprep.subr.bf16.mxu0 0
      %4638 = vmatpush2.bf16.msra.mxu0 0
      %4639 = vmatprep.subr.bf16.mxu0 0
      %4640 = vmatpush2.bf16.msra.mxu0 0
      %4641 = vmatprep.subr.bf16.mxu0 0
      %4642 = vmatpush2.bf16.msra.mxu0 0
      %4643 = vmatprep.subr.bf16.mxu0 0
      %4644 = vmatpush2.bf16.msra.mxu0 0
      %4645 = vmatprep.subr.bf16.mxu0 0
      %4646 = vmatpush2.bf16.msra.mxu0 0
      %4647 = vmatprep.subr.bf16.mxu0 0
      %4648 = vmatpush2.bf16.msra.mxu0 0
      %4649 = vmatprep.subr.bf16.mxu0 0
      %4650 = vmatpush2.bf16.msra.mxu0 0
      %4651 = vmatprep.subr.bf16.mxu0 0
      %4652 = vmatpush2.bf16.msra.mxu0 0
      %4653 = vmatprep.mubr.bf16.mxu0 0
      %4654 = vmatmul.mubr.bf16.gmra.mxu0 %v4571
      %v4655 = vpop.f32.mrf.mxu0
      %v4656 = vadd.f32 0.0, %v4655
      %v4657 = vpop.f32.mrf.mxu0
      %v4658 = vpop.f32.mrf.mxu0
      %v4659 = vadd.f32 0.0, %v4658
      %v4660 = vpop.f32.mrf.mxu0
      %4661 = vmatprep.mubr.bf16.mxu0 0
      %4662 = vmatmul.mubr.bf16.gmra.mxu0 %v4572
      %v4663 = vpop.f32.mrf.mxu0
      %v4664 = vadd.f32 0.0, %v4663
      %v4665 = vpop.f32.mrf.mxu0
      %v4666 = vpop.f32.mrf.mxu0
      %v4667 = vadd.f32 0.0, %v4666
      %v4668 = vpop.f32.mrf.mxu0
      %4669 = vdwg.mxu0
      %v4670 = vadd.f32 %v4470, %v4656
      %v4671 = vadd.f32 %v4473, %v4659
      %v4672 = vadd.f32 %v4478, %v4664
      %v4673 = vadd.f32 %v4481, %v4667
      %s4674 = scalar_lea.vmem %s3, 6
      %v4675 = vld [vmem:[%s4674] sm:$0x1]
      %v4677 = vlaneseq
      %v4678 = vshrl.u32 %v4677, 7
      %v4679 = vsub.s32 0, %v4678
      %v4680 = vrot.slane %v4675, %v4679
      %v4682 = vadd.f32 %v4670, %v4680
      %v4683 = vadd.f32 %v4671, %v4680
      %v4684 = vadd.f32 %v4672, %v4680
      %v4685 = vadd.f32 %v4673, %v4680
      %s4686 = scalar_lea.vmem %s1, 192
      %v4687 = vld [vmem:[%s4686] sm:$0xf]
      %v4688 = vld [vmem:[%s4686 + $0x4] sm:$0xf]
      %v4689 = vld [vmem:[%s4686 + $0x8] sm:$0xf]
      %v4690 = vld [vmem:[%s4686 + $0xc] sm:$0xf]
      %v4695 = vunpack.c.l.b16 %v4687
      %v4696 = vunpack.c.l.b16 %v4688
      %v4697 = vunpack.c.l.b16 %v4689
      %v4698 = vunpack.c.l.b16 %v4690
      %v4699 = vpack.c.b16 %v4696, %v4695
      %v4700 = vpack.c.b16 %v4698, %v4697
      %v4702 = vsel %vm229, %v4699, 0
      %v4705 = vsel %vm229, %v4700, 0
      %4707 = vmatprep.subr.bf16.mxu0 0
      %4708 = vmatpush1.bf16.msra.mxu0 0
      %4709 = vmatprep.subr.bf16.mxu0 0
      %4710 = vmatpush1.bf16.msra.mxu0 0
      %4711 = vmatprep.subr.bf16.mxu0 0
      %4712 = vmatpush1.bf16.msra.mxu0 0
      %4713 = vmatprep.subr.bf16.mxu0 0
      %4714 = vmatpush1.bf16.msra.mxu0 0
      %4715 = vmatprep.subr.bf16.mxu0 0
      %4716 = vmatpush1.bf16.msra.mxu0 0
      %4717 = vmatprep.subr.bf16.mxu0 0
      %4718 = vmatpush1.bf16.msra.mxu0 0
      %4719 = vmatprep.subr.bf16.mxu0 0
      %4720 = vmatpush1.bf16.msra.mxu0 %v4000
      %4721 = vmatprep.subr.bf16.mxu0 0
      %4722 = vmatpush1.bf16.msra.mxu0 %v3999
      %4723 = vmatprep.subr.bf16.mxu0 0
      %4724 = vmatpush2.bf16.msra.mxu0 0
      %4725 = vmatprep.subr.bf16.mxu0 0
      %4726 = vmatpush2.bf16.msra.mxu0 0
      %4727 = vmatprep.subr.bf16.mxu0 0
      %4728 = vmatpush2.bf16.msra.mxu0 0
      %4729 = vmatprep.subr.bf16.mxu0 0
      %4730 = vmatpush2.bf16.msra.mxu0 0
      %4731 = vmatprep.subr.bf16.mxu0 0
      %4732 = vmatpush2.bf16.msra.mxu0 0
      %4733 = vmatprep.subr.bf16.mxu0 0
      %4734 = vmatpush2.bf16.msra.mxu0 0
      %4735 = vmatprep.subr.bf16.mxu0 0
      %4736 = vmatpush2.bf16.msra.mxu0 0
      %4737 = vmatprep.subr.bf16.mxu0 0
      %4738 = vmatpush2.bf16.msra.mxu0 0
      %4739 = vmatprep.mubr.bf16.mxu0 0
      %4740 = vmatmul.mubr.bf16.gmra.mxu0 %v4702
      %v4741 = vpop.f32.mrf.mxu0
      %v4742 = vadd.f32 0.0, %v4741
      %v4743 = vpop.f32.mrf.mxu0
      %v4744 = vpop.f32.mrf.mxu0
      %v4745 = vadd.f32 0.0, %v4744
      %v4746 = vpop.f32.mrf.mxu0
      %4747 = vmatprep.mubr.bf16.mxu0 0
      %4748 = vmatmul.mubr.bf16.gmra.mxu0 %v4705
      %v4749 = vpop.f32.mrf.mxu0
      %v4750 = vadd.f32 0.0, %v4749
      %v4751 = vpop.f32.mrf.mxu0
      %v4752 = vpop.f32.mrf.mxu0
      %v4753 = vadd.f32 0.0, %v4752
      %v4754 = vpop.f32.mrf.mxu0
      %4755 = vdwg.mxu0
      %s4756 = scalar_lea.vmem %s2, 1664
      %v4757 = vld [vmem:[%s4756] sm:$0xf]
      %v4758 = vld [vmem:[%s4756 + $0x4] sm:$0xf]
      %v4759 = vld [vmem:[%s4756 + $0x8] sm:$0xf]
      %v4760 = vld [vmem:[%s4756 + $0xc] sm:$0xf]
      %v4761 = vld [vmem:[%s4756 + $0x10] sm:$0xf]
      %v4762 = vld [vmem:[%s4756 + $0x14] sm:$0xf]
      %v4763 = vld [vmem:[%s4756 + $0x18] sm:$0xf]
      %v4764 = vld [vmem:[%s4756 + $0x1c] sm:$0xf]
      %v4765 = vld [vmem:[%s4756 + $0x20] sm:$0xf]
      %v4766 = vld [vmem:[%s4756 + $0x24] sm:$0xf]
      %v4767 = vld [vmem:[%s4756 + $0x28] sm:$0xf]
      %v4768 = vld [vmem:[%s4756 + $0x2c] sm:$0xf]
      %v4769 = vld [vmem:[%s4756 + $0x30] sm:$0xf]
      %v4770 = vld [vmem:[%s4756 + $0x34] sm:$0xf]
      %v4771 = vld [vmem:[%s4756 + $0x38] sm:$0xf]
      %v4772 = vld [vmem:[%s4756 + $0x3c] sm:$0xf]
      %v4773 = vpack.c.bf16 %v4745, %v4742
      %v4774 = vpack.c.bf16 %v4753, %v4750
      %s4775 = scalar_lea.vmem %s2, 1728
      %v4776 = vld [vmem:[%s4775] sm:$0xf]
      %v4777 = vld [vmem:[%s4775 + $0x4] sm:$0xf]
      %v4778 = vld [vmem:[%s4775 + $0x8] sm:$0xf]
      %v4779 = vld [vmem:[%s4775 + $0xc] sm:$0xf]
      %v4780 = vld [vmem:[%s4775 + $0x10] sm:$0xf]
      %v4781 = vld [vmem:[%s4775 + $0x14] sm:$0xf]
      %v4782 = vld [vmem:[%s4775 + $0x18] sm:$0xf]
      %v4783 = vld [vmem:[%s4775 + $0x1c] sm:$0xf]
      %v4784 = vld [vmem:[%s4775 + $0x20] sm:$0xf]
      %v4785 = vld [vmem:[%s4775 + $0x24] sm:$0xf]
      %v4786 = vld [vmem:[%s4775 + $0x28] sm:$0xf]
      %v4787 = vld [vmem:[%s4775 + $0x2c] sm:$0xf]
      %v4788 = vld [vmem:[%s4775 + $0x30] sm:$0xf]
      %v4789 = vld [vmem:[%s4775 + $0x34] sm:$0xf]
      %v4790 = vld [vmem:[%s4775 + $0x38] sm:$0xf]
      %v4791 = vld [vmem:[%s4775 + $0x3c] sm:$0xf]
      %v4808 = vunpack.c.l.b16 %v4776
      %v4809 = vunpack.c.l.b16 %v4777
      %v4810 = vunpack.c.l.b16 %v4778
      %v4811 = vunpack.c.l.b16 %v4779
      %v4812 = vunpack.c.l.b16 %v4780
      %v4813 = vunpack.c.l.b16 %v4781
      %v4814 = vunpack.c.l.b16 %v4782
      %v4815 = vunpack.c.l.b16 %v4783
      %v4816 = vunpack.c.l.b16 %v4784
      %v4817 = vunpack.c.l.b16 %v4785
      %v4818 = vunpack.c.l.b16 %v4786
      %v4819 = vunpack.c.l.b16 %v4787
      %v4820 = vunpack.c.l.b16 %v4788
      %v4821 = vunpack.c.l.b16 %v4789
      %v4822 = vunpack.c.l.b16 %v4790
      %v4823 = vunpack.c.l.b16 %v4791
      %v4824 = vpack.c.b16 %v4809, %v4808
      %v4825 = vpack.c.b16 %v4811, %v4810
      %v4826 = vpack.c.b16 %v4813, %v4812
      %v4827 = vpack.c.b16 %v4815, %v4814
      %v4828 = vpack.c.b16 %v4817, %v4816
      %v4829 = vpack.c.b16 %v4819, %v4818
      %v4830 = vpack.c.b16 %v4821, %v4820
      %v4831 = vpack.c.b16 %v4823, %v4822
      %4840 = vmatprep.subr.bf16.mxu0 0
      %4841 = vmatpush1.bf16.msra.mxu0 %v4831
      %4842 = vmatprep.subr.bf16.mxu0 0
      %4843 = vmatpush1.bf16.msra.mxu0 %v4830
      %4844 = vmatprep.subr.bf16.mxu0 0
      %4845 = vmatpush1.bf16.msra.mxu0 %v4829
      %4846 = vmatprep.subr.bf16.mxu0 0
      %4847 = vmatpush1.bf16.msra.mxu0 %v4828
      %4848 = vmatprep.subr.bf16.mxu0 0
      %4849 = vmatpush1.bf16.msra.mxu0 %v4827
      %4850 = vmatprep.subr.bf16.mxu0 0
      %4851 = vmatpush1.bf16.msra.mxu0 %v4826
      %4852 = vmatprep.subr.bf16.mxu0 0
      %4853 = vmatpush1.bf16.msra.mxu0 %v4825
      %4854 = vmatprep.subr.bf16.mxu0 0
      %4855 = vmatpush1.bf16.msra.mxu0 %v4824
      %4856 = vmatprep.subr.bf16.mxu0 0
      %4857 = vmatpush2.bf16.msra.mxu0 0
      %4858 = vmatprep.subr.bf16.mxu0 0
      %4859 = vmatpush2.bf16.msra.mxu0 0
      %4860 = vmatprep.subr.bf16.mxu0 0
      %4861 = vmatpush2.bf16.msra.mxu0 0
      %4862 = vmatprep.subr.bf16.mxu0 0
      %4863 = vmatpush2.bf16.msra.mxu0 0
      %4864 = vmatprep.subr.bf16.mxu0 0
      %4865 = vmatpush2.bf16.msra.mxu0 0
      %4866 = vmatprep.subr.bf16.mxu0 0
      %4867 = vmatpush2.bf16.msra.mxu0 0
      %4868 = vmatprep.subr.bf16.mxu0 0
      %4869 = vmatpush2.bf16.msra.mxu0 0
      %4870 = vmatprep.subr.bf16.mxu0 0
      %4871 = vmatpush2.bf16.msra.mxu0 0
      %4872 = vmatprep.mubr.bf16.mxu0 0
      %4873 = vmatmul.mubr.bf16.gmra.mxu0 %v3999
      %v4874 = vpop.f32.mrf.mxu0
      %v4875 = vadd.f32 0.0, %v4874
      %v4876 = vpop.f32.mrf.mxu0
      %v4877 = vpop.f32.mrf.mxu0
      %v4878 = vadd.f32 0.0, %v4877
      %v4879 = vpop.f32.mrf.mxu0
      %4880 = vmatprep.mubr.bf16.mxu0 0
      %4881 = vmatmul.mubr.bf16.gmra.mxu0 %v4000
      %v4882 = vpop.f32.mrf.mxu0
      %v4883 = vadd.f32 0.0, %v4882
      %v4884 = vpop.f32.mrf.mxu0
      %v4885 = vpop.f32.mrf.mxu0
      %v4886 = vadd.f32 0.0, %v4885
      %v4887 = vpop.f32.mrf.mxu0
      %4888 = vdwg.mxu0
      %v4905 = vunpack.c.l.b16 %v4757
      %v4906 = vunpack.c.l.b16 %v4758
      %v4907 = vunpack.c.l.b16 %v4759
      %v4908 = vunpack.c.l.b16 %v4760
      %v4909 = vunpack.c.l.b16 %v4761
      %v4910 = vunpack.c.l.b16 %v4762
      %v4911 = vunpack.c.l.b16 %v4763
      %v4912 = vunpack.c.l.b16 %v4764
      %v4913 = vunpack.c.l.b16 %v4765
      %v4914 = vunpack.c.l.b16 %v4766
      %v4915 = vunpack.c.l.b16 %v4767
      %v4916 = vunpack.c.l.b16 %v4768
      %v4917 = vunpack.c.l.b16 %v4769
      %v4918 = vunpack.c.l.b16 %v4770
      %v4919 = vunpack.c.l.b16 %v4771
      %v4920 = vunpack.c.l.b16 %v4772
      %v4921 = vpack.c.b16 %v4906, %v4905
      %v4922 = vpack.c.b16 %v4908, %v4907
      %v4923 = vpack.c.b16 %v4910, %v4909
      %v4924 = vpack.c.b16 %v4912, %v4911
      %v4925 = vpack.c.b16 %v4914, %v4913
      %v4926 = vpack.c.b16 %v4916, %v4915
      %v4927 = vpack.c.b16 %v4918, %v4917
      %v4928 = vpack.c.b16 %v4920, %v4919
      %4937 = vmatprep.subr.bf16.mxu0 0
      %4938 = vmatpush1.bf16.msra.mxu0 %v4928
      %4939 = vmatprep.subr.bf16.mxu0 0
      %4940 = vmatpush1.bf16.msra.mxu0 %v4927
      %4941 = vmatprep.subr.bf16.mxu0 0
      %4942 = vmatpush1.bf16.msra.mxu0 %v4926
      %4943 = vmatprep.subr.bf16.mxu0 0
      %4944 = vmatpush1.bf16.msra.mxu0 %v4925
      %4945 = vmatprep.subr.bf16.mxu0 0
      %4946 = vmatpush1.bf16.msra.mxu0 %v4924
      %4947 = vmatprep.subr.bf16.mxu0 0
      %4948 = vmatpush1.bf16.msra.mxu0 %v4923
      %4949 = vmatprep.subr.bf16.mxu0 0
      %4950 = vmatpush1.bf16.msra.mxu0 %v4922
      %4951 = vmatprep.subr.bf16.mxu0 0
      %4952 = vmatpush1.bf16.msra.mxu0 %v4921
      %4953 = vmatprep.subr.bf16.mxu0 0
      %4954 = vmatpush2.bf16.msra.mxu0 0
      %4955 = vmatprep.subr.bf16.mxu0 0
      %4956 = vmatpush2.bf16.msra.mxu0 0
      %4957 = vmatprep.subr.bf16.mxu0 0
      %4958 = vmatpush2.bf16.msra.mxu0 0
      %4959 = vmatprep.subr.bf16.mxu0 0
      %4960 = vmatpush2.bf16.msra.mxu0 0
      %4961 = vmatprep.subr.bf16.mxu0 0
      %4962 = vmatpush2.bf16.msra.mxu0 0
      %4963 = vmatprep.subr.bf16.mxu0 0
      %4964 = vmatpush2.bf16.msra.mxu0 0
      %4965 = vmatprep.subr.bf16.mxu0 0
      %4966 = vmatpush2.bf16.msra.mxu0 0
      %4967 = vmatprep.subr.bf16.mxu0 0
      %4968 = vmatpush2.bf16.msra.mxu0 0
      %4969 = vmatprep.mubr.bf16.mxu0 0
      %4970 = vmatmul.mubr.bf16.gmra.mxu0 %v4773
      %v4971 = vpop.f32.mrf.mxu0
      %v4972 = vadd.f32 %v4875, %v4971
      %v4973 = vpop.f32.mrf.mxu0
      %v4974 = vpop.f32.mrf.mxu0
      %v4975 = vadd.f32 %v4878, %v4974
      %v4976 = vpop.f32.mrf.mxu0
      %4977 = vmatprep.mubr.bf16.mxu0 0
      %4978 = vmatmul.mubr.bf16.gmra.mxu0 %v4774
      %v4979 = vpop.f32.mrf.mxu0
      %v4980 = vadd.f32 %v4883, %v4979
      %v4981 = vpop.f32.mrf.mxu0
      %v4982 = vpop.f32.mrf.mxu0
      %v4983 = vadd.f32 %v4886, %v4982
      %v4984 = vpop.f32.mrf.mxu0
      %4985 = vdwg.mxu0
      %s4986 = scalar_lea.vmem %s1, 208
      %v4987 = vld [vmem:[%s4986] sm:$0xf]
      %v4988 = vld [vmem:[%s4986 + $0x4] sm:$0xf]
      %v4989 = vld [vmem:[%s4986 + $0x8] sm:$0xf]
      %v4990 = vld [vmem:[%s4986 + $0xc] sm:$0xf]
      %v4995 = vunpack.c.l.b16 %v4987
      %v4996 = vunpack.c.l.b16 %v4988
      %v4997 = vunpack.c.l.b16 %v4989
      %v4998 = vunpack.c.l.b16 %v4990
      %v4999 = vpack.c.b16 %v4996, %v4995
      %v5000 = vpack.c.b16 %v4998, %v4997
      %v5002 = vsel %vm229, %v4999, 0
      %v5005 = vsel %vm229, %v5000, 0
      %5007 = vmatprep.subr.bf16.mxu0 0
      %5008 = vmatpush1.bf16.msra.mxu0 0
      %5009 = vmatprep.subr.bf16.mxu0 0
      %5010 = vmatpush1.bf16.msra.mxu0 0
      %5011 = vmatprep.subr.bf16.mxu0 0
      %5012 = vmatpush1.bf16.msra.mxu0 0
      %5013 = vmatprep.subr.bf16.mxu0 0
      %5014 = vmatpush1.bf16.msra.mxu0 0
      %5015 = vmatprep.subr.bf16.mxu0 0
      %5016 = vmatpush1.bf16.msra.mxu0 0
      %5017 = vmatprep.subr.bf16.mxu0 0
      %5018 = vmatpush1.bf16.msra.mxu0 0
      %5019 = vmatprep.subr.bf16.mxu0 0
      %5020 = vmatpush1.bf16.msra.mxu0 %v4000
      %5021 = vmatprep.subr.bf16.mxu0 0
      %5022 = vmatpush1.bf16.msra.mxu0 %v3999
      %5023 = vmatprep.subr.bf16.mxu0 0
      %5024 = vmatpush2.bf16.msra.mxu0 0
      %5025 = vmatprep.subr.bf16.mxu0 0
      %5026 = vmatpush2.bf16.msra.mxu0 0
      %5027 = vmatprep.subr.bf16.mxu0 0
      %5028 = vmatpush2.bf16.msra.mxu0 0
      %5029 = vmatprep.subr.bf16.mxu0 0
      %5030 = vmatpush2.bf16.msra.mxu0 0
      %5031 = vmatprep.subr.bf16.mxu0 0
      %5032 = vmatpush2.bf16.msra.mxu0 0
      %5033 = vmatprep.subr.bf16.mxu0 0
      %5034 = vmatpush2.bf16.msra.mxu0 0
      %5035 = vmatprep.subr.bf16.mxu0 0
      %5036 = vmatpush2.bf16.msra.mxu0 0
      %5037 = vmatprep.subr.bf16.mxu0 0
      %5038 = vmatpush2.bf16.msra.mxu0 0
      %5039 = vmatprep.mubr.bf16.mxu0 0
      %5040 = vmatmul.mubr.bf16.gmra.mxu0 %v5002
      %v5041 = vpop.f32.mrf.mxu0
      %v5042 = vadd.f32 0.0, %v5041
      %v5043 = vpop.f32.mrf.mxu0
      %v5044 = vpop.f32.mrf.mxu0
      %v5045 = vadd.f32 0.0, %v5044
      %v5046 = vpop.f32.mrf.mxu0
      %5047 = vmatprep.mubr.bf16.mxu0 0
      %5048 = vmatmul.mubr.bf16.gmra.mxu0 %v5005
      %v5049 = vpop.f32.mrf.mxu0
      %v5050 = vadd.f32 0.0, %v5049
      %v5051 = vpop.f32.mrf.mxu0
      %v5052 = vpop.f32.mrf.mxu0
      %v5053 = vadd.f32 0.0, %v5052
      %v5054 = vpop.f32.mrf.mxu0
      %5055 = vdwg.mxu0
      %s5056 = scalar_lea.vmem %s2, 1792
      %v5057 = vld [vmem:[%s5056] sm:$0xf]
      %v5058 = vld [vmem:[%s5056 + $0x4] sm:$0xf]
      %v5059 = vld [vmem:[%s5056 + $0x8] sm:$0xf]
      %v5060 = vld [vmem:[%s5056 + $0xc] sm:$0xf]
      %v5061 = vld [vmem:[%s5056 + $0x10] sm:$0xf]
      %v5062 = vld [vmem:[%s5056 + $0x14] sm:$0xf]
      %v5063 = vld [vmem:[%s5056 + $0x18] sm:$0xf]
      %v5064 = vld [vmem:[%s5056 + $0x1c] sm:$0xf]
      %v5065 = vld [vmem:[%s5056 + $0x20] sm:$0xf]
      %v5066 = vld [vmem:[%s5056 + $0x24] sm:$0xf]
      %v5067 = vld [vmem:[%s5056 + $0x28] sm:$0xf]
      %v5068 = vld [vmem:[%s5056 + $0x2c] sm:$0xf]
      %v5069 = vld [vmem:[%s5056 + $0x30] sm:$0xf]
      %v5070 = vld [vmem:[%s5056 + $0x34] sm:$0xf]
      %v5071 = vld [vmem:[%s5056 + $0x38] sm:$0xf]
      %v5072 = vld [vmem:[%s5056 + $0x3c] sm:$0xf]
      %v5073 = vpack.c.bf16 %v5045, %v5042
      %v5074 = vpack.c.bf16 %v5053, %v5050
      %v5091 = vunpack.c.l.b16 %v5057
      %v5092 = vunpack.c.l.b16 %v5058
      %v5093 = vunpack.c.l.b16 %v5059
      %v5094 = vunpack.c.l.b16 %v5060
      %v5095 = vunpack.c.l.b16 %v5061
      %v5096 = vunpack.c.l.b16 %v5062
      %v5097 = vunpack.c.l.b16 %v5063
      %v5098 = vunpack.c.l.b16 %v5064
      %v5099 = vunpack.c.l.b16 %v5065
      %v5100 = vunpack.c.l.b16 %v5066
      %v5101 = vunpack.c.l.b16 %v5067
      %v5102 = vunpack.c.l.b16 %v5068
      %v5103 = vunpack.c.l.b16 %v5069
      %v5104 = vunpack.c.l.b16 %v5070
      %v5105 = vunpack.c.l.b16 %v5071
      %v5106 = vunpack.c.l.b16 %v5072
      %v5107 = vpack.c.b16 %v5092, %v5091
      %v5108 = vpack.c.b16 %v5094, %v5093
      %v5109 = vpack.c.b16 %v5096, %v5095
      %v5110 = vpack.c.b16 %v5098, %v5097
      %v5111 = vpack.c.b16 %v5100, %v5099
      %v5112 = vpack.c.b16 %v5102, %v5101
      %v5113 = vpack.c.b16 %v5104, %v5103
      %v5114 = vpack.c.b16 %v5106, %v5105
      %5123 = vmatprep.subr.bf16.mxu0 0
      %5124 = vmatpush1.bf16.msra.mxu0 %v5114
      %5125 = vmatprep.subr.bf16.mxu0 0
      %5126 = vmatpush1.bf16.msra.mxu0 %v5113
      %5127 = vmatprep.subr.bf16.mxu0 0
      %5128 = vmatpush1.bf16.msra.mxu0 %v5112
      %5129 = vmatprep.subr.bf16.mxu0 0
      %5130 = vmatpush1.bf16.msra.mxu0 %v5111
      %5131 = vmatprep.subr.bf16.mxu0 0
      %5132 = vmatpush1.bf16.msra.mxu0 %v5110
      %5133 = vmatprep.subr.bf16.mxu0 0
      %5134 = vmatpush1.bf16.msra.mxu0 %v5109
      %5135 = vmatprep.subr.bf16.mxu0 0
      %5136 = vmatpush1.bf16.msra.mxu0 %v5108
      %5137 = vmatprep.subr.bf16.mxu0 0
      %5138 = vmatpush1.bf16.msra.mxu0 %v5107
      %5139 = vmatprep.subr.bf16.mxu0 0
      %5140 = vmatpush2.bf16.msra.mxu0 0
      %5141 = vmatprep.subr.bf16.mxu0 0
      %5142 = vmatpush2.bf16.msra.mxu0 0
      %5143 = vmatprep.subr.bf16.mxu0 0
      %5144 = vmatpush2.bf16.msra.mxu0 0
      %5145 = vmatprep.subr.bf16.mxu0 0
      %5146 = vmatpush2.bf16.msra.mxu0 0
      %5147 = vmatprep.subr.bf16.mxu0 0
      %5148 = vmatpush2.bf16.msra.mxu0 0
      %5149 = vmatprep.subr.bf16.mxu0 0
      %5150 = vmatpush2.bf16.msra.mxu0 0
      %5151 = vmatprep.subr.bf16.mxu0 0
      %5152 = vmatpush2.bf16.msra.mxu0 0
      %5153 = vmatprep.subr.bf16.mxu0 0
      %5154 = vmatpush2.bf16.msra.mxu0 0
      %5155 = vmatprep.mubr.bf16.mxu0 0
      %5156 = vmatmul.mubr.bf16.gmra.mxu0 %v5073
      %v5157 = vpop.f32.mrf.mxu0
      %v5158 = vadd.f32 0.0, %v5157
      %v5159 = vpop.f32.mrf.mxu0
      %v5160 = vpop.f32.mrf.mxu0
      %v5161 = vadd.f32 0.0, %v5160
      %v5162 = vpop.f32.mrf.mxu0
      %5163 = vmatprep.mubr.bf16.mxu0 0
      %5164 = vmatmul.mubr.bf16.gmra.mxu0 %v5074
      %v5165 = vpop.f32.mrf.mxu0
      %v5166 = vadd.f32 0.0, %v5165
      %v5167 = vpop.f32.mrf.mxu0
      %v5168 = vpop.f32.mrf.mxu0
      %v5169 = vadd.f32 0.0, %v5168
      %v5170 = vpop.f32.mrf.mxu0
      %5171 = vdwg.mxu0
      %v5172 = vadd.f32 %v4972, %v5158
      %v5173 = vadd.f32 %v4975, %v5161
      %v5174 = vadd.f32 %v4980, %v5166
      %v5175 = vadd.f32 %v4983, %v5169
      %s5176 = scalar_lea.vmem %s3, 7
      %v5177 = vld [vmem:[%s5176] sm:$0x1]
      %v5179 = vlaneseq
      %v5180 = vshrl.u32 %v5179, 7
      %v5181 = vsub.s32 0, %v5180
      %v5182 = vrot.slane %v5177, %v5181
      %v5184 = vadd.f32 %v5172, %v5182
      %v5185 = vadd.f32 %v5173, %v5182
      %v5186 = vadd.f32 %v5174, %v5182
      %v5187 = vadd.f32 %v5175, %v5182
      %vm5188 = vcmp.ge.f32.partialorder %v5184, 0.0
      %vm5189 = vcmp.ge.f32.partialorder %v5185, 0.0
      %vm5190 = vcmp.ge.f32.partialorder %v5186, 0.0
      %vm5191 = vcmp.ge.f32.partialorder %v5187, 0.0
      %v5192 = vmul.f32 %v5184, 0.22916667
      %v5193 = vmul.f32 %v5185, 0.22916667
      %v5194 = vmul.f32 %v5186, 0.22916667
      %v5195 = vmul.f32 %v5187, 0.22916667
      %v5196 = vsel %vm5188, %v5184, %v5192
      %v5197 = vsel %vm5189, %v5185, %v5193
      %v5198 = vsel %vm5190, %v5186, %v5194
      %v5199 = vsel %vm5191, %v5187, %v5195
      %v5200 = vpack.c.bf16 %v5197, %v5196
      %v5201 = vpack.c.bf16 %v5199, %v5198
      %5202 = vmatprep.subr.bf16.mxu0 0
      %5203 = vmatpush1.bf16.msra.mxu0 0
      %5204 = vmatprep.subr.bf16.mxu0 0
      %5205 = vmatpush1.bf16.msra.mxu0 0
      %5206 = vmatprep.subr.bf16.mxu0 0
      %5207 = vmatpush1.bf16.msra.mxu0 0
      %5208 = vmatprep.subr.bf16.mxu0 0
      %5209 = vmatpush1.bf16.msra.mxu0 0
      %5210 = vmatprep.subr.bf16.mxu0 0
      %5211 = vmatpush1.bf16.msra.mxu0 0
      %5212 = vmatprep.subr.bf16.mxu0 0
      %5213 = vmatpush1.bf16.msra.mxu0 0
      %5214 = vmatprep.subr.bf16.mxu0 0
      %5215 = vmatpush1.bf16.msra.mxu0 %v5201
      %5216 = vmatprep.subr.bf16.mxu0 0
      %5217 = vmatpush1.bf16.msra.mxu0 %v5200
      %5218 = vmatprep.subr.bf16.mxu0 0
      %5219 = vmatpush2.bf16.msra.mxu0 0
      %5220 = vmatprep.subr.bf16.mxu0 0
      %5221 = vmatpush2.bf16.msra.mxu0 0
      %5222 = vmatprep.subr.bf16.mxu0 0
      %5223 = vmatpush2.bf16.msra.mxu0 0
      %5224 = vmatprep.subr.bf16.mxu0 0
      %5225 = vmatpush2.bf16.msra.mxu0 0
      %5226 = vmatprep.subr.bf16.mxu0 0
      %5227 = vmatpush2.bf16.msra.mxu0 0
      %5228 = vmatprep.subr.bf16.mxu0 0
      %5229 = vmatpush2.bf16.msra.mxu0 0
      %5230 = vmatprep.subr.bf16.mxu0 0
      %5231 = vmatpush2.bf16.msra.mxu0 0
      %5232 = vmatprep.subr.bf16.mxu0 0
      %5233 = vmatpush2.bf16.msra.mxu0 0
      %5234 = vmatprep.mubr.bf16.mxu0 0
      %5235 = vmatmul.mubr.bf16.gmra.mxu0 %v4012
      %v5236 = vpop.f32.mrf.mxu0
      %v5237 = vadd.f32 0.0, %v5236
      %v5238 = vpop.f32.mrf.mxu0
      %v5239 = vpop.f32.mrf.mxu0
      %v5240 = vadd.f32 0.0, %v5239
      %v5241 = vpop.f32.mrf.mxu0
      %5242 = vmatprep.mubr.bf16.mxu0 0
      %5243 = vmatmul.mubr.bf16.gmra.mxu0 %v4015
      %v5244 = vpop.f32.mrf.mxu0
      %v5245 = vadd.f32 0.0, %v5244
      %v5246 = vpop.f32.mrf.mxu0
      %v5247 = vpop.f32.mrf.mxu0
      %v5248 = vadd.f32 0.0, %v5247
      %v5249 = vpop.f32.mrf.mxu0
      %5250 = vdwg.mxu0
      %v5251 = vpack.c.bf16 %v5240, %v5237
      %v5252 = vpack.c.bf16 %v5248, %v5245
      %5253 = vmatprep.subr.bf16.mxu0 0
      %5254 = vmatpush1.bf16.msra.mxu0 %v4124
      %5255 = vmatprep.subr.bf16.mxu0 0
      %5256 = vmatpush1.bf16.msra.mxu0 %v4123
      %5257 = vmatprep.subr.bf16.mxu0 0
      %5258 = vmatpush1.bf16.msra.mxu0 %v4122
      %5259 = vmatprep.subr.bf16.mxu0 0
      %5260 = vmatpush1.bf16.msra.mxu0 %v4121
      %5261 = vmatprep.subr.bf16.mxu0 0
      %5262 = vmatpush1.bf16.msra.mxu0 %v4120
      %5263 = vmatprep.subr.bf16.mxu0 0
      %5264 = vmatpush1.bf16.msra.mxu0 %v4119
      %5265 = vmatprep.subr.bf16.mxu0 0
      %5266 = vmatpush1.bf16.msra.mxu0 %v4118
      %5267 = vmatprep.subr.bf16.mxu0 0
      %5268 = vmatpush1.bf16.msra.mxu0 %v4117
      %5269 = vmatprep.subr.bf16.mxu0 0
      %5270 = vmatpush2.bf16.msra.mxu0 0
      %5271 = vmatprep.subr.bf16.mxu0 0
      %5272 = vmatpush2.bf16.msra.mxu0 0
      %5273 = vmatprep.subr.bf16.mxu0 0
      %5274 = vmatpush2.bf16.msra.mxu0 0
      %5275 = vmatprep.subr.bf16.mxu0 0
      %5276 = vmatpush2.bf16.msra.mxu0 0
      %5277 = vmatprep.subr.bf16.mxu0 0
      %5278 = vmatpush2.bf16.msra.mxu0 0
      %5279 = vmatprep.subr.bf16.mxu0 0
      %5280 = vmatpush2.bf16.msra.mxu0 0
      %5281 = vmatprep.subr.bf16.mxu0 0
      %5282 = vmatpush2.bf16.msra.mxu0 0
      %5283 = vmatprep.subr.bf16.mxu0 0
      %5284 = vmatpush2.bf16.msra.mxu0 0
      %5285 = vmatprep.mubr.bf16.mxu0 0
      %5286 = vmatmul.mubr.bf16.gmra.mxu0 %v5251
      %v5287 = vpop.f32.mrf.mxu0
      %v5288 = vadd.f32 0.0, %v5287
      %v5289 = vpop.f32.mrf.mxu0
      %v5290 = vpop.f32.mrf.mxu0
      %v5291 = vadd.f32 0.0, %v5290
      %v5292 = vpop.f32.mrf.mxu0
      %5293 = vmatprep.mubr.bf16.mxu0 0
      %5294 = vmatmul.mubr.bf16.gmra.mxu0 %v5252
      %v5295 = vpop.f32.mrf.mxu0
      %v5296 = vadd.f32 0.0, %v5295
      %v5297 = vpop.f32.mrf.mxu0
      %v5298 = vpop.f32.mrf.mxu0
      %v5299 = vadd.f32 0.0, %v5298
      %v5300 = vpop.f32.mrf.mxu0
      %5301 = vdwg.mxu0
      %v5302 = vpack.c.bf16 %v5291, %v5288
      %v5303 = vpack.c.bf16 %v5299, %v5296
      %5304 = vmatprep.subr.bf16.mxu0 0
      %5305 = vmatpush1.bf16.msra.mxu0 0
      %5306 = vmatprep.subr.bf16.mxu0 0
      %5307 = vmatpush1.bf16.msra.mxu0 0
      %5308 = vmatprep.subr.bf16.mxu0 0
      %5309 = vmatpush1.bf16.msra.mxu0 0
      %5310 = vmatprep.subr.bf16.mxu0 0
      %5311 = vmatpush1.bf16.msra.mxu0 0
      %5312 = vmatprep.subr.bf16.mxu0 0
      %5313 = vmatpush1.bf16.msra.mxu0 0
      %5314 = vmatprep.subr.bf16.mxu0 0
      %5315 = vmatpush1.bf16.msra.mxu0 0
      %5316 = vmatprep.subr.bf16.mxu0 0
      %5317 = vmatpush1.bf16.msra.mxu0 %v5303
      %5318 = vmatprep.subr.bf16.mxu0 0
      %5319 = vmatpush1.bf16.msra.mxu0 %v5302
      %5320 = vmatprep.subr.bf16.mxu0 0
      %5321 = vmatpush2.bf16.msra.mxu0 0
      %5322 = vmatprep.subr.bf16.mxu0 0
      %5323 = vmatpush2.bf16.msra.mxu0 0
      %5324 = vmatprep.subr.bf16.mxu0 0
      %5325 = vmatpush2.bf16.msra.mxu0 0
      %5326 = vmatprep.subr.bf16.mxu0 0
      %5327 = vmatpush2.bf16.msra.mxu0 0
      %5328 = vmatprep.subr.bf16.mxu0 0
      %5329 = vmatpush2.bf16.msra.mxu0 0
      %5330 = vmatprep.subr.bf16.mxu0 0
      %5331 = vmatpush2.bf16.msra.mxu0 0
      %5332 = vmatprep.subr.bf16.mxu0 0
      %5333 = vmatpush2.bf16.msra.mxu0 0
      %5334 = vmatprep.subr.bf16.mxu0 0
      %5335 = vmatpush2.bf16.msra.mxu0 0
      %5336 = vmatprep.mubr.bf16.mxu0 0
      %5337 = vmatmul.mubr.bf16.gmra.mxu0 %v4200
      %v5338 = vpop.f32.mrf.mxu0
      %v5339 = vadd.f32 0.0, %v5338
      %v5340 = vpop.f32.mrf.mxu0
      %v5341 = vpop.f32.mrf.mxu0
      %v5342 = vadd.f32 0.0, %v5341
      %v5343 = vpop.f32.mrf.mxu0
      %5344 = vmatprep.mubr.bf16.mxu0 0
      %5345 = vmatmul.mubr.bf16.gmra.mxu0 %v4203
      %v5346 = vpop.f32.mrf.mxu0
      %v5347 = vadd.f32 0.0, %v5346
      %v5348 = vpop.f32.mrf.mxu0
      %v5349 = vpop.f32.mrf.mxu0
      %v5350 = vadd.f32 0.0, %v5349
      %v5351 = vpop.f32.mrf.mxu0
      %5352 = vdwg.mxu0
      %s5353 = scalar_lea.vmem %s2, 1856
      %v5354 = vld [vmem:[%s5353] sm:$0xf]
      %v5355 = vld [vmem:[%s5353 + $0x4] sm:$0xf]
      %v5356 = vld [vmem:[%s5353 + $0x8] sm:$0xf]
      %v5357 = vld [vmem:[%s5353 + $0xc] sm:$0xf]
      %v5358 = vld [vmem:[%s5353 + $0x10] sm:$0xf]
      %v5359 = vld [vmem:[%s5353 + $0x14] sm:$0xf]
      %v5360 = vld [vmem:[%s5353 + $0x18] sm:$0xf]
      %v5361 = vld [vmem:[%s5353 + $0x1c] sm:$0xf]
      %v5362 = vld [vmem:[%s5353 + $0x20] sm:$0xf]
      %v5363 = vld [vmem:[%s5353 + $0x24] sm:$0xf]
      %v5364 = vld [vmem:[%s5353 + $0x28] sm:$0xf]
      %v5365 = vld [vmem:[%s5353 + $0x2c] sm:$0xf]
      %v5366 = vld [vmem:[%s5353 + $0x30] sm:$0xf]
      %v5367 = vld [vmem:[%s5353 + $0x34] sm:$0xf]
      %v5368 = vld [vmem:[%s5353 + $0x38] sm:$0xf]
      %v5369 = vld [vmem:[%s5353 + $0x3c] sm:$0xf]
      %v5370 = vpack.c.bf16 %v5342, %v5339
      %v5371 = vpack.c.bf16 %v5350, %v5347
      %s5372 = scalar_lea.vmem %s2, 1920
      %v5373 = vld [vmem:[%s5372] sm:$0xf]
      %v5374 = vld [vmem:[%s5372 + $0x4] sm:$0xf]
      %v5375 = vld [vmem:[%s5372 + $0x8] sm:$0xf]
      %v5376 = vld [vmem:[%s5372 + $0xc] sm:$0xf]
      %v5377 = vld [vmem:[%s5372 + $0x10] sm:$0xf]
      %v5378 = vld [vmem:[%s5372 + $0x14] sm:$0xf]
      %v5379 = vld [vmem:[%s5372 + $0x18] sm:$0xf]
      %v5380 = vld [vmem:[%s5372 + $0x1c] sm:$0xf]
      %v5381 = vld [vmem:[%s5372 + $0x20] sm:$0xf]
      %v5382 = vld [vmem:[%s5372 + $0x24] sm:$0xf]
      %v5383 = vld [vmem:[%s5372 + $0x28] sm:$0xf]
      %v5384 = vld [vmem:[%s5372 + $0x2c] sm:$0xf]
      %v5385 = vld [vmem:[%s5372 + $0x30] sm:$0xf]
      %v5386 = vld [vmem:[%s5372 + $0x34] sm:$0xf]
      %v5387 = vld [vmem:[%s5372 + $0x38] sm:$0xf]
      %v5388 = vld [vmem:[%s5372 + $0x3c] sm:$0xf]
      %v5405 = vunpack.c.l.b16 %v5373
      %v5406 = vunpack.c.l.b16 %v5374
      %v5407 = vunpack.c.l.b16 %v5375
      %v5408 = vunpack.c.l.b16 %v5376
      %v5409 = vunpack.c.l.b16 %v5377
      %v5410 = vunpack.c.l.b16 %v5378
      %v5411 = vunpack.c.l.b16 %v5379
      %v5412 = vunpack.c.l.b16 %v5380
      %v5413 = vunpack.c.l.b16 %v5381
      %v5414 = vunpack.c.l.b16 %v5382
      %v5415 = vunpack.c.l.b16 %v5383
      %v5416 = vunpack.c.l.b16 %v5384
      %v5417 = vunpack.c.l.b16 %v5385
      %v5418 = vunpack.c.l.b16 %v5386
      %v5419 = vunpack.c.l.b16 %v5387
      %v5420 = vunpack.c.l.b16 %v5388
      %v5421 = vpack.c.b16 %v5406, %v5405
      %v5422 = vpack.c.b16 %v5408, %v5407
      %v5423 = vpack.c.b16 %v5410, %v5409
      %v5424 = vpack.c.b16 %v5412, %v5411
      %v5425 = vpack.c.b16 %v5414, %v5413
      %v5426 = vpack.c.b16 %v5416, %v5415
      %v5427 = vpack.c.b16 %v5418, %v5417
      %v5428 = vpack.c.b16 %v5420, %v5419
      %5437 = vmatprep.subr.bf16.mxu0 0
      %5438 = vmatpush1.bf16.msra.mxu0 %v5428
      %5439 = vmatprep.subr.bf16.mxu0 0
      %5440 = vmatpush1.bf16.msra.mxu0 %v5427
      %5441 = vmatprep.subr.bf16.mxu0 0
      %5442 = vmatpush1.bf16.msra.mxu0 %v5426
      %5443 = vmatprep.subr.bf16.mxu0 0
      %5444 = vmatpush1.bf16.msra.mxu0 %v5425
      %5445 = vmatprep.subr.bf16.mxu0 0
      %5446 = vmatpush1.bf16.msra.mxu0 %v5424
      %5447 = vmatprep.subr.bf16.mxu0 0
      %5448 = vmatpush1.bf16.msra.mxu0 %v5423
      %5449 = vmatprep.subr.bf16.mxu0 0
      %5450 = vmatpush1.bf16.msra.mxu0 %v5422
      %5451 = vmatprep.subr.bf16.mxu0 0
      %5452 = vmatpush1.bf16.msra.mxu0 %v5421
      %5453 = vmatprep.subr.bf16.mxu0 0
      %5454 = vmatpush2.bf16.msra.mxu0 0
      %5455 = vmatprep.subr.bf16.mxu0 0
      %5456 = vmatpush2.bf16.msra.mxu0 0
      %5457 = vmatprep.subr.bf16.mxu0 0
      %5458 = vmatpush2.bf16.msra.mxu0 0
      %5459 = vmatprep.subr.bf16.mxu0 0
      %5460 = vmatpush2.bf16.msra.mxu0 0
      %5461 = vmatprep.subr.bf16.mxu0 0
      %5462 = vmatpush2.bf16.msra.mxu0 0
      %5463 = vmatprep.subr.bf16.mxu0 0
      %5464 = vmatpush2.bf16.msra.mxu0 0
      %5465 = vmatprep.subr.bf16.mxu0 0
      %5466 = vmatpush2.bf16.msra.mxu0 0
      %5467 = vmatprep.subr.bf16.mxu0 0
      %5468 = vmatpush2.bf16.msra.mxu0 0
      %5469 = vmatprep.mubr.bf16.mxu0 0
      %5470 = vmatmul.mubr.bf16.gmra.mxu0 %v5302
      %v5471 = vpop.f32.mrf.mxu0
      %v5472 = vadd.f32 0.0, %v5471
      %v5473 = vpop.f32.mrf.mxu0
      %v5474 = vpop.f32.mrf.mxu0
      %v5475 = vadd.f32 0.0, %v5474
      %v5476 = vpop.f32.mrf.mxu0
      %5477 = vmatprep.mubr.bf16.mxu0 0
      %5478 = vmatmul.mubr.bf16.gmra.mxu0 %v5303
      %v5479 = vpop.f32.mrf.mxu0
      %v5480 = vadd.f32 0.0, %v5479
      %v5481 = vpop.f32.mrf.mxu0
      %v5482 = vpop.f32.mrf.mxu0
      %v5483 = vadd.f32 0.0, %v5482
      %v5484 = vpop.f32.mrf.mxu0
      %5485 = vdwg.mxu0
      %v5502 = vunpack.c.l.b16 %v5354
      %v5503 = vunpack.c.l.b16 %v5355
      %v5504 = vunpack.c.l.b16 %v5356
      %v5505 = vunpack.c.l.b16 %v5357
      %v5506 = vunpack.c.l.b16 %v5358
      %v5507 = vunpack.c.l.b16 %v5359
      %v5508 = vunpack.c.l.b16 %v5360
      %v5509 = vunpack.c.l.b16 %v5361
      %v5510 = vunpack.c.l.b16 %v5362
      %v5511 = vunpack.c.l.b16 %v5363
      %v5512 = vunpack.c.l.b16 %v5364
      %v5513 = vunpack.c.l.b16 %v5365
      %v5514 = vunpack.c.l.b16 %v5366
      %v5515 = vunpack.c.l.b16 %v5367
      %v5516 = vunpack.c.l.b16 %v5368
      %v5517 = vunpack.c.l.b16 %v5369
      %v5518 = vpack.c.b16 %v5503, %v5502
      %v5519 = vpack.c.b16 %v5505, %v5504
      %v5520 = vpack.c.b16 %v5507, %v5506
      %v5521 = vpack.c.b16 %v5509, %v5508
      %v5522 = vpack.c.b16 %v5511, %v5510
      %v5523 = vpack.c.b16 %v5513, %v5512
      %v5524 = vpack.c.b16 %v5515, %v5514
      %v5525 = vpack.c.b16 %v5517, %v5516
      %5534 = vmatprep.subr.bf16.mxu0 0
      %5535 = vmatpush1.bf16.msra.mxu0 %v5525
      %5536 = vmatprep.subr.bf16.mxu0 0
      %5537 = vmatpush1.bf16.msra.mxu0 %v5524
      %5538 = vmatprep.subr.bf16.mxu0 0
      %5539 = vmatpush1.bf16.msra.mxu0 %v5523
      %5540 = vmatprep.subr.bf16.mxu0 0
      %5541 = vmatpush1.bf16.msra.mxu0 %v5522
      %5542 = vmatprep.subr.bf16.mxu0 0
      %5543 = vmatpush1.bf16.msra.mxu0 %v5521
      %5544 = vmatprep.subr.bf16.mxu0 0
      %5545 = vmatpush1.bf16.msra.mxu0 %v5520
      %5546 = vmatprep.subr.bf16.mxu0 0
      %5547 = vmatpush1.bf16.msra.mxu0 %v5519
      %5548 = vmatprep.subr.bf16.mxu0 0
      %5549 = vmatpush1.bf16.msra.mxu0 %v5518
      %5550 = vmatprep.subr.bf16.mxu0 0
      %5551 = vmatpush2.bf16.msra.mxu0 0
      %5552 = vmatprep.subr.bf16.mxu0 0
      %5553 = vmatpush2.bf16.msra.mxu0 0
      %5554 = vmatprep.subr.bf16.mxu0 0
      %5555 = vmatpush2.bf16.msra.mxu0 0
      %5556 = vmatprep.subr.bf16.mxu0 0
      %5557 = vmatpush2.bf16.msra.mxu0 0
      %5558 = vmatprep.subr.bf16.mxu0 0
      %5559 = vmatpush2.bf16.msra.mxu0 0
      %5560 = vmatprep.subr.bf16.mxu0 0
      %5561 = vmatpush2.bf16.msra.mxu0 0
      %5562 = vmatprep.subr.bf16.mxu0 0
      %5563 = vmatpush2.bf16.msra.mxu0 0
      %5564 = vmatprep.subr.bf16.mxu0 0
      %5565 = vmatpush2.bf16.msra.mxu0 0
      %5566 = vmatprep.mubr.bf16.mxu0 0
      %5567 = vmatmul.mubr.bf16.gmra.mxu0 %v5370
      %v5568 = vpop.f32.mrf.mxu0
      %v5569 = vadd.f32 %v5472, %v5568
      %v5570 = vpop.f32.mrf.mxu0
      %v5571 = vpop.f32.mrf.mxu0
      %v5572 = vadd.f32 %v5475, %v5571
      %v5573 = vpop.f32.mrf.mxu0
      %5574 = vmatprep.mubr.bf16.mxu0 0
      %5575 = vmatmul.mubr.bf16.gmra.mxu0 %v5371
      %v5576 = vpop.f32.mrf.mxu0
      %v5577 = vadd.f32 %v5480, %v5576
      %v5578 = vpop.f32.mrf.mxu0
      %v5579 = vpop.f32.mrf.mxu0
      %v5580 = vadd.f32 %v5483, %v5579
      %v5581 = vpop.f32.mrf.mxu0
      %5582 = vdwg.mxu0
      %5583 = vmatprep.subr.bf16.mxu0 0
      %5584 = vmatpush1.bf16.msra.mxu0 0
      %5585 = vmatprep.subr.bf16.mxu0 0
      %5586 = vmatpush1.bf16.msra.mxu0 0
      %5587 = vmatprep.subr.bf16.mxu0 0
      %5588 = vmatpush1.bf16.msra.mxu0 0
      %5589 = vmatprep.subr.bf16.mxu0 0
      %5590 = vmatpush1.bf16.msra.mxu0 0
      %5591 = vmatprep.subr.bf16.mxu0 0
      %5592 = vmatpush1.bf16.msra.mxu0 0
      %5593 = vmatprep.subr.bf16.mxu0 0
      %5594 = vmatpush1.bf16.msra.mxu0 0
      %5595 = vmatprep.subr.bf16.mxu0 0
      %5596 = vmatpush1.bf16.msra.mxu0 %v5303
      %5597 = vmatprep.subr.bf16.mxu0 0
      %5598 = vmatpush1.bf16.msra.mxu0 %v5302
      %5599 = vmatprep.subr.bf16.mxu0 0
      %5600 = vmatpush2.bf16.msra.mxu0 0
      %5601 = vmatprep.subr.bf16.mxu0 0
      %5602 = vmatpush2.bf16.msra.mxu0 0
      %5603 = vmatprep.subr.bf16.mxu0 0
      %5604 = vmatpush2.bf16.msra.mxu0 0
      %5605 = vmatprep.subr.bf16.mxu0 0
      %5606 = vmatpush2.bf16.msra.mxu0 0
      %5607 = vmatprep.subr.bf16.mxu0 0
      %5608 = vmatpush2.bf16.msra.mxu0 0
      %5609 = vmatprep.subr.bf16.mxu0 0
      %5610 = vmatpush2.bf16.msra.mxu0 0
      %5611 = vmatprep.subr.bf16.mxu0 0
      %5612 = vmatpush2.bf16.msra.mxu0 0
      %5613 = vmatprep.subr.bf16.mxu0 0
      %5614 = vmatpush2.bf16.msra.mxu0 0
      %5615 = vmatprep.mubr.bf16.mxu0 0
      %5616 = vmatmul.mubr.bf16.gmra.mxu0 %v4500
      %v5617 = vpop.f32.mrf.mxu0
      %v5618 = vadd.f32 0.0, %v5617
      %v5619 = vpop.f32.mrf.mxu0
      %v5620 = vpop.f32.mrf.mxu0
      %v5621 = vadd.f32 0.0, %v5620
      %v5622 = vpop.f32.mrf.mxu0
      %5623 = vmatprep.mubr.bf16.mxu0 0
      %5624 = vmatmul.mubr.bf16.gmra.mxu0 %v4503
      %v5625 = vpop.f32.mrf.mxu0
      %v5626 = vadd.f32 0.0, %v5625
      %v5627 = vpop.f32.mrf.mxu0
      %v5628 = vpop.f32.mrf.mxu0
      %v5629 = vadd.f32 0.0, %v5628
      %v5630 = vpop.f32.mrf.mxu0
      %5631 = vdwg.mxu0
      %s5632 = scalar_lea.vmem %s2, 1984
      %v5633 = vld [vmem:[%s5632] sm:$0xf]
      %v5634 = vld [vmem:[%s5632 + $0x4] sm:$0xf]
      %v5635 = vld [vmem:[%s5632 + $0x8] sm:$0xf]
      %v5636 = vld [vmem:[%s5632 + $0xc] sm:$0xf]
      %v5637 = vld [vmem:[%s5632 + $0x10] sm:$0xf]
      %v5638 = vld [vmem:[%s5632 + $0x14] sm:$0xf]
      %v5639 = vld [vmem:[%s5632 + $0x18] sm:$0xf]
      %v5640 = vld [vmem:[%s5632 + $0x1c] sm:$0xf]
      %v5641 = vld [vmem:[%s5632 + $0x20] sm:$0xf]
      %v5642 = vld [vmem:[%s5632 + $0x24] sm:$0xf]
      %v5643 = vld [vmem:[%s5632 + $0x28] sm:$0xf]
      %v5644 = vld [vmem:[%s5632 + $0x2c] sm:$0xf]
      %v5645 = vld [vmem:[%s5632 + $0x30] sm:$0xf]
      %v5646 = vld [vmem:[%s5632 + $0x34] sm:$0xf]
      %v5647 = vld [vmem:[%s5632 + $0x38] sm:$0xf]
      %v5648 = vld [vmem:[%s5632 + $0x3c] sm:$0xf]
      %v5649 = vpack.c.bf16 %v5621, %v5618
      %v5650 = vpack.c.bf16 %v5629, %v5626
      %v5667 = vunpack.c.l.b16 %v5633
      %v5668 = vunpack.c.l.b16 %v5634
      %v5669 = vunpack.c.l.b16 %v5635
      %v5670 = vunpack.c.l.b16 %v5636
      %v5671 = vunpack.c.l.b16 %v5637
      %v5672 = vunpack.c.l.b16 %v5638
      %v5673 = vunpack.c.l.b16 %v5639
      %v5674 = vunpack.c.l.b16 %v5640
      %v5675 = vunpack.c.l.b16 %v5641
      %v5676 = vunpack.c.l.b16 %v5642
      %v5677 = vunpack.c.l.b16 %v5643
      %v5678 = vunpack.c.l.b16 %v5644
      %v5679 = vunpack.c.l.b16 %v5645
      %v5680 = vunpack.c.l.b16 %v5646
      %v5681 = vunpack.c.l.b16 %v5647
      %v5682 = vunpack.c.l.b16 %v5648
      %v5683 = vpack.c.b16 %v5668, %v5667
      %v5684 = vpack.c.b16 %v5670, %v5669
      %v5685 = vpack.c.b16 %v5672, %v5671
      %v5686 = vpack.c.b16 %v5674, %v5673
      %v5687 = vpack.c.b16 %v5676, %v5675
      %v5688 = vpack.c.b16 %v5678, %v5677
      %v5689 = vpack.c.b16 %v5680, %v5679
      %v5690 = vpack.c.b16 %v5682, %v5681
      %5699 = vmatprep.subr.bf16.mxu0 0
      %5700 = vmatpush1.bf16.msra.mxu0 %v5690
      %5701 = vmatprep.subr.bf16.mxu0 0
      %5702 = vmatpush1.bf16.msra.mxu0 %v5689
      %5703 = vmatprep.subr.bf16.mxu0 0
      %5704 = vmatpush1.bf16.msra.mxu0 %v5688
      %5705 = vmatprep.subr.bf16.mxu0 0
      %5706 = vmatpush1.bf16.msra.mxu0 %v5687
      %5707 = vmatprep.subr.bf16.mxu0 0
      %5708 = vmatpush1.bf16.msra.mxu0 %v5686
      %5709 = vmatprep.subr.bf16.mxu0 0
      %5710 = vmatpush1.bf16.msra.mxu0 %v5685
      %5711 = vmatprep.subr.bf16.mxu0 0
      %5712 = vmatpush1.bf16.msra.mxu0 %v5684
      %5713 = vmatprep.subr.bf16.mxu0 0
      %5714 = vmatpush1.bf16.msra.mxu0 %v5683
      %5715 = vmatprep.subr.bf16.mxu0 0
      %5716 = vmatpush2.bf16.msra.mxu0 0
      %5717 = vmatprep.subr.bf16.mxu0 0
      %5718 = vmatpush2.bf16.msra.mxu0 0
      %5719 = vmatprep.subr.bf16.mxu0 0
      %5720 = vmatpush2.bf16.msra.mxu0 0
      %5721 = vmatprep.subr.bf16.mxu0 0
      %5722 = vmatpush2.bf16.msra.mxu0 0
      %5723 = vmatprep.subr.bf16.mxu0 0
      %5724 = vmatpush2.bf16.msra.mxu0 0
      %5725 = vmatprep.subr.bf16.mxu0 0
      %5726 = vmatpush2.bf16.msra.mxu0 0
      %5727 = vmatprep.subr.bf16.mxu0 0
      %5728 = vmatpush2.bf16.msra.mxu0 0
      %5729 = vmatprep.subr.bf16.mxu0 0
      %5730 = vmatpush2.bf16.msra.mxu0 0
      %5731 = vmatprep.mubr.bf16.mxu0 0
      %5732 = vmatmul.mubr.bf16.gmra.mxu0 %v5649
      %v5733 = vpop.f32.mrf.mxu0
      %v5734 = vadd.f32 0.0, %v5733
      %v5735 = vpop.f32.mrf.mxu0
      %v5736 = vpop.f32.mrf.mxu0
      %v5737 = vadd.f32 0.0, %v5736
      %v5738 = vpop.f32.mrf.mxu0
      %5739 = vmatprep.mubr.bf16.mxu0 0
      %5740 = vmatmul.mubr.bf16.gmra.mxu0 %v5650
      %v5741 = vpop.f32.mrf.mxu0
      %v5742 = vadd.f32 0.0, %v5741
      %v5743 = vpop.f32.mrf.mxu0
      %v5744 = vpop.f32.mrf.mxu0
      %v5745 = vadd.f32 0.0, %v5744
      %v5746 = vpop.f32.mrf.mxu0
      %5747 = vdwg.mxu0
      %v5748 = vadd.f32 %v5569, %v5734
      %v5749 = vadd.f32 %v5572, %v5737
      %v5750 = vadd.f32 %v5577, %v5742
      %v5751 = vadd.f32 %v5580, %v5745
      %s5752 = scalar_lea.vmem %s3, 8
      %v5753 = vld [vmem:[%s5752] sm:$0x1]
      %v5755 = vlaneseq
      %v5756 = vshrl.u32 %v5755, 7
      %v5757 = vsub.s32 0, %v5756
      %v5758 = vrot.slane %v5753, %v5757
      %v5760 = vadd.f32 %v5748, %v5758
      %v5761 = vadd.f32 %v5749, %v5758
      %v5762 = vadd.f32 %v5750, %v5758
      %v5763 = vadd.f32 %v5751, %v5758
      %v5764 = vadd.f32 %v5760, %v4682
      %v5765 = vadd.f32 %v5761, %v4683
      %v5766 = vadd.f32 %v5762, %v4684
      %v5767 = vadd.f32 %v5763, %v4685
      %vm5768 = vcmp.ge.f32.partialorder %v5764, 0.0
      %vm5769 = vcmp.ge.f32.partialorder %v5765, 0.0
      %vm5770 = vcmp.ge.f32.partialorder %v5766, 0.0
      %vm5771 = vcmp.ge.f32.partialorder %v5767, 0.0
      %v5772 = vmul.f32 %v5764, 0.22916667
      %v5773 = vmul.f32 %v5765, 0.22916667
      %v5774 = vmul.f32 %v5766, 0.22916667
      %v5775 = vmul.f32 %v5767, 0.22916667
      %v5776 = vsel %vm5768, %v5764, %v5772
      %v5777 = vsel %vm5769, %v5765, %v5773
      %v5778 = vsel %vm5770, %v5766, %v5774
      %v5779 = vsel %vm5771, %v5767, %v5775
      %s5780 = scalar_lea.vmem %s1, 224
      %v5781 = vld [vmem:[%s5780] sm:$0xf]
      %v5782 = vld [vmem:[%s5780 + $0x4] sm:$0xf]
      %v5783 = vld [vmem:[%s5780 + $0x8] sm:$0xf]
      %v5784 = vld [vmem:[%s5780 + $0xc] sm:$0xf]
      %v5785 = vpack.c.bf16 %v5777, %v5776
      %v5786 = vpack.c.bf16 %v5779, %v5778
      %v5791 = vunpack.c.l.b16 %v5781
      %v5792 = vunpack.c.l.b16 %v5782
      %v5793 = vunpack.c.l.b16 %v5783
      %v5794 = vunpack.c.l.b16 %v5784
      %v5795 = vpack.c.b16 %v5792, %v5791
      %v5796 = vpack.c.b16 %v5794, %v5793
      %v5798 = vsel %vm229, %v5795, 0
      %v5801 = vsel %vm229, %v5796, 0
      %5803 = vmatprep.subr.bf16.mxu0 0
      %5804 = vmatpush1.bf16.msra.mxu0 0
      %5805 = vmatprep.subr.bf16.mxu0 0
      %5806 = vmatpush1.bf16.msra.mxu0 0
      %5807 = vmatprep.subr.bf16.mxu0 0
      %5808 = vmatpush1.bf16.msra.mxu0 0
      %5809 = vmatprep.subr.bf16.mxu0 0
      %5810 = vmatpush1.bf16.msra.mxu0 0
      %5811 = vmatprep.subr.bf16.mxu0 0
      %5812 = vmatpush1.bf16.msra.mxu0 0
      %5813 = vmatprep.subr.bf16.mxu0 0
      %5814 = vmatpush1.bf16.msra.mxu0 0
      %5815 = vmatprep.subr.bf16.mxu0 0
      %5816 = vmatpush1.bf16.msra.mxu0 %v5786
      %5817 = vmatprep.subr.bf16.mxu0 0
      %5818 = vmatpush1.bf16.msra.mxu0 %v5785
      %5819 = vmatprep.subr.bf16.mxu0 0
      %5820 = vmatpush2.bf16.msra.mxu0 0
      %5821 = vmatprep.subr.bf16.mxu0 0
      %5822 = vmatpush2.bf16.msra.mxu0 0
      %5823 = vmatprep.subr.bf16.mxu0 0
      %5824 = vmatpush2.bf16.msra.mxu0 0
      %5825 = vmatprep.subr.bf16.mxu0 0
      %5826 = vmatpush2.bf16.msra.mxu0 0
      %5827 = vmatprep.subr.bf16.mxu0 0
      %5828 = vmatpush2.bf16.msra.mxu0 0
      %5829 = vmatprep.subr.bf16.mxu0 0
      %5830 = vmatpush2.bf16.msra.mxu0 0
      %5831 = vmatprep.subr.bf16.mxu0 0
      %5832 = vmatpush2.bf16.msra.mxu0 0
      %5833 = vmatprep.subr.bf16.mxu0 0
      %5834 = vmatpush2.bf16.msra.mxu0 0
      %5835 = vmatprep.mubr.bf16.mxu0 0
      %5836 = vmatmul.mubr.bf16.gmra.mxu0 %v5798
      %v5837 = vpop.f32.mrf.mxu0
      %v5838 = vadd.f32 0.0, %v5837
      %v5839 = vpop.f32.mrf.mxu0
      %v5840 = vpop.f32.mrf.mxu0
      %v5841 = vadd.f32 0.0, %v5840
      %v5842 = vpop.f32.mrf.mxu0
      %5843 = vmatprep.mubr.bf16.mxu0 0
      %5844 = vmatmul.mubr.bf16.gmra.mxu0 %v5801
      %v5845 = vpop.f32.mrf.mxu0
      %v5846 = vadd.f32 0.0, %v5845
      %v5847 = vpop.f32.mrf.mxu0
      %v5848 = vpop.f32.mrf.mxu0
      %v5849 = vadd.f32 0.0, %v5848
      %v5850 = vpop.f32.mrf.mxu0
      %5851 = vdwg.mxu0
      %s5852 = scalar_lea.vmem %s2, 2048
      %v5853 = vld [vmem:[%s5852] sm:$0xf]
      %v5854 = vld [vmem:[%s5852 + $0x4] sm:$0xf]
      %v5855 = vld [vmem:[%s5852 + $0x8] sm:$0xf]
      %v5856 = vld [vmem:[%s5852 + $0xc] sm:$0xf]
      %v5857 = vld [vmem:[%s5852 + $0x10] sm:$0xf]
      %v5858 = vld [vmem:[%s5852 + $0x14] sm:$0xf]
      %v5859 = vld [vmem:[%s5852 + $0x18] sm:$0xf]
      %v5860 = vld [vmem:[%s5852 + $0x1c] sm:$0xf]
      %v5861 = vld [vmem:[%s5852 + $0x20] sm:$0xf]
      %v5862 = vld [vmem:[%s5852 + $0x24] sm:$0xf]
      %v5863 = vld [vmem:[%s5852 + $0x28] sm:$0xf]
      %v5864 = vld [vmem:[%s5852 + $0x2c] sm:$0xf]
      %v5865 = vld [vmem:[%s5852 + $0x30] sm:$0xf]
      %v5866 = vld [vmem:[%s5852 + $0x34] sm:$0xf]
      %v5867 = vld [vmem:[%s5852 + $0x38] sm:$0xf]
      %v5868 = vld [vmem:[%s5852 + $0x3c] sm:$0xf]
      %v5869 = vpack.c.bf16 %v5841, %v5838
      %v5870 = vpack.c.bf16 %v5849, %v5846
      %v5887 = vunpack.c.l.b16 %v5853
      %v5888 = vunpack.c.l.b16 %v5854
      %v5889 = vunpack.c.l.b16 %v5855
      %v5890 = vunpack.c.l.b16 %v5856
      %v5891 = vunpack.c.l.b16 %v5857
      %v5892 = vunpack.c.l.b16 %v5858
      %v5893 = vunpack.c.l.b16 %v5859
      %v5894 = vunpack.c.l.b16 %v5860
      %v5895 = vunpack.c.l.b16 %v5861
      %v5896 = vunpack.c.l.b16 %v5862
      %v5897 = vunpack.c.l.b16 %v5863
      %v5898 = vunpack.c.l.b16 %v5864
      %v5899 = vunpack.c.l.b16 %v5865
      %v5900 = vunpack.c.l.b16 %v5866
      %v5901 = vunpack.c.l.b16 %v5867
      %v5902 = vunpack.c.l.b16 %v5868
      %v5903 = vpack.c.b16 %v5888, %v5887
      %v5904 = vpack.c.b16 %v5890, %v5889
      %v5905 = vpack.c.b16 %v5892, %v5891
      %v5906 = vpack.c.b16 %v5894, %v5893
      %v5907 = vpack.c.b16 %v5896, %v5895
      %v5908 = vpack.c.b16 %v5898, %v5897
      %v5909 = vpack.c.b16 %v5900, %v5899
      %v5910 = vpack.c.b16 %v5902, %v5901
      %5919 = vmatprep.subr.bf16.mxu0 0
      %5920 = vmatpush1.bf16.msra.mxu0 %v5910
      %5921 = vmatprep.subr.bf16.mxu0 0
      %5922 = vmatpush1.bf16.msra.mxu0 %v5909
      %5923 = vmatprep.subr.bf16.mxu0 0
      %5924 = vmatpush1.bf16.msra.mxu0 %v5908
      %5925 = vmatprep.subr.bf16.mxu0 0
      %5926 = vmatpush1.bf16.msra.mxu0 %v5907
      %5927 = vmatprep.subr.bf16.mxu0 0
      %5928 = vmatpush1.bf16.msra.mxu0 %v5906
      %5929 = vmatprep.subr.bf16.mxu0 0
      %5930 = vmatpush1.bf16.msra.mxu0 %v5905
      %5931 = vmatprep.subr.bf16.mxu0 0
      %5932 = vmatpush1.bf16.msra.mxu0 %v5904
      %5933 = vmatprep.subr.bf16.mxu0 0
      %5934 = vmatpush1.bf16.msra.mxu0 %v5903
      %5935 = vmatprep.subr.bf16.mxu0 0
      %5936 = vmatpush2.bf16.msra.mxu0 0
      %5937 = vmatprep.subr.bf16.mxu0 0
      %5938 = vmatpush2.bf16.msra.mxu0 0
      %5939 = vmatprep.subr.bf16.mxu0 0
      %5940 = vmatpush2.bf16.msra.mxu0 0
      %5941 = vmatprep.subr.bf16.mxu0 0
      %5942 = vmatpush2.bf16.msra.mxu0 0
      %5943 = vmatprep.subr.bf16.mxu0 0
      %5944 = vmatpush2.bf16.msra.mxu0 0
      %5945 = vmatprep.subr.bf16.mxu0 0
      %5946 = vmatpush2.bf16.msra.mxu0 0
      %5947 = vmatprep.subr.bf16.mxu0 0
      %5948 = vmatpush2.bf16.msra.mxu0 0
      %5949 = vmatprep.subr.bf16.mxu0 0
      %5950 = vmatpush2.bf16.msra.mxu0 0
      %5951 = vmatprep.mubr.bf16.mxu0 0
      %5952 = vmatmul.mubr.bf16.gmra.mxu0 %v5869
      %v5953 = vpop.f32.mrf.mxu0
      %v5954 = vadd.f32 0.0, %v5953
      %v5955 = vpop.f32.mrf.mxu0
      %v5956 = vpop.f32.mrf.mxu0
      %v5957 = vadd.f32 0.0, %v5956
      %v5958 = vpop.f32.mrf.mxu0
      %5959 = vmatprep.mubr.bf16.mxu0 0
      %5960 = vmatmul.mubr.bf16.gmra.mxu0 %v5870
      %v5961 = vpop.f32.mrf.mxu0
      %v5962 = vadd.f32 0.0, %v5961
      %v5963 = vpop.f32.mrf.mxu0
      %v5964 = vpop.f32.mrf.mxu0
      %v5965 = vadd.f32 0.0, %v5964
      %v5966 = vpop.f32.mrf.mxu0
      %5967 = vdwg.mxu0
      %s5968 = scalar_lea.vmem %s1, 240
      %v5969 = vld [vmem:[%s5968] sm:$0xf]
      %v5970 = vld [vmem:[%s5968 + $0x4] sm:$0xf]
      %v5971 = vld [vmem:[%s5968 + $0x8] sm:$0xf]
      %v5972 = vld [vmem:[%s5968 + $0xc] sm:$0xf]
      %v5973 = vpack.c.bf16 %v5957, %v5954
      %v5974 = vpack.c.bf16 %v5965, %v5962
      %v5979 = vunpack.c.l.b16 %v5969
      %v5980 = vunpack.c.l.b16 %v5970
      %v5981 = vunpack.c.l.b16 %v5971
      %v5982 = vunpack.c.l.b16 %v5972
      %v5983 = vpack.c.b16 %v5980, %v5979
      %v5984 = vpack.c.b16 %v5982, %v5981
      %v5986 = vsel %vm229, %v5983, 0
      %v5989 = vsel %vm229, %v5984, 0
      %5991 = vmatprep.subr.bf16.mxu0 0
      %5992 = vmatpush1.bf16.msra.mxu0 0
      %5993 = vmatprep.subr.bf16.mxu0 0
      %5994 = vmatpush1.bf16.msra.mxu0 0
      %5995 = vmatprep.subr.bf16.mxu0 0
      %5996 = vmatpush1.bf16.msra.mxu0 0
      %5997 = vmatprep.subr.bf16.mxu0 0
      %5998 = vmatpush1.bf16.msra.mxu0 0
      %5999 = vmatprep.subr.bf16.mxu0 0
      %6000 = vmatpush1.bf16.msra.mxu0 0
      %6001 = vmatprep.subr.bf16.mxu0 0
      %6002 = vmatpush1.bf16.msra.mxu0 0
      %6003 = vmatprep.subr.bf16.mxu0 0
      %6004 = vmatpush1.bf16.msra.mxu0 %v5974
      %6005 = vmatprep.subr.bf16.mxu0 0
      %6006 = vmatpush1.bf16.msra.mxu0 %v5973
      %6007 = vmatprep.subr.bf16.mxu0 0
      %6008 = vmatpush2.bf16.msra.mxu0 0
      %6009 = vmatprep.subr.bf16.mxu0 0
      %6010 = vmatpush2.bf16.msra.mxu0 0
      %6011 = vmatprep.subr.bf16.mxu0 0
      %6012 = vmatpush2.bf16.msra.mxu0 0
      %6013 = vmatprep.subr.bf16.mxu0 0
      %6014 = vmatpush2.bf16.msra.mxu0 0
      %6015 = vmatprep.subr.bf16.mxu0 0
      %6016 = vmatpush2.bf16.msra.mxu0 0
      %6017 = vmatprep.subr.bf16.mxu0 0
      %6018 = vmatpush2.bf16.msra.mxu0 0
      %6019 = vmatprep.subr.bf16.mxu0 0
      %6020 = vmatpush2.bf16.msra.mxu0 0
      %6021 = vmatprep.subr.bf16.mxu0 0
      %6022 = vmatpush2.bf16.msra.mxu0 0
      %6023 = vmatprep.mubr.bf16.mxu0 0
      %6024 = vmatmul.mubr.bf16.gmra.mxu0 %v5986
      %v6025 = vpop.f32.mrf.mxu0
      %v6026 = vadd.f32 0.0, %v6025
      %v6027 = vpop.f32.mrf.mxu0
      %v6028 = vpop.f32.mrf.mxu0
      %v6029 = vadd.f32 0.0, %v6028
      %v6030 = vpop.f32.mrf.mxu0
      %6031 = vmatprep.mubr.bf16.mxu0 0
      %6032 = vmatmul.mubr.bf16.gmra.mxu0 %v5989
      %v6033 = vpop.f32.mrf.mxu0
      %v6034 = vadd.f32 0.0, %v6033
      %v6035 = vpop.f32.mrf.mxu0
      %v6036 = vpop.f32.mrf.mxu0
      %v6037 = vadd.f32 0.0, %v6036
      %v6038 = vpop.f32.mrf.mxu0
      %6039 = vdwg.mxu0
      %s6040 = scalar_lea.vmem %s2, 2112
      %v6041 = vld [vmem:[%s6040] sm:$0xf]
      %v6042 = vld [vmem:[%s6040 + $0x4] sm:$0xf]
      %v6043 = vld [vmem:[%s6040 + $0x8] sm:$0xf]
      %v6044 = vld [vmem:[%s6040 + $0xc] sm:$0xf]
      %v6045 = vld [vmem:[%s6040 + $0x10] sm:$0xf]
      %v6046 = vld [vmem:[%s6040 + $0x14] sm:$0xf]
      %v6047 = vld [vmem:[%s6040 + $0x18] sm:$0xf]
      %v6048 = vld [vmem:[%s6040 + $0x1c] sm:$0xf]
      %v6049 = vld [vmem:[%s6040 + $0x20] sm:$0xf]
      %v6050 = vld [vmem:[%s6040 + $0x24] sm:$0xf]
      %v6051 = vld [vmem:[%s6040 + $0x28] sm:$0xf]
      %v6052 = vld [vmem:[%s6040 + $0x2c] sm:$0xf]
      %v6053 = vld [vmem:[%s6040 + $0x30] sm:$0xf]
      %v6054 = vld [vmem:[%s6040 + $0x34] sm:$0xf]
      %v6055 = vld [vmem:[%s6040 + $0x38] sm:$0xf]
      %v6056 = vld [vmem:[%s6040 + $0x3c] sm:$0xf]
      %v6057 = vpack.c.bf16 %v6029, %v6026
      %v6058 = vpack.c.bf16 %v6037, %v6034
      %s6059 = scalar_lea.vmem %s2, 2176
      %v6060 = vld [vmem:[%s6059] sm:$0xf]
      %v6061 = vld [vmem:[%s6059 + $0x4] sm:$0xf]
      %v6062 = vld [vmem:[%s6059 + $0x8] sm:$0xf]
      %v6063 = vld [vmem:[%s6059 + $0xc] sm:$0xf]
      %v6064 = vld [vmem:[%s6059 + $0x10] sm:$0xf]
      %v6065 = vld [vmem:[%s6059 + $0x14] sm:$0xf]
      %v6066 = vld [vmem:[%s6059 + $0x18] sm:$0xf]
      %v6067 = vld [vmem:[%s6059 + $0x1c] sm:$0xf]
      %v6068 = vld [vmem:[%s6059 + $0x20] sm:$0xf]
      %v6069 = vld [vmem:[%s6059 + $0x24] sm:$0xf]
      %v6070 = vld [vmem:[%s6059 + $0x28] sm:$0xf]
      %v6071 = vld [vmem:[%s6059 + $0x2c] sm:$0xf]
      %v6072 = vld [vmem:[%s6059 + $0x30] sm:$0xf]
      %v6073 = vld [vmem:[%s6059 + $0x34] sm:$0xf]
      %v6074 = vld [vmem:[%s6059 + $0x38] sm:$0xf]
      %v6075 = vld [vmem:[%s6059 + $0x3c] sm:$0xf]
      %v6092 = vunpack.c.l.b16 %v6060
      %v6093 = vunpack.c.l.b16 %v6061
      %v6094 = vunpack.c.l.b16 %v6062
      %v6095 = vunpack.c.l.b16 %v6063
      %v6096 = vunpack.c.l.b16 %v6064
      %v6097 = vunpack.c.l.b16 %v6065
      %v6098 = vunpack.c.l.b16 %v6066
      %v6099 = vunpack.c.l.b16 %v6067
      %v6100 = vunpack.c.l.b16 %v6068
      %v6101 = vunpack.c.l.b16 %v6069
      %v6102 = vunpack.c.l.b16 %v6070
      %v6103 = vunpack.c.l.b16 %v6071
      %v6104 = vunpack.c.l.b16 %v6072
      %v6105 = vunpack.c.l.b16 %v6073
      %v6106 = vunpack.c.l.b16 %v6074
      %v6107 = vunpack.c.l.b16 %v6075
      %v6108 = vpack.c.b16 %v6093, %v6092
      %v6109 = vpack.c.b16 %v6095, %v6094
      %v6110 = vpack.c.b16 %v6097, %v6096
      %v6111 = vpack.c.b16 %v6099, %v6098
      %v6112 = vpack.c.b16 %v6101, %v6100
      %v6113 = vpack.c.b16 %v6103, %v6102
      %v6114 = vpack.c.b16 %v6105, %v6104
      %v6115 = vpack.c.b16 %v6107, %v6106
      %6124 = vmatprep.subr.bf16.mxu0 0
      %6125 = vmatpush1.bf16.msra.mxu0 %v6115
      %6126 = vmatprep.subr.bf16.mxu0 0
      %6127 = vmatpush1.bf16.msra.mxu0 %v6114
      %6128 = vmatprep.subr.bf16.mxu0 0
      %6129 = vmatpush1.bf16.msra.mxu0 %v6113
      %6130 = vmatprep.subr.bf16.mxu0 0
      %6131 = vmatpush1.bf16.msra.mxu0 %v6112
      %6132 = vmatprep.subr.bf16.mxu0 0
      %6133 = vmatpush1.bf16.msra.mxu0 %v6111
      %6134 = vmatprep.subr.bf16.mxu0 0
      %6135 = vmatpush1.bf16.msra.mxu0 %v6110
      %6136 = vmatprep.subr.bf16.mxu0 0
      %6137 = vmatpush1.bf16.msra.mxu0 %v6109
      %6138 = vmatprep.subr.bf16.mxu0 0
      %6139 = vmatpush1.bf16.msra.mxu0 %v6108
      %6140 = vmatprep.subr.bf16.mxu0 0
      %6141 = vmatpush2.bf16.msra.mxu0 0
      %6142 = vmatprep.subr.bf16.mxu0 0
      %6143 = vmatpush2.bf16.msra.mxu0 0
      %6144 = vmatprep.subr.bf16.mxu0 0
      %6145 = vmatpush2.bf16.msra.mxu0 0
      %6146 = vmatprep.subr.bf16.mxu0 0
      %6147 = vmatpush2.bf16.msra.mxu0 0
      %6148 = vmatprep.subr.bf16.mxu0 0
      %6149 = vmatpush2.bf16.msra.mxu0 0
      %6150 = vmatprep.subr.bf16.mxu0 0
      %6151 = vmatpush2.bf16.msra.mxu0 0
      %6152 = vmatprep.subr.bf16.mxu0 0
      %6153 = vmatpush2.bf16.msra.mxu0 0
      %6154 = vmatprep.subr.bf16.mxu0 0
      %6155 = vmatpush2.bf16.msra.mxu0 0
      %6156 = vmatprep.mubr.bf16.mxu0 0
      %6157 = vmatmul.mubr.bf16.gmra.mxu0 %v5973
      %v6158 = vpop.f32.mrf.mxu0
      %v6159 = vadd.f32 0.0, %v6158
      %v6160 = vpop.f32.mrf.mxu0
      %v6161 = vpop.f32.mrf.mxu0
      %v6162 = vadd.f32 0.0, %v6161
      %v6163 = vpop.f32.mrf.mxu0
      %6164 = vmatprep.mubr.bf16.mxu0 0
      %6165 = vmatmul.mubr.bf16.gmra.mxu0 %v5974
      %v6166 = vpop.f32.mrf.mxu0
      %v6167 = vadd.f32 0.0, %v6166
      %v6168 = vpop.f32.mrf.mxu0
      %v6169 = vpop.f32.mrf.mxu0
      %v6170 = vadd.f32 0.0, %v6169
      %v6171 = vpop.f32.mrf.mxu0
      %6172 = vdwg.mxu0
      %v6189 = vunpack.c.l.b16 %v6041
      %v6190 = vunpack.c.l.b16 %v6042
      %v6191 = vunpack.c.l.b16 %v6043
      %v6192 = vunpack.c.l.b16 %v6044
      %v6193 = vunpack.c.l.b16 %v6045
      %v6194 = vunpack.c.l.b16 %v6046
      %v6195 = vunpack.c.l.b16 %v6047
      %v6196 = vunpack.c.l.b16 %v6048
      %v6197 = vunpack.c.l.b16 %v6049
      %v6198 = vunpack.c.l.b16 %v6050
      %v6199 = vunpack.c.l.b16 %v6051
      %v6200 = vunpack.c.l.b16 %v6052
      %v6201 = vunpack.c.l.b16 %v6053
      %v6202 = vunpack.c.l.b16 %v6054
      %v6203 = vunpack.c.l.b16 %v6055
      %v6204 = vunpack.c.l.b16 %v6056
      %v6205 = vpack.c.b16 %v6190, %v6189
      %v6206 = vpack.c.b16 %v6192, %v6191
      %v6207 = vpack.c.b16 %v6194, %v6193
      %v6208 = vpack.c.b16 %v6196, %v6195
      %v6209 = vpack.c.b16 %v6198, %v6197
      %v6210 = vpack.c.b16 %v6200, %v6199
      %v6211 = vpack.c.b16 %v6202, %v6201
      %v6212 = vpack.c.b16 %v6204, %v6203
      %6221 = vmatprep.subr.bf16.mxu0 0
      %6222 = vmatpush1.bf16.msra.mxu0 %v6212
      %6223 = vmatprep.subr.bf16.mxu0 0
      %6224 = vmatpush1.bf16.msra.mxu0 %v6211
      %6225 = vmatprep.subr.bf16.mxu0 0
      %6226 = vmatpush1.bf16.msra.mxu0 %v6210
      %6227 = vmatprep.subr.bf16.mxu0 0
      %6228 = vmatpush1.bf16.msra.mxu0 %v6209
      %6229 = vmatprep.subr.bf16.mxu0 0
      %6230 = vmatpush1.bf16.msra.mxu0 %v6208
      %6231 = vmatprep.subr.bf16.mxu0 0
      %6232 = vmatpush1.bf16.msra.mxu0 %v6207
      %6233 = vmatprep.subr.bf16.mxu0 0
      %6234 = vmatpush1.bf16.msra.mxu0 %v6206
      %6235 = vmatprep.subr.bf16.mxu0 0
      %6236 = vmatpush1.bf16.msra.mxu0 %v6205
      %6237 = vmatprep.subr.bf16.mxu0 0
      %6238 = vmatpush2.bf16.msra.mxu0 0
      %6239 = vmatprep.subr.bf16.mxu0 0
      %6240 = vmatpush2.bf16.msra.mxu0 0
      %6241 = vmatprep.subr.bf16.mxu0 0
      %6242 = vmatpush2.bf16.msra.mxu0 0
      %6243 = vmatprep.subr.bf16.mxu0 0
      %6244 = vmatpush2.bf16.msra.mxu0 0
      %6245 = vmatprep.subr.bf16.mxu0 0
      %6246 = vmatpush2.bf16.msra.mxu0 0
      %6247 = vmatprep.subr.bf16.mxu0 0
      %6248 = vmatpush2.bf16.msra.mxu0 0
      %6249 = vmatprep.subr.bf16.mxu0 0
      %6250 = vmatpush2.bf16.msra.mxu0 0
      %6251 = vmatprep.subr.bf16.mxu0 0
      %6252 = vmatpush2.bf16.msra.mxu0 0
      %6253 = vmatprep.mubr.bf16.mxu0 0
      %6254 = vmatmul.mubr.bf16.gmra.mxu0 %v6057
      %v6255 = vpop.f32.mrf.mxu0
      %v6256 = vadd.f32 %v6159, %v6255
      %v6257 = vpop.f32.mrf.mxu0
      %v6258 = vpop.f32.mrf.mxu0
      %v6259 = vadd.f32 %v6162, %v6258
      %v6260 = vpop.f32.mrf.mxu0
      %6261 = vmatprep.mubr.bf16.mxu0 0
      %6262 = vmatmul.mubr.bf16.gmra.mxu0 %v6058
      %v6263 = vpop.f32.mrf.mxu0
      %v6264 = vadd.f32 %v6167, %v6263
      %v6265 = vpop.f32.mrf.mxu0
      %v6266 = vpop.f32.mrf.mxu0
      %v6267 = vadd.f32 %v6170, %v6266
      %v6268 = vpop.f32.mrf.mxu0
      %6269 = vdwg.mxu0
      %s6270 = scalar_lea.vmem %s1, 256
      %v6271 = vld [vmem:[%s6270] sm:$0xf]
      %v6272 = vld [vmem:[%s6270 + $0x4] sm:$0xf]
      %v6273 = vld [vmem:[%s6270 + $0x8] sm:$0xf]
      %v6274 = vld [vmem:[%s6270 + $0xc] sm:$0xf]
      %v6279 = vunpack.c.l.b16 %v6271
      %v6280 = vunpack.c.l.b16 %v6272
      %v6281 = vunpack.c.l.b16 %v6273
      %v6282 = vunpack.c.l.b16 %v6274
      %v6283 = vpack.c.b16 %v6280, %v6279
      %v6284 = vpack.c.b16 %v6282, %v6281
      %v6286 = vsel %vm229, %v6283, 0
      %v6289 = vsel %vm229, %v6284, 0
      %6291 = vmatprep.subr.bf16.mxu0 0
      %6292 = vmatpush1.bf16.msra.mxu0 0
      %6293 = vmatprep.subr.bf16.mxu0 0
      %6294 = vmatpush1.bf16.msra.mxu0 0
      %6295 = vmatprep.subr.bf16.mxu0 0
      %6296 = vmatpush1.bf16.msra.mxu0 0
      %6297 = vmatprep.subr.bf16.mxu0 0
      %6298 = vmatpush1.bf16.msra.mxu0 0
      %6299 = vmatprep.subr.bf16.mxu0 0
      %6300 = vmatpush1.bf16.msra.mxu0 0
      %6301 = vmatprep.subr.bf16.mxu0 0
      %6302 = vmatpush1.bf16.msra.mxu0 0
      %6303 = vmatprep.subr.bf16.mxu0 0
      %6304 = vmatpush1.bf16.msra.mxu0 %v5974
      %6305 = vmatprep.subr.bf16.mxu0 0
      %6306 = vmatpush1.bf16.msra.mxu0 %v5973
      %6307 = vmatprep.subr.bf16.mxu0 0
      %6308 = vmatpush2.bf16.msra.mxu0 0
      %6309 = vmatprep.subr.bf16.mxu0 0
      %6310 = vmatpush2.bf16.msra.mxu0 0
      %6311 = vmatprep.subr.bf16.mxu0 0
      %6312 = vmatpush2.bf16.msra.mxu0 0
      %6313 = vmatprep.subr.bf16.mxu0 0
      %6314 = vmatpush2.bf16.msra.mxu0 0
      %6315 = vmatprep.subr.bf16.mxu0 0
      %6316 = vmatpush2.bf16.msra.mxu0 0
      %6317 = vmatprep.subr.bf16.mxu0 0
      %6318 = vmatpush2.bf16.msra.mxu0 0
      %6319 = vmatprep.subr.bf16.mxu0 0
      %6320 = vmatpush2.bf16.msra.mxu0 0
      %6321 = vmatprep.subr.bf16.mxu0 0
      %6322 = vmatpush2.bf16.msra.mxu0 0
      %6323 = vmatprep.mubr.bf16.mxu0 0
      %6324 = vmatmul.mubr.bf16.gmra.mxu0 %v6286
      %v6325 = vpop.f32.mrf.mxu0
      %v6326 = vadd.f32 0.0, %v6325
      %v6327 = vpop.f32.mrf.mxu0
      %v6328 = vpop.f32.mrf.mxu0
      %v6329 = vadd.f32 0.0, %v6328
      %v6330 = vpop.f32.mrf.mxu0
      %6331 = vmatprep.mubr.bf16.mxu0 0
      %6332 = vmatmul.mubr.bf16.gmra.mxu0 %v6289
      %v6333 = vpop.f32.mrf.mxu0
      %v6334 = vadd.f32 0.0, %v6333
      %v6335 = vpop.f32.mrf.mxu0
      %v6336 = vpop.f32.mrf.mxu0
      %v6337 = vadd.f32 0.0, %v6336
      %v6338 = vpop.f32.mrf.mxu0
      %6339 = vdwg.mxu0
      %s6340 = scalar_lea.vmem %s2, 2240
      %v6341 = vld [vmem:[%s6340] sm:$0xf]
      %v6342 = vld [vmem:[%s6340 + $0x4] sm:$0xf]
      %v6343 = vld [vmem:[%s6340 + $0x8] sm:$0xf]
      %v6344 = vld [vmem:[%s6340 + $0xc] sm:$0xf]
      %v6345 = vld [vmem:[%s6340 + $0x10] sm:$0xf]
      %v6346 = vld [vmem:[%s6340 + $0x14] sm:$0xf]
      %v6347 = vld [vmem:[%s6340 + $0x18] sm:$0xf]
      %v6348 = vld [vmem:[%s6340 + $0x1c] sm:$0xf]
      %v6349 = vld [vmem:[%s6340 + $0x20] sm:$0xf]
      %v6350 = vld [vmem:[%s6340 + $0x24] sm:$0xf]
      %v6351 = vld [vmem:[%s6340 + $0x28] sm:$0xf]
      %v6352 = vld [vmem:[%s6340 + $0x2c] sm:$0xf]
      %v6353 = vld [vmem:[%s6340 + $0x30] sm:$0xf]
      %v6354 = vld [vmem:[%s6340 + $0x34] sm:$0xf]
      %v6355 = vld [vmem:[%s6340 + $0x38] sm:$0xf]
      %v6356 = vld [vmem:[%s6340 + $0x3c] sm:$0xf]
      %v6357 = vpack.c.bf16 %v6329, %v6326
      %v6358 = vpack.c.bf16 %v6337, %v6334
      %v6375 = vunpack.c.l.b16 %v6341
      %v6376 = vunpack.c.l.b16 %v6342
      %v6377 = vunpack.c.l.b16 %v6343
      %v6378 = vunpack.c.l.b16 %v6344
      %v6379 = vunpack.c.l.b16 %v6345
      %v6380 = vunpack.c.l.b16 %v6346
      %v6381 = vunpack.c.l.b16 %v6347
      %v6382 = vunpack.c.l.b16 %v6348
      %v6383 = vunpack.c.l.b16 %v6349
      %v6384 = vunpack.c.l.b16 %v6350
      %v6385 = vunpack.c.l.b16 %v6351
      %v6386 = vunpack.c.l.b16 %v6352
      %v6387 = vunpack.c.l.b16 %v6353
      %v6388 = vunpack.c.l.b16 %v6354
      %v6389 = vunpack.c.l.b16 %v6355
      %v6390 = vunpack.c.l.b16 %v6356
      %v6391 = vpack.c.b16 %v6376, %v6375
      %v6392 = vpack.c.b16 %v6378, %v6377
      %v6393 = vpack.c.b16 %v6380, %v6379
      %v6394 = vpack.c.b16 %v6382, %v6381
      %v6395 = vpack.c.b16 %v6384, %v6383
      %v6396 = vpack.c.b16 %v6386, %v6385
      %v6397 = vpack.c.b16 %v6388, %v6387
      %v6398 = vpack.c.b16 %v6390, %v6389
      %6407 = vmatprep.subr.bf16.mxu0 0
      %6408 = vmatpush1.bf16.msra.mxu0 %v6398
      %6409 = vmatprep.subr.bf16.mxu0 0
      %6410 = vmatpush1.bf16.msra.mxu0 %v6397
      %6411 = vmatprep.subr.bf16.mxu0 0
      %6412 = vmatpush1.bf16.msra.mxu0 %v6396
      %6413 = vmatprep.subr.bf16.mxu0 0
      %6414 = vmatpush1.bf16.msra.mxu0 %v6395
      %6415 = vmatprep.subr.bf16.mxu0 0
      %6416 = vmatpush1.bf16.msra.mxu0 %v6394
      %6417 = vmatprep.subr.bf16.mxu0 0
      %6418 = vmatpush1.bf16.msra.mxu0 %v6393
      %6419 = vmatprep.subr.bf16.mxu0 0
      %6420 = vmatpush1.bf16.msra.mxu0 %v6392
      %6421 = vmatprep.subr.bf16.mxu0 0
      %6422 = vmatpush1.bf16.msra.mxu0 %v6391
      %6423 = vmatprep.subr.bf16.mxu0 0
      %6424 = vmatpush2.bf16.msra.mxu0 0
      %6425 = vmatprep.subr.bf16.mxu0 0
      %6426 = vmatpush2.bf16.msra.mxu0 0
      %6427 = vmatprep.subr.bf16.mxu0 0
      %6428 = vmatpush2.bf16.msra.mxu0 0
      %6429 = vmatprep.subr.bf16.mxu0 0
      %6430 = vmatpush2.bf16.msra.mxu0 0
      %6431 = vmatprep.subr.bf16.mxu0 0
      %6432 = vmatpush2.bf16.msra.mxu0 0
      %6433 = vmatprep.subr.bf16.mxu0 0
      %6434 = vmatpush2.bf16.msra.mxu0 0
      %6435 = vmatprep.subr.bf16.mxu0 0
      %6436 = vmatpush2.bf16.msra.mxu0 0
      %6437 = vmatprep.subr.bf16.mxu0 0
      %6438 = vmatpush2.bf16.msra.mxu0 0
      %6439 = vmatprep.mubr.bf16.mxu0 0
      %6440 = vmatmul.mubr.bf16.gmra.mxu0 %v6357
      %v6441 = vpop.f32.mrf.mxu0
      %v6442 = vadd.f32 0.0, %v6441
      %v6443 = vpop.f32.mrf.mxu0
      %v6444 = vpop.f32.mrf.mxu0
      %v6445 = vadd.f32 0.0, %v6444
      %v6446 = vpop.f32.mrf.mxu0
      %6447 = vmatprep.mubr.bf16.mxu0 0
      %6448 = vmatmul.mubr.bf16.gmra.mxu0 %v6358
      %v6449 = vpop.f32.mrf.mxu0
      %v6450 = vadd.f32 0.0, %v6449
      %v6451 = vpop.f32.mrf.mxu0
      %v6452 = vpop.f32.mrf.mxu0
      %v6453 = vadd.f32 0.0, %v6452
      %v6454 = vpop.f32.mrf.mxu0
      %6455 = vdwg.mxu0
      %v6456 = vadd.f32 %v6256, %v6442
      %v6457 = vadd.f32 %v6259, %v6445
      %v6458 = vadd.f32 %v6264, %v6450
      %v6459 = vadd.f32 %v6267, %v6453
      %s6460 = scalar_lea.vmem %s3, 9
      %v6461 = vld [vmem:[%s6460] sm:$0x1]
      %v6463 = vlaneseq
      %v6464 = vshrl.u32 %v6463, 7
      %v6465 = vsub.s32 0, %v6464
      %v6466 = vrot.slane %v6461, %v6465
      %v6468 = vadd.f32 %v6456, %v6466
      %v6469 = vadd.f32 %v6457, %v6466
      %v6470 = vadd.f32 %v6458, %v6466
      %v6471 = vadd.f32 %v6459, %v6466
      %6472 = vmatprep.subr.bf16.mxu0 0
      %6473 = vmatpush1.bf16.msra.mxu0 0
      %6474 = vmatprep.subr.bf16.mxu0 0
      %6475 = vmatpush1.bf16.msra.mxu0 0
      %6476 = vmatprep.subr.bf16.mxu0 0
      %6477 = vmatpush1.bf16.msra.mxu0 0
      %6478 = vmatprep.subr.bf16.mxu0 0
      %6479 = vmatpush1.bf16.msra.mxu0 0
      %6480 = vmatprep.subr.bf16.mxu0 0
      %6481 = vmatpush1.bf16.msra.mxu0 0
      %6482 = vmatprep.subr.bf16.mxu0 0
      %6483 = vmatpush1.bf16.msra.mxu0 0
      %6484 = vmatprep.subr.bf16.mxu0 0
      %6485 = vmatpush1.bf16.msra.mxu0 %v5786
      %6486 = vmatprep.subr.bf16.mxu0 0
      %6487 = vmatpush1.bf16.msra.mxu0 %v5785
      %6488 = vmatprep.subr.bf16.mxu0 0
      %6489 = vmatpush2.bf16.msra.mxu0 0
      %6490 = vmatprep.subr.bf16.mxu0 0
      %6491 = vmatpush2.bf16.msra.mxu0 0
      %6492 = vmatprep.subr.bf16.mxu0 0
      %6493 = vmatpush2.bf16.msra.mxu0 0
      %6494 = vmatprep.subr.bf16.mxu0 0
      %6495 = vmatpush2.bf16.msra.mxu0 0
      %6496 = vmatprep.subr.bf16.mxu0 0
      %6497 = vmatpush2.bf16.msra.mxu0 0
      %6498 = vmatprep.subr.bf16.mxu0 0
      %6499 = vmatpush2.bf16.msra.mxu0 0
      %6500 = vmatprep.subr.bf16.mxu0 0
      %6501 = vmatpush2.bf16.msra.mxu0 0
      %6502 = vmatprep.subr.bf16.mxu0 0
      %6503 = vmatpush2.bf16.msra.mxu0 0
      %6504 = vmatprep.mubr.bf16.mxu0 0
      %6505 = vmatmul.mubr.bf16.gmra.mxu0 %v4200
      %v6506 = vpop.f32.mrf.mxu0
      %v6507 = vadd.f32 0.0, %v6506
      %v6508 = vpop.f32.mrf.mxu0
      %v6509 = vpop.f32.mrf.mxu0
      %v6510 = vadd.f32 0.0, %v6509
      %v6511 = vpop.f32.mrf.mxu0
      %6512 = vmatprep.mubr.bf16.mxu0 0
      %6513 = vmatmul.mubr.bf16.gmra.mxu0 %v4203
      %v6514 = vpop.f32.mrf.mxu0
      %v6515 = vadd.f32 0.0, %v6514
      %v6516 = vpop.f32.mrf.mxu0
      %v6517 = vpop.f32.mrf.mxu0
      %v6518 = vadd.f32 0.0, %v6517
      %v6519 = vpop.f32.mrf.mxu0
      %6520 = vdwg.mxu0
      %s6521 = scalar_lea.vmem %s2, 2304
      %v6522 = vld [vmem:[%s6521] sm:$0xf]
      %v6523 = vld [vmem:[%s6521 + $0x4] sm:$0xf]
      %v6524 = vld [vmem:[%s6521 + $0x8] sm:$0xf]
      %v6525 = vld [vmem:[%s6521 + $0xc] sm:$0xf]
      %v6526 = vld [vmem:[%s6521 + $0x10] sm:$0xf]
      %v6527 = vld [vmem:[%s6521 + $0x14] sm:$0xf]
      %v6528 = vld [vmem:[%s6521 + $0x18] sm:$0xf]
      %v6529 = vld [vmem:[%s6521 + $0x1c] sm:$0xf]
      %v6530 = vld [vmem:[%s6521 + $0x20] sm:$0xf]
      %v6531 = vld [vmem:[%s6521 + $0x24] sm:$0xf]
      %v6532 = vld [vmem:[%s6521 + $0x28] sm:$0xf]
      %v6533 = vld [vmem:[%s6521 + $0x2c] sm:$0xf]
      %v6534 = vld [vmem:[%s6521 + $0x30] sm:$0xf]
      %v6535 = vld [vmem:[%s6521 + $0x34] sm:$0xf]
      %v6536 = vld [vmem:[%s6521 + $0x38] sm:$0xf]
      %v6537 = vld [vmem:[%s6521 + $0x3c] sm:$0xf]
      %v6538 = vpack.c.bf16 %v6510, %v6507
      %v6539 = vpack.c.bf16 %v6518, %v6515
      %s6540 = scalar_lea.vmem %s2, 2368
      %v6541 = vld [vmem:[%s6540] sm:$0xf]
      %v6542 = vld [vmem:[%s6540 + $0x4] sm:$0xf]
      %v6543 = vld [vmem:[%s6540 + $0x8] sm:$0xf]
      %v6544 = vld [vmem:[%s6540 + $0xc] sm:$0xf]
      %v6545 = vld [vmem:[%s6540 + $0x10] sm:$0xf]
      %v6546 = vld [vmem:[%s6540 + $0x14] sm:$0xf]
      %v6547 = vld [vmem:[%s6540 + $0x18] sm:$0xf]
      %v6548 = vld [vmem:[%s6540 + $0x1c] sm:$0xf]
      %v6549 = vld [vmem:[%s6540 + $0x20] sm:$0xf]
      %v6550 = vld [vmem:[%s6540 + $0x24] sm:$0xf]
      %v6551 = vld [vmem:[%s6540 + $0x28] sm:$0xf]
      %v6552 = vld [vmem:[%s6540 + $0x2c] sm:$0xf]
      %v6553 = vld [vmem:[%s6540 + $0x30] sm:$0xf]
      %v6554 = vld [vmem:[%s6540 + $0x34] sm:$0xf]
      %v6555 = vld [vmem:[%s6540 + $0x38] sm:$0xf]
      %v6556 = vld [vmem:[%s6540 + $0x3c] sm:$0xf]
      %v6573 = vunpack.c.l.b16 %v6541
      %v6574 = vunpack.c.l.b16 %v6542
      %v6575 = vunpack.c.l.b16 %v6543
      %v6576 = vunpack.c.l.b16 %v6544
      %v6577 = vunpack.c.l.b16 %v6545
      %v6578 = vunpack.c.l.b16 %v6546
      %v6579 = vunpack.c.l.b16 %v6547
      %v6580 = vunpack.c.l.b16 %v6548
      %v6581 = vunpack.c.l.b16 %v6549
      %v6582 = vunpack.c.l.b16 %v6550
      %v6583 = vunpack.c.l.b16 %v6551
      %v6584 = vunpack.c.l.b16 %v6552
      %v6585 = vunpack.c.l.b16 %v6553
      %v6586 = vunpack.c.l.b16 %v6554
      %v6587 = vunpack.c.l.b16 %v6555
      %v6588 = vunpack.c.l.b16 %v6556
      %v6589 = vpack.c.b16 %v6574, %v6573
      %v6590 = vpack.c.b16 %v6576, %v6575
      %v6591 = vpack.c.b16 %v6578, %v6577
      %v6592 = vpack.c.b16 %v6580, %v6579
      %v6593 = vpack.c.b16 %v6582, %v6581
      %v6594 = vpack.c.b16 %v6584, %v6583
      %v6595 = vpack.c.b16 %v6586, %v6585
      %v6596 = vpack.c.b16 %v6588, %v6587
      %6605 = vmatprep.subr.bf16.mxu0 0
      %6606 = vmatpush1.bf16.msra.mxu0 %v6596
      %6607 = vmatprep.subr.bf16.mxu0 0
      %6608 = vmatpush1.bf16.msra.mxu0 %v6595
      %6609 = vmatprep.subr.bf16.mxu0 0
      %6610 = vmatpush1.bf16.msra.mxu0 %v6594
      %6611 = vmatprep.subr.bf16.mxu0 0
      %6612 = vmatpush1.bf16.msra.mxu0 %v6593
      %6613 = vmatprep.subr.bf16.mxu0 0
      %6614 = vmatpush1.bf16.msra.mxu0 %v6592
      %6615 = vmatprep.subr.bf16.mxu0 0
      %6616 = vmatpush1.bf16.msra.mxu0 %v6591
      %6617 = vmatprep.subr.bf16.mxu0 0
      %6618 = vmatpush1.bf16.msra.mxu0 %v6590
      %6619 = vmatprep.subr.bf16.mxu0 0
      %6620 = vmatpush1.bf16.msra.mxu0 %v6589
      %6621 = vmatprep.subr.bf16.mxu0 0
      %6622 = vmatpush2.bf16.msra.mxu0 0
      %6623 = vmatprep.subr.bf16.mxu0 0
      %6624 = vmatpush2.bf16.msra.mxu0 0
      %6625 = vmatprep.subr.bf16.mxu0 0
      %6626 = vmatpush2.bf16.msra.mxu0 0
      %6627 = vmatprep.subr.bf16.mxu0 0
      %6628 = vmatpush2.bf16.msra.mxu0 0
      %6629 = vmatprep.subr.bf16.mxu0 0
      %6630 = vmatpush2.bf16.msra.mxu0 0
      %6631 = vmatprep.subr.bf16.mxu0 0
      %6632 = vmatpush2.bf16.msra.mxu0 0
      %6633 = vmatprep.subr.bf16.mxu0 0
      %6634 = vmatpush2.bf16.msra.mxu0 0
      %6635 = vmatprep.subr.bf16.mxu0 0
      %6636 = vmatpush2.bf16.msra.mxu0 0
      %6637 = vmatprep.mubr.bf16.mxu0 0
      %6638 = vmatmul.mubr.bf16.gmra.mxu0 %v5785
      %v6639 = vpop.f32.mrf.mxu0
      %v6640 = vadd.f32 0.0, %v6639
      %v6641 = vpop.f32.mrf.mxu0
      %v6642 = vpop.f32.mrf.mxu0
      %v6643 = vadd.f32 0.0, %v6642
      %v6644 = vpop.f32.mrf.mxu0
      %6645 = vmatprep.mubr.bf16.mxu0 0
      %6646 = vmatmul.mubr.bf16.gmra.mxu0 %v5786
      %v6647 = vpop.f32.mrf.mxu0
      %v6648 = vadd.f32 0.0, %v6647
      %v6649 = vpop.f32.mrf.mxu0
      %v6650 = vpop.f32.mrf.mxu0
      %v6651 = vadd.f32 0.0, %v6650
      %v6652 = vpop.f32.mrf.mxu0
      %6653 = vdwg.mxu0
      %v6670 = vunpack.c.l.b16 %v6522
      %v6671 = vunpack.c.l.b16 %v6523
      %v6672 = vunpack.c.l.b16 %v6524
      %v6673 = vunpack.c.l.b16 %v6525
      %v6674 = vunpack.c.l.b16 %v6526
      %v6675 = vunpack.c.l.b16 %v6527
      %v6676 = vunpack.c.l.b16 %v6528
      %v6677 = vunpack.c.l.b16 %v6529
      %v6678 = vunpack.c.l.b16 %v6530
      %v6679 = vunpack.c.l.b16 %v6531
      %v6680 = vunpack.c.l.b16 %v6532
      %v6681 = vunpack.c.l.b16 %v6533
      %v6682 = vunpack.c.l.b16 %v6534
      %v6683 = vunpack.c.l.b16 %v6535
      %v6684 = vunpack.c.l.b16 %v6536
      %v6685 = vunpack.c.l.b16 %v6537
      %v6686 = vpack.c.b16 %v6671, %v6670
      %v6687 = vpack.c.b16 %v6673, %v6672
      %v6688 = vpack.c.b16 %v6675, %v6674
      %v6689 = vpack.c.b16 %v6677, %v6676
      %v6690 = vpack.c.b16 %v6679, %v6678
      %v6691 = vpack.c.b16 %v6681, %v6680
      %v6692 = vpack.c.b16 %v6683, %v6682
      %v6693 = vpack.c.b16 %v6685, %v6684
      %6702 = vmatprep.subr.bf16.mxu0 0
      %6703 = vmatpush1.bf16.msra.mxu0 %v6693
      %6704 = vmatprep.subr.bf16.mxu0 0
      %6705 = vmatpush1.bf16.msra.mxu0 %v6692
      %6706 = vmatprep.subr.bf16.mxu0 0
      %6707 = vmatpush1.bf16.msra.mxu0 %v6691
      %6708 = vmatprep.subr.bf16.mxu0 0
      %6709 = vmatpush1.bf16.msra.mxu0 %v6690
      %6710 = vmatprep.subr.bf16.mxu0 0
      %6711 = vmatpush1.bf16.msra.mxu0 %v6689
      %6712 = vmatprep.subr.bf16.mxu0 0
      %6713 = vmatpush1.bf16.msra.mxu0 %v6688
      %6714 = vmatprep.subr.bf16.mxu0 0
      %6715 = vmatpush1.bf16.msra.mxu0 %v6687
      %6716 = vmatprep.subr.bf16.mxu0 0
      %6717 = vmatpush1.bf16.msra.mxu0 %v6686
      %6718 = vmatprep.subr.bf16.mxu0 0
      %6719 = vmatpush2.bf16.msra.mxu0 0
      %6720 = vmatprep.subr.bf16.mxu0 0
      %6721 = vmatpush2.bf16.msra.mxu0 0
      %6722 = vmatprep.subr.bf16.mxu0 0
      %6723 = vmatpush2.bf16.msra.mxu0 0
      %6724 = vmatprep.subr.bf16.mxu0 0
      %6725 = vmatpush2.bf16.msra.mxu0 0
      %6726 = vmatprep.subr.bf16.mxu0 0
      %6727 = vmatpush2.bf16.msra.mxu0 0
      %6728 = vmatprep.subr.bf16.mxu0 0
      %6729 = vmatpush2.bf16.msra.mxu0 0
      %6730 = vmatprep.subr.bf16.mxu0 0
      %6731 = vmatpush2.bf16.msra.mxu0 0
      %6732 = vmatprep.subr.bf16.mxu0 0
      %6733 = vmatpush2.bf16.msra.mxu0 0
      %6734 = vmatprep.mubr.bf16.mxu0 0
      %6735 = vmatmul.mubr.bf16.gmra.mxu0 %v6538
      %v6736 = vpop.f32.mrf.mxu0
      %v6737 = vadd.f32 %v6640, %v6736
      %v6738 = vpop.f32.mrf.mxu0
      %v6739 = vpop.f32.mrf.mxu0
      %v6740 = vadd.f32 %v6643, %v6739
      %v6741 = vpop.f32.mrf.mxu0
      %6742 = vmatprep.mubr.bf16.mxu0 0
      %6743 = vmatmul.mubr.bf16.gmra.mxu0 %v6539
      %v6744 = vpop.f32.mrf.mxu0
      %v6745 = vadd.f32 %v6648, %v6744
      %v6746 = vpop.f32.mrf.mxu0
      %v6747 = vpop.f32.mrf.mxu0
      %v6748 = vadd.f32 %v6651, %v6747
      %v6749 = vpop.f32.mrf.mxu0
      %6750 = vdwg.mxu0
      %6751 = vmatprep.subr.bf16.mxu0 0
      %6752 = vmatpush1.bf16.msra.mxu0 0
      %6753 = vmatprep.subr.bf16.mxu0 0
      %6754 = vmatpush1.bf16.msra.mxu0 0
      %6755 = vmatprep.subr.bf16.mxu0 0
      %6756 = vmatpush1.bf16.msra.mxu0 0
      %6757 = vmatprep.subr.bf16.mxu0 0
      %6758 = vmatpush1.bf16.msra.mxu0 0
      %6759 = vmatprep.subr.bf16.mxu0 0
      %6760 = vmatpush1.bf16.msra.mxu0 0
      %6761 = vmatprep.subr.bf16.mxu0 0
      %6762 = vmatpush1.bf16.msra.mxu0 0
      %6763 = vmatprep.subr.bf16.mxu0 0
      %6764 = vmatpush1.bf16.msra.mxu0 %v5786
      %6765 = vmatprep.subr.bf16.mxu0 0
      %6766 = vmatpush1.bf16.msra.mxu0 %v5785
      %6767 = vmatprep.subr.bf16.mxu0 0
      %6768 = vmatpush2.bf16.msra.mxu0 0
      %6769 = vmatprep.subr.bf16.mxu0 0
      %6770 = vmatpush2.bf16.msra.mxu0 0
      %6771 = vmatprep.subr.bf16.mxu0 0
      %6772 = vmatpush2.bf16.msra.mxu0 0
      %6773 = vmatprep.subr.bf16.mxu0 0
      %6774 = vmatpush2.bf16.msra.mxu0 0
      %6775 = vmatprep.subr.bf16.mxu0 0
      %6776 = vmatpush2.bf16.msra.mxu0 0
      %6777 = vmatprep.subr.bf16.mxu0 0
      %6778 = vmatpush2.bf16.msra.mxu0 0
      %6779 = vmatprep.subr.bf16.mxu0 0
      %6780 = vmatpush2.bf16.msra.mxu0 0
      %6781 = vmatprep.subr.bf16.mxu0 0
      %6782 = vmatpush2.bf16.msra.mxu0 0
      %6783 = vmatprep.mubr.bf16.mxu0 0
      %6784 = vmatmul.mubr.bf16.gmra.mxu0 %v4500
      %v6785 = vpop.f32.mrf.mxu0
      %v6786 = vadd.f32 0.0, %v6785
      %v6787 = vpop.f32.mrf.mxu0
      %v6788 = vpop.f32.mrf.mxu0
      %v6789 = vadd.f32 0.0, %v6788
      %v6790 = vpop.f32.mrf.mxu0
      %6791 = vmatprep.mubr.bf16.mxu0 0
      %6792 = vmatmul.mubr.bf16.gmra.mxu0 %v4503
      %v6793 = vpop.f32.mrf.mxu0
      %v6794 = vadd.f32 0.0, %v6793
      %v6795 = vpop.f32.mrf.mxu0
      %v6796 = vpop.f32.mrf.mxu0
      %v6797 = vadd.f32 0.0, %v6796
      %v6798 = vpop.f32.mrf.mxu0
      %6799 = vdwg.mxu0
      %s6800 = scalar_lea.vmem %s2, 2432
      %v6801 = vld [vmem:[%s6800] sm:$0xf]
      %v6802 = vld [vmem:[%s6800 + $0x4] sm:$0xf]
      %v6803 = vld [vmem:[%s6800 + $0x8] sm:$0xf]
      %v6804 = vld [vmem:[%s6800 + $0xc] sm:$0xf]
      %v6805 = vld [vmem:[%s6800 + $0x10] sm:$0xf]
      %v6806 = vld [vmem:[%s6800 + $0x14] sm:$0xf]
      %v6807 = vld [vmem:[%s6800 + $0x18] sm:$0xf]
      %v6808 = vld [vmem:[%s6800 + $0x1c] sm:$0xf]
      %v6809 = vld [vmem:[%s6800 + $0x20] sm:$0xf]
      %v6810 = vld [vmem:[%s6800 + $0x24] sm:$0xf]
      %v6811 = vld [vmem:[%s6800 + $0x28] sm:$0xf]
      %v6812 = vld [vmem:[%s6800 + $0x2c] sm:$0xf]
      %v6813 = vld [vmem:[%s6800 + $0x30] sm:$0xf]
      %v6814 = vld [vmem:[%s6800 + $0x34] sm:$0xf]
      %v6815 = vld [vmem:[%s6800 + $0x38] sm:$0xf]
      %v6816 = vld [vmem:[%s6800 + $0x3c] sm:$0xf]
      %v6817 = vpack.c.bf16 %v6789, %v6786
      %v6818 = vpack.c.bf16 %v6797, %v6794
      %v6835 = vunpack.c.l.b16 %v6801
      %v6836 = vunpack.c.l.b16 %v6802
      %v6837 = vunpack.c.l.b16 %v6803
      %v6838 = vunpack.c.l.b16 %v6804
      %v6839 = vunpack.c.l.b16 %v6805
      %v6840 = vunpack.c.l.b16 %v6806
      %v6841 = vunpack.c.l.b16 %v6807
      %v6842 = vunpack.c.l.b16 %v6808
      %v6843 = vunpack.c.l.b16 %v6809
      %v6844 = vunpack.c.l.b16 %v6810
      %v6845 = vunpack.c.l.b16 %v6811
      %v6846 = vunpack.c.l.b16 %v6812
      %v6847 = vunpack.c.l.b16 %v6813
      %v6848 = vunpack.c.l.b16 %v6814
      %v6849 = vunpack.c.l.b16 %v6815
      %v6850 = vunpack.c.l.b16 %v6816
      %v6851 = vpack.c.b16 %v6836, %v6835
      %v6852 = vpack.c.b16 %v6838, %v6837
      %v6853 = vpack.c.b16 %v6840, %v6839
      %v6854 = vpack.c.b16 %v6842, %v6841
      %v6855 = vpack.c.b16 %v6844, %v6843
      %v6856 = vpack.c.b16 %v6846, %v6845
      %v6857 = vpack.c.b16 %v6848, %v6847
      %v6858 = vpack.c.b16 %v6850, %v6849
      %6867 = vmatprep.subr.bf16.mxu0 0
      %6868 = vmatpush1.bf16.msra.mxu0 %v6858
      %6869 = vmatprep.subr.bf16.mxu0 0
      %6870 = vmatpush1.bf16.msra.mxu0 %v6857
      %6871 = vmatprep.subr.bf16.mxu0 0
      %6872 = vmatpush1.bf16.msra.mxu0 %v6856
      %6873 = vmatprep.subr.bf16.mxu0 0
      %6874 = vmatpush1.bf16.msra.mxu0 %v6855
      %6875 = vmatprep.subr.bf16.mxu0 0
      %6876 = vmatpush1.bf16.msra.mxu0 %v6854
      %6877 = vmatprep.subr.bf16.mxu0 0
      %6878 = vmatpush1.bf16.msra.mxu0 %v6853
      %6879 = vmatprep.subr.bf16.mxu0 0
      %6880 = vmatpush1.bf16.msra.mxu0 %v6852
      %6881 = vmatprep.subr.bf16.mxu0 0
      %6882 = vmatpush1.bf16.msra.mxu0 %v6851
      %6883 = vmatprep.subr.bf16.mxu0 0
      %6884 = vmatpush2.bf16.msra.mxu0 0
      %6885 = vmatprep.subr.bf16.mxu0 0
      %6886 = vmatpush2.bf16.msra.mxu0 0
      %6887 = vmatprep.subr.bf16.mxu0 0
      %6888 = vmatpush2.bf16.msra.mxu0 0
      %6889 = vmatprep.subr.bf16.mxu0 0
      %6890 = vmatpush2.bf16.msra.mxu0 0
      %6891 = vmatprep.subr.bf16.mxu0 0
      %6892 = vmatpush2.bf16.msra.mxu0 0
      %6893 = vmatprep.subr.bf16.mxu0 0
      %6894 = vmatpush2.bf16.msra.mxu0 0
      %6895 = vmatprep.subr.bf16.mxu0 0
      %6896 = vmatpush2.bf16.msra.mxu0 0
      %6897 = vmatprep.subr.bf16.mxu0 0
      %6898 = vmatpush2.bf16.msra.mxu0 0
      %6899 = vmatprep.mubr.bf16.mxu0 0
      %6900 = vmatmul.mubr.bf16.gmra.mxu0 %v6817
      %v6901 = vpop.f32.mrf.mxu0
      %v6902 = vadd.f32 0.0, %v6901
      %v6903 = vpop.f32.mrf.mxu0
      %v6904 = vpop.f32.mrf.mxu0
      %v6905 = vadd.f32 0.0, %v6904
      %v6906 = vpop.f32.mrf.mxu0
      %6907 = vmatprep.mubr.bf16.mxu0 0
      %6908 = vmatmul.mubr.bf16.gmra.mxu0 %v6818
      %v6909 = vpop.f32.mrf.mxu0
      %v6910 = vadd.f32 0.0, %v6909
      %v6911 = vpop.f32.mrf.mxu0
      %v6912 = vpop.f32.mrf.mxu0
      %v6913 = vadd.f32 0.0, %v6912
      %v6914 = vpop.f32.mrf.mxu0
      %6915 = vdwg.mxu0
      %v6916 = vadd.f32 %v6737, %v6902
      %v6917 = vadd.f32 %v6740, %v6905
      %v6918 = vadd.f32 %v6745, %v6910
      %v6919 = vadd.f32 %v6748, %v6913
      %s6920 = scalar_lea.vmem %s3, 10
      %v6921 = vld [vmem:[%s6920] sm:$0x1]
      %v6923 = vlaneseq
      %v6924 = vshrl.u32 %v6923, 7
      %v6925 = vsub.s32 0, %v6924
      %v6926 = vrot.slane %v6921, %v6925
      %v6928 = vadd.f32 %v6916, %v6926
      %v6929 = vadd.f32 %v6917, %v6926
      %v6930 = vadd.f32 %v6918, %v6926
      %v6931 = vadd.f32 %v6919, %v6926
      %vm6932 = vcmp.ge.f32.partialorder %v6928, 0.0
      %vm6933 = vcmp.ge.f32.partialorder %v6929, 0.0
      %vm6934 = vcmp.ge.f32.partialorder %v6930, 0.0
      %vm6935 = vcmp.ge.f32.partialorder %v6931, 0.0
      %v6936 = vmul.f32 %v6928, 0.22916667
      %v6937 = vmul.f32 %v6929, 0.22916667
      %v6938 = vmul.f32 %v6930, 0.22916667
      %v6939 = vmul.f32 %v6931, 0.22916667
      %v6940 = vsel %vm6932, %v6928, %v6936
      %v6941 = vsel %vm6933, %v6929, %v6937
      %v6942 = vsel %vm6934, %v6930, %v6938
      %v6943 = vsel %vm6935, %v6931, %v6939
      %v6944 = vpack.c.bf16 %v6941, %v6940
      %v6945 = vpack.c.bf16 %v6943, %v6942
      %6946 = vmatprep.subr.bf16.mxu0 0
      %6947 = vmatpush1.bf16.msra.mxu0 0
      %6948 = vmatprep.subr.bf16.mxu0 0
      %6949 = vmatpush1.bf16.msra.mxu0 0
      %6950 = vmatprep.subr.bf16.mxu0 0
      %6951 = vmatpush1.bf16.msra.mxu0 0
      %6952 = vmatprep.subr.bf16.mxu0 0
      %6953 = vmatpush1.bf16.msra.mxu0 0
      %6954 = vmatprep.subr.bf16.mxu0 0
      %6955 = vmatpush1.bf16.msra.mxu0 0
      %6956 = vmatprep.subr.bf16.mxu0 0
      %6957 = vmatpush1.bf16.msra.mxu0 0
      %6958 = vmatprep.subr.bf16.mxu0 0
      %6959 = vmatpush1.bf16.msra.mxu0 %v6945
      %6960 = vmatprep.subr.bf16.mxu0 0
      %6961 = vmatpush1.bf16.msra.mxu0 %v6944
      %6962 = vmatprep.subr.bf16.mxu0 0
      %6963 = vmatpush2.bf16.msra.mxu0 0
      %6964 = vmatprep.subr.bf16.mxu0 0
      %6965 = vmatpush2.bf16.msra.mxu0 0
      %6966 = vmatprep.subr.bf16.mxu0 0
      %6967 = vmatpush2.bf16.msra.mxu0 0
      %6968 = vmatprep.subr.bf16.mxu0 0
      %6969 = vmatpush2.bf16.msra.mxu0 0
      %6970 = vmatprep.subr.bf16.mxu0 0
      %6971 = vmatpush2.bf16.msra.mxu0 0
      %6972 = vmatprep.subr.bf16.mxu0 0
      %6973 = vmatpush2.bf16.msra.mxu0 0
      %6974 = vmatprep.subr.bf16.mxu0 0
      %6975 = vmatpush2.bf16.msra.mxu0 0
      %6976 = vmatprep.subr.bf16.mxu0 0
      %6977 = vmatpush2.bf16.msra.mxu0 0
      %6978 = vmatprep.mubr.bf16.mxu0 0
      %6979 = vmatmul.mubr.bf16.gmra.mxu0 %v5798
      %v6980 = vpop.f32.mrf.mxu0
      %v6981 = vadd.f32 0.0, %v6980
      %v6982 = vpop.f32.mrf.mxu0
      %v6983 = vpop.f32.mrf.mxu0
      %v6984 = vadd.f32 0.0, %v6983
      %v6985 = vpop.f32.mrf.mxu0
      %6986 = vmatprep.mubr.bf16.mxu0 0
      %6987 = vmatmul.mubr.bf16.gmra.mxu0 %v5801
      %v6988 = vpop.f32.mrf.mxu0
      %v6989 = vadd.f32 0.0, %v6988
      %v6990 = vpop.f32.mrf.mxu0
      %v6991 = vpop.f32.mrf.mxu0
      %v6992 = vadd.f32 0.0, %v6991
      %v6993 = vpop.f32.mrf.mxu0
      %6994 = vdwg.mxu0
      %s6995 = scalar_lea.vmem %s2, 2496
      %v6996 = vld [vmem:[%s6995] sm:$0xf]
      %v6997 = vld [vmem:[%s6995 + $0x4] sm:$0xf]
      %v6998 = vld [vmem:[%s6995 + $0x8] sm:$0xf]
      %v6999 = vld [vmem:[%s6995 + $0xc] sm:$0xf]
      %v7000 = vld [vmem:[%s6995 + $0x10] sm:$0xf]
      %v7001 = vld [vmem:[%s6995 + $0x14] sm:$0xf]
      %v7002 = vld [vmem:[%s6995 + $0x18] sm:$0xf]
      %v7003 = vld [vmem:[%s6995 + $0x1c] sm:$0xf]
      %v7004 = vld [vmem:[%s6995 + $0x20] sm:$0xf]
      %v7005 = vld [vmem:[%s6995 + $0x24] sm:$0xf]
      %v7006 = vld [vmem:[%s6995 + $0x28] sm:$0xf]
      %v7007 = vld [vmem:[%s6995 + $0x2c] sm:$0xf]
      %v7008 = vld [vmem:[%s6995 + $0x30] sm:$0xf]
      %v7009 = vld [vmem:[%s6995 + $0x34] sm:$0xf]
      %v7010 = vld [vmem:[%s6995 + $0x38] sm:$0xf]
      %v7011 = vld [vmem:[%s6995 + $0x3c] sm:$0xf]
      %v7012 = vpack.c.bf16 %v6984, %v6981
      %v7013 = vpack.c.bf16 %v6992, %v6989
      %v7030 = vunpack.c.l.b16 %v6996
      %v7031 = vunpack.c.l.b16 %v6997
      %v7032 = vunpack.c.l.b16 %v6998
      %v7033 = vunpack.c.l.b16 %v6999
      %v7034 = vunpack.c.l.b16 %v7000
      %v7035 = vunpack.c.l.b16 %v7001
      %v7036 = vunpack.c.l.b16 %v7002
      %v7037 = vunpack.c.l.b16 %v7003
      %v7038 = vunpack.c.l.b16 %v7004
      %v7039 = vunpack.c.l.b16 %v7005
      %v7040 = vunpack.c.l.b16 %v7006
      %v7041 = vunpack.c.l.b16 %v7007
      %v7042 = vunpack.c.l.b16 %v7008
      %v7043 = vunpack.c.l.b16 %v7009
      %v7044 = vunpack.c.l.b16 %v7010
      %v7045 = vunpack.c.l.b16 %v7011
      %v7046 = vpack.c.b16 %v7031, %v7030
      %v7047 = vpack.c.b16 %v7033, %v7032
      %v7048 = vpack.c.b16 %v7035, %v7034
      %v7049 = vpack.c.b16 %v7037, %v7036
      %v7050 = vpack.c.b16 %v7039, %v7038
      %v7051 = vpack.c.b16 %v7041, %v7040
      %v7052 = vpack.c.b16 %v7043, %v7042
      %v7053 = vpack.c.b16 %v7045, %v7044
      %7062 = vmatprep.subr.bf16.mxu0 0
      %7063 = vmatpush1.bf16.msra.mxu0 %v7053
      %7064 = vmatprep.subr.bf16.mxu0 0
      %7065 = vmatpush1.bf16.msra.mxu0 %v7052
      %7066 = vmatprep.subr.bf16.mxu0 0
      %7067 = vmatpush1.bf16.msra.mxu0 %v7051
      %7068 = vmatprep.subr.bf16.mxu0 0
      %7069 = vmatpush1.bf16.msra.mxu0 %v7050
      %7070 = vmatprep.subr.bf16.mxu0 0
      %7071 = vmatpush1.bf16.msra.mxu0 %v7049
      %7072 = vmatprep.subr.bf16.mxu0 0
      %7073 = vmatpush1.bf16.msra.mxu0 %v7048
      %7074 = vmatprep.subr.bf16.mxu0 0
      %7075 = vmatpush1.bf16.msra.mxu0 %v7047
      %7076 = vmatprep.subr.bf16.mxu0 0
      %7077 = vmatpush1.bf16.msra.mxu0 %v7046
      %7078 = vmatprep.subr.bf16.mxu0 0
      %7079 = vmatpush2.bf16.msra.mxu0 0
      %7080 = vmatprep.subr.bf16.mxu0 0
      %7081 = vmatpush2.bf16.msra.mxu0 0
      %7082 = vmatprep.subr.bf16.mxu0 0
      %7083 = vmatpush2.bf16.msra.mxu0 0
      %7084 = vmatprep.subr.bf16.mxu0 0
      %7085 = vmatpush2.bf16.msra.mxu0 0
      %7086 = vmatprep.subr.bf16.mxu0 0
      %7087 = vmatpush2.bf16.msra.mxu0 0
      %7088 = vmatprep.subr.bf16.mxu0 0
      %7089 = vmatpush2.bf16.msra.mxu0 0
      %7090 = vmatprep.subr.bf16.mxu0 0
      %7091 = vmatpush2.bf16.msra.mxu0 0
      %7092 = vmatprep.subr.bf16.mxu0 0
      %7093 = vmatpush2.bf16.msra.mxu0 0
      %7094 = vmatprep.mubr.bf16.mxu0 0
      %7095 = vmatmul.mubr.bf16.gmra.mxu0 %v7012
      %v7096 = vpop.f32.mrf.mxu0
      %v7097 = vadd.f32 0.0, %v7096
      %v7098 = vpop.f32.mrf.mxu0
      %v7099 = vpop.f32.mrf.mxu0
      %v7100 = vadd.f32 0.0, %v7099
      %v7101 = vpop.f32.mrf.mxu0
      %7102 = vmatprep.mubr.bf16.mxu0 0
      %7103 = vmatmul.mubr.bf16.gmra.mxu0 %v7013
      %v7104 = vpop.f32.mrf.mxu0
      %v7105 = vadd.f32 0.0, %v7104
      %v7106 = vpop.f32.mrf.mxu0
      %v7107 = vpop.f32.mrf.mxu0
      %v7108 = vadd.f32 0.0, %v7107
      %v7109 = vpop.f32.mrf.mxu0
      %7110 = vdwg.mxu0
      %v7111 = vpack.c.bf16 %v7100, %v7097
      %v7112 = vpack.c.bf16 %v7108, %v7105
      %7113 = vmatprep.subr.bf16.mxu0 0
      %7114 = vmatpush1.bf16.msra.mxu0 0
      %7115 = vmatprep.subr.bf16.mxu0 0
      %7116 = vmatpush1.bf16.msra.mxu0 0
      %7117 = vmatprep.subr.bf16.mxu0 0
      %7118 = vmatpush1.bf16.msra.mxu0 0
      %7119 = vmatprep.subr.bf16.mxu0 0
      %7120 = vmatpush1.bf16.msra.mxu0 0
      %7121 = vmatprep.subr.bf16.mxu0 0
      %7122 = vmatpush1.bf16.msra.mxu0 0
      %7123 = vmatprep.subr.bf16.mxu0 0
      %7124 = vmatpush1.bf16.msra.mxu0 0
      %7125 = vmatprep.subr.bf16.mxu0 0
      %7126 = vmatpush1.bf16.msra.mxu0 %v7112
      %7127 = vmatprep.subr.bf16.mxu0 0
      %7128 = vmatpush1.bf16.msra.mxu0 %v7111
      %7129 = vmatprep.subr.bf16.mxu0 0
      %7130 = vmatpush2.bf16.msra.mxu0 0
      %7131 = vmatprep.subr.bf16.mxu0 0
      %7132 = vmatpush2.bf16.msra.mxu0 0
      %7133 = vmatprep.subr.bf16.mxu0 0
      %7134 = vmatpush2.bf16.msra.mxu0 0
      %7135 = vmatprep.subr.bf16.mxu0 0
      %7136 = vmatpush2.bf16.msra.mxu0 0
      %7137 = vmatprep.subr.bf16.mxu0 0
      %7138 = vmatpush2.bf16.msra.mxu0 0
      %7139 = vmatprep.subr.bf16.mxu0 0
      %7140 = vmatpush2.bf16.msra.mxu0 0
      %7141 = vmatprep.subr.bf16.mxu0 0
      %7142 = vmatpush2.bf16.msra.mxu0 0
      %7143 = vmatprep.subr.bf16.mxu0 0
      %7144 = vmatpush2.bf16.msra.mxu0 0
      %7145 = vmatprep.mubr.bf16.mxu0 0
      %7146 = vmatmul.mubr.bf16.gmra.mxu0 %v5986
      %v7147 = vpop.f32.mrf.mxu0
      %v7148 = vadd.f32 0.0, %v7147
      %v7149 = vpop.f32.mrf.mxu0
      %v7150 = vpop.f32.mrf.mxu0
      %v7151 = vadd.f32 0.0, %v7150
      %v7152 = vpop.f32.mrf.mxu0
      %7153 = vmatprep.mubr.bf16.mxu0 0
      %7154 = vmatmul.mubr.bf16.gmra.mxu0 %v5989
      %v7155 = vpop.f32.mrf.mxu0
      %v7156 = vadd.f32 0.0, %v7155
      %v7157 = vpop.f32.mrf.mxu0
      %v7158 = vpop.f32.mrf.mxu0
      %v7159 = vadd.f32 0.0, %v7158
      %v7160 = vpop.f32.mrf.mxu0
      %7161 = vdwg.mxu0
      %s7162 = scalar_lea.vmem %s2, 2560
      %v7163 = vld [vmem:[%s7162] sm:$0xf]
      %v7164 = vld [vmem:[%s7162 + $0x4] sm:$0xf]
      %v7165 = vld [vmem:[%s7162 + $0x8] sm:$0xf]
      %v7166 = vld [vmem:[%s7162 + $0xc] sm:$0xf]
      %v7167 = vld [vmem:[%s7162 + $0x10] sm:$0xf]
      %v7168 = vld [vmem:[%s7162 + $0x14] sm:$0xf]
      %v7169 = vld [vmem:[%s7162 + $0x18] sm:$0xf]
      %v7170 = vld [vmem:[%s7162 + $0x1c] sm:$0xf]
      %v7171 = vld [vmem:[%s7162 + $0x20] sm:$0xf]
      %v7172 = vld [vmem:[%s7162 + $0x24] sm:$0xf]
      %v7173 = vld [vmem:[%s7162 + $0x28] sm:$0xf]
      %v7174 = vld [vmem:[%s7162 + $0x2c] sm:$0xf]
      %v7175 = vld [vmem:[%s7162 + $0x30] sm:$0xf]
      %v7176 = vld [vmem:[%s7162 + $0x34] sm:$0xf]
      %v7177 = vld [vmem:[%s7162 + $0x38] sm:$0xf]
      %v7178 = vld [vmem:[%s7162 + $0x3c] sm:$0xf]
      %v7179 = vpack.c.bf16 %v7151, %v7148
      %v7180 = vpack.c.bf16 %v7159, %v7156
      %s7181 = scalar_lea.vmem %s2, 2624
      %v7182 = vld [vmem:[%s7181] sm:$0xf]
      %v7183 = vld [vmem:[%s7181 + $0x4] sm:$0xf]
      %v7184 = vld [vmem:[%s7181 + $0x8] sm:$0xf]
      %v7185 = vld [vmem:[%s7181 + $0xc] sm:$0xf]
      %v7186 = vld [vmem:[%s7181 + $0x10] sm:$0xf]
      %v7187 = vld [vmem:[%s7181 + $0x14] sm:$0xf]
      %v7188 = vld [vmem:[%s7181 + $0x18] sm:$0xf]
      %v7189 = vld [vmem:[%s7181 + $0x1c] sm:$0xf]
      %v7190 = vld [vmem:[%s7181 + $0x20] sm:$0xf]
      %v7191 = vld [vmem:[%s7181 + $0x24] sm:$0xf]
      %v7192 = vld [vmem:[%s7181 + $0x28] sm:$0xf]
      %v7193 = vld [vmem:[%s7181 + $0x2c] sm:$0xf]
      %v7194 = vld [vmem:[%s7181 + $0x30] sm:$0xf]
      %v7195 = vld [vmem:[%s7181 + $0x34] sm:$0xf]
      %v7196 = vld [vmem:[%s7181 + $0x38] sm:$0xf]
      %v7197 = vld [vmem:[%s7181 + $0x3c] sm:$0xf]
      %v7214 = vunpack.c.l.b16 %v7182
      %v7215 = vunpack.c.l.b16 %v7183
      %v7216 = vunpack.c.l.b16 %v7184
      %v7217 = vunpack.c.l.b16 %v7185
      %v7218 = vunpack.c.l.b16 %v7186
      %v7219 = vunpack.c.l.b16 %v7187
      %v7220 = vunpack.c.l.b16 %v7188
      %v7221 = vunpack.c.l.b16 %v7189
      %v7222 = vunpack.c.l.b16 %v7190
      %v7223 = vunpack.c.l.b16 %v7191
      %v7224 = vunpack.c.l.b16 %v7192
      %v7225 = vunpack.c.l.b16 %v7193
      %v7226 = vunpack.c.l.b16 %v7194
      %v7227 = vunpack.c.l.b16 %v7195
      %v7228 = vunpack.c.l.b16 %v7196
      %v7229 = vunpack.c.l.b16 %v7197
      %v7230 = vpack.c.b16 %v7215, %v7214
      %v7231 = vpack.c.b16 %v7217, %v7216
      %v7232 = vpack.c.b16 %v7219, %v7218
      %v7233 = vpack.c.b16 %v7221, %v7220
      %v7234 = vpack.c.b16 %v7223, %v7222
      %v7235 = vpack.c.b16 %v7225, %v7224
      %v7236 = vpack.c.b16 %v7227, %v7226
      %v7237 = vpack.c.b16 %v7229, %v7228
      %7246 = vmatprep.subr.bf16.mxu0 0
      %7247 = vmatpush1.bf16.msra.mxu0 %v7237
      %7248 = vmatprep.subr.bf16.mxu0 0
      %7249 = vmatpush1.bf16.msra.mxu0 %v7236
      %7250 = vmatprep.subr.bf16.mxu0 0
      %7251 = vmatpush1.bf16.msra.mxu0 %v7235
      %7252 = vmatprep.subr.bf16.mxu0 0
      %7253 = vmatpush1.bf16.msra.mxu0 %v7234
      %7254 = vmatprep.subr.bf16.mxu0 0
      %7255 = vmatpush1.bf16.msra.mxu0 %v7233
      %7256 = vmatprep.subr.bf16.mxu0 0
      %7257 = vmatpush1.bf16.msra.mxu0 %v7232
      %7258 = vmatprep.subr.bf16.mxu0 0
      %7259 = vmatpush1.bf16.msra.mxu0 %v7231
      %7260 = vmatprep.subr.bf16.mxu0 0
      %7261 = vmatpush1.bf16.msra.mxu0 %v7230
      %7262 = vmatprep.subr.bf16.mxu0 0
      %7263 = vmatpush2.bf16.msra.mxu0 0
      %7264 = vmatprep.subr.bf16.mxu0 0
      %7265 = vmatpush2.bf16.msra.mxu0 0
      %7266 = vmatprep.subr.bf16.mxu0 0
      %7267 = vmatpush2.bf16.msra.mxu0 0
      %7268 = vmatprep.subr.bf16.mxu0 0
      %7269 = vmatpush2.bf16.msra.mxu0 0
      %7270 = vmatprep.subr.bf16.mxu0 0
      %7271 = vmatpush2.bf16.msra.mxu0 0
      %7272 = vmatprep.subr.bf16.mxu0 0
      %7273 = vmatpush2.bf16.msra.mxu0 0
      %7274 = vmatprep.subr.bf16.mxu0 0
      %7275 = vmatpush2.bf16.msra.mxu0 0
      %7276 = vmatprep.subr.bf16.mxu0 0
      %7277 = vmatpush2.bf16.msra.mxu0 0
      %7278 = vmatprep.mubr.bf16.mxu0 0
      %7279 = vmatmul.mubr.bf16.gmra.mxu0 %v7111
      %v7280 = vpop.f32.mrf.mxu0
      %v7281 = vadd.f32 0.0, %v7280
      %v7282 = vpop.f32.mrf.mxu0
      %v7283 = vpop.f32.mrf.mxu0
      %v7284 = vadd.f32 0.0, %v7283
      %v7285 = vpop.f32.mrf.mxu0
      %7286 = vmatprep.mubr.bf16.mxu0 0
      %7287 = vmatmul.mubr.bf16.gmra.mxu0 %v7112
      %v7288 = vpop.f32.mrf.mxu0
      %v7289 = vadd.f32 0.0, %v7288
      %v7290 = vpop.f32.mrf.mxu0
      %v7291 = vpop.f32.mrf.mxu0
      %v7292 = vadd.f32 0.0, %v7291
      %v7293 = vpop.f32.mrf.mxu0
      %7294 = vdwg.mxu0
      %v7311 = vunpack.c.l.b16 %v7163
      %v7312 = vunpack.c.l.b16 %v7164
      %v7313 = vunpack.c.l.b16 %v7165
      %v7314 = vunpack.c.l.b16 %v7166
      %v7315 = vunpack.c.l.b16 %v7167
      %v7316 = vunpack.c.l.b16 %v7168
      %v7317 = vunpack.c.l.b16 %v7169
      %v7318 = vunpack.c.l.b16 %v7170
      %v7319 = vunpack.c.l.b16 %v7171
      %v7320 = vunpack.c.l.b16 %v7172
      %v7321 = vunpack.c.l.b16 %v7173
      %v7322 = vunpack.c.l.b16 %v7174
      %v7323 = vunpack.c.l.b16 %v7175
      %v7324 = vunpack.c.l.b16 %v7176
      %v7325 = vunpack.c.l.b16 %v7177
      %v7326 = vunpack.c.l.b16 %v7178
      %v7327 = vpack.c.b16 %v7312, %v7311
      %v7328 = vpack.c.b16 %v7314, %v7313
      %v7329 = vpack.c.b16 %v7316, %v7315
      %v7330 = vpack.c.b16 %v7318, %v7317
      %v7331 = vpack.c.b16 %v7320, %v7319
      %v7332 = vpack.c.b16 %v7322, %v7321
      %v7333 = vpack.c.b16 %v7324, %v7323
      %v7334 = vpack.c.b16 %v7326, %v7325
      %7343 = vmatprep.subr.bf16.mxu0 0
      %7344 = vmatpush1.bf16.msra.mxu0 %v7334
      %7345 = vmatprep.subr.bf16.mxu0 0
      %7346 = vmatpush1.bf16.msra.mxu0 %v7333
      %7347 = vmatprep.subr.bf16.mxu0 0
      %7348 = vmatpush1.bf16.msra.mxu0 %v7332
      %7349 = vmatprep.subr.bf16.mxu0 0
      %7350 = vmatpush1.bf16.msra.mxu0 %v7331
      %7351 = vmatprep.subr.bf16.mxu0 0
      %7352 = vmatpush1.bf16.msra.mxu0 %v7330
      %7353 = vmatprep.subr.bf16.mxu0 0
      %7354 = vmatpush1.bf16.msra.mxu0 %v7329
      %7355 = vmatprep.subr.bf16.mxu0 0
      %7356 = vmatpush1.bf16.msra.mxu0 %v7328
      %7357 = vmatprep.subr.bf16.mxu0 0
      %7358 = vmatpush1.bf16.msra.mxu0 %v7327
      %7359 = vmatprep.subr.bf16.mxu0 0
      %7360 = vmatpush2.bf16.msra.mxu0 0
      %7361 = vmatprep.subr.bf16.mxu0 0
      %7362 = vmatpush2.bf16.msra.mxu0 0
      %7363 = vmatprep.subr.bf16.mxu0 0
      %7364 = vmatpush2.bf16.msra.mxu0 0
      %7365 = vmatprep.subr.bf16.mxu0 0
      %7366 = vmatpush2.bf16.msra.mxu0 0
      %7367 = vmatprep.subr.bf16.mxu0 0
      %7368 = vmatpush2.bf16.msra.mxu0 0
      %7369 = vmatprep.subr.bf16.mxu0 0
      %7370 = vmatpush2.bf16.msra.mxu0 0
      %7371 = vmatprep.subr.bf16.mxu0 0
      %7372 = vmatpush2.bf16.msra.mxu0 0
      %7373 = vmatprep.subr.bf16.mxu0 0
      %7374 = vmatpush2.bf16.msra.mxu0 0
      %7375 = vmatprep.mubr.bf16.mxu0 0
      %7376 = vmatmul.mubr.bf16.gmra.mxu0 %v7179
      %v7377 = vpop.f32.mrf.mxu0
      %v7378 = vadd.f32 %v7281, %v7377
      %v7379 = vpop.f32.mrf.mxu0
      %v7380 = vpop.f32.mrf.mxu0
      %v7381 = vadd.f32 %v7284, %v7380
      %v7382 = vpop.f32.mrf.mxu0
      %7383 = vmatprep.mubr.bf16.mxu0 0
      %7384 = vmatmul.mubr.bf16.gmra.mxu0 %v7180
      %v7385 = vpop.f32.mrf.mxu0
      %v7386 = vadd.f32 %v7289, %v7385
      %v7387 = vpop.f32.mrf.mxu0
      %v7388 = vpop.f32.mrf.mxu0
      %v7389 = vadd.f32 %v7292, %v7388
      %v7390 = vpop.f32.mrf.mxu0
      %7391 = vdwg.mxu0
      %7392 = vmatprep.subr.bf16.mxu0 0
      %7393 = vmatpush1.bf16.msra.mxu0 0
      %7394 = vmatprep.subr.bf16.mxu0 0
      %7395 = vmatpush1.bf16.msra.mxu0 0
      %7396 = vmatprep.subr.bf16.mxu0 0
      %7397 = vmatpush1.bf16.msra.mxu0 0
      %7398 = vmatprep.subr.bf16.mxu0 0
      %7399 = vmatpush1.bf16.msra.mxu0 0
      %7400 = vmatprep.subr.bf16.mxu0 0
      %7401 = vmatpush1.bf16.msra.mxu0 0
      %7402 = vmatprep.subr.bf16.mxu0 0
      %7403 = vmatpush1.bf16.msra.mxu0 0
      %7404 = vmatprep.subr.bf16.mxu0 0
      %7405 = vmatpush1.bf16.msra.mxu0 %v7112
      %7406 = vmatprep.subr.bf16.mxu0 0
      %7407 = vmatpush1.bf16.msra.mxu0 %v7111
      %7408 = vmatprep.subr.bf16.mxu0 0
      %7409 = vmatpush2.bf16.msra.mxu0 0
      %7410 = vmatprep.subr.bf16.mxu0 0
      %7411 = vmatpush2.bf16.msra.mxu0 0
      %7412 = vmatprep.subr.bf16.mxu0 0
      %7413 = vmatpush2.bf16.msra.mxu0 0
      %7414 = vmatprep.subr.bf16.mxu0 0
      %7415 = vmatpush2.bf16.msra.mxu0 0
      %7416 = vmatprep.subr.bf16.mxu0 0
      %7417 = vmatpush2.bf16.msra.mxu0 0
      %7418 = vmatprep.subr.bf16.mxu0 0
      %7419 = vmatpush2.bf16.msra.mxu0 0
      %7420 = vmatprep.subr.bf16.mxu0 0
      %7421 = vmatpush2.bf16.msra.mxu0 0
      %7422 = vmatprep.subr.bf16.mxu0 0
      %7423 = vmatpush2.bf16.msra.mxu0 0
      %7424 = vmatprep.mubr.bf16.mxu0 0
      %7425 = vmatmul.mubr.bf16.gmra.mxu0 %v6286
      %v7426 = vpop.f32.mrf.mxu0
      %v7427 = vadd.f32 0.0, %v7426
      %v7428 = vpop.f32.mrf.mxu0
      %v7429 = vpop.f32.mrf.mxu0
      %v7430 = vadd.f32 0.0, %v7429
      %v7431 = vpop.f32.mrf.mxu0
      %7432 = vmatprep.mubr.bf16.mxu0 0
      %7433 = vmatmul.mubr.bf16.gmra.mxu0 %v6289
      %v7434 = vpop.f32.mrf.mxu0
      %v7435 = vadd.f32 0.0, %v7434
      %v7436 = vpop.f32.mrf.mxu0
      %v7437 = vpop.f32.mrf.mxu0
      %v7438 = vadd.f32 0.0, %v7437
      %v7439 = vpop.f32.mrf.mxu0
      %7440 = vdwg.mxu0
      %s7441 = scalar_lea.vmem %s2, 2688
      %v7442 = vld [vmem:[%s7441] sm:$0xf]
      %v7443 = vld [vmem:[%s7441 + $0x4] sm:$0xf]
      %v7444 = vld [vmem:[%s7441 + $0x8] sm:$0xf]
      %v7445 = vld [vmem:[%s7441 + $0xc] sm:$0xf]
      %v7446 = vld [vmem:[%s7441 + $0x10] sm:$0xf]
      %v7447 = vld [vmem:[%s7441 + $0x14] sm:$0xf]
      %v7448 = vld [vmem:[%s7441 + $0x18] sm:$0xf]
      %v7449 = vld [vmem:[%s7441 + $0x1c] sm:$0xf]
      %v7450 = vld [vmem:[%s7441 + $0x20] sm:$0xf]
      %v7451 = vld [vmem:[%s7441 + $0x24] sm:$0xf]
      %v7452 = vld [vmem:[%s7441 + $0x28] sm:$0xf]
      %v7453 = vld [vmem:[%s7441 + $0x2c] sm:$0xf]
      %v7454 = vld [vmem:[%s7441 + $0x30] sm:$0xf]
      %v7455 = vld [vmem:[%s7441 + $0x34] sm:$0xf]
      %v7456 = vld [vmem:[%s7441 + $0x38] sm:$0xf]
      %v7457 = vld [vmem:[%s7441 + $0x3c] sm:$0xf]
      %v7458 = vpack.c.bf16 %v7430, %v7427
      %v7459 = vpack.c.bf16 %v7438, %v7435
      %v7476 = vunpack.c.l.b16 %v7442
      %v7477 = vunpack.c.l.b16 %v7443
      %v7478 = vunpack.c.l.b16 %v7444
      %v7479 = vunpack.c.l.b16 %v7445
      %v7480 = vunpack.c.l.b16 %v7446
      %v7481 = vunpack.c.l.b16 %v7447
      %v7482 = vunpack.c.l.b16 %v7448
      %v7483 = vunpack.c.l.b16 %v7449
      %v7484 = vunpack.c.l.b16 %v7450
      %v7485 = vunpack.c.l.b16 %v7451
      %v7486 = vunpack.c.l.b16 %v7452
      %v7487 = vunpack.c.l.b16 %v7453
      %v7488 = vunpack.c.l.b16 %v7454
      %v7489 = vunpack.c.l.b16 %v7455
      %v7490 = vunpack.c.l.b16 %v7456
      %v7491 = vunpack.c.l.b16 %v7457
      %v7492 = vpack.c.b16 %v7477, %v7476
      %v7493 = vpack.c.b16 %v7479, %v7478
      %v7494 = vpack.c.b16 %v7481, %v7480
      %v7495 = vpack.c.b16 %v7483, %v7482
      %v7496 = vpack.c.b16 %v7485, %v7484
      %v7497 = vpack.c.b16 %v7487, %v7486
      %v7498 = vpack.c.b16 %v7489, %v7488
      %v7499 = vpack.c.b16 %v7491, %v7490
      %7508 = vmatprep.subr.bf16.mxu0 0
      %7509 = vmatpush1.bf16.msra.mxu0 %v7499
      %7510 = vmatprep.subr.bf16.mxu0 0
      %7511 = vmatpush1.bf16.msra.mxu0 %v7498
      %7512 = vmatprep.subr.bf16.mxu0 0
      %7513 = vmatpush1.bf16.msra.mxu0 %v7497
      %7514 = vmatprep.subr.bf16.mxu0 0
      %7515 = vmatpush1.bf16.msra.mxu0 %v7496
      %7516 = vmatprep.subr.bf16.mxu0 0
      %7517 = vmatpush1.bf16.msra.mxu0 %v7495
      %7518 = vmatprep.subr.bf16.mxu0 0
      %7519 = vmatpush1.bf16.msra.mxu0 %v7494
      %7520 = vmatprep.subr.bf16.mxu0 0
      %7521 = vmatpush1.bf16.msra.mxu0 %v7493
      %7522 = vmatprep.subr.bf16.mxu0 0
      %7523 = vmatpush1.bf16.msra.mxu0 %v7492
      %7524 = vmatprep.subr.bf16.mxu0 0
      %7525 = vmatpush2.bf16.msra.mxu0 0
      %7526 = vmatprep.subr.bf16.mxu0 0
      %7527 = vmatpush2.bf16.msra.mxu0 0
      %7528 = vmatprep.subr.bf16.mxu0 0
      %7529 = vmatpush2.bf16.msra.mxu0 0
      %7530 = vmatprep.subr.bf16.mxu0 0
      %7531 = vmatpush2.bf16.msra.mxu0 0
      %7532 = vmatprep.subr.bf16.mxu0 0
      %7533 = vmatpush2.bf16.msra.mxu0 0
      %7534 = vmatprep.subr.bf16.mxu0 0
      %7535 = vmatpush2.bf16.msra.mxu0 0
      %7536 = vmatprep.subr.bf16.mxu0 0
      %7537 = vmatpush2.bf16.msra.mxu0 0
      %7538 = vmatprep.subr.bf16.mxu0 0
      %7539 = vmatpush2.bf16.msra.mxu0 0
      %7540 = vmatprep.mubr.bf16.mxu0 0
      %7541 = vmatmul.mubr.bf16.gmra.mxu0 %v7458
      %v7542 = vpop.f32.mrf.mxu0
      %v7543 = vadd.f32 0.0, %v7542
      %v7544 = vpop.f32.mrf.mxu0
      %v7545 = vpop.f32.mrf.mxu0
      %v7546 = vadd.f32 0.0, %v7545
      %v7547 = vpop.f32.mrf.mxu0
      %7548 = vmatprep.mubr.bf16.mxu0 0
      %7549 = vmatmul.mubr.bf16.gmra.mxu0 %v7459
      %v7550 = vpop.f32.mrf.mxu0
      %v7551 = vadd.f32 0.0, %v7550
      %v7552 = vpop.f32.mrf.mxu0
      %v7553 = vpop.f32.mrf.mxu0
      %v7554 = vadd.f32 0.0, %v7553
      %v7555 = vpop.f32.mrf.mxu0
      %7556 = vdwg.mxu0
      %v7557 = vadd.f32 %v7378, %v7543
      %v7558 = vadd.f32 %v7381, %v7546
      %v7559 = vadd.f32 %v7386, %v7551
      %v7560 = vadd.f32 %v7389, %v7554
      %s7561 = scalar_lea.vmem %s3, 11
      %v7562 = vld [vmem:[%s7561] sm:$0x1]
      %v7564 = vlaneseq
      %v7565 = vshrl.u32 %v7564, 7
      %v7566 = vsub.s32 0, %v7565
      %v7567 = vrot.slane %v7562, %v7566
      %v7569 = vadd.f32 %v7557, %v7567
      %v7570 = vadd.f32 %v7558, %v7567
      %v7571 = vadd.f32 %v7559, %v7567
      %v7572 = vadd.f32 %v7560, %v7567
      %v7573 = vadd.f32 %v7569, %v6468
      %v7574 = vadd.f32 %v7570, %v6469
      %v7575 = vadd.f32 %v7571, %v6470
      %v7576 = vadd.f32 %v7572, %v6471
      %vm7577 = vcmp.ge.f32.partialorder %v7573, 0.0
      %vm7578 = vcmp.ge.f32.partialorder %v7574, 0.0
      %vm7579 = vcmp.ge.f32.partialorder %v7575, 0.0
      %vm7580 = vcmp.ge.f32.partialorder %v7576, 0.0
      %v7581 = vmul.f32 %v7573, 0.22916667
      %v7582 = vmul.f32 %v7574, 0.22916667
      %v7583 = vmul.f32 %v7575, 0.22916667
      %v7584 = vmul.f32 %v7576, 0.22916667
      %v7585 = vsel %vm7577, %v7573, %v7581
      %v7586 = vsel %vm7578, %v7574, %v7582
      %v7587 = vsel %vm7579, %v7575, %v7583
      %v7588 = vsel %vm7580, %v7576, %v7584
      %s7589 = scalar_lea.vmem %s1, 272
      %v7590 = vld [vmem:[%s7589] sm:$0xf]
      %v7591 = vld [vmem:[%s7589 + $0x4] sm:$0xf]
      %v7592 = vld [vmem:[%s7589 + $0x8] sm:$0xf]
      %v7593 = vld [vmem:[%s7589 + $0xc] sm:$0xf]
      %s7594 = scalar_lea.vmem %s2, 2752
      %v7595 = vld [vmem:[%s7594] sm:$0xf]
      %v7596 = vld [vmem:[%s7594 + $0x4] sm:$0xf]
      %v7597 = vld [vmem:[%s7594 + $0x8] sm:$0xf]
      %v7598 = vld [vmem:[%s7594 + $0xc] sm:$0xf]
      %v7599 = vld [vmem:[%s7594 + $0x10] sm:$0xf]
      %v7600 = vld [vmem:[%s7594 + $0x14] sm:$0xf]
      %v7601 = vld [vmem:[%s7594 + $0x18] sm:$0xf]
      %v7602 = vld [vmem:[%s7594 + $0x1c] sm:$0xf]
      %v7603 = vld [vmem:[%s7594 + $0x20] sm:$0xf]
      %v7604 = vld [vmem:[%s7594 + $0x24] sm:$0xf]
      %v7605 = vld [vmem:[%s7594 + $0x28] sm:$0xf]
      %v7606 = vld [vmem:[%s7594 + $0x2c] sm:$0xf]
      %v7607 = vld [vmem:[%s7594 + $0x30] sm:$0xf]
      %v7608 = vld [vmem:[%s7594 + $0x34] sm:$0xf]
      %v7609 = vld [vmem:[%s7594 + $0x38] sm:$0xf]
      %v7610 = vld [vmem:[%s7594 + $0x3c] sm:$0xf]
      %v7611 = vpack.c.bf16 %v7586, %v7585
      %v7612 = vpack.c.bf16 %v7588, %v7587
      %v7629 = vunpack.c.l.b16 %v7595
      %v7630 = vunpack.c.l.b16 %v7596
      %v7631 = vunpack.c.l.b16 %v7597
      %v7632 = vunpack.c.l.b16 %v7598
      %v7633 = vunpack.c.l.b16 %v7599
      %v7634 = vunpack.c.l.b16 %v7600
      %v7635 = vunpack.c.l.b16 %v7601
      %v7636 = vunpack.c.l.b16 %v7602
      %v7637 = vunpack.c.l.b16 %v7603
      %v7638 = vunpack.c.l.b16 %v7604
      %v7639 = vunpack.c.l.b16 %v7605
      %v7640 = vunpack.c.l.b16 %v7606
      %v7641 = vunpack.c.l.b16 %v7607
      %v7642 = vunpack.c.l.b16 %v7608
      %v7643 = vunpack.c.l.b16 %v7609
      %v7644 = vunpack.c.l.b16 %v7610
      %v7645 = vpack.c.b16 %v7630, %v7629
      %v7646 = vpack.c.b16 %v7632, %v7631
      %v7647 = vpack.c.b16 %v7634, %v7633
      %v7648 = vpack.c.b16 %v7636, %v7635
      %v7649 = vpack.c.b16 %v7638, %v7637
      %v7650 = vpack.c.b16 %v7640, %v7639
      %v7651 = vpack.c.b16 %v7642, %v7641
      %v7652 = vpack.c.b16 %v7644, %v7643
      %7661 = vmatprep.subr.bf16.mxu0 0
      %7662 = vmatpush1.bf16.msra.mxu0 %v7652
      %7663 = vmatprep.subr.bf16.mxu0 0
      %7664 = vmatpush1.bf16.msra.mxu0 %v7651
      %7665 = vmatprep.subr.bf16.mxu0 0
      %7666 = vmatpush1.bf16.msra.mxu0 %v7650
      %7667 = vmatprep.subr.bf16.mxu0 0
      %7668 = vmatpush1.bf16.msra.mxu0 %v7649
      %7669 = vmatprep.subr.bf16.mxu0 0
      %7670 = vmatpush1.bf16.msra.mxu0 %v7648
      %7671 = vmatprep.subr.bf16.mxu0 0
      %7672 = vmatpush1.bf16.msra.mxu0 %v7647
      %7673 = vmatprep.subr.bf16.mxu0 0
      %7674 = vmatpush1.bf16.msra.mxu0 %v7646
      %7675 = vmatprep.subr.bf16.mxu0 0
      %7676 = vmatpush1.bf16.msra.mxu0 %v7645
      %7677 = vmatprep.subr.bf16.mxu0 0
      %7678 = vmatpush2.bf16.msra.mxu0 0
      %7679 = vmatprep.subr.bf16.mxu0 0
      %7680 = vmatpush2.bf16.msra.mxu0 0
      %7681 = vmatprep.subr.bf16.mxu0 0
      %7682 = vmatpush2.bf16.msra.mxu0 0
      %7683 = vmatprep.subr.bf16.mxu0 0
      %7684 = vmatpush2.bf16.msra.mxu0 0
      %7685 = vmatprep.subr.bf16.mxu0 0
      %7686 = vmatpush2.bf16.msra.mxu0 0
      %7687 = vmatprep.subr.bf16.mxu0 0
      %7688 = vmatpush2.bf16.msra.mxu0 0
      %7689 = vmatprep.subr.bf16.mxu0 0
      %7690 = vmatpush2.bf16.msra.mxu0 0
      %7691 = vmatprep.subr.bf16.mxu0 0
      %7692 = vmatpush2.bf16.msra.mxu0 0
      %7693 = vmatprep.mubr.bf16.mxu0 0
      %7694 = vmatmul.mubr.bf16.gmra.mxu0 %v7611
      %v7695 = vpop.f32.mrf.mxu0
      %v7696 = vadd.f32 0.0, %v7695
      %v7697 = vpop.f32.mrf.mxu0
      %v7698 = vpop.f32.mrf.mxu0
      %v7699 = vadd.f32 0.0, %v7698
      %v7700 = vpop.f32.mrf.mxu0
      %7701 = vmatprep.mubr.bf16.mxu0 0
      %7702 = vmatmul.mubr.bf16.gmra.mxu0 %v7612
      %v7703 = vpop.f32.mrf.mxu0
      %v7704 = vadd.f32 0.0, %v7703
      %v7705 = vpop.f32.mrf.mxu0
      %v7706 = vpop.f32.mrf.mxu0
      %v7707 = vadd.f32 0.0, %v7706
      %v7708 = vpop.f32.mrf.mxu0
      %7709 = vdwg.mxu0
      %v7710 = vpack.c.bf16 %v7699, %v7696
      %v7711 = vpack.c.bf16 %v7707, %v7704
      %s7712 = scalar_lea.vmem %s1, 288
      %v7713 = vld [vmem:[%s7712] sm:$0xf]
      %v7714 = vld [vmem:[%s7712 + $0x4] sm:$0xf]
      %v7715 = vld [vmem:[%s7712 + $0x8] sm:$0xf]
      %v7716 = vld [vmem:[%s7712 + $0xc] sm:$0xf]
      %s7717 = scalar_lea.vmem %s2, 2816
      %v7718 = vld [vmem:[%s7717] sm:$0xf]
      %v7719 = vld [vmem:[%s7717 + $0x4] sm:$0xf]
      %v7720 = vld [vmem:[%s7717 + $0x8] sm:$0xf]
      %v7721 = vld [vmem:[%s7717 + $0xc] sm:$0xf]
      %v7722 = vld [vmem:[%s7717 + $0x10] sm:$0xf]
      %v7723 = vld [vmem:[%s7717 + $0x14] sm:$0xf]
      %v7724 = vld [vmem:[%s7717 + $0x18] sm:$0xf]
      %v7725 = vld [vmem:[%s7717 + $0x1c] sm:$0xf]
      %v7726 = vld [vmem:[%s7717 + $0x20] sm:$0xf]
      %v7727 = vld [vmem:[%s7717 + $0x24] sm:$0xf]
      %v7728 = vld [vmem:[%s7717 + $0x28] sm:$0xf]
      %v7729 = vld [vmem:[%s7717 + $0x2c] sm:$0xf]
      %v7730 = vld [vmem:[%s7717 + $0x30] sm:$0xf]
      %v7731 = vld [vmem:[%s7717 + $0x34] sm:$0xf]
      %v7732 = vld [vmem:[%s7717 + $0x38] sm:$0xf]
      %v7733 = vld [vmem:[%s7717 + $0x3c] sm:$0xf]
      %v7750 = vunpack.c.l.b16 %v7718
      %v7751 = vunpack.c.l.b16 %v7719
      %v7752 = vunpack.c.l.b16 %v7720
      %v7753 = vunpack.c.l.b16 %v7721
      %v7754 = vunpack.c.l.b16 %v7722
      %v7755 = vunpack.c.l.b16 %v7723
      %v7756 = vunpack.c.l.b16 %v7724
      %v7757 = vunpack.c.l.b16 %v7725
      %v7758 = vunpack.c.l.b16 %v7726
      %v7759 = vunpack.c.l.b16 %v7727
      %v7760 = vunpack.c.l.b16 %v7728
      %v7761 = vunpack.c.l.b16 %v7729
      %v7762 = vunpack.c.l.b16 %v7730
      %v7763 = vunpack.c.l.b16 %v7731
      %v7764 = vunpack.c.l.b16 %v7732
      %v7765 = vunpack.c.l.b16 %v7733
      %v7766 = vpack.c.b16 %v7751, %v7750
      %v7767 = vpack.c.b16 %v7753, %v7752
      %v7768 = vpack.c.b16 %v7755, %v7754
      %v7769 = vpack.c.b16 %v7757, %v7756
      %v7770 = vpack.c.b16 %v7759, %v7758
      %v7771 = vpack.c.b16 %v7761, %v7760
      %v7772 = vpack.c.b16 %v7763, %v7762
      %v7773 = vpack.c.b16 %v7765, %v7764
      %7782 = vmatprep.subr.bf16.mxu0 0
      %7783 = vmatpush1.bf16.msra.mxu0 %v7773
      %7784 = vmatprep.subr.bf16.mxu0 0
      %7785 = vmatpush1.bf16.msra.mxu0 %v7772
      %7786 = vmatprep.subr.bf16.mxu0 0
      %7787 = vmatpush1.bf16.msra.mxu0 %v7771
      %7788 = vmatprep.subr.bf16.mxu0 0
      %7789 = vmatpush1.bf16.msra.mxu0 %v7770
      %7790 = vmatprep.subr.bf16.mxu0 0
      %7791 = vmatpush1.bf16.msra.mxu0 %v7769
      %7792 = vmatprep.subr.bf16.mxu0 0
      %7793 = vmatpush1.bf16.msra.mxu0 %v7768
      %7794 = vmatprep.subr.bf16.mxu0 0
      %7795 = vmatpush1.bf16.msra.mxu0 %v7767
      %7796 = vmatprep.subr.bf16.mxu0 0
      %7797 = vmatpush1.bf16.msra.mxu0 %v7766
      %7798 = vmatprep.subr.bf16.mxu0 0
      %7799 = vmatpush2.bf16.msra.mxu0 0
      %7800 = vmatprep.subr.bf16.mxu0 0
      %7801 = vmatpush2.bf16.msra.mxu0 0
      %7802 = vmatprep.subr.bf16.mxu0 0
      %7803 = vmatpush2.bf16.msra.mxu0 0
      %7804 = vmatprep.subr.bf16.mxu0 0
      %7805 = vmatpush2.bf16.msra.mxu0 0
      %7806 = vmatprep.subr.bf16.mxu0 0
      %7807 = vmatpush2.bf16.msra.mxu0 0
      %7808 = vmatprep.subr.bf16.mxu0 0
      %7809 = vmatpush2.bf16.msra.mxu0 0
      %7810 = vmatprep.subr.bf16.mxu0 0
      %7811 = vmatpush2.bf16.msra.mxu0 0
      %7812 = vmatprep.subr.bf16.mxu0 0
      %7813 = vmatpush2.bf16.msra.mxu0 0
      %7814 = vmatprep.mubr.bf16.mxu0 0
      %7815 = vmatmul.mubr.bf16.gmra.mxu0 %v7611
      %v7816 = vpop.f32.mrf.mxu0
      %v7817 = vadd.f32 0.0, %v7816
      %v7818 = vpop.f32.mrf.mxu0
      %v7819 = vpop.f32.mrf.mxu0
      %v7820 = vadd.f32 0.0, %v7819
      %v7821 = vpop.f32.mrf.mxu0
      %7822 = vmatprep.mubr.bf16.mxu0 0
      %7823 = vmatmul.mubr.bf16.gmra.mxu0 %v7612
      %v7824 = vpop.f32.mrf.mxu0
      %v7825 = vadd.f32 0.0, %v7824
      %v7826 = vpop.f32.mrf.mxu0
      %v7827 = vpop.f32.mrf.mxu0
      %v7828 = vadd.f32 0.0, %v7827
      %v7829 = vpop.f32.mrf.mxu0
      %7830 = vdwg.mxu0
      %v7831 = vpack.c.bf16 %v7820, %v7817
      %v7832 = vpack.c.bf16 %v7828, %v7825
      %v7837 = vunpack.c.l.b16 %v7713
      %v7838 = vunpack.c.l.b16 %v7714
      %v7839 = vunpack.c.l.b16 %v7715
      %v7840 = vunpack.c.l.b16 %v7716
      %v7841 = vpack.c.b16 %v7838, %v7837
      %v7842 = vpack.c.b16 %v7840, %v7839
      %v7844 = vsel %vm229, %v7841, 0
      %v7847 = vsel %vm229, %v7842, 0
      %7849 = vmatprep.subr.bf16.mxu0 0
      %7850 = vmatpush1.bf16.msra.mxu0 0
      %7851 = vmatprep.subr.bf16.mxu0 0
      %7852 = vmatpush1.bf16.msra.mxu0 0
      %7853 = vmatprep.subr.bf16.mxu0 0
      %7854 = vmatpush1.bf16.msra.mxu0 0
      %7855 = vmatprep.subr.bf16.mxu0 0
      %7856 = vmatpush1.bf16.msra.mxu0 0
      %7857 = vmatprep.subr.bf16.mxu0 0
      %7858 = vmatpush1.bf16.msra.mxu0 0
      %7859 = vmatprep.subr.bf16.mxu0 0
      %7860 = vmatpush1.bf16.msra.mxu0 0
      %7861 = vmatprep.subr.bf16.mxu0 0
      %7862 = vmatpush1.bf16.msra.mxu0 %v7832
      %7863 = vmatprep.subr.bf16.mxu0 0
      %7864 = vmatpush1.bf16.msra.mxu0 %v7831
      %7865 = vmatprep.subr.bf16.mxu0 0
      %7866 = vmatpush2.bf16.msra.mxu0 0
      %7867 = vmatprep.subr.bf16.mxu0 0
      %7868 = vmatpush2.bf16.msra.mxu0 0
      %7869 = vmatprep.subr.bf16.mxu0 0
      %7870 = vmatpush2.bf16.msra.mxu0 0
      %7871 = vmatprep.subr.bf16.mxu0 0
      %7872 = vmatpush2.bf16.msra.mxu0 0
      %7873 = vmatprep.subr.bf16.mxu0 0
      %7874 = vmatpush2.bf16.msra.mxu0 0
      %7875 = vmatprep.subr.bf16.mxu0 0
      %7876 = vmatpush2.bf16.msra.mxu0 0
      %7877 = vmatprep.subr.bf16.mxu0 0
      %7878 = vmatpush2.bf16.msra.mxu0 0
      %7879 = vmatprep.subr.bf16.mxu0 0
      %7880 = vmatpush2.bf16.msra.mxu0 0
      %7881 = vmatprep.mubr.bf16.mxu0 0
      %7882 = vmatmul.mubr.bf16.gmra.mxu0 %v7844
      %v7883 = vpop.f32.mrf.mxu0
      %v7884 = vadd.f32 0.0, %v7883
      %v7885 = vpop.f32.mrf.mxu0
      %v7886 = vpop.f32.mrf.mxu0
      %v7887 = vadd.f32 0.0, %v7886
      %v7888 = vpop.f32.mrf.mxu0
      %7889 = vmatprep.mubr.bf16.mxu0 0
      %7890 = vmatmul.mubr.bf16.gmra.mxu0 %v7847
      %v7891 = vpop.f32.mrf.mxu0
      %v7892 = vadd.f32 0.0, %v7891
      %v7893 = vpop.f32.mrf.mxu0
      %v7894 = vpop.f32.mrf.mxu0
      %v7895 = vadd.f32 0.0, %v7894
      %v7896 = vpop.f32.mrf.mxu0
      %7897 = vdwg.mxu0
      %v7902 = vunpack.c.l.b16 %v7590
      %v7903 = vunpack.c.l.b16 %v7591
      %v7904 = vunpack.c.l.b16 %v7592
      %v7905 = vunpack.c.l.b16 %v7593
      %v7906 = vpack.c.b16 %v7903, %v7902
      %v7907 = vpack.c.b16 %v7905, %v7904
      %v7909 = vsel %vm229, %v7906, 0
      %v7912 = vsel %vm229, %v7907, 0
      %7914 = vmatprep.subr.bf16.mxu0 0
      %7915 = vmatpush1.bf16.msra.mxu0 0
      %7916 = vmatprep.subr.bf16.mxu0 0
      %7917 = vmatpush1.bf16.msra.mxu0 0
      %7918 = vmatprep.subr.bf16.mxu0 0
      %7919 = vmatpush1.bf16.msra.mxu0 0
      %7920 = vmatprep.subr.bf16.mxu0 0
      %7921 = vmatpush1.bf16.msra.mxu0 0
      %7922 = vmatprep.subr.bf16.mxu0 0
      %7923 = vmatpush1.bf16.msra.mxu0 0
      %7924 = vmatprep.subr.bf16.mxu0 0
      %7925 = vmatpush1.bf16.msra.mxu0 0
      %7926 = vmatprep.subr.bf16.mxu0 0
      %7927 = vmatpush1.bf16.msra.mxu0 %v7711
      %7928 = vmatprep.subr.bf16.mxu0 0
      %7929 = vmatpush1.bf16.msra.mxu0 %v7710
      %7930 = vmatprep.subr.bf16.mxu0 0
      %7931 = vmatpush2.bf16.msra.mxu0 0
      %7932 = vmatprep.subr.bf16.mxu0 0
      %7933 = vmatpush2.bf16.msra.mxu0 0
      %7934 = vmatprep.subr.bf16.mxu0 0
      %7935 = vmatpush2.bf16.msra.mxu0 0
      %7936 = vmatprep.subr.bf16.mxu0 0
      %7937 = vmatpush2.bf16.msra.mxu0 0
      %7938 = vmatprep.subr.bf16.mxu0 0
      %7939 = vmatpush2.bf16.msra.mxu0 0
      %7940 = vmatprep.subr.bf16.mxu0 0
      %7941 = vmatpush2.bf16.msra.mxu0 0
      %7942 = vmatprep.subr.bf16.mxu0 0
      %7943 = vmatpush2.bf16.msra.mxu0 0
      %7944 = vmatprep.subr.bf16.mxu0 0
      %7945 = vmatpush2.bf16.msra.mxu0 0
      %7946 = vmatprep.mubr.bf16.mxu0 0
      %7947 = vmatmul.mubr.bf16.gmra.mxu0 %v7909
      %v7948 = vpop.f32.mrf.mxu0
      %v7949 = vadd.f32 %v7884, %v7948
      %v7950 = vpop.f32.mrf.mxu0
      %v7951 = vpop.f32.mrf.mxu0
      %v7952 = vadd.f32 %v7887, %v7951
      %v7953 = vpop.f32.mrf.mxu0
      %7954 = vmatprep.mubr.bf16.mxu0 0
      %7955 = vmatmul.mubr.bf16.gmra.mxu0 %v7912
      %v7956 = vpop.f32.mrf.mxu0
      %v7957 = vadd.f32 %v7892, %v7956
      %v7958 = vpop.f32.mrf.mxu0
      %v7959 = vpop.f32.mrf.mxu0
      %v7960 = vadd.f32 %v7895, %v7959
      %v7961 = vpop.f32.mrf.mxu0
      %7962 = vdwg.mxu0
      %s7963 = scalar_lea.vmem %s3, 12
      %v7964 = vld [vmem:[%s7963] sm:$0x1]
      %v7966 = vlaneseq
      %v7967 = vshrl.u32 %v7966, 7
      %v7968 = vsub.s32 0, %v7967
      %v7969 = vrot.slane %v7964, %v7968
      %v7971 = vadd.f32 %v7949, %v7969
      %v7972 = vadd.f32 %v7952, %v7969
      %v7973 = vadd.f32 %v7957, %v7969
      %v7974 = vadd.f32 %v7960, %v7969
      %s7975 = scalar_lea.vmem %s2, 2880
      %v7976 = vld [vmem:[%s7975] sm:$0xf]
      %v7977 = vld [vmem:[%s7975 + $0x4] sm:$0xf]
      %v7978 = vld [vmem:[%s7975 + $0x8] sm:$0xf]
      %v7979 = vld [vmem:[%s7975 + $0xc] sm:$0xf]
      %v7980 = vld [vmem:[%s7975 + $0x10] sm:$0xf]
      %v7981 = vld [vmem:[%s7975 + $0x14] sm:$0xf]
      %v7982 = vld [vmem:[%s7975 + $0x18] sm:$0xf]
      %v7983 = vld [vmem:[%s7975 + $0x1c] sm:$0xf]
      %v7984 = vld [vmem:[%s7975 + $0x20] sm:$0xf]
      %v7985 = vld [vmem:[%s7975 + $0x24] sm:$0xf]
      %v7986 = vld [vmem:[%s7975 + $0x28] sm:$0xf]
      %v7987 = vld [vmem:[%s7975 + $0x2c] sm:$0xf]
      %v7988 = vld [vmem:[%s7975 + $0x30] sm:$0xf]
      %v7989 = vld [vmem:[%s7975 + $0x34] sm:$0xf]
      %v7990 = vld [vmem:[%s7975 + $0x38] sm:$0xf]
      %v7991 = vld [vmem:[%s7975 + $0x3c] sm:$0xf]
      %v7992 = vpack.c.bf16 %v7972, %v7971
      %v7993 = vpack.c.bf16 %v7974, %v7973
      %s7994 = scalar_lea.vmem %s3, 13
      %v7995 = vld [vmem:[%s7994] sm:$0x1]
      %v7997 = vlaneseq
      %v7998 = vshrl.u32 %v7997, 7
      %v7999 = vsub.s32 0, %v7998
      %v8000 = vrot.slane %v7995, %v7999
      %v8018 = vunpack.c.l.b16 %v7976
      %v8019 = vunpack.c.l.b16 %v7977
      %v8020 = vunpack.c.l.b16 %v7978
      %v8021 = vunpack.c.l.b16 %v7979
      %v8022 = vunpack.c.l.b16 %v7980
      %v8023 = vunpack.c.l.b16 %v7981
      %v8024 = vunpack.c.l.b16 %v7982
      %v8025 = vunpack.c.l.b16 %v7983
      %v8026 = vunpack.c.l.b16 %v7984
      %v8027 = vunpack.c.l.b16 %v7985
      %v8028 = vunpack.c.l.b16 %v7986
      %v8029 = vunpack.c.l.b16 %v7987
      %v8030 = vunpack.c.l.b16 %v7988
      %v8031 = vunpack.c.l.b16 %v7989
      %v8032 = vunpack.c.l.b16 %v7990
      %v8033 = vunpack.c.l.b16 %v7991
      %v8034 = vpack.c.b16 %v8019, %v8018
      %v8035 = vpack.c.b16 %v8021, %v8020
      %v8036 = vpack.c.b16 %v8023, %v8022
      %v8037 = vpack.c.b16 %v8025, %v8024
      %v8038 = vpack.c.b16 %v8027, %v8026
      %v8039 = vpack.c.b16 %v8029, %v8028
      %v8040 = vpack.c.b16 %v8031, %v8030
      %v8041 = vpack.c.b16 %v8033, %v8032
      %8050 = vmatprep.subr.bf16.mxu0 0
      %8051 = vmatpush1.bf16.msra.mxu0 %v8041
      %8052 = vmatprep.subr.bf16.mxu0 0
      %8053 = vmatpush1.bf16.msra.mxu0 %v8040
      %8054 = vmatprep.subr.bf16.mxu0 0
      %8055 = vmatpush1.bf16.msra.mxu0 %v8039
      %8056 = vmatprep.subr.bf16.mxu0 0
      %8057 = vmatpush1.bf16.msra.mxu0 %v8038
      %8058 = vmatprep.subr.bf16.mxu0 0
      %8059 = vmatpush1.bf16.msra.mxu0 %v8037
      %8060 = vmatprep.subr.bf16.mxu0 0
      %8061 = vmatpush1.bf16.msra.mxu0 %v8036
      %8062 = vmatprep.subr.bf16.mxu0 0
      %8063 = vmatpush1.bf16.msra.mxu0 %v8035
      %8064 = vmatprep.subr.bf16.mxu0 0
      %8065 = vmatpush1.bf16.msra.mxu0 %v8034
      %8066 = vmatprep.subr.bf16.mxu0 0
      %8067 = vmatpush2.bf16.msra.mxu0 0
      %8068 = vmatprep.subr.bf16.mxu0 0
      %8069 = vmatpush2.bf16.msra.mxu0 0
      %8070 = vmatprep.subr.bf16.mxu0 0
      %8071 = vmatpush2.bf16.msra.mxu0 0
      %8072 = vmatprep.subr.bf16.mxu0 0
      %8073 = vmatpush2.bf16.msra.mxu0 0
      %8074 = vmatprep.subr.bf16.mxu0 0
      %8075 = vmatpush2.bf16.msra.mxu0 0
      %8076 = vmatprep.subr.bf16.mxu0 0
      %8077 = vmatpush2.bf16.msra.mxu0 0
      %8078 = vmatprep.subr.bf16.mxu0 0
      %8079 = vmatpush2.bf16.msra.mxu0 0
      %8080 = vmatprep.subr.bf16.mxu0 0
      %8081 = vmatpush2.bf16.msra.mxu0 0
      %8082 = vmatprep.mubr.bf16.mxu0 0
      %8083 = vmatmul.mubr.bf16.gmra.mxu0 %v7992
      %v8084 = vpop.f32.mrf.mxu0
      %v8085 = vadd.f32 %v8000, %v8084
      %v8086 = vpop.f32.mrf.mxu0
      %v8087 = vpop.f32.mrf.mxu0
      %v8088 = vadd.f32 %v8000, %v8087
      %v8089 = vpop.f32.mrf.mxu0
      %8090 = vmatprep.mubr.bf16.mxu0 0
      %8091 = vmatmul.mubr.bf16.gmra.mxu0 %v7993
      %v8092 = vpop.f32.mrf.mxu0
      %v8093 = vadd.f32 %v8000, %v8092
      %v8094 = vpop.f32.mrf.mxu0
      %v8095 = vpop.f32.mrf.mxu0
      %v8096 = vadd.f32 %v8000, %v8095
      %v8097 = vpop.f32.mrf.mxu0
      %8098 = vdwg.mxu0
      %8099 = vst [vmem:[%s197] sm:$0xff] %v8085
      %8100 = vst [vmem:[%s197 + $0x8] sm:$0xff] %v8088
      %8101 = vst [vmem:[%s197 + $0x10] sm:$0xff] %v8093
      %8102 = vst [vmem:[%s197 + $0x18] sm:$0xff] %v8096
      %p8103 = scmp.lt.s32.totalorder %s15, 1
      %s8104 = scalar_select %p8103, %s15, 1
      %s8105 = smul.addr %s8104, 4
      %s8106 = smul.addr %s8105, 8
      %s8107 = scalar_lea.vmem %s4, %s8106
      // Predicated region
      $region37: #{encoder_forward.1} parent=35 // pred_check
        %p8108 = pneg %p122
      $region38: #{encoder_forward.1} parent=35 // pred_check_branch
        %8110 = sbr.rel (%p8108) target = $region40
      $region39: #{encoder_forward.1} parent=35 // pred_region
        _
      $region40: #{encoder_forward.1} parent=35 // pred_fallthru
        _
    $region36: #{encoder_forward.1} parent=5 // pred_fallthru
      _
    %p8111 = scmp.le.s32.totalorder 2, %s10
    // Predicated region
    $region41: #{encoder_forward.1} parent=5 // pred_check
      %p8112 = pneg %p8111
    $region42: #{encoder_forward.1} parent=5 // pred_check_branch
      %8114 = sbr.rel (%p8112) target = $region44
    $region43: #{encoder_forward.1} parent=5 // pred_region
      %s8115 = ssub.s32 %s10, 2
      // Predicated region
      $region45: #{encoder_forward.1} parent=43 // pred_check
        %p8116 = pneg %p128
      $region46: #{encoder_forward.1} parent=43 // pred_check_branch
        %8118 = sbr.rel (%p8116) target = $region48
      $region47: #{encoder_forward.1} parent=43 // pred_region
        %p8119 = scmp.lt.s32.totalorder %s16, 1
        %s8120 = scalar_select %p8119, %s16, 1
        %s8121 = smul.addr %s8120, 4
        %s8122 = smul.addr %s8121, 8
        %s8123 = scalar_lea.vmem %s4, %s8122
      $region48: #{encoder_forward.1} parent=43 // pred_fallthru
        _
    $region44: #{encoder_forward.1} parent=5 // pred_fallthru
      _
  $region6: #{encoder_forward.1} parent=0 // loop_footer
    %s14 = sadd.s32 1, %s10
  $region7: #{encoder_forward.1} parent=0 // loop_footer_branch
    %9 = sbr.rel target = $region3
  $region8: #{encoder_forward.1} parent=0 // loop_exit
    _

</llo_original>
